<compile_context>
chip_gen: v5e
topology: v5e:2x2
jax: 0.10.0
libtpu: 0.0.40
codegen_flags: <defaults>
</compile_context>

<pallas_src>
import jax
import jax.numpy as jnp
from jax import lax
from jax.experimental import pallas as pl
from jax.experimental.pallas import tpu as pltpu

EPS = 1e-5


def double_conv_kernel(x_pad_ref, w1_ref, g1_ref, b1_ref, w2_ref, g2_ref, b2_ref,
                       out_ref, halo_ref):
    # x_pad_ref : (N, H+2, W+2, Cin)   zero-padded input, NHWC
    # w1_ref    : (9*Cin, Cout)        im2col weights, (kh, kw, cin) row-major
    # w2_ref    : (9*Cout, Cout)
    # g*/b*     : (1, Cout)            BN affine params
    # out_ref   : (N, H, W*Cout)       lane-dense output
    # halo_ref  : (N, H+2, W+2, Cout)  VMEM halo buffer for conv2
    N, HP, WP, Cin = x_pad_ref.shape
    H, W = HP - 2, WP - 2
    Cout = g1_ref.shape[-1]
    cnt = jnp.float32(N * H * W)

    def bn_relu(t, g, b):
        # Single-pass batch statistics: var = E[x^2] - E[x]^2 (biased).
        s = jnp.sum(t, axis=(0, 1, 2), keepdims=True)
        ss = jnp.sum(t * t, axis=(0, 1, 2), keepdims=True)
        m = s / cnt
        v = ss / cnt - m * m
        return jnp.maximum((t - m) * lax.rsqrt(v + EPS) * g + b, 0.0)

    # ---- conv1: im2col (9 shifted ref views concatenated along channels)
    #      followed by a single deep-K MXU contraction.
    patch1 = jnp.concatenate(
        [x_pad_ref[:, kh:kh + H, kw:kw + W, :]
         for kh in range(3) for kw in range(3)],
        axis=-1)                                               # (N, H, W, 9*Cin)
    y = lax.dot_general(patch1, w1_ref[...],
                        dimension_numbers=(((3,), (0,)), ((), ())),
                        preferred_element_type=jnp.float32)    # (N, H, W, Cout)
    y = bn_relu(y, g1_ref[...], b1_ref[...])

    # ---- conv2 halo: zero ONLY the four 1-pixel border strips, write the
    #      interior once (no full-buffer zero fill).
    halo_ref[:, 0:1, :, :] = jnp.zeros((N, 1, WP, Cout), jnp.float32)
    halo_ref[:, H + 1:H + 2, :, :] = jnp.zeros((N, 1, WP, Cout), jnp.float32)
    halo_ref[:, 1:H + 1, 0:1, :] = jnp.zeros((N, H, 1, Cout), jnp.float32)
    halo_ref[:, 1:H + 1, W + 1:W + 2, :] = jnp.zeros((N, H, 1, Cout), jnp.float32)
    halo_ref[:, 1:H + 1, 1:W + 1, :] = y

    # ---- conv2: same im2col, patches sliced straight off the halo ref.
    patch2 = jnp.concatenate(
        [halo_ref[:, kh:kh + H, kw:kw + W, :]
         for kh in range(3) for kw in range(3)],
        axis=-1)                                               # (N, H, W, 9*Cout)
    z = lax.dot_general(patch2, w2_ref[...],
                        dimension_numbers=(((3,), (0,)), ((), ())),
                        preferred_element_type=jnp.float32)    # (N, H, W, Cout)
    z = bn_relu(z, g2_ref[...], b2_ref[...])

    # ---- lane-dense store: merge (W, Cout) into the lane axis so the output
    #      block's last dim is W*Cout (=128 for the demo shapes).
    zd = jnp.concatenate([z[:, :, w, :] for w in range(W)], axis=-1)  # (N,H,W*Cout)
    out_ref[...] = zd.astype(out_ref.dtype)


def double_conv(x_nchw, w1, g1, b1, w2, g2, b2):
    """x_nchw: (N, Cin, H, W); w1: (3,3,Cin,Cout) HWIO; w2: (3,3,Cout,Cout) HWIO."""
    x = jnp.transpose(x_nchw, (0, 2, 3, 1)).astype(jnp.float32)   # NHWC
    N, H, W, Cin = x.shape
    Cout = w1.shape[-1]

    # TODO(synk): the zero-pad + NCHW<->NHWC conversion still run in XLA and the
    # kernel is gridless/whole-array; production-size UNet feature maps need a
    # (batch, row-tile) grid with halo BlockSpecs, a two-pass BatchNorm
    # reduction, and bf16 MXU operands (v6e/v7x) to fit v7x's 64 MiB VMEM.
    x_pad = jnp.pad(x, ((0, 0), (1, 1), (1, 1), (0, 0)))

    # im2col weights: flatten (kh, kw, cin) row-major -> contraction depth 9*Cin.
    w1r = w1.reshape(9 * Cin, Cout).astype(jnp.float32)
    w2r = w2.reshape(9 * Cout, Cout).astype(jnp.float32)

    vmem = pl.BlockSpec(memory_space=pltpu.MemorySpace.VMEM)
    out = pl.pallas_call(
        double_conv_kernel,
        out_shape=jax.ShapeDtypeStruct((N, H, W * Cout), jnp.float32),
        in_specs=[vmem] * 7,
        out_specs=vmem,
        scratch_shapes=[pltpu.VMEM((N, H + 2, W + 2, Cout), jnp.float32)],
    )(x_pad, w1r,
      g1.reshape(1, Cout).astype(jnp.float32), b1.reshape(1, Cout).astype(jnp.float32),
      w2r,
      g2.reshape(1, Cout).astype(jnp.float32), b2.reshape(1, Cout).astype(jnp.float32))
    return jnp.transpose(out.reshape(N, H, W, Cout), (0, 3, 1, 2))   # back to NCHW


def reference(x_nchw, w1, g1, b1, w2, g2, b2):
    """Pure-JAX reference matching PyTorch train-mode DoubleConv."""
    x = jnp.transpose(x_nchw, (0, 2, 3, 1))

    def block(x, w, g, b):
        y = lax.conv_general_dilated(
            x, w, window_strides=(1, 1), padding="SAME",
            dimension_numbers=("NHWC", "HWIO", "NHWC"),
            precision=lax.Precision.HIGHEST)
        m = y.mean(axis=(0, 1, 2))
        v = ((y - m) ** 2).mean(axis=(0, 1, 2))
        y = (y - m) / jnp.sqrt(v + EPS) * g + b
        return jnp.maximum(y, 0.0)

    y = block(block(x, w1, g1, b1), w2, g2, b2)
    return jnp.transpose(y, (0, 3, 1, 2))


if __name__ == "__main__":
    N, Cin, H, W, Cout = 2, 4, 16, 16, 8
    key = jax.random.PRNGKey(0)
    ks = jax.random.split(key, 7)

    x = jax.random.normal(ks[0], (N, Cin, H, W), jnp.float32)
    # Deterministic synthetic parameters (no checkpoint load).
    w1 = 0.1 * jax.random.normal(ks[1], (3, 3, Cin, Cout), jnp.float32)   # HWIO
    g1 = 1.0 + 0.1 * jax.random.normal(ks[2], (Cout,), jnp.float32)
    b1 = 0.1 * jax.random.normal(ks[3], (Cout,), jnp.float32)
    w2 = 0.1 * jax.random.normal(ks[4], (3, 3, Cout, Cout), jnp.float32)  # HWIO
    g2 = 1.0 + 0.1 * jax.random.normal(ks[5], (Cout,), jnp.float32)
    b2 = 0.1 * jax.random.normal(ks[6], (Cout,), jnp.float32)

    y = double_conv(x, w1, g1, b1, w2, g2, b2)
    jax.block_until_ready(y)

    y_ref = reference(x, w1, g1, b1, w2, g2, b2)
    assert y.shape == (N, Cout, H, W)
    err = float(jnp.max(jnp.abs(y - y_ref)))
    assert jnp.allclose(y, y_ref, atol=1e-3, rtol=1e-3), err
    print("KERNEL_OK")
</pallas_src>

<mosaic_0001>
module attributes {stable_mosaic.version = 11 : i64} {
  func.func @double_conv_kernel(%arg0: memref<2x18x18x4xf32, #tpu.memory_space<vmem>>, %arg1: memref<36x8xf32, #tpu.memory_space<vmem>>, %arg2: memref<1x8xf32, #tpu.memory_space<vmem>>, %arg3: memref<1x8xf32, #tpu.memory_space<vmem>>, %arg4: memref<72x8xf32, #tpu.memory_space<vmem>>, %arg5: memref<1x8xf32, #tpu.memory_space<vmem>>, %arg6: memref<1x8xf32, #tpu.memory_space<vmem>>, %arg7: memref<2x16x128xf32, #tpu.memory_space<vmem>>, %arg8: memref<2x18x18x8xf32, #tpu.memory_space<vmem>>) attributes {dimension_semantics = [], scalar_prefetch = 0 : i64, scratch_operands = 1 : i64, tpu.core_type = #tpu.core_type<tc>} {
    %c0 = arith.constant 0 : index
    %c0_0 = arith.constant 0 : index
    %c0_1 = arith.constant 0 : index
    %c0_2 = arith.constant 0 : index
    %0 = vector.load %arg0[%c0, %c0_0, %c0_1, %c0_2] : memref<2x18x18x4xf32, #tpu.memory_space<vmem>>, vector<2x16x16x4xf32>
    %c0_3 = arith.constant 0 : index
    %c0_4 = arith.constant 0 : index
    %c1 = arith.constant 1 : index
    %c0_5 = arith.constant 0 : index
    %1 = vector.load %arg0[%c0_3, %c0_4, %c1, %c0_5] : memref<2x18x18x4xf32, #tpu.memory_space<vmem>>, vector<2x16x16x4xf32>
    %c0_6 = arith.constant 0 : index
    %c0_7 = arith.constant 0 : index
    %c2 = arith.constant 2 : index
    %c0_8 = arith.constant 0 : index
    %2 = vector.load %arg0[%c0_6, %c0_7, %c2, %c0_8] : memref<2x18x18x4xf32, #tpu.memory_space<vmem>>, vector<2x16x16x4xf32>
    %c0_9 = arith.constant 0 : index
    %c1_10 = arith.constant 1 : index
    %c0_11 = arith.constant 0 : index
    %c0_12 = arith.constant 0 : index
    %3 = vector.load %arg0[%c0_9, %c1_10, %c0_11, %c0_12] : memref<2x18x18x4xf32, #tpu.memory_space<vmem>>, vector<2x16x16x4xf32>
    %c0_13 = arith.constant 0 : index
    %c1_14 = arith.constant 1 : index
    %c1_15 = arith.constant 1 : index
    %c0_16 = arith.constant 0 : index
    %4 = vector.load %arg0[%c0_13, %c1_14, %c1_15, %c0_16] : memref<2x18x18x4xf32, #tpu.memory_space<vmem>>, vector<2x16x16x4xf32>
    %c0_17 = arith.constant 0 : index
    %c1_18 = arith.constant 1 : index
    %c2_19 = arith.constant 2 : index
    %c0_20 = arith.constant 0 : index
    %5 = vector.load %arg0[%c0_17, %c1_18, %c2_19, %c0_20] : memref<2x18x18x4xf32, #tpu.memory_space<vmem>>, vector<2x16x16x4xf32>
    %c0_21 = arith.constant 0 : index
    %c2_22 = arith.constant 2 : index
    %c0_23 = arith.constant 0 : index
    %c0_24 = arith.constant 0 : index
    %6 = vector.load %arg0[%c0_21, %c2_22, %c0_23, %c0_24] : memref<2x18x18x4xf32, #tpu.memory_space<vmem>>, vector<2x16x16x4xf32>
    %c0_25 = arith.constant 0 : index
    %c2_26 = arith.constant 2 : index
    %c1_27 = arith.constant 1 : index
    %c0_28 = arith.constant 0 : index
    %7 = vector.load %arg0[%c0_25, %c2_26, %c1_27, %c0_28] : memref<2x18x18x4xf32, #tpu.memory_space<vmem>>, vector<2x16x16x4xf32>
    %c0_29 = arith.constant 0 : index
    %c2_30 = arith.constant 2 : index
    %c2_31 = arith.constant 2 : index
    %c0_32 = arith.constant 0 : index
    %8 = vector.load %arg0[%c0_29, %c2_30, %c2_31, %c0_32] : memref<2x18x18x4xf32, #tpu.memory_space<vmem>>, vector<2x16x16x4xf32>
    %9 = tpu.concatenate %0, %1, %2, %3, %4, %5, %6, %7, %8 in 3 : vector<2x16x16x4xf32>, vector<2x16x16x4xf32>, vector<2x16x16x4xf32>, vector<2x16x16x4xf32>, vector<2x16x16x4xf32>, vector<2x16x16x4xf32>, vector<2x16x16x4xf32>, vector<2x16x16x4xf32>, vector<2x16x16x4xf32> -> vector<2x16x16x36xf32>
    %c0_33 = arith.constant 0 : index
    %c0_34 = arith.constant 0 : index
    %10 = vector.load %arg1[%c0_33, %c0_34] : memref<36x8xf32, #tpu.memory_space<vmem>>, vector<36x8xf32>
    %cst = arith.constant dense<0.000000e+00> : vector<2x16x16x8xf32>
    %11 = tpu.matmul %9, %10, %cst {dimension_numbers = #tpu.dot_dimension_numbers<[3], [0], [0, 1, 2], [1], [0, 0, 0, 1, 0, 2, 1, 1], [], []>} : vector<2x16x16x36xf32>, vector<36x8xf32>, vector<2x16x16x8xf32> -> vector<2x16x16x8xf32>
    %c0_35 = arith.constant 0 : index
    %c0_36 = arith.constant 0 : index
    %12 = vector.load %arg2[%c0_35, %c0_36] : memref<1x8xf32, #tpu.memory_space<vmem>>, vector<1x8xf32>
    %c0_37 = arith.constant 0 : index
    %c0_38 = arith.constant 0 : index
    %13 = vector.load %arg3[%c0_37, %c0_38] : memref<1x8xf32, #tpu.memory_space<vmem>>, vector<1x8xf32>
    %cst_39 = arith.constant dense<0.000000e+00> : vector<8xf32>
    %14 = vector.multi_reduction <add>, %11, %cst_39 [0, 1, 2] : vector<2x16x16x8xf32> to vector<8xf32>
    %15 = vector.shape_cast %14 : vector<8xf32> to vector<1x1x1x8xf32>
    %16 = arith.mulf %11, %11 : vector<2x16x16x8xf32>
    %cst_40 = arith.constant dense<0.000000e+00> : vector<8xf32>
    %17 = vector.multi_reduction <add>, %16, %cst_40 [0, 1, 2] : vector<2x16x16x8xf32> to vector<8xf32>
    %18 = vector.shape_cast %17 : vector<8xf32> to vector<1x1x1x8xf32>
    %cst_41 = arith.constant 5.120000e+02 : f32
    %19 = vector.broadcast %cst_41 : f32 to vector<1x1x1x8xf32>
    %20 = arith.divf %15, %19 : vector<1x1x1x8xf32>
    %cst_42 = arith.constant 5.120000e+02 : f32
    %21 = vector.broadcast %cst_42 : f32 to vector<1x1x1x8xf32>
    %22 = arith.divf %18, %21 : vector<1x1x1x8xf32>
    %23 = arith.mulf %20, %20 : vector<1x1x1x8xf32>
    %24 = arith.subf %22, %23 : vector<1x1x1x8xf32>
    %25 = vector.broadcast %20 : vector<1x1x1x8xf32> to vector<2x16x16x8xf32>
    %26 = arith.subf %11, %25 : vector<2x16x16x8xf32>
    %cst_43 = arith.constant 9.99999974E-6 : f32
    %27 = vector.broadcast %cst_43 : f32 to vector<1x1x1x8xf32>
    %28 = arith.addf %24, %27 : vector<1x1x1x8xf32>
    %29 = math.rsqrt %28 : vector<1x1x1x8xf32>
    %30 = vector.broadcast %29 : vector<1x1x1x8xf32> to vector<2x16x16x8xf32>
    %31 = arith.mulf %26, %30 : vector<2x16x16x8xf32>
    %32 = vector.shape_cast %12 : vector<1x8xf32> to vector<1x1x1x8xf32>
    %33 = vector.broadcast %32 : vector<1x1x1x8xf32> to vector<2x16x16x8xf32>
    %34 = arith.mulf %31, %33 : vector<2x16x16x8xf32>
    %35 = vector.shape_cast %13 : vector<1x8xf32> to vector<1x1x1x8xf32>
    %36 = vector.broadcast %35 : vector<1x1x1x8xf32> to vector<2x16x16x8xf32>
    %37 = arith.addf %34, %36 : vector<2x16x16x8xf32>
    %cst_44 = arith.constant 0.000000e+00 : f32
    %38 = vector.broadcast %cst_44 : f32 to vector<2x16x16x8xf32>
    %39 = arith.maximumf %37, %38 : vector<2x16x16x8xf32>
    %cst_45 = arith.constant 0.000000e+00 : f32
    %40 = vector.broadcast %cst_45 : f32 to vector<2x1x18x8xf32>
    %c0_46 = arith.constant 0 : index
    %c0_47 = arith.constant 0 : index
    %c0_48 = arith.constant 0 : index
    %c0_49 = arith.constant 0 : index
    %41 = vector.load %arg8[%c0_46, %c0_47, %c0_48, %c0_49] : memref<2x18x18x8xf32, #tpu.memory_space<vmem>>, vector<2x1x18x8xf32>
    tpu.vector_store %arg8[%c0_46, %c0_47, %c0_48, %c0_49], %40 {strides = array<i32>} : memref<2x18x18x8xf32, #tpu.memory_space<vmem>>, vector<2x1x18x8xf32>,
    %cst_50 = arith.constant 0.000000e+00 : f32
    %42 = vector.broadcast %cst_50 : f32 to vector<2x1x18x8xf32>
    %c0_51 = arith.constant 0 : index
    %c17 = arith.constant 17 : index
    %c0_52 = arith.constant 0 : index
    %c0_53 = arith.constant 0 : index
    %43 = vector.load %arg8[%c0_51, %c17, %c0_52, %c0_53] : memref<2x18x18x8xf32, #tpu.memory_space<vmem>>, vector<2x1x18x8xf32>
    tpu.vector_store %arg8[%c0_51, %c17, %c0_52, %c0_53], %42 {strides = array<i32>} : memref<2x18x18x8xf32, #tpu.memory_space<vmem>>, vector<2x1x18x8xf32>,
    %cst_54 = arith.constant 0.000000e+00 : f32
    %44 = vector.broadcast %cst_54 : f32 to vector<2x16x1x8xf32>
    %c0_55 = arith.constant 0 : index
    %c1_56 = arith.constant 1 : index
    %c0_57 = arith.constant 0 : index
    %c0_58 = arith.constant 0 : index
    %45 = vector.load %arg8[%c0_55, %c1_56, %c0_57, %c0_58] : memref<2x18x18x8xf32, #tpu.memory_space<vmem>>, vector<2x16x1x8xf32>
    tpu.vector_store %arg8[%c0_55, %c1_56, %c0_57, %c0_58], %44 {strides = array<i32>} : memref<2x18x18x8xf32, #tpu.memory_space<vmem>>, vector<2x16x1x8xf32>,
    %cst_59 = arith.constant 0.000000e+00 : f32
    %46 = vector.broadcast %cst_59 : f32 to vector<2x16x1x8xf32>
    %c0_60 = arith.constant 0 : index
    %c1_61 = arith.constant 1 : index
    %c17_62 = arith.constant 17 : index
    %c0_63 = arith.constant 0 : index
    %47 = vector.load %arg8[%c0_60, %c1_61, %c17_62, %c0_63] : memref<2x18x18x8xf32, #tpu.memory_space<vmem>>, vector<2x16x1x8xf32>
    tpu.vector_store %arg8[%c0_60, %c1_61, %c17_62, %c0_63], %46 {strides = array<i32>} : memref<2x18x18x8xf32, #tpu.memory_space<vmem>>, vector<2x16x1x8xf32>,
    %c0_64 = arith.constant 0 : index
    %c1_65 = arith.constant 1 : index
    %c1_66 = arith.constant 1 : index
    %c0_67 = arith.constant 0 : index
    %48 = vector.load %arg8[%c0_64, %c1_65, %c1_66, %c0_67] : memref<2x18x18x8xf32, #tpu.memory_space<vmem>>, vector<2x16x16x8xf32>
    tpu.vector_store %arg8[%c0_64, %c1_65, %c1_66, %c0_67], %39 {strides = array<i32>} : memref<2x18x18x8xf32, #tpu.memory_space<vmem>>, vector<2x16x16x8xf32>,
    %c0_68 = arith.constant 0 : index
    %c0_69 = arith.constant 0 : index
    %c0_70 = arith.constant 0 : index
    %c0_71 = arith.constant 0 : index
    %49 = vector.load %arg8[%c0_68, %c0_69, %c0_70, %c0_71] : memref<2x18x18x8xf32, #tpu.memory_space<vmem>>, vector<2x16x16x8xf32>
    %c0_72 = arith.constant 0 : index
    %c0_73 = arith.constant 0 : index
    %c1_74 = arith.constant 1 : index
    %c0_75 = arith.constant 0 : index
    %50 = vector.load %arg8[%c0_72, %c0_73, %c1_74, %c0_75] : memref<2x18x18x8xf32, #tpu.memory_space<vmem>>, vector<2x16x16x8xf32>
    %c0_76 = arith.constant 0 : index
    %c0_77 = arith.constant 0 : index
    %c2_78 = arith.constant 2 : index
    %c0_79 = arith.constant 0 : index
    %51 = vector.load %arg8[%c0_76, %c0_77, %c2_78, %c0_79] : memref<2x18x18x8xf32, #tpu.memory_space<vmem>>, vector<2x16x16x8xf32>
    %c0_80 = arith.constant 0 : index
    %c1_81 = arith.constant 1 : index
    %c0_82 = arith.constant 0 : index
    %c0_83 = arith.constant 0 : index
    %52 = vector.load %arg8[%c0_80, %c1_81, %c0_82, %c0_83] : memref<2x18x18x8xf32, #tpu.memory_space<vmem>>, vector<2x16x16x8xf32>
    %c0_84 = arith.constant 0 : index
    %c1_85 = arith.constant 1 : index
    %c1_86 = arith.constant 1 : index
    %c0_87 = arith.constant 0 : index
    %53 = vector.load %arg8[%c0_84, %c1_85, %c1_86, %c0_87] : memref<2x18x18x8xf32, #tpu.memory_space<vmem>>, vector<2x16x16x8xf32>
    %c0_88 = arith.constant 0 : index
    %c1_89 = arith.constant 1 : index
    %c2_90 = arith.constant 2 : index
    %c0_91 = arith.constant 0 : index
    %54 = vector.load %arg8[%c0_88, %c1_89, %c2_90, %c0_91] : memref<2x18x18x8xf32, #tpu.memory_space<vmem>>, vector<2x16x16x8xf32>
    %c0_92 = arith.constant 0 : index
    %c2_93 = arith.constant 2 : index
    %c0_94 = arith.constant 0 : index
    %c0_95 = arith.constant 0 : index
    %55 = vector.load %arg8[%c0_92, %c2_93, %c0_94, %c0_95] : memref<2x18x18x8xf32, #tpu.memory_space<vmem>>, vector<2x16x16x8xf32>
    %c0_96 = arith.constant 0 : index
    %c2_97 = arith.constant 2 : index
    %c1_98 = arith.constant 1 : index
    %c0_99 = arith.constant 0 : index
    %56 = vector.load %arg8[%c0_96, %c2_97, %c1_98, %c0_99] : memref<2x18x18x8xf32, #tpu.memory_space<vmem>>, vector<2x16x16x8xf32>
    %c0_100 = arith.constant 0 : index
    %c2_101 = arith.constant 2 : index
    %c2_102 = arith.constant 2 : index
    %c0_103 = arith.constant 0 : index
    %57 = vector.load %arg8[%c0_100, %c2_101, %c2_102, %c0_103] : memref<2x18x18x8xf32, #tpu.memory_space<vmem>>, vector<2x16x16x8xf32>
    %58 = tpu.concatenate %49, %50, %51, %52, %53, %54, %55, %56, %57 in 3 : vector<2x16x16x8xf32>, vector<2x16x16x8xf32>, vector<2x16x16x8xf32>, vector<2x16x16x8xf32>, vector<2x16x16x8xf32>, vector<2x16x16x8xf32>, vector<2x16x16x8xf32>, vector<2x16x16x8xf32>, vector<2x16x16x8xf32> -> vector<2x16x16x72xf32>
    %c0_104 = arith.constant 0 : index
    %c0_105 = arith.constant 0 : index
    %59 = vector.load %arg4[%c0_104, %c0_105] : memref<72x8xf32, #tpu.memory_space<vmem>>, vector<72x8xf32>
    %cst_106 = arith.constant dense<0.000000e+00> : vector<2x16x16x8xf32>
    %60 = tpu.matmul %58, %59, %cst_106 {dimension_numbers = #tpu.dot_dimension_numbers<[3], [0], [0, 1, 2], [1], [0, 0, 0, 1, 0, 2, 1, 1], [], []>} : vector<2x16x16x72xf32>, vector<72x8xf32>, vector<2x16x16x8xf32> -> vector<2x16x16x8xf32>
    %c0_107 = arith.constant 0 : index
    %c0_108 = arith.constant 0 : index
    %61 = vector.load %arg5[%c0_107, %c0_108] : memref<1x8xf32, #tpu.memory_space<vmem>>, vector<1x8xf32>
    %c0_109 = arith.constant 0 : index
    %c0_110 = arith.constant 0 : index
    %62 = vector.load %arg6[%c0_109, %c0_110] : memref<1x8xf32, #tpu.memory_space<vmem>>, vector<1x8xf32>
    %cst_111 = arith.constant dense<0.000000e+00> : vector<8xf32>
    %63 = vector.multi_reduction <add>, %60, %cst_111 [0, 1, 2] : vector<2x16x16x8xf32> to vector<8xf32>
    %64 = vector.shape_cast %63 : vector<8xf32> to vector<1x1x1x8xf32>
    %65 = arith.mulf %60, %60 : vector<2x16x16x8xf32>
    %cst_112 = arith.constant dense<0.000000e+00> : vector<8xf32>
    %66 = vector.multi_reduction <add>, %65, %cst_112 [0, 1, 2] : vector<2x16x16x8xf32> to vector<8xf32>
    %67 = vector.shape_cast %66 : vector<8xf32> to vector<1x1x1x8xf32>
    %cst_113 = arith.constant 5.120000e+02 : f32
    %68 = vector.broadcast %cst_113 : f32 to vector<1x1x1x8xf32>
    %69 = arith.divf %64, %68 : vector<1x1x1x8xf32>
    %cst_114 = arith.constant 5.120000e+02 : f32
    %70 = vector.broadcast %cst_114 : f32 to vector<1x1x1x8xf32>
    %71 = arith.divf %67, %70 : vector<1x1x1x8xf32>
    %72 = arith.mulf %69, %69 : vector<1x1x1x8xf32>
    %73 = arith.subf %71, %72 : vector<1x1x1x8xf32>
    %74 = vector.broadcast %69 : vector<1x1x1x8xf32> to vector<2x16x16x8xf32>
    %75 = arith.subf %60, %74 : vector<2x16x16x8xf32>
    %cst_115 = arith.constant 9.99999974E-6 : f32
    %76 = vector.broadcast %cst_115 : f32 to vector<1x1x1x8xf32>
    %77 = arith.addf %73, %76 : vector<1x1x1x8xf32>
    %78 = math.rsqrt %77 : vector<1x1x1x8xf32>
    %79 = vector.broadcast %78 : vector<1x1x1x8xf32> to vector<2x16x16x8xf32>
    %80 = arith.mulf %75, %79 : vector<2x16x16x8xf32>
    %81 = vector.shape_cast %61 : vector<1x8xf32> to vector<1x1x1x8xf32>
    %82 = vector.broadcast %81 : vector<1x1x1x8xf32> to vector<2x16x16x8xf32>
    %83 = arith.mulf %80, %82 : vector<2x16x16x8xf32>
    %84 = vector.shape_cast %62 : vector<1x8xf32> to vector<1x1x1x8xf32>
    %85 = vector.broadcast %84 : vector<1x1x1x8xf32> to vector<2x16x16x8xf32>
    %86 = arith.addf %83, %85 : vector<2x16x16x8xf32>
    %cst_116 = arith.constant 0.000000e+00 : f32
    %87 = vector.broadcast %cst_116 : f32 to vector<2x16x16x8xf32>
    %88 = arith.maximumf %86, %87 : vector<2x16x16x8xf32>
    %89 = vector.extract_strided_slice %88 {offsets = [0, 0, 0, 0], sizes = [2, 16, 1, 8], strides = [1, 1, 1, 1]} : vector<2x16x16x8xf32> to vector<2x16x1x8xf32>
    %90 = vector.shape_cast %89 : vector<2x16x1x8xf32> to vector<2x16x8xf32>
    %91 = vector.extract_strided_slice %88 {offsets = [0, 0, 1, 0], sizes = [2, 16, 1, 8], strides = [1, 1, 1, 1]} : vector<2x16x16x8xf32> to vector<2x16x1x8xf32>
    %92 = vector.shape_cast %91 : vector<2x16x1x8xf32> to vector<2x16x8xf32>
    %93 = vector.extract_strided_slice %88 {offsets = [0, 0, 2, 0], sizes = [2, 16, 1, 8], strides = [1, 1, 1, 1]} : vector<2x16x16x8xf32> to vector<2x16x1x8xf32>
    %94 = vector.shape_cast %93 : vector<2x16x1x8xf32> to vector<2x16x8xf32>
    %95 = vector.extract_strided_slice %88 {offsets = [0, 0, 3, 0], sizes = [2, 16, 1, 8], strides = [1, 1, 1, 1]} : vector<2x16x16x8xf32> to vector<2x16x1x8xf32>
    %96 = vector.shape_cast %95 : vector<2x16x1x8xf32> to vector<2x16x8xf32>
    %97 = vector.extract_strided_slice %88 {offsets = [0, 0, 4, 0], sizes = [2, 16, 1, 8], strides = [1, 1, 1, 1]} : vector<2x16x16x8xf32> to vector<2x16x1x8xf32>
    %98 = vector.shape_cast %97 : vector<2x16x1x8xf32> to vector<2x16x8xf32>
    %99 = vector.extract_strided_slice %88 {offsets = [0, 0, 5, 0], sizes = [2, 16, 1, 8], strides = [1, 1, 1, 1]} : vector<2x16x16x8xf32> to vector<2x16x1x8xf32>
    %100 = vector.shape_cast %99 : vector<2x16x1x8xf32> to vector<2x16x8xf32>
    %101 = vector.extract_strided_slice %88 {offsets = [0, 0, 6, 0], sizes = [2, 16, 1, 8], strides = [1, 1, 1, 1]} : vector<2x16x16x8xf32> to vector<2x16x1x8xf32>
    %102 = vector.shape_cast %101 : vector<2x16x1x8xf32> to vector<2x16x8xf32>
    %103 = vector.extract_strided_slice %88 {offsets = [0, 0, 7, 0], sizes = [2, 16, 1, 8], strides = [1, 1, 1, 1]} : vector<2x16x16x8xf32> to vector<2x16x1x8xf32>
    %104 = vector.shape_cast %103 : vector<2x16x1x8xf32> to vector<2x16x8xf32>
    %105 = vector.extract_strided_slice %88 {offsets = [0, 0, 8, 0], sizes = [2, 16, 1, 8], strides = [1, 1, 1, 1]} : vector<2x16x16x8xf32> to vector<2x16x1x8xf32>
    %106 = vector.shape_cast %105 : vector<2x16x1x8xf32> to vector<2x16x8xf32>
    %107 = vector.extract_strided_slice %88 {offsets = [0, 0, 9, 0], sizes = [2, 16, 1, 8], strides = [1, 1, 1, 1]} : vector<2x16x16x8xf32> to vector<2x16x1x8xf32>
    %108 = vector.shape_cast %107 : vector<2x16x1x8xf32> to vector<2x16x8xf32>
    %109 = vector.extract_strided_slice %88 {offsets = [0, 0, 10, 0], sizes = [2, 16, 1, 8], strides = [1, 1, 1, 1]} : vector<2x16x16x8xf32> to vector<2x16x1x8xf32>
    %110 = vector.shape_cast %109 : vector<2x16x1x8xf32> to vector<2x16x8xf32>
    %111 = vector.extract_strided_slice %88 {offsets = [0, 0, 11, 0], sizes = [2, 16, 1, 8], strides = [1, 1, 1, 1]} : vector<2x16x16x8xf32> to vector<2x16x1x8xf32>
    %112 = vector.shape_cast %111 : vector<2x16x1x8xf32> to vector<2x16x8xf32>
    %113 = vector.extract_strided_slice %88 {offsets = [0, 0, 12, 0], sizes = [2, 16, 1, 8], strides = [1, 1, 1, 1]} : vector<2x16x16x8xf32> to vector<2x16x1x8xf32>
    %114 = vector.shape_cast %113 : vector<2x16x1x8xf32> to vector<2x16x8xf32>
    %115 = vector.extract_strided_slice %88 {offsets = [0, 0, 13, 0], sizes = [2, 16, 1, 8], strides = [1, 1, 1, 1]} : vector<2x16x16x8xf32> to vector<2x16x1x8xf32>
    %116 = vector.shape_cast %115 : vector<2x16x1x8xf32> to vector<2x16x8xf32>
    %117 = vector.extract_strided_slice %88 {offsets = [0, 0, 14, 0], sizes = [2, 16, 1, 8], strides = [1, 1, 1, 1]} : vector<2x16x16x8xf32> to vector<2x16x1x8xf32>
    %118 = vector.shape_cast %117 : vector<2x16x1x8xf32> to vector<2x16x8xf32>
    %119 = vector.extract_strided_slice %88 {offsets = [0, 0, 15, 0], sizes = [2, 16, 1, 8], strides = [1, 1, 1, 1]} : vector<2x16x16x8xf32> to vector<2x16x1x8xf32>
    %120 = vector.shape_cast %119 : vector<2x16x1x8xf32> to vector<2x16x8xf32>
    %121 = tpu.concatenate %90, %92, %94, %96, %98, %100, %102, %104, %106, %108, %110, %112, %114, %116, %118, %120 in 2 : vector<2x16x8xf32>, vector<2x16x8xf32>, vector<2x16x8xf32>, vector<2x16x8xf32>, vector<2x16x8xf32>, vector<2x16x8xf32>, vector<2x16x8xf32>, vector<2x16x8xf32>, vector<2x16x8xf32>, vector<2x16x8xf32>, vector<2x16x8xf32>, vector<2x16x8xf32>, vector<2x16x8xf32>, vector<2x16x8xf32>, vector<2x16x8xf32>, vector<2x16x8xf32> -> vector<2x16x128xf32>
    %c0_117 = arith.constant 0 : index
    %c0_118 = arith.constant 0 : index
    %c0_119 = arith.constant 0 : index
    %122 = vector.load %arg7[%c0_117, %c0_118, %c0_119] : memref<2x16x128xf32, #tpu.memory_space<vmem>>, vector<2x16x128xf32>
    tpu.vector_store %arg7[%c0_117, %c0_118, %c0_119], %121 {strides = array<i32>} : memref<2x16x128xf32, #tpu.memory_space<vmem>>, vector<2x16x128xf32>,
    return
  }
}

</mosaic_0001>

<llo_original>
// kernel: tpu_custom_call.1
$region0: #{tpu_custom_call.1}
  #allocation0 [shape = 'u32[]', space=smem, size = 0x4, offset = 0x4, fixed_abs, tag = 'smem constant byte address 0x4 - core index']
  #allocation1 [shape = 'u32[72,128]{1,0:T(1,128)}', space=vmem, size = 0x9000, scoped, tag = 'internal scratch']
  #allocation2 [shape = 'f32[2,18,18,8]{3,2,1,0:T(8,128)}', space=vmem, size = 0x6c000, scoped, tag = 'scratch operand']
  %s0 = inlined_call_operand.vmem [shape: f32[2,18,18,4], index: 0, kind: input, shape index: {}]
  %s1 = inlined_call_operand.vmem [shape: f32[36,8], index: 1, kind: input, shape index: {}]
  %s2 = inlined_call_operand.vmem [shape: f32[1,8], index: 2, kind: input, shape index: {}]
  %s3 = inlined_call_operand.vmem [shape: f32[1,8], index: 3, kind: input, shape index: {}]
  %s4 = inlined_call_operand.vmem [shape: f32[72,8], index: 4, kind: input, shape index: {}]
  %s5 = inlined_call_operand.vmem [shape: f32[1,8], index: 5, kind: input, shape index: {}]
  %s6 = inlined_call_operand.vmem [shape: f32[1,8], index: 6, kind: input, shape index: {}]
  %s7 = inlined_call_operand.hbm [shape: f32[2,16,128], index: 7, kind: output, shape index: {}]
  %s8 = sld [smem:[#allocation0]]
  $region38: #{tpu_custom_call.1} parent=0
    _
  %s10 = ssub.s32 1, %s8
  %s11 = scalar_select 0, %s10, %s8
  $region1: #{tpu_custom_call.1} parent=0
    #allocation3 [shape = 'u8[16384]{0}', space=vmem, size = 0x4000, scoped, tag = 'output window, operand 0, single buffered']
    #allocation4 [shape = 's32[1]{0}', space=sflag, size = 0x4, scoped, tag = 'scoped memory for tpu_custom_call.1']
    %12 = vsyncpa [#allocation4], 0
    // Predicated region
    $region2: #{tpu_custom_call.1} parent=1 // pred_check
      _
    $region3: #{tpu_custom_call.1} parent=1 // pred_check_branch
      %14 = sbr.rel (0) target = $region5
    $region4: #{tpu_custom_call.1} parent=1 // pred_region
      _
    $region5: #{tpu_custom_call.1} parent=1 // pred_fallthru
      _
    // Predicated region
    $region6: #{tpu_custom_call.1} parent=1 // pred_check
      _
    $region7: #{tpu_custom_call.1} parent=1 // pred_check_branch
      %16 = sbr.rel (0) target = $region9
    $region8: #{tpu_custom_call.1} parent=1 // pred_region
      _
    $region9: #{tpu_custom_call.1} parent=1 // pred_fallthru
      _
    // Predicated region
    $region10: #{tpu_custom_call.1} parent=1 // pred_check
      _
    $region11: #{tpu_custom_call.1} parent=1 // pred_check_branch
      %18 = sbr.rel (0) target = $region13
    $region12: #{tpu_custom_call.1} parent=1 // pred_region
      _
    $region13: #{tpu_custom_call.1} parent=1 // pred_fallthru
      _
    // Predicated region
    $region14: #{tpu_custom_call.1} parent=1 // pred_check
      _
    $region15: #{tpu_custom_call.1} parent=1 // pred_check_branch
      %20 = sbr.rel (0) target = $region17
    $region16: #{tpu_custom_call.1} parent=1 // pred_region
      _
    $region17: #{tpu_custom_call.1} parent=1 // pred_fallthru
      _
    // Predicated region
    $region18: #{tpu_custom_call.1} parent=1 // pred_check
      _
    $region19: #{tpu_custom_call.1} parent=1 // pred_check_branch
      %22 = sbr.rel (0) target = $region21
    $region20: #{tpu_custom_call.1} parent=1 // pred_region
      _
    $region21: #{tpu_custom_call.1} parent=1 // pred_fallthru
      _
    // Predicated region
    $region22: #{tpu_custom_call.1} parent=1 // pred_check
      _
    $region23: #{tpu_custom_call.1} parent=1 // pred_check_branch
      %24 = sbr.rel (0) target = $region25
    $region24: #{tpu_custom_call.1} parent=1 // pred_region
      _
    $region25: #{tpu_custom_call.1} parent=1 // pred_fallthru
      _
    // Predicated region
    $region26: #{tpu_custom_call.1} parent=1 // pred_check
      _
    $region27: #{tpu_custom_call.1} parent=1 // pred_check_branch
      %26 = sbr.rel (0) target = $region29
    $region28: #{tpu_custom_call.1} parent=1 // pred_region
      _
    $region29: #{tpu_custom_call.1} parent=1 // pred_fallthru
      _
    %v27 = vld [vmem:[%s0] sm:$0xff]
    %v28 = vld [vmem:[%s0 + $0x8] sm:$0xff]
    %v29 = vld [vmem:[%s0 + $0x18] sm:$0xff]
    %v30 = vld [vmem:[%s0 + $0x20] sm:$0xff]
    %v31 = vld [vmem:[%s0 + $0x30] sm:$0xff]
    %v32 = vld [vmem:[%s0 + $0x38] sm:$0xff]
    %v33 = vld [vmem:[%s0 + $0x48] sm:$0xff]
    %v34 = vld [vmem:[%s0 + $0x50] sm:$0xff]
    %v35 = vld [vmem:[%s0 + $0x60] sm:$0xff]
    %v36 = vld [vmem:[%s0 + $0x68] sm:$0xff]
    %v37 = vld [vmem:[%s0 + $0x78] sm:$0xff]
    %v38 = vld [vmem:[%s0 + $0x80] sm:$0xff]
    %v39 = vld [vmem:[%s0 + $0x90] sm:$0xff]
    %v40 = vld [vmem:[%s0 + $0x98] sm:$0xff]
    %v41 = vld [vmem:[%s0 + $0xa8] sm:$0xff]
    %v42 = vld [vmem:[%s0 + $0xb0] sm:$0xff]
    %v43 = vld [vmem:[%s0 + $0xc0] sm:$0xff]
    %v44 = vld [vmem:[%s0 + $0xc8] sm:$0xff]
    %v45 = vld [vmem:[%s0 + $0xd8] sm:$0xff]
    %v46 = vld [vmem:[%s0 + $0xe0] sm:$0xff]
    %v47 = vld [vmem:[%s0 + $0xf0] sm:$0xff]
    %v48 = vld [vmem:[%s0 + $0xf8] sm:$0xff]
    %v49 = vld [vmem:[%s0 + $0x108] sm:$0xff]
    %v50 = vld [vmem:[%s0 + $0x110] sm:$0xff]
    %v51 = vld [vmem:[%s0 + $0x120] sm:$0xff]
    %v52 = vld [vmem:[%s0 + $0x128] sm:$0xff]
    %v53 = vld [vmem:[%s0 + $0x138] sm:$0xff]
    %v54 = vld [vmem:[%s0 + $0x140] sm:$0xff]
    %v55 = vld [vmem:[%s0 + $0x150] sm:$0xff]
    %v56 = vld [vmem:[%s0 + $0x158] sm:$0xff]
    %v57 = vld [vmem:[%s0 + $0x168] sm:$0xff]
    %v58 = vld [vmem:[%s0 + $0x170] sm:$0xff]
    %v59 = vld [vmem:[%s0 + $0x1b0] sm:$0xff]
    %v60 = vld [vmem:[%s0 + $0x1b8] sm:$0xff]
    %v61 = vld [vmem:[%s0 + $0x1c8] sm:$0xff]
    %v62 = vld [vmem:[%s0 + $0x1d0] sm:$0xff]
    %v63 = vld [vmem:[%s0 + $0x1e0] sm:$0xff]
    %v64 = vld [vmem:[%s0 + $0x1e8] sm:$0xff]
    %v65 = vld [vmem:[%s0 + $0x1f8] sm:$0xff]
    %v66 = vld [vmem:[%s0 + $0x200] sm:$0xff]
    %v67 = vld [vmem:[%s0 + $0x210] sm:$0xff]
    %v68 = vld [vmem:[%s0 + $0x218] sm:$0xff]
    %v69 = vld [vmem:[%s0 + $0x228] sm:$0xff]
    %v70 = vld [vmem:[%s0 + $0x230] sm:$0xff]
    %v71 = vld [vmem:[%s0 + $0x240] sm:$0xff]
    %v72 = vld [vmem:[%s0 + $0x248] sm:$0xff]
    %v73 = vld [vmem:[%s0 + $0x258] sm:$0xff]
    %v74 = vld [vmem:[%s0 + $0x260] sm:$0xff]
    %v75 = vld [vmem:[%s0 + $0x270] sm:$0xff]
    %v76 = vld [vmem:[%s0 + $0x278] sm:$0xff]
    %v77 = vld [vmem:[%s0 + $0x288] sm:$0xff]
    %v78 = vld [vmem:[%s0 + $0x290] sm:$0xff]
    %v79 = vld [vmem:[%s0 + $0x2a0] sm:$0xff]
    %v80 = vld [vmem:[%s0 + $0x2a8] sm:$0xff]
    %v81 = vld [vmem:[%s0 + $0x2b8] sm:$0xff]
    %v82 = vld [vmem:[%s0 + $0x2c0] sm:$0xff]
    %v83 = vld [vmem:[%s0 + $0x2d0] sm:$0xff]
    %v84 = vld [vmem:[%s0 + $0x2d8] sm:$0xff]
    %v85 = vld [vmem:[%s0 + $0x2e8] sm:$0xff]
    %v86 = vld [vmem:[%s0 + $0x2f0] sm:$0xff]
    %v87 = vld [vmem:[%s0 + $0x300] sm:$0xff]
    %v88 = vld [vmem:[%s0 + $0x308] sm:$0xff]
    %v89 = vld [vmem:[%s0 + $0x318] sm:$0xff]
    %v90 = vld [vmem:[%s0 + $0x320] sm:$0xff]
    %v91 = vld [vmem:[%s0 + $0x1] sm:$0xff]
    %v92 = vld [vmem:[%s0 + $0x9] sm:$0xff]
    %v93 = vld [vmem:[%s0 + $0x19] sm:$0xff]
    %v94 = vld [vmem:[%s0 + $0x21] sm:$0xff]
    %v95 = vld [vmem:[%s0 + $0x31] sm:$0xff]
    %v96 = vld [vmem:[%s0 + $0x39] sm:$0xff]
    %v97 = vld [vmem:[%s0 + $0x49] sm:$0xff]
    %v98 = vld [vmem:[%s0 + $0x51] sm:$0xff]
    %v99 = vld [vmem:[%s0 + $0x61] sm:$0xff]
    %v100 = vld [vmem:[%s0 + $0x69] sm:$0xff]
    %v101 = vld [vmem:[%s0 + $0x79] sm:$0xff]
    %v102 = vld [vmem:[%s0 + $0x81] sm:$0xff]
    %v103 = vld [vmem:[%s0 + $0x91] sm:$0xff]
    %v104 = vld [vmem:[%s0 + $0x99] sm:$0xff]
    %v105 = vld [vmem:[%s0 + $0xa9] sm:$0xff]
    %v106 = vld [vmem:[%s0 + $0xb1] sm:$0xff]
    %v107 = vld [vmem:[%s0 + $0xc1] sm:$0xff]
    %v108 = vld [vmem:[%s0 + $0xc9] sm:$0xff]
    %v109 = vld [vmem:[%s0 + $0xd9] sm:$0xff]
    %v110 = vld [vmem:[%s0 + $0xe1] sm:$0xff]
    %v111 = vld [vmem:[%s0 + $0xf1] sm:$0xff]
    %v112 = vld [vmem:[%s0 + $0xf9] sm:$0xff]
    %v113 = vld [vmem:[%s0 + $0x109] sm:$0xff]
    %v114 = vld [vmem:[%s0 + $0x111] sm:$0xff]
    %v115 = vld [vmem:[%s0 + $0x121] sm:$0xff]
    %v116 = vld [vmem:[%s0 + $0x129] sm:$0xff]
    %v117 = vld [vmem:[%s0 + $0x139] sm:$0xff]
    %v118 = vld [vmem:[%s0 + $0x141] sm:$0xff]
    %v119 = vld [vmem:[%s0 + $0x151] sm:$0xff]
    %v120 = vld [vmem:[%s0 + $0x159] sm:$0xff]
    %v121 = vld [vmem:[%s0 + $0x169] sm:$0xff]
    %v122 = vld [vmem:[%s0 + $0x171] sm:$0xff]
    %v123 = vld [vmem:[%s0 + $0x1b1] sm:$0xff]
    %v124 = vld [vmem:[%s0 + $0x1b9] sm:$0xff]
    %v125 = vld [vmem:[%s0 + $0x1c9] sm:$0xff]
    %v126 = vld [vmem:[%s0 + $0x1d1] sm:$0xff]
    %v127 = vld [vmem:[%s0 + $0x1e1] sm:$0xff]
    %v128 = vld [vmem:[%s0 + $0x1e9] sm:$0xff]
    %v129 = vld [vmem:[%s0 + $0x1f9] sm:$0xff]
    %v130 = vld [vmem:[%s0 + $0x201] sm:$0xff]
    %v131 = vld [vmem:[%s0 + $0x211] sm:$0xff]
    %v132 = vld [vmem:[%s0 + $0x219] sm:$0xff]
    %v133 = vld [vmem:[%s0 + $0x229] sm:$0xff]
    %v134 = vld [vmem:[%s0 + $0x231] sm:$0xff]
    %v135 = vld [vmem:[%s0 + $0x241] sm:$0xff]
    %v136 = vld [vmem:[%s0 + $0x249] sm:$0xff]
    %v137 = vld [vmem:[%s0 + $0x259] sm:$0xff]
    %v138 = vld [vmem:[%s0 + $0x261] sm:$0xff]
    %v139 = vld [vmem:[%s0 + $0x271] sm:$0xff]
    %v140 = vld [vmem:[%s0 + $0x279] sm:$0xff]
    %v141 = vld [vmem:[%s0 + $0x289] sm:$0xff]
    %v142 = vld [vmem:[%s0 + $0x291] sm:$0xff]
    %v143 = vld [vmem:[%s0 + $0x2a1] sm:$0xff]
    %v144 = vld [vmem:[%s0 + $0x2a9] sm:$0xff]
    %v145 = vld [vmem:[%s0 + $0x2b9] sm:$0xff]
    %v146 = vld [vmem:[%s0 + $0x2c1] sm:$0xff]
    %v147 = vld [vmem:[%s0 + $0x2d1] sm:$0xff]
    %v148 = vld [vmem:[%s0 + $0x2d9] sm:$0xff]
    %v149 = vld [vmem:[%s0 + $0x2e9] sm:$0xff]
    %v150 = vld [vmem:[%s0 + $0x2f1] sm:$0xff]
    %v151 = vld [vmem:[%s0 + $0x301] sm:$0xff]
    %v152 = vld [vmem:[%s0 + $0x309] sm:$0xff]
    %v153 = vld [vmem:[%s0 + $0x319] sm:$0xff]
    %v154 = vld [vmem:[%s0 + $0x321] sm:$0xff]
    %v155 = vld [vmem:[%s0 + $0x2] sm:$0xff]
    %v156 = vld [vmem:[%s0 + $0xa] sm:$0xff]
    %v157 = vld [vmem:[%s0 + $0x1a] sm:$0xff]
    %v158 = vld [vmem:[%s0 + $0x22] sm:$0xff]
    %v159 = vld [vmem:[%s0 + $0x32] sm:$0xff]
    %v160 = vld [vmem:[%s0 + $0x3a] sm:$0xff]
    %v161 = vld [vmem:[%s0 + $0x4a] sm:$0xff]
    %v162 = vld [vmem:[%s0 + $0x52] sm:$0xff]
    %v163 = vld [vmem:[%s0 + $0x62] sm:$0xff]
    %v164 = vld [vmem:[%s0 + $0x6a] sm:$0xff]
    %v165 = vld [vmem:[%s0 + $0x7a] sm:$0xff]
    %v166 = vld [vmem:[%s0 + $0x82] sm:$0xff]
    %v167 = vld [vmem:[%s0 + $0x92] sm:$0xff]
    %v168 = vld [vmem:[%s0 + $0x9a] sm:$0xff]
    %v169 = vld [vmem:[%s0 + $0xaa] sm:$0xff]
    %v170 = vld [vmem:[%s0 + $0xb2] sm:$0xff]
    %v171 = vld [vmem:[%s0 + $0xc2] sm:$0xff]
    %v172 = vld [vmem:[%s0 + $0xca] sm:$0xff]
    %v173 = vld [vmem:[%s0 + $0xda] sm:$0xff]
    %v174 = vld [vmem:[%s0 + $0xe2] sm:$0xff]
    %v175 = vld [vmem:[%s0 + $0xf2] sm:$0xff]
    %v176 = vld [vmem:[%s0 + $0xfa] sm:$0xff]
    %v177 = vld [vmem:[%s0 + $0x10a] sm:$0xff]
    %v178 = vld [vmem:[%s0 + $0x112] sm:$0xff]
    %v179 = vld [vmem:[%s0 + $0x122] sm:$0xff]
    %v180 = vld [vmem:[%s0 + $0x12a] sm:$0xff]
    %v181 = vld [vmem:[%s0 + $0x13a] sm:$0xff]
    %v182 = vld [vmem:[%s0 + $0x142] sm:$0xff]
    %v183 = vld [vmem:[%s0 + $0x152] sm:$0xff]
    %v184 = vld [vmem:[%s0 + $0x15a] sm:$0xff]
    %v185 = vld [vmem:[%s0 + $0x16a] sm:$0xff]
    %v186 = vld [vmem:[%s0 + $0x172] sm:$0xff]
    %v187 = vld [vmem:[%s0 + $0x1b2] sm:$0xff]
    %v188 = vld [vmem:[%s0 + $0x1ba] sm:$0xff]
    %v189 = vld [vmem:[%s0 + $0x1ca] sm:$0xff]
    %v190 = vld [vmem:[%s0 + $0x1d2] sm:$0xff]
    %v191 = vld [vmem:[%s0 + $0x1e2] sm:$0xff]
    %v192 = vld [vmem:[%s0 + $0x1ea] sm:$0xff]
    %v193 = vld [vmem:[%s0 + $0x1fa] sm:$0xff]
    %v194 = vld [vmem:[%s0 + $0x202] sm:$0xff]
    %v195 = vld [vmem:[%s0 + $0x212] sm:$0xff]
    %v196 = vld [vmem:[%s0 + $0x21a] sm:$0xff]
    %v197 = vld [vmem:[%s0 + $0x22a] sm:$0xff]
    %v198 = vld [vmem:[%s0 + $0x232] sm:$0xff]
    %v199 = vld [vmem:[%s0 + $0x242] sm:$0xff]
    %v200 = vld [vmem:[%s0 + $0x24a] sm:$0xff]
    %v201 = vld [vmem:[%s0 + $0x25a] sm:$0xff]
    %v202 = vld [vmem:[%s0 + $0x262] sm:$0xff]
    %v203 = vld [vmem:[%s0 + $0x272] sm:$0xff]
    %v204 = vld [vmem:[%s0 + $0x27a] sm:$0xff]
    %v205 = vld [vmem:[%s0 + $0x28a] sm:$0xff]
    %v206 = vld [vmem:[%s0 + $0x292] sm:$0xff]
    %v207 = vld [vmem:[%s0 + $0x2a2] sm:$0xff]
    %v208 = vld [vmem:[%s0 + $0x2aa] sm:$0xff]
    %v209 = vld [vmem:[%s0 + $0x2ba] sm:$0xff]
    %v210 = vld [vmem:[%s0 + $0x2c2] sm:$0xff]
    %v211 = vld [vmem:[%s0 + $0x2d2] sm:$0xff]
    %v212 = vld [vmem:[%s0 + $0x2da] sm:$0xff]
    %v213 = vld [vmem:[%s0 + $0x2ea] sm:$0xff]
    %v214 = vld [vmem:[%s0 + $0x2f2] sm:$0xff]
    %v215 = vld [vmem:[%s0 + $0x302] sm:$0xff]
    %v216 = vld [vmem:[%s0 + $0x30a] sm:$0xff]
    %v217 = vld [vmem:[%s0 + $0x31a] sm:$0xff]
    %v218 = vld [vmem:[%s0 + $0x322] sm:$0xff]
    %s219 = scalar_lea.vmem %s0, 24
    %v220 = vld [vmem:[%s219] sm:$0xff]
    %v221 = vld [vmem:[%s219 + $0x8] sm:$0xff]
    %v222 = vld [vmem:[%s219 + $0x18] sm:$0xff]
    %v223 = vld [vmem:[%s219 + $0x20] sm:$0xff]
    %v224 = vld [vmem:[%s219 + $0x30] sm:$0xff]
    %v225 = vld [vmem:[%s219 + $0x38] sm:$0xff]
    %v226 = vld [vmem:[%s219 + $0x48] sm:$0xff]
    %v227 = vld [vmem:[%s219 + $0x50] sm:$0xff]
    %v228 = vld [vmem:[%s219 + $0x60] sm:$0xff]
    %v229 = vld [vmem:[%s219 + $0x68] sm:$0xff]
    %v230 = vld [vmem:[%s219 + $0x78] sm:$0xff]
    %v231 = vld [vmem:[%s219 + $0x80] sm:$0xff]
    %v232 = vld [vmem:[%s219 + $0x90] sm:$0xff]
    %v233 = vld [vmem:[%s219 + $0x98] sm:$0xff]
    %v234 = vld [vmem:[%s219 + $0xa8] sm:$0xff]
    %v235 = vld [vmem:[%s219 + $0xb0] sm:$0xff]
    %v236 = vld [vmem:[%s219 + $0xc0] sm:$0xff]
    %v237 = vld [vmem:[%s219 + $0xc8] sm:$0xff]
    %v238 = vld [vmem:[%s219 + $0xd8] sm:$0xff]
    %v239 = vld [vmem:[%s219 + $0xe0] sm:$0xff]
    %v240 = vld [vmem:[%s219 + $0xf0] sm:$0xff]
    %v241 = vld [vmem:[%s219 + $0xf8] sm:$0xff]
    %v242 = vld [vmem:[%s219 + $0x108] sm:$0xff]
    %v243 = vld [vmem:[%s219 + $0x110] sm:$0xff]
    %v244 = vld [vmem:[%s219 + $0x120] sm:$0xff]
    %v245 = vld [vmem:[%s219 + $0x128] sm:$0xff]
    %v246 = vld [vmem:[%s219 + $0x138] sm:$0xff]
    %v247 = vld [vmem:[%s219 + $0x140] sm:$0xff]
    %v248 = vld [vmem:[%s219 + $0x150] sm:$0xff]
    %v249 = vld [vmem:[%s219 + $0x158] sm:$0xff]
    %v250 = vld [vmem:[%s219 + $0x168] sm:$0xff]
    %v251 = vld [vmem:[%s219 + $0x170] sm:$0xff]
    %v252 = vld [vmem:[%s219 + $0x1b0] sm:$0xff]
    %v253 = vld [vmem:[%s219 + $0x1b8] sm:$0xff]
    %v254 = vld [vmem:[%s219 + $0x1c8] sm:$0xff]
    %v255 = vld [vmem:[%s219 + $0x1d0] sm:$0xff]
    %v256 = vld [vmem:[%s219 + $0x1e0] sm:$0xff]
    %v257 = vld [vmem:[%s219 + $0x1e8] sm:$0xff]
    %v258 = vld [vmem:[%s219 + $0x1f8] sm:$0xff]
    %v259 = vld [vmem:[%s219 + $0x200] sm:$0xff]
    %v260 = vld [vmem:[%s219 + $0x210] sm:$0xff]
    %v261 = vld [vmem:[%s219 + $0x218] sm:$0xff]
    %v262 = vld [vmem:[%s219 + $0x228] sm:$0xff]
    %v263 = vld [vmem:[%s219 + $0x230] sm:$0xff]
    %v264 = vld [vmem:[%s219 + $0x240] sm:$0xff]
    %v265 = vld [vmem:[%s219 + $0x248] sm:$0xff]
    %v266 = vld [vmem:[%s219 + $0x258] sm:$0xff]
    %v267 = vld [vmem:[%s219 + $0x260] sm:$0xff]
    %v268 = vld [vmem:[%s219 + $0x270] sm:$0xff]
    %v269 = vld [vmem:[%s219 + $0x278] sm:$0xff]
    %v270 = vld [vmem:[%s219 + $0x288] sm:$0xff]
    %v271 = vld [vmem:[%s219 + $0x290] sm:$0xff]
    %v272 = vld [vmem:[%s219 + $0x2a0] sm:$0xff]
    %v273 = vld [vmem:[%s219 + $0x2a8] sm:$0xff]
    %v274 = vld [vmem:[%s219 + $0x2b8] sm:$0xff]
    %v275 = vld [vmem:[%s219 + $0x2c0] sm:$0xff]
    %v276 = vld [vmem:[%s219 + $0x2d0] sm:$0xff]
    %v277 = vld [vmem:[%s219 + $0x2d8] sm:$0xff]
    %v278 = vld [vmem:[%s219 + $0x2e8] sm:$0xff]
    %v279 = vld [vmem:[%s219 + $0x2f0] sm:$0xff]
    %v280 = vld [vmem:[%s219 + $0x300] sm:$0xff]
    %v281 = vld [vmem:[%s219 + $0x308] sm:$0xff]
    %v282 = vld [vmem:[%s219 + $0x318] sm:$0xff]
    %v283 = vld [vmem:[%s219 + $0x320] sm:$0xff]
    %v284 = vld [vmem:[%s219 + $0x1] sm:$0xff]
    %v285 = vld [vmem:[%s219 + $0x9] sm:$0xff]
    %v286 = vld [vmem:[%s219 + $0x19] sm:$0xff]
    %v287 = vld [vmem:[%s219 + $0x21] sm:$0xff]
    %v288 = vld [vmem:[%s219 + $0x31] sm:$0xff]
    %v289 = vld [vmem:[%s219 + $0x39] sm:$0xff]
    %v290 = vld [vmem:[%s219 + $0x49] sm:$0xff]
    %v291 = vld [vmem:[%s219 + $0x51] sm:$0xff]
    %v292 = vld [vmem:[%s219 + $0x61] sm:$0xff]
    %v293 = vld [vmem:[%s219 + $0x69] sm:$0xff]
    %v294 = vld [vmem:[%s219 + $0x79] sm:$0xff]
    %v295 = vld [vmem:[%s219 + $0x81] sm:$0xff]
    %v296 = vld [vmem:[%s219 + $0x91] sm:$0xff]
    %v297 = vld [vmem:[%s219 + $0x99] sm:$0xff]
    %v298 = vld [vmem:[%s219 + $0xa9] sm:$0xff]
    %v299 = vld [vmem:[%s219 + $0xb1] sm:$0xff]
    %v300 = vld [vmem:[%s219 + $0xc1] sm:$0xff]
    %v301 = vld [vmem:[%s219 + $0xc9] sm:$0xff]
    %v302 = vld [vmem:[%s219 + $0xd9] sm:$0xff]
    %v303 = vld [vmem:[%s219 + $0xe1] sm:$0xff]
    %v304 = vld [vmem:[%s219 + $0xf1] sm:$0xff]
    %v305 = vld [vmem:[%s219 + $0xf9] sm:$0xff]
    %v306 = vld [vmem:[%s219 + $0x109] sm:$0xff]
    %v307 = vld [vmem:[%s219 + $0x111] sm:$0xff]
    %v308 = vld [vmem:[%s219 + $0x121] sm:$0xff]
    %v309 = vld [vmem:[%s219 + $0x129] sm:$0xff]
    %v310 = vld [vmem:[%s219 + $0x139] sm:$0xff]
    %v311 = vld [vmem:[%s219 + $0x141] sm:$0xff]
    %v312 = vld [vmem:[%s219 + $0x151] sm:$0xff]
    %v313 = vld [vmem:[%s219 + $0x159] sm:$0xff]
    %v314 = vld [vmem:[%s219 + $0x169] sm:$0xff]
    %v315 = vld [vmem:[%s219 + $0x171] sm:$0xff]
    %v316 = vld [vmem:[%s219 + $0x1b1] sm:$0xff]
    %v317 = vld [vmem:[%s219 + $0x1b9] sm:$0xff]
    %v318 = vld [vmem:[%s219 + $0x1c9] sm:$0xff]
    %v319 = vld [vmem:[%s219 + $0x1d1] sm:$0xff]
    %v320 = vld [vmem:[%s219 + $0x1e1] sm:$0xff]
    %v321 = vld [vmem:[%s219 + $0x1e9] sm:$0xff]
    %v322 = vld [vmem:[%s219 + $0x1f9] sm:$0xff]
    %v323 = vld [vmem:[%s219 + $0x201] sm:$0xff]
    %v324 = vld [vmem:[%s219 + $0x211] sm:$0xff]
    %v325 = vld [vmem:[%s219 + $0x219] sm:$0xff]
    %v326 = vld [vmem:[%s219 + $0x229] sm:$0xff]
    %v327 = vld [vmem:[%s219 + $0x231] sm:$0xff]
    %v328 = vld [vmem:[%s219 + $0x241] sm:$0xff]
    %v329 = vld [vmem:[%s219 + $0x249] sm:$0xff]
    %v330 = vld [vmem:[%s219 + $0x259] sm:$0xff]
    %v331 = vld [vmem:[%s219 + $0x261] sm:$0xff]
    %v332 = vld [vmem:[%s219 + $0x271] sm:$0xff]
    %v333 = vld [vmem:[%s219 + $0x279] sm:$0xff]
    %v334 = vld [vmem:[%s219 + $0x289] sm:$0xff]
    %v335 = vld [vmem:[%s219 + $0x291] sm:$0xff]
    %v336 = vld [vmem:[%s219 + $0x2a1] sm:$0xff]
    %v337 = vld [vmem:[%s219 + $0x2a9] sm:$0xff]
    %v338 = vld [vmem:[%s219 + $0x2b9] sm:$0xff]
    %v339 = vld [vmem:[%s219 + $0x2c1] sm:$0xff]
    %v340 = vld [vmem:[%s219 + $0x2d1] sm:$0xff]
    %v341 = vld [vmem:[%s219 + $0x2d9] sm:$0xff]
    %v342 = vld [vmem:[%s219 + $0x2e9] sm:$0xff]
    %v343 = vld [vmem:[%s219 + $0x2f1] sm:$0xff]
    %v344 = vld [vmem:[%s219 + $0x301] sm:$0xff]
    %v345 = vld [vmem:[%s219 + $0x309] sm:$0xff]
    %v346 = vld [vmem:[%s219 + $0x319] sm:$0xff]
    %v347 = vld [vmem:[%s219 + $0x321] sm:$0xff]
    %v348 = vld [vmem:[%s219 + $0x2] sm:$0xff]
    %v349 = vld [vmem:[%s219 + $0xa] sm:$0xff]
    %v350 = vld [vmem:[%s219 + $0x1a] sm:$0xff]
    %v351 = vld [vmem:[%s219 + $0x22] sm:$0xff]
    %v352 = vld [vmem:[%s219 + $0x32] sm:$0xff]
    %v353 = vld [vmem:[%s219 + $0x3a] sm:$0xff]
    %v354 = vld [vmem:[%s219 + $0x4a] sm:$0xff]
    %v355 = vld [vmem:[%s219 + $0x52] sm:$0xff]
    %v356 = vld [vmem:[%s219 + $0x62] sm:$0xff]
    %v357 = vld [vmem:[%s219 + $0x6a] sm:$0xff]
    %v358 = vld [vmem:[%s219 + $0x7a] sm:$0xff]
    %v359 = vld [vmem:[%s219 + $0x82] sm:$0xff]
    %v360 = vld [vmem:[%s219 + $0x92] sm:$0xff]
    %v361 = vld [vmem:[%s219 + $0x9a] sm:$0xff]
    %v362 = vld [vmem:[%s219 + $0xaa] sm:$0xff]
    %v363 = vld [vmem:[%s219 + $0xb2] sm:$0xff]
    %v364 = vld [vmem:[%s219 + $0xc2] sm:$0xff]
    %v365 = vld [vmem:[%s219 + $0xca] sm:$0xff]
    %v366 = vld [vmem:[%s219 + $0xda] sm:$0xff]
    %v367 = vld [vmem:[%s219 + $0xe2] sm:$0xff]
    %v368 = vld [vmem:[%s219 + $0xf2] sm:$0xff]
    %v369 = vld [vmem:[%s219 + $0xfa] sm:$0xff]
    %v370 = vld [vmem:[%s219 + $0x10a] sm:$0xff]
    %v371 = vld [vmem:[%s219 + $0x112] sm:$0xff]
    %v372 = vld [vmem:[%s219 + $0x122] sm:$0xff]
    %v373 = vld [vmem:[%s219 + $0x12a] sm:$0xff]
    %v374 = vld [vmem:[%s219 + $0x13a] sm:$0xff]
    %v375 = vld [vmem:[%s219 + $0x142] sm:$0xff]
    %v376 = vld [vmem:[%s219 + $0x152] sm:$0xff]
    %v377 = vld [vmem:[%s219 + $0x15a] sm:$0xff]
    %v378 = vld [vmem:[%s219 + $0x16a] sm:$0xff]
    %v379 = vld [vmem:[%s219 + $0x172] sm:$0xff]
    %v380 = vld [vmem:[%s219 + $0x1b2] sm:$0xff]
    %v381 = vld [vmem:[%s219 + $0x1ba] sm:$0xff]
    %v382 = vld [vmem:[%s219 + $0x1ca] sm:$0xff]
    %v383 = vld [vmem:[%s219 + $0x1d2] sm:$0xff]
    %v384 = vld [vmem:[%s219 + $0x1e2] sm:$0xff]
    %v385 = vld [vmem:[%s219 + $0x1ea] sm:$0xff]
    %v386 = vld [vmem:[%s219 + $0x1fa] sm:$0xff]
    %v387 = vld [vmem:[%s219 + $0x202] sm:$0xff]
    %v388 = vld [vmem:[%s219 + $0x212] sm:$0xff]
    %v389 = vld [vmem:[%s219 + $0x21a] sm:$0xff]
    %v390 = vld [vmem:[%s219 + $0x22a] sm:$0xff]
    %v391 = vld [vmem:[%s219 + $0x232] sm:$0xff]
    %v392 = vld [vmem:[%s219 + $0x242] sm:$0xff]
    %v393 = vld [vmem:[%s219 + $0x24a] sm:$0xff]
    %v394 = vld [vmem:[%s219 + $0x25a] sm:$0xff]
    %v395 = vld [vmem:[%s219 + $0x262] sm:$0xff]
    %v396 = vld [vmem:[%s219 + $0x272] sm:$0xff]
    %v397 = vld [vmem:[%s219 + $0x27a] sm:$0xff]
    %v398 = vld [vmem:[%s219 + $0x28a] sm:$0xff]
    %v399 = vld [vmem:[%s219 + $0x292] sm:$0xff]
    %v400 = vld [vmem:[%s219 + $0x2a2] sm:$0xff]
    %v401 = vld [vmem:[%s219 + $0x2aa] sm:$0xff]
    %v402 = vld [vmem:[%s219 + $0x2ba] sm:$0xff]
    %v403 = vld [vmem:[%s219 + $0x2c2] sm:$0xff]
    %v404 = vld [vmem:[%s219 + $0x2d2] sm:$0xff]
    %v405 = vld [vmem:[%s219 + $0x2da] sm:$0xff]
    %v406 = vld [vmem:[%s219 + $0x2ea] sm:$0xff]
    %v407 = vld [vmem:[%s219 + $0x2f2] sm:$0xff]
    %v408 = vld [vmem:[%s219 + $0x302] sm:$0xff]
    %v409 = vld [vmem:[%s219 + $0x30a] sm:$0xff]
    %v410 = vld [vmem:[%s219 + $0x31a] sm:$0xff]
    %v411 = vld [vmem:[%s219 + $0x322] sm:$0xff]
    %s412 = scalar_lea.vmem %s0, 48
    %v413 = vld [vmem:[%s412] sm:$0xff]
    %v414 = vld [vmem:[%s412 + $0x8] sm:$0xff]
    %v415 = vld [vmem:[%s412 + $0x18] sm:$0xff]
    %v416 = vld [vmem:[%s412 + $0x20] sm:$0xff]
    %v417 = vld [vmem:[%s412 + $0x30] sm:$0xff]
    %v418 = vld [vmem:[%s412 + $0x38] sm:$0xff]
    %v419 = vld [vmem:[%s412 + $0x48] sm:$0xff]
    %v420 = vld [vmem:[%s412 + $0x50] sm:$0xff]
    %v421 = vld [vmem:[%s412 + $0x60] sm:$0xff]
    %v422 = vld [vmem:[%s412 + $0x68] sm:$0xff]
    %v423 = vld [vmem:[%s412 + $0x78] sm:$0xff]
    %v424 = vld [vmem:[%s412 + $0x80] sm:$0xff]
    %v425 = vld [vmem:[%s412 + $0x90] sm:$0xff]
    %v426 = vld [vmem:[%s412 + $0x98] sm:$0xff]
    %v427 = vld [vmem:[%s412 + $0xa8] sm:$0xff]
    %v428 = vld [vmem:[%s412 + $0xb0] sm:$0xff]
    %v429 = vld [vmem:[%s412 + $0xc0] sm:$0xff]
    %v430 = vld [vmem:[%s412 + $0xc8] sm:$0xff]
    %v431 = vld [vmem:[%s412 + $0xd8] sm:$0xff]
    %v432 = vld [vmem:[%s412 + $0xe0] sm:$0xff]
    %v433 = vld [vmem:[%s412 + $0xf0] sm:$0xff]
    %v434 = vld [vmem:[%s412 + $0xf8] sm:$0xff]
    %v435 = vld [vmem:[%s412 + $0x108] sm:$0xff]
    %v436 = vld [vmem:[%s412 + $0x110] sm:$0xff]
    %v437 = vld [vmem:[%s412 + $0x120] sm:$0xff]
    %v438 = vld [vmem:[%s412 + $0x128] sm:$0xff]
    %v439 = vld [vmem:[%s412 + $0x138] sm:$0xff]
    %v440 = vld [vmem:[%s412 + $0x140] sm:$0xff]
    %v441 = vld [vmem:[%s412 + $0x150] sm:$0xff]
    %v442 = vld [vmem:[%s412 + $0x158] sm:$0xff]
    %v443 = vld [vmem:[%s412 + $0x168] sm:$0xff]
    %v444 = vld [vmem:[%s412 + $0x170] sm:$0xff]
    %v445 = vld [vmem:[%s412 + $0x1b0] sm:$0xff]
    %v446 = vld [vmem:[%s412 + $0x1b8] sm:$0xff]
    %v447 = vld [vmem:[%s412 + $0x1c8] sm:$0xff]
    %v448 = vld [vmem:[%s412 + $0x1d0] sm:$0xff]
    %v449 = vld [vmem:[%s412 + $0x1e0] sm:$0xff]
    %v450 = vld [vmem:[%s412 + $0x1e8] sm:$0xff]
    %v451 = vld [vmem:[%s412 + $0x1f8] sm:$0xff]
    %v452 = vld [vmem:[%s412 + $0x200] sm:$0xff]
    %v453 = vld [vmem:[%s412 + $0x210] sm:$0xff]
    %v454 = vld [vmem:[%s412 + $0x218] sm:$0xff]
    %v455 = vld [vmem:[%s412 + $0x228] sm:$0xff]
    %v456 = vld [vmem:[%s412 + $0x230] sm:$0xff]
    %v457 = vld [vmem:[%s412 + $0x240] sm:$0xff]
    %v458 = vld [vmem:[%s412 + $0x248] sm:$0xff]
    %v459 = vld [vmem:[%s412 + $0x258] sm:$0xff]
    %v460 = vld [vmem:[%s412 + $0x260] sm:$0xff]
    %v461 = vld [vmem:[%s412 + $0x270] sm:$0xff]
    %v462 = vld [vmem:[%s412 + $0x278] sm:$0xff]
    %v463 = vld [vmem:[%s412 + $0x288] sm:$0xff]
    %v464 = vld [vmem:[%s412 + $0x290] sm:$0xff]
    %v465 = vld [vmem:[%s412 + $0x2a0] sm:$0xff]
    %v466 = vld [vmem:[%s412 + $0x2a8] sm:$0xff]
    %v467 = vld [vmem:[%s412 + $0x2b8] sm:$0xff]
    %v468 = vld [vmem:[%s412 + $0x2c0] sm:$0xff]
    %v469 = vld [vmem:[%s412 + $0x2d0] sm:$0xff]
    %v470 = vld [vmem:[%s412 + $0x2d8] sm:$0xff]
    %v471 = vld [vmem:[%s412 + $0x2e8] sm:$0xff]
    %v472 = vld [vmem:[%s412 + $0x2f0] sm:$0xff]
    %v473 = vld [vmem:[%s412 + $0x300] sm:$0xff]
    %v474 = vld [vmem:[%s412 + $0x308] sm:$0xff]
    %v475 = vld [vmem:[%s412 + $0x318] sm:$0xff]
    %v476 = vld [vmem:[%s412 + $0x320] sm:$0xff]
    %v477 = vld [vmem:[%s412 + $0x1] sm:$0xff]
    %v478 = vld [vmem:[%s412 + $0x9] sm:$0xff]
    %v479 = vld [vmem:[%s412 + $0x19] sm:$0xff]
    %v480 = vld [vmem:[%s412 + $0x21] sm:$0xff]
    %v481 = vld [vmem:[%s412 + $0x31] sm:$0xff]
    %v482 = vld [vmem:[%s412 + $0x39] sm:$0xff]
    %v483 = vld [vmem:[%s412 + $0x49] sm:$0xff]
    %v484 = vld [vmem:[%s412 + $0x51] sm:$0xff]
    %v485 = vld [vmem:[%s412 + $0x61] sm:$0xff]
    %v486 = vld [vmem:[%s412 + $0x69] sm:$0xff]
    %v487 = vld [vmem:[%s412 + $0x79] sm:$0xff]
    %v488 = vld [vmem:[%s412 + $0x81] sm:$0xff]
    %v489 = vld [vmem:[%s412 + $0x91] sm:$0xff]
    %v490 = vld [vmem:[%s412 + $0x99] sm:$0xff]
    %v491 = vld [vmem:[%s412 + $0xa9] sm:$0xff]
    %v492 = vld [vmem:[%s412 + $0xb1] sm:$0xff]
    %v493 = vld [vmem:[%s412 + $0xc1] sm:$0xff]
    %v494 = vld [vmem:[%s412 + $0xc9] sm:$0xff]
    %v495 = vld [vmem:[%s412 + $0xd9] sm:$0xff]
    %v496 = vld [vmem:[%s412 + $0xe1] sm:$0xff]
    %v497 = vld [vmem:[%s412 + $0xf1] sm:$0xff]
    %v498 = vld [vmem:[%s412 + $0xf9] sm:$0xff]
    %v499 = vld [vmem:[%s412 + $0x109] sm:$0xff]
    %v500 = vld [vmem:[%s412 + $0x111] sm:$0xff]
    %v501 = vld [vmem:[%s412 + $0x121] sm:$0xff]
    %v502 = vld [vmem:[%s412 + $0x129] sm:$0xff]
    %v503 = vld [vmem:[%s412 + $0x139] sm:$0xff]
    %v504 = vld [vmem:[%s412 + $0x141] sm:$0xff]
    %v505 = vld [vmem:[%s412 + $0x151] sm:$0xff]
    %v506 = vld [vmem:[%s412 + $0x159] sm:$0xff]
    %v507 = vld [vmem:[%s412 + $0x169] sm:$0xff]
    %v508 = vld [vmem:[%s412 + $0x171] sm:$0xff]
    %v509 = vld [vmem:[%s412 + $0x1b1] sm:$0xff]
    %v510 = vld [vmem:[%s412 + $0x1b9] sm:$0xff]
    %v511 = vld [vmem:[%s412 + $0x1c9] sm:$0xff]
    %v512 = vld [vmem:[%s412 + $0x1d1] sm:$0xff]
    %v513 = vld [vmem:[%s412 + $0x1e1] sm:$0xff]
    %v514 = vld [vmem:[%s412 + $0x1e9] sm:$0xff]
    %v515 = vld [vmem:[%s412 + $0x1f9] sm:$0xff]
    %v516 = vld [vmem:[%s412 + $0x201] sm:$0xff]
    %v517 = vld [vmem:[%s412 + $0x211] sm:$0xff]
    %v518 = vld [vmem:[%s412 + $0x219] sm:$0xff]
    %v519 = vld [vmem:[%s412 + $0x229] sm:$0xff]
    %v520 = vld [vmem:[%s412 + $0x231] sm:$0xff]
    %v521 = vld [vmem:[%s412 + $0x241] sm:$0xff]
    %v522 = vld [vmem:[%s412 + $0x249] sm:$0xff]
    %v523 = vld [vmem:[%s412 + $0x259] sm:$0xff]
    %v524 = vld [vmem:[%s412 + $0x261] sm:$0xff]
    %v525 = vld [vmem:[%s412 + $0x271] sm:$0xff]
    %v526 = vld [vmem:[%s412 + $0x279] sm:$0xff]
    %v527 = vld [vmem:[%s412 + $0x289] sm:$0xff]
    %v528 = vld [vmem:[%s412 + $0x291] sm:$0xff]
    %v529 = vld [vmem:[%s412 + $0x2a1] sm:$0xff]
    %v530 = vld [vmem:[%s412 + $0x2a9] sm:$0xff]
    %v531 = vld [vmem:[%s412 + $0x2b9] sm:$0xff]
    %v532 = vld [vmem:[%s412 + $0x2c1] sm:$0xff]
    %v533 = vld [vmem:[%s412 + $0x2d1] sm:$0xff]
    %v534 = vld [vmem:[%s412 + $0x2d9] sm:$0xff]
    %v535 = vld [vmem:[%s412 + $0x2e9] sm:$0xff]
    %v536 = vld [vmem:[%s412 + $0x2f1] sm:$0xff]
    %v537 = vld [vmem:[%s412 + $0x301] sm:$0xff]
    %v538 = vld [vmem:[%s412 + $0x309] sm:$0xff]
    %v539 = vld [vmem:[%s412 + $0x319] sm:$0xff]
    %v540 = vld [vmem:[%s412 + $0x321] sm:$0xff]
    %v541 = vld [vmem:[%s412 + $0x2] sm:$0xff]
    %v542 = vld [vmem:[%s412 + $0xa] sm:$0xff]
    %v543 = vld [vmem:[%s412 + $0x1a] sm:$0xff]
    %v544 = vld [vmem:[%s412 + $0x22] sm:$0xff]
    %v545 = vld [vmem:[%s412 + $0x32] sm:$0xff]
    %v546 = vld [vmem:[%s412 + $0x3a] sm:$0xff]
    %v547 = vld [vmem:[%s412 + $0x4a] sm:$0xff]
    %v548 = vld [vmem:[%s412 + $0x52] sm:$0xff]
    %v549 = vld [vmem:[%s412 + $0x62] sm:$0xff]
    %v550 = vld [vmem:[%s412 + $0x6a] sm:$0xff]
    %v551 = vld [vmem:[%s412 + $0x7a] sm:$0xff]
    %v552 = vld [vmem:[%s412 + $0x82] sm:$0xff]
    %v553 = vld [vmem:[%s412 + $0x92] sm:$0xff]
    %v554 = vld [vmem:[%s412 + $0x9a] sm:$0xff]
    %v555 = vld [vmem:[%s412 + $0xaa] sm:$0xff]
    %v556 = vld [vmem:[%s412 + $0xb2] sm:$0xff]
    %v557 = vld [vmem:[%s412 + $0xc2] sm:$0xff]
    %v558 = vld [vmem:[%s412 + $0xca] sm:$0xff]
    %v559 = vld [vmem:[%s412 + $0xda] sm:$0xff]
    %v560 = vld [vmem:[%s412 + $0xe2] sm:$0xff]
    %v561 = vld [vmem:[%s412 + $0xf2] sm:$0xff]
    %v562 = vld [vmem:[%s412 + $0xfa] sm:$0xff]
    %v563 = vld [vmem:[%s412 + $0x10a] sm:$0xff]
    %v564 = vld [vmem:[%s412 + $0x112] sm:$0xff]
    %v565 = vld [vmem:[%s412 + $0x122] sm:$0xff]
    %v566 = vld [vmem:[%s412 + $0x12a] sm:$0xff]
    %v567 = vld [vmem:[%s412 + $0x13a] sm:$0xff]
    %v568 = vld [vmem:[%s412 + $0x142] sm:$0xff]
    %v569 = vld [vmem:[%s412 + $0x152] sm:$0xff]
    %v570 = vld [vmem:[%s412 + $0x15a] sm:$0xff]
    %v571 = vld [vmem:[%s412 + $0x16a] sm:$0xff]
    %v572 = vld [vmem:[%s412 + $0x172] sm:$0xff]
    %v573 = vld [vmem:[%s412 + $0x1b2] sm:$0xff]
    %v574 = vld [vmem:[%s412 + $0x1ba] sm:$0xff]
    %v575 = vld [vmem:[%s412 + $0x1ca] sm:$0xff]
    %v576 = vld [vmem:[%s412 + $0x1d2] sm:$0xff]
    %v577 = vld [vmem:[%s412 + $0x1e2] sm:$0xff]
    %v578 = vld [vmem:[%s412 + $0x1ea] sm:$0xff]
    %v579 = vld [vmem:[%s412 + $0x1fa] sm:$0xff]
    %v580 = vld [vmem:[%s412 + $0x202] sm:$0xff]
    %v581 = vld [vmem:[%s412 + $0x212] sm:$0xff]
    %v582 = vld [vmem:[%s412 + $0x21a] sm:$0xff]
    %v583 = vld [vmem:[%s412 + $0x22a] sm:$0xff]
    %v584 = vld [vmem:[%s412 + $0x232] sm:$0xff]
    %v585 = vld [vmem:[%s412 + $0x242] sm:$0xff]
    %v586 = vld [vmem:[%s412 + $0x24a] sm:$0xff]
    %v587 = vld [vmem:[%s412 + $0x25a] sm:$0xff]
    %v588 = vld [vmem:[%s412 + $0x262] sm:$0xff]
    %v589 = vld [vmem:[%s412 + $0x272] sm:$0xff]
    %v590 = vld [vmem:[%s412 + $0x27a] sm:$0xff]
    %v591 = vld [vmem:[%s412 + $0x28a] sm:$0xff]
    %v592 = vld [vmem:[%s412 + $0x292] sm:$0xff]
    %v593 = vld [vmem:[%s412 + $0x2a2] sm:$0xff]
    %v594 = vld [vmem:[%s412 + $0x2aa] sm:$0xff]
    %v595 = vld [vmem:[%s412 + $0x2ba] sm:$0xff]
    %v596 = vld [vmem:[%s412 + $0x2c2] sm:$0xff]
    %v597 = vld [vmem:[%s412 + $0x2d2] sm:$0xff]
    %v598 = vld [vmem:[%s412 + $0x2da] sm:$0xff]
    %v599 = vld [vmem:[%s412 + $0x2ea] sm:$0xff]
    %v600 = vld [vmem:[%s412 + $0x2f2] sm:$0xff]
    %v601 = vld [vmem:[%s412 + $0x302] sm:$0xff]
    %v602 = vld [vmem:[%s412 + $0x30a] sm:$0xff]
    %v603 = vld [vmem:[%s412 + $0x31a] sm:$0xff]
    %v604 = vld [vmem:[%s412 + $0x322] sm:$0xff]
    %669 = vrot.lane.b32.xlu0 %v91, 4
    %v670 = vpop.permute.xlu0 %669
    %671 = vrot.lane.b32.xlu0 %v92, 4
    %v672 = vpop.permute.xlu0 %671
    %673 = vrot.lane.b32.xlu0 %v93, 4
    %v674 = vpop.permute.xlu0 %673
    %675 = vrot.lane.b32.xlu0 %v94, 4
    %v676 = vpop.permute.xlu0 %675
    %677 = vrot.lane.b32.xlu0 %v95, 4
    %v678 = vpop.permute.xlu0 %677
    %679 = vrot.lane.b32.xlu0 %v96, 4
    %v680 = vpop.permute.xlu0 %679
    %681 = vrot.lane.b32.xlu0 %v97, 4
    %v682 = vpop.permute.xlu0 %681
    %683 = vrot.lane.b32.xlu0 %v98, 4
    %v684 = vpop.permute.xlu0 %683
    %685 = vrot.lane.b32.xlu0 %v99, 4
    %v686 = vpop.permute.xlu0 %685
    %687 = vrot.lane.b32.xlu0 %v100, 4
    %v688 = vpop.permute.xlu0 %687
    %689 = vrot.lane.b32.xlu0 %v101, 4
    %v690 = vpop.permute.xlu0 %689
    %691 = vrot.lane.b32.xlu0 %v102, 4
    %v692 = vpop.permute.xlu0 %691
    %693 = vrot.lane.b32.xlu0 %v103, 4
    %v694 = vpop.permute.xlu0 %693
    %695 = vrot.lane.b32.xlu0 %v104, 4
    %v696 = vpop.permute.xlu0 %695
    %697 = vrot.lane.b32.xlu0 %v105, 4
    %v698 = vpop.permute.xlu0 %697
    %699 = vrot.lane.b32.xlu0 %v106, 4
    %v700 = vpop.permute.xlu0 %699
    %701 = vrot.lane.b32.xlu0 %v107, 4
    %v702 = vpop.permute.xlu0 %701
    %703 = vrot.lane.b32.xlu0 %v108, 4
    %v704 = vpop.permute.xlu0 %703
    %705 = vrot.lane.b32.xlu0 %v109, 4
    %v706 = vpop.permute.xlu0 %705
    %707 = vrot.lane.b32.xlu0 %v110, 4
    %v708 = vpop.permute.xlu0 %707
    %709 = vrot.lane.b32.xlu0 %v111, 4
    %v710 = vpop.permute.xlu0 %709
    %711 = vrot.lane.b32.xlu0 %v112, 4
    %v712 = vpop.permute.xlu0 %711
    %713 = vrot.lane.b32.xlu0 %v113, 4
    %v714 = vpop.permute.xlu0 %713
    %715 = vrot.lane.b32.xlu0 %v114, 4
    %v716 = vpop.permute.xlu0 %715
    %717 = vrot.lane.b32.xlu0 %v115, 4
    %v718 = vpop.permute.xlu0 %717
    %719 = vrot.lane.b32.xlu0 %v116, 4
    %v720 = vpop.permute.xlu0 %719
    %721 = vrot.lane.b32.xlu0 %v117, 4
    %v722 = vpop.permute.xlu0 %721
    %723 = vrot.lane.b32.xlu0 %v118, 4
    %v724 = vpop.permute.xlu0 %723
    %725 = vrot.lane.b32.xlu0 %v119, 4
    %v726 = vpop.permute.xlu0 %725
    %727 = vrot.lane.b32.xlu0 %v120, 4
    %v728 = vpop.permute.xlu0 %727
    %729 = vrot.lane.b32.xlu0 %v121, 4
    %v730 = vpop.permute.xlu0 %729
    %731 = vrot.lane.b32.xlu0 %v122, 4
    %v732 = vpop.permute.xlu0 %731
    %733 = vrot.lane.b32.xlu0 %v123, 4
    %v734 = vpop.permute.xlu0 %733
    %735 = vrot.lane.b32.xlu0 %v124, 4
    %v736 = vpop.permute.xlu0 %735
    %737 = vrot.lane.b32.xlu0 %v125, 4
    %v738 = vpop.permute.xlu0 %737
    %739 = vrot.lane.b32.xlu0 %v126, 4
    %v740 = vpop.permute.xlu0 %739
    %741 = vrot.lane.b32.xlu0 %v127, 4
    %v742 = vpop.permute.xlu0 %741
    %743 = vrot.lane.b32.xlu0 %v128, 4
    %v744 = vpop.permute.xlu0 %743
    %745 = vrot.lane.b32.xlu0 %v129, 4
    %v746 = vpop.permute.xlu0 %745
    %747 = vrot.lane.b32.xlu0 %v130, 4
    %v748 = vpop.permute.xlu0 %747
    %749 = vrot.lane.b32.xlu0 %v131, 4
    %v750 = vpop.permute.xlu0 %749
    %751 = vrot.lane.b32.xlu0 %v132, 4
    %v752 = vpop.permute.xlu0 %751
    %753 = vrot.lane.b32.xlu0 %v133, 4
    %v754 = vpop.permute.xlu0 %753
    %755 = vrot.lane.b32.xlu0 %v134, 4
    %v756 = vpop.permute.xlu0 %755
    %757 = vrot.lane.b32.xlu0 %v135, 4
    %v758 = vpop.permute.xlu0 %757
    %759 = vrot.lane.b32.xlu0 %v136, 4
    %v760 = vpop.permute.xlu0 %759
    %761 = vrot.lane.b32.xlu0 %v137, 4
    %v762 = vpop.permute.xlu0 %761
    %763 = vrot.lane.b32.xlu0 %v138, 4
    %v764 = vpop.permute.xlu0 %763
    %765 = vrot.lane.b32.xlu0 %v139, 4
    %v766 = vpop.permute.xlu0 %765
    %767 = vrot.lane.b32.xlu0 %v140, 4
    %v768 = vpop.permute.xlu0 %767
    %769 = vrot.lane.b32.xlu0 %v141, 4
    %v770 = vpop.permute.xlu0 %769
    %771 = vrot.lane.b32.xlu0 %v142, 4
    %v772 = vpop.permute.xlu0 %771
    %773 = vrot.lane.b32.xlu0 %v143, 4
    %v774 = vpop.permute.xlu0 %773
    %775 = vrot.lane.b32.xlu0 %v144, 4
    %v776 = vpop.permute.xlu0 %775
    %777 = vrot.lane.b32.xlu0 %v145, 4
    %v778 = vpop.permute.xlu0 %777
    %779 = vrot.lane.b32.xlu0 %v146, 4
    %v780 = vpop.permute.xlu0 %779
    %781 = vrot.lane.b32.xlu0 %v147, 4
    %v782 = vpop.permute.xlu0 %781
    %783 = vrot.lane.b32.xlu0 %v148, 4
    %v784 = vpop.permute.xlu0 %783
    %785 = vrot.lane.b32.xlu0 %v149, 4
    %v786 = vpop.permute.xlu0 %785
    %787 = vrot.lane.b32.xlu0 %v150, 4
    %v788 = vpop.permute.xlu0 %787
    %789 = vrot.lane.b32.xlu0 %v151, 4
    %v790 = vpop.permute.xlu0 %789
    %791 = vrot.lane.b32.xlu0 %v152, 4
    %v792 = vpop.permute.xlu0 %791
    %793 = vrot.lane.b32.xlu0 %v153, 4
    %v794 = vpop.permute.xlu0 %793
    %795 = vrot.lane.b32.xlu0 %v154, 4
    %v796 = vpop.permute.xlu0 %795
    %925 = vrot.lane.b32.xlu0 %v155, 8
    %v926 = vpop.permute.xlu0 %925
    %927 = vrot.lane.b32.xlu0 %v156, 8
    %v928 = vpop.permute.xlu0 %927
    %929 = vrot.lane.b32.xlu0 %v157, 8
    %v930 = vpop.permute.xlu0 %929
    %931 = vrot.lane.b32.xlu0 %v158, 8
    %v932 = vpop.permute.xlu0 %931
    %933 = vrot.lane.b32.xlu0 %v159, 8
    %v934 = vpop.permute.xlu0 %933
    %935 = vrot.lane.b32.xlu0 %v160, 8
    %v936 = vpop.permute.xlu0 %935
    %937 = vrot.lane.b32.xlu0 %v161, 8
    %v938 = vpop.permute.xlu0 %937
    %939 = vrot.lane.b32.xlu0 %v162, 8
    %v940 = vpop.permute.xlu0 %939
    %941 = vrot.lane.b32.xlu0 %v163, 8
    %v942 = vpop.permute.xlu0 %941
    %943 = vrot.lane.b32.xlu0 %v164, 8
    %v944 = vpop.permute.xlu0 %943
    %945 = vrot.lane.b32.xlu0 %v165, 8
    %v946 = vpop.permute.xlu0 %945
    %947 = vrot.lane.b32.xlu0 %v166, 8
    %v948 = vpop.permute.xlu0 %947
    %949 = vrot.lane.b32.xlu0 %v167, 8
    %v950 = vpop.permute.xlu0 %949
    %951 = vrot.lane.b32.xlu0 %v168, 8
    %v952 = vpop.permute.xlu0 %951
    %953 = vrot.lane.b32.xlu0 %v169, 8
    %v954 = vpop.permute.xlu0 %953
    %955 = vrot.lane.b32.xlu0 %v170, 8
    %v956 = vpop.permute.xlu0 %955
    %957 = vrot.lane.b32.xlu0 %v171, 8
    %v958 = vpop.permute.xlu0 %957
    %959 = vrot.lane.b32.xlu0 %v172, 8
    %v960 = vpop.permute.xlu0 %959
    %961 = vrot.lane.b32.xlu0 %v173, 8
    %v962 = vpop.permute.xlu0 %961
    %963 = vrot.lane.b32.xlu0 %v174, 8
    %v964 = vpop.permute.xlu0 %963
    %965 = vrot.lane.b32.xlu0 %v175, 8
    %v966 = vpop.permute.xlu0 %965
    %967 = vrot.lane.b32.xlu0 %v176, 8
    %v968 = vpop.permute.xlu0 %967
    %969 = vrot.lane.b32.xlu0 %v177, 8
    %v970 = vpop.permute.xlu0 %969
    %971 = vrot.lane.b32.xlu0 %v178, 8
    %v972 = vpop.permute.xlu0 %971
    %973 = vrot.lane.b32.xlu0 %v179, 8
    %v974 = vpop.permute.xlu0 %973
    %975 = vrot.lane.b32.xlu0 %v180, 8
    %v976 = vpop.permute.xlu0 %975
    %977 = vrot.lane.b32.xlu0 %v181, 8
    %v978 = vpop.permute.xlu0 %977
    %979 = vrot.lane.b32.xlu0 %v182, 8
    %v980 = vpop.permute.xlu0 %979
    %981 = vrot.lane.b32.xlu0 %v183, 8
    %v982 = vpop.permute.xlu0 %981
    %983 = vrot.lane.b32.xlu0 %v184, 8
    %v984 = vpop.permute.xlu0 %983
    %985 = vrot.lane.b32.xlu0 %v185, 8
    %v986 = vpop.permute.xlu0 %985
    %987 = vrot.lane.b32.xlu0 %v186, 8
    %v988 = vpop.permute.xlu0 %987
    %989 = vrot.lane.b32.xlu0 %v187, 8
    %v990 = vpop.permute.xlu0 %989
    %991 = vrot.lane.b32.xlu0 %v188, 8
    %v992 = vpop.permute.xlu0 %991
    %993 = vrot.lane.b32.xlu0 %v189, 8
    %v994 = vpop.permute.xlu0 %993
    %995 = vrot.lane.b32.xlu0 %v190, 8
    %v996 = vpop.permute.xlu0 %995
    %997 = vrot.lane.b32.xlu0 %v191, 8
    %v998 = vpop.permute.xlu0 %997
    %999 = vrot.lane.b32.xlu0 %v192, 8
    %v1000 = vpop.permute.xlu0 %999
    %1001 = vrot.lane.b32.xlu0 %v193, 8
    %v1002 = vpop.permute.xlu0 %1001
    %1003 = vrot.lane.b32.xlu0 %v194, 8
    %v1004 = vpop.permute.xlu0 %1003
    %1005 = vrot.lane.b32.xlu0 %v195, 8
    %v1006 = vpop.permute.xlu0 %1005
    %1007 = vrot.lane.b32.xlu0 %v196, 8
    %v1008 = vpop.permute.xlu0 %1007
    %1009 = vrot.lane.b32.xlu0 %v197, 8
    %v1010 = vpop.permute.xlu0 %1009
    %1011 = vrot.lane.b32.xlu0 %v198, 8
    %v1012 = vpop.permute.xlu0 %1011
    %1013 = vrot.lane.b32.xlu0 %v199, 8
    %v1014 = vpop.permute.xlu0 %1013
    %1015 = vrot.lane.b32.xlu0 %v200, 8
    %v1016 = vpop.permute.xlu0 %1015
    %1017 = vrot.lane.b32.xlu0 %v201, 8
    %v1018 = vpop.permute.xlu0 %1017
    %1019 = vrot.lane.b32.xlu0 %v202, 8
    %v1020 = vpop.permute.xlu0 %1019
    %1021 = vrot.lane.b32.xlu0 %v203, 8
    %v1022 = vpop.permute.xlu0 %1021
    %1023 = vrot.lane.b32.xlu0 %v204, 8
    %v1024 = vpop.permute.xlu0 %1023
    %1025 = vrot.lane.b32.xlu0 %v205, 8
    %v1026 = vpop.permute.xlu0 %1025
    %1027 = vrot.lane.b32.xlu0 %v206, 8
    %v1028 = vpop.permute.xlu0 %1027
    %1029 = vrot.lane.b32.xlu0 %v207, 8
    %v1030 = vpop.permute.xlu0 %1029
    %1031 = vrot.lane.b32.xlu0 %v208, 8
    %v1032 = vpop.permute.xlu0 %1031
    %1033 = vrot.lane.b32.xlu0 %v209, 8
    %v1034 = vpop.permute.xlu0 %1033
    %1035 = vrot.lane.b32.xlu0 %v210, 8
    %v1036 = vpop.permute.xlu0 %1035
    %1037 = vrot.lane.b32.xlu0 %v211, 8
    %v1038 = vpop.permute.xlu0 %1037
    %1039 = vrot.lane.b32.xlu0 %v212, 8
    %v1040 = vpop.permute.xlu0 %1039
    %1041 = vrot.lane.b32.xlu0 %v213, 8
    %v1042 = vpop.permute.xlu0 %1041
    %1043 = vrot.lane.b32.xlu0 %v214, 8
    %v1044 = vpop.permute.xlu0 %1043
    %1045 = vrot.lane.b32.xlu0 %v215, 8
    %v1046 = vpop.permute.xlu0 %1045
    %1047 = vrot.lane.b32.xlu0 %v216, 8
    %v1048 = vpop.permute.xlu0 %1047
    %1049 = vrot.lane.b32.xlu0 %v217, 8
    %v1050 = vpop.permute.xlu0 %1049
    %1051 = vrot.lane.b32.xlu0 %v218, 8
    %v1052 = vpop.permute.xlu0 %1051
    %1181 = vrot.lane.b32.xlu0 %v220, 12
    %v1182 = vpop.permute.xlu0 %1181
    %1183 = vrot.lane.b32.xlu0 %v221, 12
    %v1184 = vpop.permute.xlu0 %1183
    %1185 = vrot.lane.b32.xlu0 %v222, 12
    %v1186 = vpop.permute.xlu0 %1185
    %1187 = vrot.lane.b32.xlu0 %v223, 12
    %v1188 = vpop.permute.xlu0 %1187
    %1189 = vrot.lane.b32.xlu0 %v224, 12
    %v1190 = vpop.permute.xlu0 %1189
    %1191 = vrot.lane.b32.xlu0 %v225, 12
    %v1192 = vpop.permute.xlu0 %1191
    %1193 = vrot.lane.b32.xlu0 %v226, 12
    %v1194 = vpop.permute.xlu0 %1193
    %1195 = vrot.lane.b32.xlu0 %v227, 12
    %v1196 = vpop.permute.xlu0 %1195
    %1197 = vrot.lane.b32.xlu0 %v228, 12
    %v1198 = vpop.permute.xlu0 %1197
    %1199 = vrot.lane.b32.xlu0 %v229, 12
    %v1200 = vpop.permute.xlu0 %1199
    %1201 = vrot.lane.b32.xlu0 %v230, 12
    %v1202 = vpop.permute.xlu0 %1201
    %1203 = vrot.lane.b32.xlu0 %v231, 12
    %v1204 = vpop.permute.xlu0 %1203
    %1205 = vrot.lane.b32.xlu0 %v232, 12
    %v1206 = vpop.permute.xlu0 %1205
    %1207 = vrot.lane.b32.xlu0 %v233, 12
    %v1208 = vpop.permute.xlu0 %1207
    %1209 = vrot.lane.b32.xlu0 %v234, 12
    %v1210 = vpop.permute.xlu0 %1209
    %1211 = vrot.lane.b32.xlu0 %v235, 12
    %v1212 = vpop.permute.xlu0 %1211
    %1213 = vrot.lane.b32.xlu0 %v236, 12
    %v1214 = vpop.permute.xlu0 %1213
    %1215 = vrot.lane.b32.xlu0 %v237, 12
    %v1216 = vpop.permute.xlu0 %1215
    %1217 = vrot.lane.b32.xlu0 %v238, 12
    %v1218 = vpop.permute.xlu0 %1217
    %1219 = vrot.lane.b32.xlu0 %v239, 12
    %v1220 = vpop.permute.xlu0 %1219
    %1221 = vrot.lane.b32.xlu0 %v240, 12
    %v1222 = vpop.permute.xlu0 %1221
    %1223 = vrot.lane.b32.xlu0 %v241, 12
    %v1224 = vpop.permute.xlu0 %1223
    %1225 = vrot.lane.b32.xlu0 %v242, 12
    %v1226 = vpop.permute.xlu0 %1225
    %1227 = vrot.lane.b32.xlu0 %v243, 12
    %v1228 = vpop.permute.xlu0 %1227
    %1229 = vrot.lane.b32.xlu0 %v244, 12
    %v1230 = vpop.permute.xlu0 %1229
    %1231 = vrot.lane.b32.xlu0 %v245, 12
    %v1232 = vpop.permute.xlu0 %1231
    %1233 = vrot.lane.b32.xlu0 %v246, 12
    %v1234 = vpop.permute.xlu0 %1233
    %1235 = vrot.lane.b32.xlu0 %v247, 12
    %v1236 = vpop.permute.xlu0 %1235
    %1237 = vrot.lane.b32.xlu0 %v248, 12
    %v1238 = vpop.permute.xlu0 %1237
    %1239 = vrot.lane.b32.xlu0 %v249, 12
    %v1240 = vpop.permute.xlu0 %1239
    %1241 = vrot.lane.b32.xlu0 %v250, 12
    %v1242 = vpop.permute.xlu0 %1241
    %1243 = vrot.lane.b32.xlu0 %v251, 12
    %v1244 = vpop.permute.xlu0 %1243
    %1245 = vrot.lane.b32.xlu0 %v252, 12
    %v1246 = vpop.permute.xlu0 %1245
    %1247 = vrot.lane.b32.xlu0 %v253, 12
    %v1248 = vpop.permute.xlu0 %1247
    %1249 = vrot.lane.b32.xlu0 %v254, 12
    %v1250 = vpop.permute.xlu0 %1249
    %1251 = vrot.lane.b32.xlu0 %v255, 12
    %v1252 = vpop.permute.xlu0 %1251
    %1253 = vrot.lane.b32.xlu0 %v256, 12
    %v1254 = vpop.permute.xlu0 %1253
    %1255 = vrot.lane.b32.xlu0 %v257, 12
    %v1256 = vpop.permute.xlu0 %1255
    %1257 = vrot.lane.b32.xlu0 %v258, 12
    %v1258 = vpop.permute.xlu0 %1257
    %1259 = vrot.lane.b32.xlu0 %v259, 12
    %v1260 = vpop.permute.xlu0 %1259
    %1261 = vrot.lane.b32.xlu0 %v260, 12
    %v1262 = vpop.permute.xlu0 %1261
    %1263 = vrot.lane.b32.xlu0 %v261, 12
    %v1264 = vpop.permute.xlu0 %1263
    %1265 = vrot.lane.b32.xlu0 %v262, 12
    %v1266 = vpop.permute.xlu0 %1265
    %1267 = vrot.lane.b32.xlu0 %v263, 12
    %v1268 = vpop.permute.xlu0 %1267
    %1269 = vrot.lane.b32.xlu0 %v264, 12
    %v1270 = vpop.permute.xlu0 %1269
    %1271 = vrot.lane.b32.xlu0 %v265, 12
    %v1272 = vpop.permute.xlu0 %1271
    %1273 = vrot.lane.b32.xlu0 %v266, 12
    %v1274 = vpop.permute.xlu0 %1273
    %1275 = vrot.lane.b32.xlu0 %v267, 12
    %v1276 = vpop.permute.xlu0 %1275
    %1277 = vrot.lane.b32.xlu0 %v268, 12
    %v1278 = vpop.permute.xlu0 %1277
    %1279 = vrot.lane.b32.xlu0 %v269, 12
    %v1280 = vpop.permute.xlu0 %1279
    %1281 = vrot.lane.b32.xlu0 %v270, 12
    %v1282 = vpop.permute.xlu0 %1281
    %1283 = vrot.lane.b32.xlu0 %v271, 12
    %v1284 = vpop.permute.xlu0 %1283
    %1285 = vrot.lane.b32.xlu0 %v272, 12
    %v1286 = vpop.permute.xlu0 %1285
    %1287 = vrot.lane.b32.xlu0 %v273, 12
    %v1288 = vpop.permute.xlu0 %1287
    %1289 = vrot.lane.b32.xlu0 %v274, 12
    %v1290 = vpop.permute.xlu0 %1289
    %1291 = vrot.lane.b32.xlu0 %v275, 12
    %v1292 = vpop.permute.xlu0 %1291
    %1293 = vrot.lane.b32.xlu0 %v276, 12
    %v1294 = vpop.permute.xlu0 %1293
    %1295 = vrot.lane.b32.xlu0 %v277, 12
    %v1296 = vpop.permute.xlu0 %1295
    %1297 = vrot.lane.b32.xlu0 %v278, 12
    %v1298 = vpop.permute.xlu0 %1297
    %1299 = vrot.lane.b32.xlu0 %v279, 12
    %v1300 = vpop.permute.xlu0 %1299
    %1301 = vrot.lane.b32.xlu0 %v280, 12
    %v1302 = vpop.permute.xlu0 %1301
    %1303 = vrot.lane.b32.xlu0 %v281, 12
    %v1304 = vpop.permute.xlu0 %1303
    %1305 = vrot.lane.b32.xlu0 %v282, 12
    %v1306 = vpop.permute.xlu0 %1305
    %1307 = vrot.lane.b32.xlu0 %v283, 12
    %v1308 = vpop.permute.xlu0 %1307
    %1437 = vrot.lane.b32.xlu0 %v284, 16
    %v1438 = vpop.permute.xlu0 %1437
    %1439 = vrot.lane.b32.xlu0 %v285, 16
    %v1440 = vpop.permute.xlu0 %1439
    %1441 = vrot.lane.b32.xlu0 %v286, 16
    %v1442 = vpop.permute.xlu0 %1441
    %1443 = vrot.lane.b32.xlu0 %v287, 16
    %v1444 = vpop.permute.xlu0 %1443
    %1445 = vrot.lane.b32.xlu0 %v288, 16
    %v1446 = vpop.permute.xlu0 %1445
    %1447 = vrot.lane.b32.xlu0 %v289, 16
    %v1448 = vpop.permute.xlu0 %1447
    %1449 = vrot.lane.b32.xlu0 %v290, 16
    %v1450 = vpop.permute.xlu0 %1449
    %1451 = vrot.lane.b32.xlu0 %v291, 16
    %v1452 = vpop.permute.xlu0 %1451
    %1453 = vrot.lane.b32.xlu0 %v292, 16
    %v1454 = vpop.permute.xlu0 %1453
    %1455 = vrot.lane.b32.xlu0 %v293, 16
    %v1456 = vpop.permute.xlu0 %1455
    %1457 = vrot.lane.b32.xlu0 %v294, 16
    %v1458 = vpop.permute.xlu0 %1457
    %1459 = vrot.lane.b32.xlu0 %v295, 16
    %v1460 = vpop.permute.xlu0 %1459
    %1461 = vrot.lane.b32.xlu0 %v296, 16
    %v1462 = vpop.permute.xlu0 %1461
    %1463 = vrot.lane.b32.xlu0 %v297, 16
    %v1464 = vpop.permute.xlu0 %1463
    %1465 = vrot.lane.b32.xlu0 %v298, 16
    %v1466 = vpop.permute.xlu0 %1465
    %1467 = vrot.lane.b32.xlu0 %v299, 16
    %v1468 = vpop.permute.xlu0 %1467
    %1469 = vrot.lane.b32.xlu0 %v300, 16
    %v1470 = vpop.permute.xlu0 %1469
    %1471 = vrot.lane.b32.xlu0 %v301, 16
    %v1472 = vpop.permute.xlu0 %1471
    %1473 = vrot.lane.b32.xlu0 %v302, 16
    %v1474 = vpop.permute.xlu0 %1473
    %1475 = vrot.lane.b32.xlu0 %v303, 16
    %v1476 = vpop.permute.xlu0 %1475
    %1477 = vrot.lane.b32.xlu0 %v304, 16
    %v1478 = vpop.permute.xlu0 %1477
    %1479 = vrot.lane.b32.xlu0 %v305, 16
    %v1480 = vpop.permute.xlu0 %1479
    %1481 = vrot.lane.b32.xlu0 %v306, 16
    %v1482 = vpop.permute.xlu0 %1481
    %1483 = vrot.lane.b32.xlu0 %v307, 16
    %v1484 = vpop.permute.xlu0 %1483
    %1485 = vrot.lane.b32.xlu0 %v308, 16
    %v1486 = vpop.permute.xlu0 %1485
    %1487 = vrot.lane.b32.xlu0 %v309, 16
    %v1488 = vpop.permute.xlu0 %1487
    %1489 = vrot.lane.b32.xlu0 %v310, 16
    %v1490 = vpop.permute.xlu0 %1489
    %1491 = vrot.lane.b32.xlu0 %v311, 16
    %v1492 = vpop.permute.xlu0 %1491
    %1493 = vrot.lane.b32.xlu0 %v312, 16
    %v1494 = vpop.permute.xlu0 %1493
    %1495 = vrot.lane.b32.xlu0 %v313, 16
    %v1496 = vpop.permute.xlu0 %1495
    %1497 = vrot.lane.b32.xlu0 %v314, 16
    %v1498 = vpop.permute.xlu0 %1497
    %1499 = vrot.lane.b32.xlu0 %v315, 16
    %v1500 = vpop.permute.xlu0 %1499
    %1501 = vrot.lane.b32.xlu0 %v316, 16
    %v1502 = vpop.permute.xlu0 %1501
    %1503 = vrot.lane.b32.xlu0 %v317, 16
    %v1504 = vpop.permute.xlu0 %1503
    %1505 = vrot.lane.b32.xlu0 %v318, 16
    %v1506 = vpop.permute.xlu0 %1505
    %1507 = vrot.lane.b32.xlu0 %v319, 16
    %v1508 = vpop.permute.xlu0 %1507
    %1509 = vrot.lane.b32.xlu0 %v320, 16
    %v1510 = vpop.permute.xlu0 %1509
    %1511 = vrot.lane.b32.xlu0 %v321, 16
    %v1512 = vpop.permute.xlu0 %1511
    %1513 = vrot.lane.b32.xlu0 %v322, 16
    %v1514 = vpop.permute.xlu0 %1513
    %1515 = vrot.lane.b32.xlu0 %v323, 16
    %v1516 = vpop.permute.xlu0 %1515
    %1517 = vrot.lane.b32.xlu0 %v324, 16
    %v1518 = vpop.permute.xlu0 %1517
    %1519 = vrot.lane.b32.xlu0 %v325, 16
    %v1520 = vpop.permute.xlu0 %1519
    %1521 = vrot.lane.b32.xlu0 %v326, 16
    %v1522 = vpop.permute.xlu0 %1521
    %1523 = vrot.lane.b32.xlu0 %v327, 16
    %v1524 = vpop.permute.xlu0 %1523
    %1525 = vrot.lane.b32.xlu0 %v328, 16
    %v1526 = vpop.permute.xlu0 %1525
    %1527 = vrot.lane.b32.xlu0 %v329, 16
    %v1528 = vpop.permute.xlu0 %1527
    %1529 = vrot.lane.b32.xlu0 %v330, 16
    %v1530 = vpop.permute.xlu0 %1529
    %1531 = vrot.lane.b32.xlu0 %v331, 16
    %v1532 = vpop.permute.xlu0 %1531
    %1533 = vrot.lane.b32.xlu0 %v332, 16
    %v1534 = vpop.permute.xlu0 %1533
    %1535 = vrot.lane.b32.xlu0 %v333, 16
    %v1536 = vpop.permute.xlu0 %1535
    %1537 = vrot.lane.b32.xlu0 %v334, 16
    %v1538 = vpop.permute.xlu0 %1537
    %1539 = vrot.lane.b32.xlu0 %v335, 16
    %v1540 = vpop.permute.xlu0 %1539
    %1541 = vrot.lane.b32.xlu0 %v336, 16
    %v1542 = vpop.permute.xlu0 %1541
    %1543 = vrot.lane.b32.xlu0 %v337, 16
    %v1544 = vpop.permute.xlu0 %1543
    %1545 = vrot.lane.b32.xlu0 %v338, 16
    %v1546 = vpop.permute.xlu0 %1545
    %1547 = vrot.lane.b32.xlu0 %v339, 16
    %v1548 = vpop.permute.xlu0 %1547
    %1549 = vrot.lane.b32.xlu0 %v340, 16
    %v1550 = vpop.permute.xlu0 %1549
    %1551 = vrot.lane.b32.xlu0 %v341, 16
    %v1552 = vpop.permute.xlu0 %1551
    %1553 = vrot.lane.b32.xlu0 %v342, 16
    %v1554 = vpop.permute.xlu0 %1553
    %1555 = vrot.lane.b32.xlu0 %v343, 16
    %v1556 = vpop.permute.xlu0 %1555
    %1557 = vrot.lane.b32.xlu0 %v344, 16
    %v1558 = vpop.permute.xlu0 %1557
    %1559 = vrot.lane.b32.xlu0 %v345, 16
    %v1560 = vpop.permute.xlu0 %1559
    %1561 = vrot.lane.b32.xlu0 %v346, 16
    %v1562 = vpop.permute.xlu0 %1561
    %1563 = vrot.lane.b32.xlu0 %v347, 16
    %v1564 = vpop.permute.xlu0 %1563
    %1693 = vrot.lane.b32.xlu0 %v348, 20
    %v1694 = vpop.permute.xlu0 %1693
    %1695 = vrot.lane.b32.xlu0 %v349, 20
    %v1696 = vpop.permute.xlu0 %1695
    %1697 = vrot.lane.b32.xlu0 %v350, 20
    %v1698 = vpop.permute.xlu0 %1697
    %1699 = vrot.lane.b32.xlu0 %v351, 20
    %v1700 = vpop.permute.xlu0 %1699
    %1701 = vrot.lane.b32.xlu0 %v352, 20
    %v1702 = vpop.permute.xlu0 %1701
    %1703 = vrot.lane.b32.xlu0 %v353, 20
    %v1704 = vpop.permute.xlu0 %1703
    %1705 = vrot.lane.b32.xlu0 %v354, 20
    %v1706 = vpop.permute.xlu0 %1705
    %1707 = vrot.lane.b32.xlu0 %v355, 20
    %v1708 = vpop.permute.xlu0 %1707
    %1709 = vrot.lane.b32.xlu0 %v356, 20
    %v1710 = vpop.permute.xlu0 %1709
    %1711 = vrot.lane.b32.xlu0 %v357, 20
    %v1712 = vpop.permute.xlu0 %1711
    %1713 = vrot.lane.b32.xlu0 %v358, 20
    %v1714 = vpop.permute.xlu0 %1713
    %1715 = vrot.lane.b32.xlu0 %v359, 20
    %v1716 = vpop.permute.xlu0 %1715
    %1717 = vrot.lane.b32.xlu0 %v360, 20
    %v1718 = vpop.permute.xlu0 %1717
    %1719 = vrot.lane.b32.xlu0 %v361, 20
    %v1720 = vpop.permute.xlu0 %1719
    %1721 = vrot.lane.b32.xlu0 %v362, 20
    %v1722 = vpop.permute.xlu0 %1721
    %1723 = vrot.lane.b32.xlu0 %v363, 20
    %v1724 = vpop.permute.xlu0 %1723
    %1725 = vrot.lane.b32.xlu0 %v364, 20
    %v1726 = vpop.permute.xlu0 %1725
    %1727 = vrot.lane.b32.xlu0 %v365, 20
    %v1728 = vpop.permute.xlu0 %1727
    %1729 = vrot.lane.b32.xlu0 %v366, 20
    %v1730 = vpop.permute.xlu0 %1729
    %1731 = vrot.lane.b32.xlu0 %v367, 20
    %v1732 = vpop.permute.xlu0 %1731
    %1733 = vrot.lane.b32.xlu0 %v368, 20
    %v1734 = vpop.permute.xlu0 %1733
    %1735 = vrot.lane.b32.xlu0 %v369, 20
    %v1736 = vpop.permute.xlu0 %1735
    %1737 = vrot.lane.b32.xlu0 %v370, 20
    %v1738 = vpop.permute.xlu0 %1737
    %1739 = vrot.lane.b32.xlu0 %v371, 20
    %v1740 = vpop.permute.xlu0 %1739
    %1741 = vrot.lane.b32.xlu0 %v372, 20
    %v1742 = vpop.permute.xlu0 %1741
    %1743 = vrot.lane.b32.xlu0 %v373, 20
    %v1744 = vpop.permute.xlu0 %1743
    %1745 = vrot.lane.b32.xlu0 %v374, 20
    %v1746 = vpop.permute.xlu0 %1745
    %1747 = vrot.lane.b32.xlu0 %v375, 20
    %v1748 = vpop.permute.xlu0 %1747
    %1749 = vrot.lane.b32.xlu0 %v376, 20
    %v1750 = vpop.permute.xlu0 %1749
    %1751 = vrot.lane.b32.xlu0 %v377, 20
    %v1752 = vpop.permute.xlu0 %1751
    %1753 = vrot.lane.b32.xlu0 %v378, 20
    %v1754 = vpop.permute.xlu0 %1753
    %1755 = vrot.lane.b32.xlu0 %v379, 20
    %v1756 = vpop.permute.xlu0 %1755
    %1757 = vrot.lane.b32.xlu0 %v380, 20
    %v1758 = vpop.permute.xlu0 %1757
    %1759 = vrot.lane.b32.xlu0 %v381, 20
    %v1760 = vpop.permute.xlu0 %1759
    %1761 = vrot.lane.b32.xlu0 %v382, 20
    %v1762 = vpop.permute.xlu0 %1761
    %1763 = vrot.lane.b32.xlu0 %v383, 20
    %v1764 = vpop.permute.xlu0 %1763
    %1765 = vrot.lane.b32.xlu0 %v384, 20
    %v1766 = vpop.permute.xlu0 %1765
    %1767 = vrot.lane.b32.xlu0 %v385, 20
    %v1768 = vpop.permute.xlu0 %1767
    %1769 = vrot.lane.b32.xlu0 %v386, 20
    %v1770 = vpop.permute.xlu0 %1769
    %1771 = vrot.lane.b32.xlu0 %v387, 20
    %v1772 = vpop.permute.xlu0 %1771
    %1773 = vrot.lane.b32.xlu0 %v388, 20
    %v1774 = vpop.permute.xlu0 %1773
    %1775 = vrot.lane.b32.xlu0 %v389, 20
    %v1776 = vpop.permute.xlu0 %1775
    %1777 = vrot.lane.b32.xlu0 %v390, 20
    %v1778 = vpop.permute.xlu0 %1777
    %1779 = vrot.lane.b32.xlu0 %v391, 20
    %v1780 = vpop.permute.xlu0 %1779
    %1781 = vrot.lane.b32.xlu0 %v392, 20
    %v1782 = vpop.permute.xlu0 %1781
    %1783 = vrot.lane.b32.xlu0 %v393, 20
    %v1784 = vpop.permute.xlu0 %1783
    %1785 = vrot.lane.b32.xlu0 %v394, 20
    %v1786 = vpop.permute.xlu0 %1785
    %1787 = vrot.lane.b32.xlu0 %v395, 20
    %v1788 = vpop.permute.xlu0 %1787
    %1789 = vrot.lane.b32.xlu0 %v396, 20
    %v1790 = vpop.permute.xlu0 %1789
    %1791 = vrot.lane.b32.xlu0 %v397, 20
    %v1792 = vpop.permute.xlu0 %1791
    %1793 = vrot.lane.b32.xlu0 %v398, 20
    %v1794 = vpop.permute.xlu0 %1793
    %1795 = vrot.lane.b32.xlu0 %v399, 20
    %v1796 = vpop.permute.xlu0 %1795
    %1797 = vrot.lane.b32.xlu0 %v400, 20
    %v1798 = vpop.permute.xlu0 %1797
    %1799 = vrot.lane.b32.xlu0 %v401, 20
    %v1800 = vpop.permute.xlu0 %1799
    %1801 = vrot.lane.b32.xlu0 %v402, 20
    %v1802 = vpop.permute.xlu0 %1801
    %1803 = vrot.lane.b32.xlu0 %v403, 20
    %v1804 = vpop.permute.xlu0 %1803
    %1805 = vrot.lane.b32.xlu0 %v404, 20
    %v1806 = vpop.permute.xlu0 %1805
    %1807 = vrot.lane.b32.xlu0 %v405, 20
    %v1808 = vpop.permute.xlu0 %1807
    %1809 = vrot.lane.b32.xlu0 %v406, 20
    %v1810 = vpop.permute.xlu0 %1809
    %1811 = vrot.lane.b32.xlu0 %v407, 20
    %v1812 = vpop.permute.xlu0 %1811
    %1813 = vrot.lane.b32.xlu0 %v408, 20
    %v1814 = vpop.permute.xlu0 %1813
    %1815 = vrot.lane.b32.xlu0 %v409, 20
    %v1816 = vpop.permute.xlu0 %1815
    %1817 = vrot.lane.b32.xlu0 %v410, 20
    %v1818 = vpop.permute.xlu0 %1817
    %1819 = vrot.lane.b32.xlu0 %v411, 20
    %v1820 = vpop.permute.xlu0 %1819
    %1949 = vrot.lane.b32.xlu0 %v413, 24
    %v1950 = vpop.permute.xlu0 %1949
    %1951 = vrot.lane.b32.xlu0 %v414, 24
    %v1952 = vpop.permute.xlu0 %1951
    %1953 = vrot.lane.b32.xlu0 %v415, 24
    %v1954 = vpop.permute.xlu0 %1953
    %1955 = vrot.lane.b32.xlu0 %v416, 24
    %v1956 = vpop.permute.xlu0 %1955
    %1957 = vrot.lane.b32.xlu0 %v417, 24
    %v1958 = vpop.permute.xlu0 %1957
    %1959 = vrot.lane.b32.xlu0 %v418, 24
    %v1960 = vpop.permute.xlu0 %1959
    %1961 = vrot.lane.b32.xlu0 %v419, 24
    %v1962 = vpop.permute.xlu0 %1961
    %1963 = vrot.lane.b32.xlu0 %v420, 24
    %v1964 = vpop.permute.xlu0 %1963
    %1965 = vrot.lane.b32.xlu0 %v421, 24
    %v1966 = vpop.permute.xlu0 %1965
    %1967 = vrot.lane.b32.xlu0 %v422, 24
    %v1968 = vpop.permute.xlu0 %1967
    %1969 = vrot.lane.b32.xlu0 %v423, 24
    %v1970 = vpop.permute.xlu0 %1969
    %1971 = vrot.lane.b32.xlu0 %v424, 24
    %v1972 = vpop.permute.xlu0 %1971
    %1973 = vrot.lane.b32.xlu0 %v425, 24
    %v1974 = vpop.permute.xlu0 %1973
    %1975 = vrot.lane.b32.xlu0 %v426, 24
    %v1976 = vpop.permute.xlu0 %1975
    %1977 = vrot.lane.b32.xlu0 %v427, 24
    %v1978 = vpop.permute.xlu0 %1977
    %1979 = vrot.lane.b32.xlu0 %v428, 24
    %v1980 = vpop.permute.xlu0 %1979
    %1981 = vrot.lane.b32.xlu0 %v429, 24
    %v1982 = vpop.permute.xlu0 %1981
    %1983 = vrot.lane.b32.xlu0 %v430, 24
    %v1984 = vpop.permute.xlu0 %1983
    %1985 = vrot.lane.b32.xlu0 %v431, 24
    %v1986 = vpop.permute.xlu0 %1985
    %1987 = vrot.lane.b32.xlu0 %v432, 24
    %v1988 = vpop.permute.xlu0 %1987
    %1989 = vrot.lane.b32.xlu0 %v433, 24
    %v1990 = vpop.permute.xlu0 %1989
    %1991 = vrot.lane.b32.xlu0 %v434, 24
    %v1992 = vpop.permute.xlu0 %1991
    %1993 = vrot.lane.b32.xlu0 %v435, 24
    %v1994 = vpop.permute.xlu0 %1993
    %1995 = vrot.lane.b32.xlu0 %v436, 24
    %v1996 = vpop.permute.xlu0 %1995
    %1997 = vrot.lane.b32.xlu0 %v437, 24
    %v1998 = vpop.permute.xlu0 %1997
    %1999 = vrot.lane.b32.xlu0 %v438, 24
    %v2000 = vpop.permute.xlu0 %1999
    %2001 = vrot.lane.b32.xlu0 %v439, 24
    %v2002 = vpop.permute.xlu0 %2001
    %2003 = vrot.lane.b32.xlu0 %v440, 24
    %v2004 = vpop.permute.xlu0 %2003
    %2005 = vrot.lane.b32.xlu0 %v441, 24
    %v2006 = vpop.permute.xlu0 %2005
    %2007 = vrot.lane.b32.xlu0 %v442, 24
    %v2008 = vpop.permute.xlu0 %2007
    %2009 = vrot.lane.b32.xlu0 %v443, 24
    %v2010 = vpop.permute.xlu0 %2009
    %2011 = vrot.lane.b32.xlu0 %v444, 24
    %v2012 = vpop.permute.xlu0 %2011
    %2013 = vrot.lane.b32.xlu0 %v445, 24
    %v2014 = vpop.permute.xlu0 %2013
    %2015 = vrot.lane.b32.xlu0 %v446, 24
    %v2016 = vpop.permute.xlu0 %2015
    %2017 = vrot.lane.b32.xlu0 %v447, 24
    %v2018 = vpop.permute.xlu0 %2017
    %2019 = vrot.lane.b32.xlu0 %v448, 24
    %v2020 = vpop.permute.xlu0 %2019
    %2021 = vrot.lane.b32.xlu0 %v449, 24
    %v2022 = vpop.permute.xlu0 %2021
    %2023 = vrot.lane.b32.xlu0 %v450, 24
    %v2024 = vpop.permute.xlu0 %2023
    %2025 = vrot.lane.b32.xlu0 %v451, 24
    %v2026 = vpop.permute.xlu0 %2025
    %2027 = vrot.lane.b32.xlu0 %v452, 24
    %v2028 = vpop.permute.xlu0 %2027
    %2029 = vrot.lane.b32.xlu0 %v453, 24
    %v2030 = vpop.permute.xlu0 %2029
    %2031 = vrot.lane.b32.xlu0 %v454, 24
    %v2032 = vpop.permute.xlu0 %2031
    %2033 = vrot.lane.b32.xlu0 %v455, 24
    %v2034 = vpop.permute.xlu0 %2033
    %2035 = vrot.lane.b32.xlu0 %v456, 24
    %v2036 = vpop.permute.xlu0 %2035
    %2037 = vrot.lane.b32.xlu0 %v457, 24
    %v2038 = vpop.permute.xlu0 %2037
    %2039 = vrot.lane.b32.xlu0 %v458, 24
    %v2040 = vpop.permute.xlu0 %2039
    %2041 = vrot.lane.b32.xlu0 %v459, 24
    %v2042 = vpop.permute.xlu0 %2041
    %2043 = vrot.lane.b32.xlu0 %v460, 24
    %v2044 = vpop.permute.xlu0 %2043
    %2045 = vrot.lane.b32.xlu0 %v461, 24
    %v2046 = vpop.permute.xlu0 %2045
    %2047 = vrot.lane.b32.xlu0 %v462, 24
    %v2048 = vpop.permute.xlu0 %2047
    %2049 = vrot.lane.b32.xlu0 %v463, 24
    %v2050 = vpop.permute.xlu0 %2049
    %2051 = vrot.lane.b32.xlu0 %v464, 24
    %v2052 = vpop.permute.xlu0 %2051
    %2053 = vrot.lane.b32.xlu0 %v465, 24
    %v2054 = vpop.permute.xlu0 %2053
    %2055 = vrot.lane.b32.xlu0 %v466, 24
    %v2056 = vpop.permute.xlu0 %2055
    %2057 = vrot.lane.b32.xlu0 %v467, 24
    %v2058 = vpop.permute.xlu0 %2057
    %2059 = vrot.lane.b32.xlu0 %v468, 24
    %v2060 = vpop.permute.xlu0 %2059
    %2061 = vrot.lane.b32.xlu0 %v469, 24
    %v2062 = vpop.permute.xlu0 %2061
    %2063 = vrot.lane.b32.xlu0 %v470, 24
    %v2064 = vpop.permute.xlu0 %2063
    %2065 = vrot.lane.b32.xlu0 %v471, 24
    %v2066 = vpop.permute.xlu0 %2065
    %2067 = vrot.lane.b32.xlu0 %v472, 24
    %v2068 = vpop.permute.xlu0 %2067
    %2069 = vrot.lane.b32.xlu0 %v473, 24
    %v2070 = vpop.permute.xlu0 %2069
    %2071 = vrot.lane.b32.xlu0 %v474, 24
    %v2072 = vpop.permute.xlu0 %2071
    %2073 = vrot.lane.b32.xlu0 %v475, 24
    %v2074 = vpop.permute.xlu0 %2073
    %2075 = vrot.lane.b32.xlu0 %v476, 24
    %v2076 = vpop.permute.xlu0 %2075
    %2205 = vrot.lane.b32.xlu0 %v477, 28
    %v2206 = vpop.permute.xlu0 %2205
    %2207 = vrot.lane.b32.xlu0 %v478, 28
    %v2208 = vpop.permute.xlu0 %2207
    %2209 = vrot.lane.b32.xlu0 %v479, 28
    %v2210 = vpop.permute.xlu0 %2209
    %2211 = vrot.lane.b32.xlu0 %v480, 28
    %v2212 = vpop.permute.xlu0 %2211
    %2213 = vrot.lane.b32.xlu0 %v481, 28
    %v2214 = vpop.permute.xlu0 %2213
    %2215 = vrot.lane.b32.xlu0 %v482, 28
    %v2216 = vpop.permute.xlu0 %2215
    %2217 = vrot.lane.b32.xlu0 %v483, 28
    %v2218 = vpop.permute.xlu0 %2217
    %2219 = vrot.lane.b32.xlu0 %v484, 28
    %v2220 = vpop.permute.xlu0 %2219
    %2221 = vrot.lane.b32.xlu0 %v485, 28
    %v2222 = vpop.permute.xlu0 %2221
    %2223 = vrot.lane.b32.xlu0 %v486, 28
    %v2224 = vpop.permute.xlu0 %2223
    %2225 = vrot.lane.b32.xlu0 %v487, 28
    %v2226 = vpop.permute.xlu0 %2225
    %2227 = vrot.lane.b32.xlu0 %v488, 28
    %v2228 = vpop.permute.xlu0 %2227
    %2229 = vrot.lane.b32.xlu0 %v489, 28
    %v2230 = vpop.permute.xlu0 %2229
    %2231 = vrot.lane.b32.xlu0 %v490, 28
    %v2232 = vpop.permute.xlu0 %2231
    %2233 = vrot.lane.b32.xlu0 %v491, 28
    %v2234 = vpop.permute.xlu0 %2233
    %2235 = vrot.lane.b32.xlu0 %v492, 28
    %v2236 = vpop.permute.xlu0 %2235
    %2237 = vrot.lane.b32.xlu0 %v493, 28
    %v2238 = vpop.permute.xlu0 %2237
    %2239 = vrot.lane.b32.xlu0 %v494, 28
    %v2240 = vpop.permute.xlu0 %2239
    %2241 = vrot.lane.b32.xlu0 %v495, 28
    %v2242 = vpop.permute.xlu0 %2241
    %2243 = vrot.lane.b32.xlu0 %v496, 28
    %v2244 = vpop.permute.xlu0 %2243
    %2245 = vrot.lane.b32.xlu0 %v497, 28
    %v2246 = vpop.permute.xlu0 %2245
    %2247 = vrot.lane.b32.xlu0 %v498, 28
    %v2248 = vpop.permute.xlu0 %2247
    %2249 = vrot.lane.b32.xlu0 %v499, 28
    %v2250 = vpop.permute.xlu0 %2249
    %2251 = vrot.lane.b32.xlu0 %v500, 28
    %v2252 = vpop.permute.xlu0 %2251
    %2253 = vrot.lane.b32.xlu0 %v501, 28
    %v2254 = vpop.permute.xlu0 %2253
    %2255 = vrot.lane.b32.xlu0 %v502, 28
    %v2256 = vpop.permute.xlu0 %2255
    %2257 = vrot.lane.b32.xlu0 %v503, 28
    %v2258 = vpop.permute.xlu0 %2257
    %2259 = vrot.lane.b32.xlu0 %v504, 28
    %v2260 = vpop.permute.xlu0 %2259
    %2261 = vrot.lane.b32.xlu0 %v505, 28
    %v2262 = vpop.permute.xlu0 %2261
    %2263 = vrot.lane.b32.xlu0 %v506, 28
    %v2264 = vpop.permute.xlu0 %2263
    %2265 = vrot.lane.b32.xlu0 %v507, 28
    %v2266 = vpop.permute.xlu0 %2265
    %2267 = vrot.lane.b32.xlu0 %v508, 28
    %v2268 = vpop.permute.xlu0 %2267
    %2269 = vrot.lane.b32.xlu0 %v509, 28
    %v2270 = vpop.permute.xlu0 %2269
    %2271 = vrot.lane.b32.xlu0 %v510, 28
    %v2272 = vpop.permute.xlu0 %2271
    %2273 = vrot.lane.b32.xlu0 %v511, 28
    %v2274 = vpop.permute.xlu0 %2273
    %2275 = vrot.lane.b32.xlu0 %v512, 28
    %v2276 = vpop.permute.xlu0 %2275
    %2277 = vrot.lane.b32.xlu0 %v513, 28
    %v2278 = vpop.permute.xlu0 %2277
    %2279 = vrot.lane.b32.xlu0 %v514, 28
    %v2280 = vpop.permute.xlu0 %2279
    %2281 = vrot.lane.b32.xlu0 %v515, 28
    %v2282 = vpop.permute.xlu0 %2281
    %2283 = vrot.lane.b32.xlu0 %v516, 28
    %v2284 = vpop.permute.xlu0 %2283
    %2285 = vrot.lane.b32.xlu0 %v517, 28
    %v2286 = vpop.permute.xlu0 %2285
    %2287 = vrot.lane.b32.xlu0 %v518, 28
    %v2288 = vpop.permute.xlu0 %2287
    %2289 = vrot.lane.b32.xlu0 %v519, 28
    %v2290 = vpop.permute.xlu0 %2289
    %2291 = vrot.lane.b32.xlu0 %v520, 28
    %v2292 = vpop.permute.xlu0 %2291
    %2293 = vrot.lane.b32.xlu0 %v521, 28
    %v2294 = vpop.permute.xlu0 %2293
    %2295 = vrot.lane.b32.xlu0 %v522, 28
    %v2296 = vpop.permute.xlu0 %2295
    %2297 = vrot.lane.b32.xlu0 %v523, 28
    %v2298 = vpop.permute.xlu0 %2297
    %2299 = vrot.lane.b32.xlu0 %v524, 28
    %v2300 = vpop.permute.xlu0 %2299
    %2301 = vrot.lane.b32.xlu0 %v525, 28
    %v2302 = vpop.permute.xlu0 %2301
    %2303 = vrot.lane.b32.xlu0 %v526, 28
    %v2304 = vpop.permute.xlu0 %2303
    %2305 = vrot.lane.b32.xlu0 %v527, 28
    %v2306 = vpop.permute.xlu0 %2305
    %2307 = vrot.lane.b32.xlu0 %v528, 28
    %v2308 = vpop.permute.xlu0 %2307
    %2309 = vrot.lane.b32.xlu0 %v529, 28
    %v2310 = vpop.permute.xlu0 %2309
    %2311 = vrot.lane.b32.xlu0 %v530, 28
    %v2312 = vpop.permute.xlu0 %2311
    %2313 = vrot.lane.b32.xlu0 %v531, 28
    %v2314 = vpop.permute.xlu0 %2313
    %2315 = vrot.lane.b32.xlu0 %v532, 28
    %v2316 = vpop.permute.xlu0 %2315
    %2317 = vrot.lane.b32.xlu0 %v533, 28
    %v2318 = vpop.permute.xlu0 %2317
    %2319 = vrot.lane.b32.xlu0 %v534, 28
    %v2320 = vpop.permute.xlu0 %2319
    %2321 = vrot.lane.b32.xlu0 %v535, 28
    %v2322 = vpop.permute.xlu0 %2321
    %2323 = vrot.lane.b32.xlu0 %v536, 28
    %v2324 = vpop.permute.xlu0 %2323
    %2325 = vrot.lane.b32.xlu0 %v537, 28
    %v2326 = vpop.permute.xlu0 %2325
    %2327 = vrot.lane.b32.xlu0 %v538, 28
    %v2328 = vpop.permute.xlu0 %2327
    %2329 = vrot.lane.b32.xlu0 %v539, 28
    %v2330 = vpop.permute.xlu0 %2329
    %2331 = vrot.lane.b32.xlu0 %v540, 28
    %v2332 = vpop.permute.xlu0 %2331
    %2461 = vrot.lane.b32.xlu0 %v541, 32
    %v2462 = vpop.permute.xlu0 %2461
    %2463 = vrot.lane.b32.xlu0 %v542, 32
    %v2464 = vpop.permute.xlu0 %2463
    %2465 = vrot.lane.b32.xlu0 %v543, 32
    %v2466 = vpop.permute.xlu0 %2465
    %2467 = vrot.lane.b32.xlu0 %v544, 32
    %v2468 = vpop.permute.xlu0 %2467
    %2469 = vrot.lane.b32.xlu0 %v545, 32
    %v2470 = vpop.permute.xlu0 %2469
    %2471 = vrot.lane.b32.xlu0 %v546, 32
    %v2472 = vpop.permute.xlu0 %2471
    %2473 = vrot.lane.b32.xlu0 %v547, 32
    %v2474 = vpop.permute.xlu0 %2473
    %2475 = vrot.lane.b32.xlu0 %v548, 32
    %v2476 = vpop.permute.xlu0 %2475
    %2477 = vrot.lane.b32.xlu0 %v549, 32
    %v2478 = vpop.permute.xlu0 %2477
    %2479 = vrot.lane.b32.xlu0 %v550, 32
    %v2480 = vpop.permute.xlu0 %2479
    %2481 = vrot.lane.b32.xlu0 %v551, 32
    %v2482 = vpop.permute.xlu0 %2481
    %2483 = vrot.lane.b32.xlu0 %v552, 32
    %v2484 = vpop.permute.xlu0 %2483
    %2485 = vrot.lane.b32.xlu0 %v553, 32
    %v2486 = vpop.permute.xlu0 %2485
    %2487 = vrot.lane.b32.xlu0 %v554, 32
    %v2488 = vpop.permute.xlu0 %2487
    %2489 = vrot.lane.b32.xlu0 %v555, 32
    %v2490 = vpop.permute.xlu0 %2489
    %2491 = vrot.lane.b32.xlu0 %v556, 32
    %v2492 = vpop.permute.xlu0 %2491
    %2493 = vrot.lane.b32.xlu0 %v557, 32
    %v2494 = vpop.permute.xlu0 %2493
    %2495 = vrot.lane.b32.xlu0 %v558, 32
    %v2496 = vpop.permute.xlu0 %2495
    %2497 = vrot.lane.b32.xlu0 %v559, 32
    %v2498 = vpop.permute.xlu0 %2497
    %2499 = vrot.lane.b32.xlu0 %v560, 32
    %v2500 = vpop.permute.xlu0 %2499
    %2501 = vrot.lane.b32.xlu0 %v561, 32
    %v2502 = vpop.permute.xlu0 %2501
    %2503 = vrot.lane.b32.xlu0 %v562, 32
    %v2504 = vpop.permute.xlu0 %2503
    %2505 = vrot.lane.b32.xlu0 %v563, 32
    %v2506 = vpop.permute.xlu0 %2505
    %2507 = vrot.lane.b32.xlu0 %v564, 32
    %v2508 = vpop.permute.xlu0 %2507
    %2509 = vrot.lane.b32.xlu0 %v565, 32
    %v2510 = vpop.permute.xlu0 %2509
    %2511 = vrot.lane.b32.xlu0 %v566, 32
    %v2512 = vpop.permute.xlu0 %2511
    %2513 = vrot.lane.b32.xlu0 %v567, 32
    %v2514 = vpop.permute.xlu0 %2513
    %2515 = vrot.lane.b32.xlu0 %v568, 32
    %v2516 = vpop.permute.xlu0 %2515
    %2517 = vrot.lane.b32.xlu0 %v569, 32
    %v2518 = vpop.permute.xlu0 %2517
    %2519 = vrot.lane.b32.xlu0 %v570, 32
    %v2520 = vpop.permute.xlu0 %2519
    %2521 = vrot.lane.b32.xlu0 %v571, 32
    %v2522 = vpop.permute.xlu0 %2521
    %2523 = vrot.lane.b32.xlu0 %v572, 32
    %v2524 = vpop.permute.xlu0 %2523
    %2525 = vrot.lane.b32.xlu0 %v573, 32
    %v2526 = vpop.permute.xlu0 %2525
    %2527 = vrot.lane.b32.xlu0 %v574, 32
    %v2528 = vpop.permute.xlu0 %2527
    %2529 = vrot.lane.b32.xlu0 %v575, 32
    %v2530 = vpop.permute.xlu0 %2529
    %2531 = vrot.lane.b32.xlu0 %v576, 32
    %v2532 = vpop.permute.xlu0 %2531
    %2533 = vrot.lane.b32.xlu0 %v577, 32
    %v2534 = vpop.permute.xlu0 %2533
    %2535 = vrot.lane.b32.xlu0 %v578, 32
    %v2536 = vpop.permute.xlu0 %2535
    %2537 = vrot.lane.b32.xlu0 %v579, 32
    %v2538 = vpop.permute.xlu0 %2537
    %2539 = vrot.lane.b32.xlu0 %v580, 32
    %v2540 = vpop.permute.xlu0 %2539
    %2541 = vrot.lane.b32.xlu0 %v581, 32
    %v2542 = vpop.permute.xlu0 %2541
    %2543 = vrot.lane.b32.xlu0 %v582, 32
    %v2544 = vpop.permute.xlu0 %2543
    %2545 = vrot.lane.b32.xlu0 %v583, 32
    %v2546 = vpop.permute.xlu0 %2545
    %2547 = vrot.lane.b32.xlu0 %v584, 32
    %v2548 = vpop.permute.xlu0 %2547
    %2549 = vrot.lane.b32.xlu0 %v585, 32
    %v2550 = vpop.permute.xlu0 %2549
    %2551 = vrot.lane.b32.xlu0 %v586, 32
    %v2552 = vpop.permute.xlu0 %2551
    %2553 = vrot.lane.b32.xlu0 %v587, 32
    %v2554 = vpop.permute.xlu0 %2553
    %2555 = vrot.lane.b32.xlu0 %v588, 32
    %v2556 = vpop.permute.xlu0 %2555
    %2557 = vrot.lane.b32.xlu0 %v589, 32
    %v2558 = vpop.permute.xlu0 %2557
    %2559 = vrot.lane.b32.xlu0 %v590, 32
    %v2560 = vpop.permute.xlu0 %2559
    %2561 = vrot.lane.b32.xlu0 %v591, 32
    %v2562 = vpop.permute.xlu0 %2561
    %2563 = vrot.lane.b32.xlu0 %v592, 32
    %v2564 = vpop.permute.xlu0 %2563
    %2565 = vrot.lane.b32.xlu0 %v593, 32
    %v2566 = vpop.permute.xlu0 %2565
    %2567 = vrot.lane.b32.xlu0 %v594, 32
    %v2568 = vpop.permute.xlu0 %2567
    %2569 = vrot.lane.b32.xlu0 %v595, 32
    %v2570 = vpop.permute.xlu0 %2569
    %2571 = vrot.lane.b32.xlu0 %v596, 32
    %v2572 = vpop.permute.xlu0 %2571
    %2573 = vrot.lane.b32.xlu0 %v597, 32
    %v2574 = vpop.permute.xlu0 %2573
    %2575 = vrot.lane.b32.xlu0 %v598, 32
    %v2576 = vpop.permute.xlu0 %2575
    %2577 = vrot.lane.b32.xlu0 %v599, 32
    %v2578 = vpop.permute.xlu0 %2577
    %2579 = vrot.lane.b32.xlu0 %v600, 32
    %v2580 = vpop.permute.xlu0 %2579
    %2581 = vrot.lane.b32.xlu0 %v601, 32
    %v2582 = vpop.permute.xlu0 %2581
    %2583 = vrot.lane.b32.xlu0 %v602, 32
    %v2584 = vpop.permute.xlu0 %2583
    %2585 = vrot.lane.b32.xlu0 %v603, 32
    %v2586 = vpop.permute.xlu0 %2585
    %2587 = vrot.lane.b32.xlu0 %v604, 32
    %v2588 = vpop.permute.xlu0 %2587
    %vm2653 = vcmask 31744
    %v2654 = vsel %vm2653, %v27, %v670
    %v2655 = vsel %vm2653, %v28, %v672
    %v2656 = vsel %vm2653, %v29, %v674
    %v2657 = vsel %vm2653, %v30, %v676
    %v2658 = vsel %vm2653, %v31, %v678
    %v2659 = vsel %vm2653, %v32, %v680
    %v2660 = vsel %vm2653, %v33, %v682
    %v2661 = vsel %vm2653, %v34, %v684
    %v2662 = vsel %vm2653, %v35, %v686
    %v2663 = vsel %vm2653, %v36, %v688
    %v2664 = vsel %vm2653, %v37, %v690
    %v2665 = vsel %vm2653, %v38, %v692
    %v2666 = vsel %vm2653, %v39, %v694
    %v2667 = vsel %vm2653, %v40, %v696
    %v2668 = vsel %vm2653, %v41, %v698
    %v2669 = vsel %vm2653, %v42, %v700
    %v2670 = vsel %vm2653, %v43, %v702
    %v2671 = vsel %vm2653, %v44, %v704
    %v2672 = vsel %vm2653, %v45, %v706
    %v2673 = vsel %vm2653, %v46, %v708
    %v2674 = vsel %vm2653, %v47, %v710
    %v2675 = vsel %vm2653, %v48, %v712
    %v2676 = vsel %vm2653, %v49, %v714
    %v2677 = vsel %vm2653, %v50, %v716
    %v2678 = vsel %vm2653, %v51, %v718
    %v2679 = vsel %vm2653, %v52, %v720
    %v2680 = vsel %vm2653, %v53, %v722
    %v2681 = vsel %vm2653, %v54, %v724
    %v2682 = vsel %vm2653, %v55, %v726
    %v2683 = vsel %vm2653, %v56, %v728
    %v2684 = vsel %vm2653, %v57, %v730
    %v2685 = vsel %vm2653, %v58, %v732
    %v2686 = vsel %vm2653, %v59, %v734
    %v2687 = vsel %vm2653, %v60, %v736
    %v2688 = vsel %vm2653, %v61, %v738
    %v2689 = vsel %vm2653, %v62, %v740
    %v2690 = vsel %vm2653, %v63, %v742
    %v2691 = vsel %vm2653, %v64, %v744
    %v2692 = vsel %vm2653, %v65, %v746
    %v2693 = vsel %vm2653, %v66, %v748
    %v2694 = vsel %vm2653, %v67, %v750
    %v2695 = vsel %vm2653, %v68, %v752
    %v2696 = vsel %vm2653, %v69, %v754
    %v2697 = vsel %vm2653, %v70, %v756
    %v2698 = vsel %vm2653, %v71, %v758
    %v2699 = vsel %vm2653, %v72, %v760
    %v2700 = vsel %vm2653, %v73, %v762
    %v2701 = vsel %vm2653, %v74, %v764
    %v2702 = vsel %vm2653, %v75, %v766
    %v2703 = vsel %vm2653, %v76, %v768
    %v2704 = vsel %vm2653, %v77, %v770
    %v2705 = vsel %vm2653, %v78, %v772
    %v2706 = vsel %vm2653, %v79, %v774
    %v2707 = vsel %vm2653, %v80, %v776
    %v2708 = vsel %vm2653, %v81, %v778
    %v2709 = vsel %vm2653, %v82, %v780
    %v2710 = vsel %vm2653, %v83, %v782
    %v2711 = vsel %vm2653, %v84, %v784
    %v2712 = vsel %vm2653, %v85, %v786
    %v2713 = vsel %vm2653, %v86, %v788
    %v2714 = vsel %vm2653, %v87, %v790
    %v2715 = vsel %vm2653, %v88, %v792
    %v2716 = vsel %vm2653, %v89, %v794
    %v2717 = vsel %vm2653, %v90, %v796
    %vm2718 = vcmask 64512
    %v2719 = vsel %vm2718, %v2654, %v926
    %v2720 = vsel %vm2718, %v2655, %v928
    %v2721 = vsel %vm2718, %v2656, %v930
    %v2722 = vsel %vm2718, %v2657, %v932
    %v2723 = vsel %vm2718, %v2658, %v934
    %v2724 = vsel %vm2718, %v2659, %v936
    %v2725 = vsel %vm2718, %v2660, %v938
    %v2726 = vsel %vm2718, %v2661, %v940
    %v2727 = vsel %vm2718, %v2662, %v942
    %v2728 = vsel %vm2718, %v2663, %v944
    %v2729 = vsel %vm2718, %v2664, %v946
    %v2730 = vsel %vm2718, %v2665, %v948
    %v2731 = vsel %vm2718, %v2666, %v950
    %v2732 = vsel %vm2718, %v2667, %v952
    %v2733 = vsel %vm2718, %v2668, %v954
    %v2734 = vsel %vm2718, %v2669, %v956
    %v2735 = vsel %vm2718, %v2670, %v958
    %v2736 = vsel %vm2718, %v2671, %v960
    %v2737 = vsel %vm2718, %v2672, %v962
    %v2738 = vsel %vm2718, %v2673, %v964
    %v2739 = vsel %vm2718, %v2674, %v966
    %v2740 = vsel %vm2718, %v2675, %v968
    %v2741 = vsel %vm2718, %v2676, %v970
    %v2742 = vsel %vm2718, %v2677, %v972
    %v2743 = vsel %vm2718, %v2678, %v974
    %v2744 = vsel %vm2718, %v2679, %v976
    %v2745 = vsel %vm2718, %v2680, %v978
    %v2746 = vsel %vm2718, %v2681, %v980
    %v2747 = vsel %vm2718, %v2682, %v982
    %v2748 = vsel %vm2718, %v2683, %v984
    %v2749 = vsel %vm2718, %v2684, %v986
    %v2750 = vsel %vm2718, %v2685, %v988
    %v2751 = vsel %vm2718, %v2686, %v990
    %v2752 = vsel %vm2718, %v2687, %v992
    %v2753 = vsel %vm2718, %v2688, %v994
    %v2754 = vsel %vm2718, %v2689, %v996
    %v2755 = vsel %vm2718, %v2690, %v998
    %v2756 = vsel %vm2718, %v2691, %v1000
    %v2757 = vsel %vm2718, %v2692, %v1002
    %v2758 = vsel %vm2718, %v2693, %v1004
    %v2759 = vsel %vm2718, %v2694, %v1006
    %v2760 = vsel %vm2718, %v2695, %v1008
    %v2761 = vsel %vm2718, %v2696, %v1010
    %v2762 = vsel %vm2718, %v2697, %v1012
    %v2763 = vsel %vm2718, %v2698, %v1014
    %v2764 = vsel %vm2718, %v2699, %v1016
    %v2765 = vsel %vm2718, %v2700, %v1018
    %v2766 = vsel %vm2718, %v2701, %v1020
    %v2767 = vsel %vm2718, %v2702, %v1022
    %v2768 = vsel %vm2718, %v2703, %v1024
    %v2769 = vsel %vm2718, %v2704, %v1026
    %v2770 = vsel %vm2718, %v2705, %v1028
    %v2771 = vsel %vm2718, %v2706, %v1030
    %v2772 = vsel %vm2718, %v2707, %v1032
    %v2773 = vsel %vm2718, %v2708, %v1034
    %v2774 = vsel %vm2718, %v2709, %v1036
    %v2775 = vsel %vm2718, %v2710, %v1038
    %v2776 = vsel %vm2718, %v2711, %v1040
    %v2777 = vsel %vm2718, %v2712, %v1042
    %v2778 = vsel %vm2718, %v2713, %v1044
    %v2779 = vsel %vm2718, %v2714, %v1046
    %v2780 = vsel %vm2718, %v2715, %v1048
    %v2781 = vsel %vm2718, %v2716, %v1050
    %v2782 = vsel %vm2718, %v2717, %v1052
    %vm2783 = vcmask 97280
    %v2784 = vsel %vm2783, %v2719, %v1182
    %v2785 = vsel %vm2783, %v2720, %v1184
    %v2786 = vsel %vm2783, %v2721, %v1186
    %v2787 = vsel %vm2783, %v2722, %v1188
    %v2788 = vsel %vm2783, %v2723, %v1190
    %v2789 = vsel %vm2783, %v2724, %v1192
    %v2790 = vsel %vm2783, %v2725, %v1194
    %v2791 = vsel %vm2783, %v2726, %v1196
    %v2792 = vsel %vm2783, %v2727, %v1198
    %v2793 = vsel %vm2783, %v2728, %v1200
    %v2794 = vsel %vm2783, %v2729, %v1202
    %v2795 = vsel %vm2783, %v2730, %v1204
    %v2796 = vsel %vm2783, %v2731, %v1206
    %v2797 = vsel %vm2783, %v2732, %v1208
    %v2798 = vsel %vm2783, %v2733, %v1210
    %v2799 = vsel %vm2783, %v2734, %v1212
    %v2800 = vsel %vm2783, %v2735, %v1214
    %v2801 = vsel %vm2783, %v2736, %v1216
    %v2802 = vsel %vm2783, %v2737, %v1218
    %v2803 = vsel %vm2783, %v2738, %v1220
    %v2804 = vsel %vm2783, %v2739, %v1222
    %v2805 = vsel %vm2783, %v2740, %v1224
    %v2806 = vsel %vm2783, %v2741, %v1226
    %v2807 = vsel %vm2783, %v2742, %v1228
    %v2808 = vsel %vm2783, %v2743, %v1230
    %v2809 = vsel %vm2783, %v2744, %v1232
    %v2810 = vsel %vm2783, %v2745, %v1234
    %v2811 = vsel %vm2783, %v2746, %v1236
    %v2812 = vsel %vm2783, %v2747, %v1238
    %v2813 = vsel %vm2783, %v2748, %v1240
    %v2814 = vsel %vm2783, %v2749, %v1242
    %v2815 = vsel %vm2783, %v2750, %v1244
    %v2816 = vsel %vm2783, %v2751, %v1246
    %v2817 = vsel %vm2783, %v2752, %v1248
    %v2818 = vsel %vm2783, %v2753, %v1250
    %v2819 = vsel %vm2783, %v2754, %v1252
    %v2820 = vsel %vm2783, %v2755, %v1254
    %v2821 = vsel %vm2783, %v2756, %v1256
    %v2822 = vsel %vm2783, %v2757, %v1258
    %v2823 = vsel %vm2783, %v2758, %v1260
    %v2824 = vsel %vm2783, %v2759, %v1262
    %v2825 = vsel %vm2783, %v2760, %v1264
    %v2826 = vsel %vm2783, %v2761, %v1266
    %v2827 = vsel %vm2783, %v2762, %v1268
    %v2828 = vsel %vm2783, %v2763, %v1270
    %v2829 = vsel %vm2783, %v2764, %v1272
    %v2830 = vsel %vm2783, %v2765, %v1274
    %v2831 = vsel %vm2783, %v2766, %v1276
    %v2832 = vsel %vm2783, %v2767, %v1278
    %v2833 = vsel %vm2783, %v2768, %v1280
    %v2834 = vsel %vm2783, %v2769, %v1282
    %v2835 = vsel %vm2783, %v2770, %v1284
    %v2836 = vsel %vm2783, %v2771, %v1286
    %v2837 = vsel %vm2783, %v2772, %v1288
    %v2838 = vsel %vm2783, %v2773, %v1290
    %v2839 = vsel %vm2783, %v2774, %v1292
    %v2840 = vsel %vm2783, %v2775, %v1294
    %v2841 = vsel %vm2783, %v2776, %v1296
    %v2842 = vsel %vm2783, %v2777, %v1298
    %v2843 = vsel %vm2783, %v2778, %v1300
    %v2844 = vsel %vm2783, %v2779, %v1302
    %v2845 = vsel %vm2783, %v2780, %v1304
    %v2846 = vsel %vm2783, %v2781, %v1306
    %v2847 = vsel %vm2783, %v2782, %v1308
    %vm2848 = vcmask 130048
    %v2849 = vsel %vm2848, %v2784, %v1438
    %v2850 = vsel %vm2848, %v2785, %v1440
    %v2851 = vsel %vm2848, %v2786, %v1442
    %v2852 = vsel %vm2848, %v2787, %v1444
    %v2853 = vsel %vm2848, %v2788, %v1446
    %v2854 = vsel %vm2848, %v2789, %v1448
    %v2855 = vsel %vm2848, %v2790, %v1450
    %v2856 = vsel %vm2848, %v2791, %v1452
    %v2857 = vsel %vm2848, %v2792, %v1454
    %v2858 = vsel %vm2848, %v2793, %v1456
    %v2859 = vsel %vm2848, %v2794, %v1458
    %v2860 = vsel %vm2848, %v2795, %v1460
    %v2861 = vsel %vm2848, %v2796, %v1462
    %v2862 = vsel %vm2848, %v2797, %v1464
    %v2863 = vsel %vm2848, %v2798, %v1466
    %v2864 = vsel %vm2848, %v2799, %v1468
    %v2865 = vsel %vm2848, %v2800, %v1470
    %v2866 = vsel %vm2848, %v2801, %v1472
    %v2867 = vsel %vm2848, %v2802, %v1474
    %v2868 = vsel %vm2848, %v2803, %v1476
    %v2869 = vsel %vm2848, %v2804, %v1478
    %v2870 = vsel %vm2848, %v2805, %v1480
    %v2871 = vsel %vm2848, %v2806, %v1482
    %v2872 = vsel %vm2848, %v2807, %v1484
    %v2873 = vsel %vm2848, %v2808, %v1486
    %v2874 = vsel %vm2848, %v2809, %v1488
    %v2875 = vsel %vm2848, %v2810, %v1490
    %v2876 = vsel %vm2848, %v2811, %v1492
    %v2877 = vsel %vm2848, %v2812, %v1494
    %v2878 = vsel %vm2848, %v2813, %v1496
    %v2879 = vsel %vm2848, %v2814, %v1498
    %v2880 = vsel %vm2848, %v2815, %v1500
    %v2881 = vsel %vm2848, %v2816, %v1502
    %v2882 = vsel %vm2848, %v2817, %v1504
    %v2883 = vsel %vm2848, %v2818, %v1506
    %v2884 = vsel %vm2848, %v2819, %v1508
    %v2885 = vsel %vm2848, %v2820, %v1510
    %v2886 = vsel %vm2848, %v2821, %v1512
    %v2887 = vsel %vm2848, %v2822, %v1514
    %v2888 = vsel %vm2848, %v2823, %v1516
    %v2889 = vsel %vm2848, %v2824, %v1518
    %v2890 = vsel %vm2848, %v2825, %v1520
    %v2891 = vsel %vm2848, %v2826, %v1522
    %v2892 = vsel %vm2848, %v2827, %v1524
    %v2893 = vsel %vm2848, %v2828, %v1526
    %v2894 = vsel %vm2848, %v2829, %v1528
    %v2895 = vsel %vm2848, %v2830, %v1530
    %v2896 = vsel %vm2848, %v2831, %v1532
    %v2897 = vsel %vm2848, %v2832, %v1534
    %v2898 = vsel %vm2848, %v2833, %v1536
    %v2899 = vsel %vm2848, %v2834, %v1538
    %v2900 = vsel %vm2848, %v2835, %v1540
    %v2901 = vsel %vm2848, %v2836, %v1542
    %v2902 = vsel %vm2848, %v2837, %v1544
    %v2903 = vsel %vm2848, %v2838, %v1546
    %v2904 = vsel %vm2848, %v2839, %v1548
    %v2905 = vsel %vm2848, %v2840, %v1550
    %v2906 = vsel %vm2848, %v2841, %v1552
    %v2907 = vsel %vm2848, %v2842, %v1554
    %v2908 = vsel %vm2848, %v2843, %v1556
    %v2909 = vsel %vm2848, %v2844, %v1558
    %v2910 = vsel %vm2848, %v2845, %v1560
    %v2911 = vsel %vm2848, %v2846, %v1562
    %v2912 = vsel %vm2848, %v2847, %v1564
    %vm2913 = vcmask 162816
    %v2914 = vsel %vm2913, %v2849, %v1694
    %v2915 = vsel %vm2913, %v2850, %v1696
    %v2916 = vsel %vm2913, %v2851, %v1698
    %v2917 = vsel %vm2913, %v2852, %v1700
    %v2918 = vsel %vm2913, %v2853, %v1702
    %v2919 = vsel %vm2913, %v2854, %v1704
    %v2920 = vsel %vm2913, %v2855, %v1706
    %v2921 = vsel %vm2913, %v2856, %v1708
    %v2922 = vsel %vm2913, %v2857, %v1710
    %v2923 = vsel %vm2913, %v2858, %v1712
    %v2924 = vsel %vm2913, %v2859, %v1714
    %v2925 = vsel %vm2913, %v2860, %v1716
    %v2926 = vsel %vm2913, %v2861, %v1718
    %v2927 = vsel %vm2913, %v2862, %v1720
    %v2928 = vsel %vm2913, %v2863, %v1722
    %v2929 = vsel %vm2913, %v2864, %v1724
    %v2930 = vsel %vm2913, %v2865, %v1726
    %v2931 = vsel %vm2913, %v2866, %v1728
    %v2932 = vsel %vm2913, %v2867, %v1730
    %v2933 = vsel %vm2913, %v2868, %v1732
    %v2934 = vsel %vm2913, %v2869, %v1734
    %v2935 = vsel %vm2913, %v2870, %v1736
    %v2936 = vsel %vm2913, %v2871, %v1738
    %v2937 = vsel %vm2913, %v2872, %v1740
    %v2938 = vsel %vm2913, %v2873, %v1742
    %v2939 = vsel %vm2913, %v2874, %v1744
    %v2940 = vsel %vm2913, %v2875, %v1746
    %v2941 = vsel %vm2913, %v2876, %v1748
    %v2942 = vsel %vm2913, %v2877, %v1750
    %v2943 = vsel %vm2913, %v2878, %v1752
    %v2944 = vsel %vm2913, %v2879, %v1754
    %v2945 = vsel %vm2913, %v2880, %v1756
    %v2946 = vsel %vm2913, %v2881, %v1758
    %v2947 = vsel %vm2913, %v2882, %v1760
    %v2948 = vsel %vm2913, %v2883, %v1762
    %v2949 = vsel %vm2913, %v2884, %v1764
    %v2950 = vsel %vm2913, %v2885, %v1766
    %v2951 = vsel %vm2913, %v2886, %v1768
    %v2952 = vsel %vm2913, %v2887, %v1770
    %v2953 = vsel %vm2913, %v2888, %v1772
    %v2954 = vsel %vm2913, %v2889, %v1774
    %v2955 = vsel %vm2913, %v2890, %v1776
    %v2956 = vsel %vm2913, %v2891, %v1778
    %v2957 = vsel %vm2913, %v2892, %v1780
    %v2958 = vsel %vm2913, %v2893, %v1782
    %v2959 = vsel %vm2913, %v2894, %v1784
    %v2960 = vsel %vm2913, %v2895, %v1786
    %v2961 = vsel %vm2913, %v2896, %v1788
    %v2962 = vsel %vm2913, %v2897, %v1790
    %v2963 = vsel %vm2913, %v2898, %v1792
    %v2964 = vsel %vm2913, %v2899, %v1794
    %v2965 = vsel %vm2913, %v2900, %v1796
    %v2966 = vsel %vm2913, %v2901, %v1798
    %v2967 = vsel %vm2913, %v2902, %v1800
    %v2968 = vsel %vm2913, %v2903, %v1802
    %v2969 = vsel %vm2913, %v2904, %v1804
    %v2970 = vsel %vm2913, %v2905, %v1806
    %v2971 = vsel %vm2913, %v2906, %v1808
    %v2972 = vsel %vm2913, %v2907, %v1810
    %v2973 = vsel %vm2913, %v2908, %v1812
    %v2974 = vsel %vm2913, %v2909, %v1814
    %v2975 = vsel %vm2913, %v2910, %v1816
    %v2976 = vsel %vm2913, %v2911, %v1818
    %v2977 = vsel %vm2913, %v2912, %v1820
    %vm2978 = vcmask 195584
    %v2979 = vsel %vm2978, %v2914, %v1950
    %v2980 = vsel %vm2978, %v2915, %v1952
    %v2981 = vsel %vm2978, %v2916, %v1954
    %v2982 = vsel %vm2978, %v2917, %v1956
    %v2983 = vsel %vm2978, %v2918, %v1958
    %v2984 = vsel %vm2978, %v2919, %v1960
    %v2985 = vsel %vm2978, %v2920, %v1962
    %v2986 = vsel %vm2978, %v2921, %v1964
    %v2987 = vsel %vm2978, %v2922, %v1966
    %v2988 = vsel %vm2978, %v2923, %v1968
    %v2989 = vsel %vm2978, %v2924, %v1970
    %v2990 = vsel %vm2978, %v2925, %v1972
    %v2991 = vsel %vm2978, %v2926, %v1974
    %v2992 = vsel %vm2978, %v2927, %v1976
    %v2993 = vsel %vm2978, %v2928, %v1978
    %v2994 = vsel %vm2978, %v2929, %v1980
    %v2995 = vsel %vm2978, %v2930, %v1982
    %v2996 = vsel %vm2978, %v2931, %v1984
    %v2997 = vsel %vm2978, %v2932, %v1986
    %v2998 = vsel %vm2978, %v2933, %v1988
    %v2999 = vsel %vm2978, %v2934, %v1990
    %v3000 = vsel %vm2978, %v2935, %v1992
    %v3001 = vsel %vm2978, %v2936, %v1994
    %v3002 = vsel %vm2978, %v2937, %v1996
    %v3003 = vsel %vm2978, %v2938, %v1998
    %v3004 = vsel %vm2978, %v2939, %v2000
    %v3005 = vsel %vm2978, %v2940, %v2002
    %v3006 = vsel %vm2978, %v2941, %v2004
    %v3007 = vsel %vm2978, %v2942, %v2006
    %v3008 = vsel %vm2978, %v2943, %v2008
    %v3009 = vsel %vm2978, %v2944, %v2010
    %v3010 = vsel %vm2978, %v2945, %v2012
    %v3011 = vsel %vm2978, %v2946, %v2014
    %v3012 = vsel %vm2978, %v2947, %v2016
    %v3013 = vsel %vm2978, %v2948, %v2018
    %v3014 = vsel %vm2978, %v2949, %v2020
    %v3015 = vsel %vm2978, %v2950, %v2022
    %v3016 = vsel %vm2978, %v2951, %v2024
    %v3017 = vsel %vm2978, %v2952, %v2026
    %v3018 = vsel %vm2978, %v2953, %v2028
    %v3019 = vsel %vm2978, %v2954, %v2030
    %v3020 = vsel %vm2978, %v2955, %v2032
    %v3021 = vsel %vm2978, %v2956, %v2034
    %v3022 = vsel %vm2978, %v2957, %v2036
    %v3023 = vsel %vm2978, %v2958, %v2038
    %v3024 = vsel %vm2978, %v2959, %v2040
    %v3025 = vsel %vm2978, %v2960, %v2042
    %v3026 = vsel %vm2978, %v2961, %v2044
    %v3027 = vsel %vm2978, %v2962, %v2046
    %v3028 = vsel %vm2978, %v2963, %v2048
    %v3029 = vsel %vm2978, %v2964, %v2050
    %v3030 = vsel %vm2978, %v2965, %v2052
    %v3031 = vsel %vm2978, %v2966, %v2054
    %v3032 = vsel %vm2978, %v2967, %v2056
    %v3033 = vsel %vm2978, %v2968, %v2058
    %v3034 = vsel %vm2978, %v2969, %v2060
    %v3035 = vsel %vm2978, %v2970, %v2062
    %v3036 = vsel %vm2978, %v2971, %v2064
    %v3037 = vsel %vm2978, %v2972, %v2066
    %v3038 = vsel %vm2978, %v2973, %v2068
    %v3039 = vsel %vm2978, %v2974, %v2070
    %v3040 = vsel %vm2978, %v2975, %v2072
    %v3041 = vsel %vm2978, %v2976, %v2074
    %v3042 = vsel %vm2978, %v2977, %v2076
    %vm3043 = vcmask 228352
    %v3044 = vsel %vm3043, %v2979, %v2206
    %v3045 = vsel %vm3043, %v2980, %v2208
    %v3046 = vsel %vm3043, %v2981, %v2210
    %v3047 = vsel %vm3043, %v2982, %v2212
    %v3048 = vsel %vm3043, %v2983, %v2214
    %v3049 = vsel %vm3043, %v2984, %v2216
    %v3050 = vsel %vm3043, %v2985, %v2218
    %v3051 = vsel %vm3043, %v2986, %v2220
    %v3052 = vsel %vm3043, %v2987, %v2222
    %v3053 = vsel %vm3043, %v2988, %v2224
    %v3054 = vsel %vm3043, %v2989, %v2226
    %v3055 = vsel %vm3043, %v2990, %v2228
    %v3056 = vsel %vm3043, %v2991, %v2230
    %v3057 = vsel %vm3043, %v2992, %v2232
    %v3058 = vsel %vm3043, %v2993, %v2234
    %v3059 = vsel %vm3043, %v2994, %v2236
    %v3060 = vsel %vm3043, %v2995, %v2238
    %v3061 = vsel %vm3043, %v2996, %v2240
    %v3062 = vsel %vm3043, %v2997, %v2242
    %v3063 = vsel %vm3043, %v2998, %v2244
    %v3064 = vsel %vm3043, %v2999, %v2246
    %v3065 = vsel %vm3043, %v3000, %v2248
    %v3066 = vsel %vm3043, %v3001, %v2250
    %v3067 = vsel %vm3043, %v3002, %v2252
    %v3068 = vsel %vm3043, %v3003, %v2254
    %v3069 = vsel %vm3043, %v3004, %v2256
    %v3070 = vsel %vm3043, %v3005, %v2258
    %v3071 = vsel %vm3043, %v3006, %v2260
    %v3072 = vsel %vm3043, %v3007, %v2262
    %v3073 = vsel %vm3043, %v3008, %v2264
    %v3074 = vsel %vm3043, %v3009, %v2266
    %v3075 = vsel %vm3043, %v3010, %v2268
    %v3076 = vsel %vm3043, %v3011, %v2270
    %v3077 = vsel %vm3043, %v3012, %v2272
    %v3078 = vsel %vm3043, %v3013, %v2274
    %v3079 = vsel %vm3043, %v3014, %v2276
    %v3080 = vsel %vm3043, %v3015, %v2278
    %v3081 = vsel %vm3043, %v3016, %v2280
    %v3082 = vsel %vm3043, %v3017, %v2282
    %v3083 = vsel %vm3043, %v3018, %v2284
    %v3084 = vsel %vm3043, %v3019, %v2286
    %v3085 = vsel %vm3043, %v3020, %v2288
    %v3086 = vsel %vm3043, %v3021, %v2290
    %v3087 = vsel %vm3043, %v3022, %v2292
    %v3088 = vsel %vm3043, %v3023, %v2294
    %v3089 = vsel %vm3043, %v3024, %v2296
    %v3090 = vsel %vm3043, %v3025, %v2298
    %v3091 = vsel %vm3043, %v3026, %v2300
    %v3092 = vsel %vm3043, %v3027, %v2302
    %v3093 = vsel %vm3043, %v3028, %v2304
    %v3094 = vsel %vm3043, %v3029, %v2306
    %v3095 = vsel %vm3043, %v3030, %v2308
    %v3096 = vsel %vm3043, %v3031, %v2310
    %v3097 = vsel %vm3043, %v3032, %v2312
    %v3098 = vsel %vm3043, %v3033, %v2314
    %v3099 = vsel %vm3043, %v3034, %v2316
    %v3100 = vsel %vm3043, %v3035, %v2318
    %v3101 = vsel %vm3043, %v3036, %v2320
    %v3102 = vsel %vm3043, %v3037, %v2322
    %v3103 = vsel %vm3043, %v3038, %v2324
    %v3104 = vsel %vm3043, %v3039, %v2326
    %v3105 = vsel %vm3043, %v3040, %v2328
    %v3106 = vsel %vm3043, %v3041, %v2330
    %v3107 = vsel %vm3043, %v3042, %v2332
    %vm3108 = vcmask 261120
    %v3109 = vsel %vm3108, %v3044, %v2462
    %v3110 = vsel %vm3108, %v3045, %v2464
    %v3111 = vsel %vm3108, %v3046, %v2466
    %v3112 = vsel %vm3108, %v3047, %v2468
    %v3113 = vsel %vm3108, %v3048, %v2470
    %v3114 = vsel %vm3108, %v3049, %v2472
    %v3115 = vsel %vm3108, %v3050, %v2474
    %v3116 = vsel %vm3108, %v3051, %v2476
    %v3117 = vsel %vm3108, %v3052, %v2478
    %v3118 = vsel %vm3108, %v3053, %v2480
    %v3119 = vsel %vm3108, %v3054, %v2482
    %v3120 = vsel %vm3108, %v3055, %v2484
    %v3121 = vsel %vm3108, %v3056, %v2486
    %v3122 = vsel %vm3108, %v3057, %v2488
    %v3123 = vsel %vm3108, %v3058, %v2490
    %v3124 = vsel %vm3108, %v3059, %v2492
    %v3125 = vsel %vm3108, %v3060, %v2494
    %v3126 = vsel %vm3108, %v3061, %v2496
    %v3127 = vsel %vm3108, %v3062, %v2498
    %v3128 = vsel %vm3108, %v3063, %v2500
    %v3129 = vsel %vm3108, %v3064, %v2502
    %v3130 = vsel %vm3108, %v3065, %v2504
    %v3131 = vsel %vm3108, %v3066, %v2506
    %v3132 = vsel %vm3108, %v3067, %v2508
    %v3133 = vsel %vm3108, %v3068, %v2510
    %v3134 = vsel %vm3108, %v3069, %v2512
    %v3135 = vsel %vm3108, %v3070, %v2514
    %v3136 = vsel %vm3108, %v3071, %v2516
    %v3137 = vsel %vm3108, %v3072, %v2518
    %v3138 = vsel %vm3108, %v3073, %v2520
    %v3139 = vsel %vm3108, %v3074, %v2522
    %v3140 = vsel %vm3108, %v3075, %v2524
    %v3141 = vsel %vm3108, %v3076, %v2526
    %v3142 = vsel %vm3108, %v3077, %v2528
    %v3143 = vsel %vm3108, %v3078, %v2530
    %v3144 = vsel %vm3108, %v3079, %v2532
    %v3145 = vsel %vm3108, %v3080, %v2534
    %v3146 = vsel %vm3108, %v3081, %v2536
    %v3147 = vsel %vm3108, %v3082, %v2538
    %v3148 = vsel %vm3108, %v3083, %v2540
    %v3149 = vsel %vm3108, %v3084, %v2542
    %v3150 = vsel %vm3108, %v3085, %v2544
    %v3151 = vsel %vm3108, %v3086, %v2546
    %v3152 = vsel %vm3108, %v3087, %v2548
    %v3153 = vsel %vm3108, %v3088, %v2550
    %v3154 = vsel %vm3108, %v3089, %v2552
    %v3155 = vsel %vm3108, %v3090, %v2554
    %v3156 = vsel %vm3108, %v3091, %v2556
    %v3157 = vsel %vm3108, %v3092, %v2558
    %v3158 = vsel %vm3108, %v3093, %v2560
    %v3159 = vsel %vm3108, %v3094, %v2562
    %v3160 = vsel %vm3108, %v3095, %v2564
    %v3161 = vsel %vm3108, %v3096, %v2566
    %v3162 = vsel %vm3108, %v3097, %v2568
    %v3163 = vsel %vm3108, %v3098, %v2570
    %v3164 = vsel %vm3108, %v3099, %v2572
    %v3165 = vsel %vm3108, %v3100, %v2574
    %v3166 = vsel %vm3108, %v3101, %v2576
    %v3167 = vsel %vm3108, %v3102, %v2578
    %v3168 = vsel %vm3108, %v3103, %v2580
    %v3169 = vsel %vm3108, %v3104, %v2582
    %v3170 = vsel %vm3108, %v3105, %v2584
    %v3171 = vsel %vm3108, %v3106, %v2586
    %v3172 = vsel %vm3108, %v3107, %v2588
    %v3173 = vld [vmem:[%s1] sm:$0xff]
    %v3174 = vld [vmem:[%s1 + $0x8] sm:$0xff]
    %v3175 = vld [vmem:[%s1 + $0x10] sm:$0xff]
    %v3176 = vld [vmem:[%s1 + $0x18] sm:$0xff]
    %v3177 = vld [vmem:[%s1 + $0x20] sm:$0xf]
    %vm3178 = vcmask 293888
    %v3180 = vsel %vm3178, %v3109, 0
    %v3183 = vsel %vm3178, %v3110, 0
    %v3186 = vsel %vm3178, %v3111, 0
    %v3189 = vsel %vm3178, %v3112, 0
    %v3192 = vsel %vm3178, %v3113, 0
    %v3195 = vsel %vm3178, %v3114, 0
    %v3198 = vsel %vm3178, %v3115, 0
    %v3201 = vsel %vm3178, %v3116, 0
    %v3204 = vsel %vm3178, %v3117, 0
    %v3207 = vsel %vm3178, %v3118, 0
    %v3210 = vsel %vm3178, %v3119, 0
    %v3213 = vsel %vm3178, %v3120, 0
    %v3216 = vsel %vm3178, %v3121, 0
    %v3219 = vsel %vm3178, %v3122, 0
    %v3222 = vsel %vm3178, %v3123, 0
    %v3225 = vsel %vm3178, %v3124, 0
    %v3228 = vsel %vm3178, %v3125, 0
    %v3231 = vsel %vm3178, %v3126, 0
    %v3234 = vsel %vm3178, %v3127, 0
    %v3237 = vsel %vm3178, %v3128, 0
    %v3240 = vsel %vm3178, %v3129, 0
    %v3243 = vsel %vm3178, %v3130, 0
    %v3246 = vsel %vm3178, %v3131, 0
    %v3249 = vsel %vm3178, %v3132, 0
    %v3252 = vsel %vm3178, %v3133, 0
    %v3255 = vsel %vm3178, %v3134, 0
    %v3258 = vsel %vm3178, %v3135, 0
    %v3261 = vsel %vm3178, %v3136, 0
    %v3264 = vsel %vm3178, %v3137, 0
    %v3267 = vsel %vm3178, %v3138, 0
    %v3270 = vsel %vm3178, %v3139, 0
    %v3273 = vsel %vm3178, %v3140, 0
    %v3276 = vsel %vm3178, %v3141, 0
    %v3279 = vsel %vm3178, %v3142, 0
    %v3282 = vsel %vm3178, %v3143, 0
    %v3285 = vsel %vm3178, %v3144, 0
    %v3288 = vsel %vm3178, %v3145, 0
    %v3291 = vsel %vm3178, %v3146, 0
    %v3294 = vsel %vm3178, %v3147, 0
    %v3297 = vsel %vm3178, %v3148, 0
    %v3300 = vsel %vm3178, %v3149, 0
    %v3303 = vsel %vm3178, %v3150, 0
    %v3306 = vsel %vm3178, %v3151, 0
    %v3309 = vsel %vm3178, %v3152, 0
    %v3312 = vsel %vm3178, %v3153, 0
    %v3315 = vsel %vm3178, %v3154, 0
    %v3318 = vsel %vm3178, %v3155, 0
    %v3321 = vsel %vm3178, %v3156, 0
    %v3324 = vsel %vm3178, %v3157, 0
    %v3327 = vsel %vm3178, %v3158, 0
    %v3330 = vsel %vm3178, %v3159, 0
    %v3333 = vsel %vm3178, %v3160, 0
    %v3336 = vsel %vm3178, %v3161, 0
    %v3339 = vsel %vm3178, %v3162, 0
    %v3342 = vsel %vm3178, %v3163, 0
    %v3345 = vsel %vm3178, %v3164, 0
    %v3348 = vsel %vm3178, %v3165, 0
    %v3351 = vsel %vm3178, %v3166, 0
    %v3354 = vsel %vm3178, %v3167, 0
    %v3357 = vsel %vm3178, %v3168, 0
    %v3360 = vsel %vm3178, %v3169, 0
    %v3363 = vsel %vm3178, %v3170, 0
    %v3366 = vsel %vm3178, %v3171, 0
    %v3369 = vsel %vm3178, %v3172, 0
    %vm3371 = vcmask 1043456
    %v3373 = vsel %vm3371, %v3177, 0
    %3375 = vmatpush.msra.mxu0 0.0
    %3376 = vmatpush.msra.mxu0 0.0
    %3377 = vmatpush.msra.mxu0 0.0
    %3378 = vmatpush.msra.mxu0 0.0
    %3379 = vmatpush.msra.mxu0 0.0
    %3380 = vmatpush.msra.mxu0 0.0
    %3381 = vmatpush.msra.mxu0 0.0
    %3382 = vmatpush.msra.mxu0 0.0
    %3383 = vmatpush.msra.mxu0 0.0
    %3384 = vmatpush.msra.mxu0 0.0
    %3385 = vmatpush.msra.mxu0 0.0
    %3386 = vmatpush.msra.mxu0 %v3373
    %3387 = vmatpush.msra.mxu0 %v3176
    %3388 = vmatpush.msra.mxu0 %v3175
    %3389 = vmatpush.msra.mxu0 %v3174
    %3390 = vmatpush.msra.mxu0 %v3173
    %3391 = vmatmul.f32.gmra.mxu0 %v3180
    %v3392 = vpop.f32.mrf.mxu0
    %v3393 = vadd.f32 0.0, %v3392
    %3394 = vmatmul.f32.gmra.mxu0 %v3183
    %v3395 = vpop.f32.mrf.mxu0
    %v3396 = vadd.f32 0.0, %v3395
    %3397 = vmatmul.f32.gmra.mxu0 %v3186
    %v3398 = vpop.f32.mrf.mxu0
    %v3399 = vadd.f32 0.0, %v3398
    %3400 = vmatmul.f32.gmra.mxu0 %v3189
    %v3401 = vpop.f32.mrf.mxu0
    %v3402 = vadd.f32 0.0, %v3401
    %3403 = vmatmul.f32.gmra.mxu0 %v3192
    %v3404 = vpop.f32.mrf.mxu0
    %v3405 = vadd.f32 0.0, %v3404
    %3406 = vmatmul.f32.gmra.mxu0 %v3195
    %v3407 = vpop.f32.mrf.mxu0
    %v3408 = vadd.f32 0.0, %v3407
    %3409 = vmatmul.f32.gmra.mxu0 %v3198
    %v3410 = vpop.f32.mrf.mxu0
    %v3411 = vadd.f32 0.0, %v3410
    %3412 = vmatmul.f32.gmra.mxu0 %v3201
    %v3413 = vpop.f32.mrf.mxu0
    %v3414 = vadd.f32 0.0, %v3413
    %3415 = vmatmul.f32.gmra.mxu0 %v3204
    %v3416 = vpop.f32.mrf.mxu0
    %v3417 = vadd.f32 0.0, %v3416
    %3418 = vmatmul.f32.gmra.mxu0 %v3207
    %v3419 = vpop.f32.mrf.mxu0
    %v3420 = vadd.f32 0.0, %v3419
    %3421 = vmatmul.f32.gmra.mxu0 %v3210
    %v3422 = vpop.f32.mrf.mxu0
    %v3423 = vadd.f32 0.0, %v3422
    %3424 = vmatmul.f32.gmra.mxu0 %v3213
    %v3425 = vpop.f32.mrf.mxu0
    %v3426 = vadd.f32 0.0, %v3425
    %3427 = vmatmul.f32.gmra.mxu0 %v3216
    %v3428 = vpop.f32.mrf.mxu0
    %v3429 = vadd.f32 0.0, %v3428
    %3430 = vmatmul.f32.gmra.mxu0 %v3219
    %v3431 = vpop.f32.mrf.mxu0
    %v3432 = vadd.f32 0.0, %v3431
    %3433 = vmatmul.f32.gmra.mxu0 %v3222
    %v3434 = vpop.f32.mrf.mxu0
    %v3435 = vadd.f32 0.0, %v3434
    %3436 = vmatmul.f32.gmra.mxu0 %v3225
    %v3437 = vpop.f32.mrf.mxu0
    %v3438 = vadd.f32 0.0, %v3437
    %3439 = vmatmul.f32.gmra.mxu0 %v3228
    %v3440 = vpop.f32.mrf.mxu0
    %v3441 = vadd.f32 0.0, %v3440
    %3442 = vmatmul.f32.gmra.mxu0 %v3231
    %v3443 = vpop.f32.mrf.mxu0
    %v3444 = vadd.f32 0.0, %v3443
    %3445 = vmatmul.f32.gmra.mxu0 %v3234
    %v3446 = vpop.f32.mrf.mxu0
    %v3447 = vadd.f32 0.0, %v3446
    %3448 = vmatmul.f32.gmra.mxu0 %v3237
    %v3449 = vpop.f32.mrf.mxu0
    %v3450 = vadd.f32 0.0, %v3449
    %3451 = vmatmul.f32.gmra.mxu0 %v3240
    %v3452 = vpop.f32.mrf.mxu0
    %v3453 = vadd.f32 0.0, %v3452
    %3454 = vmatmul.f32.gmra.mxu0 %v3243
    %v3455 = vpop.f32.mrf.mxu0
    %v3456 = vadd.f32 0.0, %v3455
    %3457 = vmatmul.f32.gmra.mxu0 %v3246
    %v3458 = vpop.f32.mrf.mxu0
    %v3459 = vadd.f32 0.0, %v3458
    %3460 = vmatmul.f32.gmra.mxu0 %v3249
    %v3461 = vpop.f32.mrf.mxu0
    %v3462 = vadd.f32 0.0, %v3461
    %3463 = vmatmul.f32.gmra.mxu0 %v3252
    %v3464 = vpop.f32.mrf.mxu0
    %v3465 = vadd.f32 0.0, %v3464
    %3466 = vmatmul.f32.gmra.mxu0 %v3255
    %v3467 = vpop.f32.mrf.mxu0
    %v3468 = vadd.f32 0.0, %v3467
    %3469 = vmatmul.f32.gmra.mxu0 %v3258
    %v3470 = vpop.f32.mrf.mxu0
    %v3471 = vadd.f32 0.0, %v3470
    %3472 = vmatmul.f32.gmra.mxu0 %v3261
    %v3473 = vpop.f32.mrf.mxu0
    %v3474 = vadd.f32 0.0, %v3473
    %3475 = vmatmul.f32.gmra.mxu0 %v3264
    %v3476 = vpop.f32.mrf.mxu0
    %v3477 = vadd.f32 0.0, %v3476
    %3478 = vmatmul.f32.gmra.mxu0 %v3267
    %v3479 = vpop.f32.mrf.mxu0
    %v3480 = vadd.f32 0.0, %v3479
    %3481 = vmatmul.f32.gmra.mxu0 %v3270
    %v3482 = vpop.f32.mrf.mxu0
    %v3483 = vadd.f32 0.0, %v3482
    %3484 = vmatmul.f32.gmra.mxu0 %v3273
    %v3485 = vpop.f32.mrf.mxu0
    %v3486 = vadd.f32 0.0, %v3485
    %3487 = vmatmul.f32.gmra.mxu0 %v3276
    %v3488 = vpop.f32.mrf.mxu0
    %v3489 = vadd.f32 0.0, %v3488
    %3490 = vmatmul.f32.gmra.mxu0 %v3279
    %v3491 = vpop.f32.mrf.mxu0
    %v3492 = vadd.f32 0.0, %v3491
    %3493 = vmatmul.f32.gmra.mxu0 %v3282
    %v3494 = vpop.f32.mrf.mxu0
    %v3495 = vadd.f32 0.0, %v3494
    %3496 = vmatmul.f32.gmra.mxu0 %v3285
    %v3497 = vpop.f32.mrf.mxu0
    %v3498 = vadd.f32 0.0, %v3497
    %3499 = vmatmul.f32.gmra.mxu0 %v3288
    %v3500 = vpop.f32.mrf.mxu0
    %v3501 = vadd.f32 0.0, %v3500
    %3502 = vmatmul.f32.gmra.mxu0 %v3291
    %v3503 = vpop.f32.mrf.mxu0
    %v3504 = vadd.f32 0.0, %v3503
    %3505 = vmatmul.f32.gmra.mxu0 %v3294
    %v3506 = vpop.f32.mrf.mxu0
    %v3507 = vadd.f32 0.0, %v3506
    %3508 = vmatmul.f32.gmra.mxu0 %v3297
    %v3509 = vpop.f32.mrf.mxu0
    %v3510 = vadd.f32 0.0, %v3509
    %3511 = vmatmul.f32.gmra.mxu0 %v3300
    %v3512 = vpop.f32.mrf.mxu0
    %v3513 = vadd.f32 0.0, %v3512
    %3514 = vmatmul.f32.gmra.mxu0 %v3303
    %v3515 = vpop.f32.mrf.mxu0
    %v3516 = vadd.f32 0.0, %v3515
    %3517 = vmatmul.f32.gmra.mxu0 %v3306
    %v3518 = vpop.f32.mrf.mxu0
    %v3519 = vadd.f32 0.0, %v3518
    %3520 = vmatmul.f32.gmra.mxu0 %v3309
    %v3521 = vpop.f32.mrf.mxu0
    %v3522 = vadd.f32 0.0, %v3521
    %3523 = vmatmul.f32.gmra.mxu0 %v3312
    %v3524 = vpop.f32.mrf.mxu0
    %v3525 = vadd.f32 0.0, %v3524
    %3526 = vmatmul.f32.gmra.mxu0 %v3315
    %v3527 = vpop.f32.mrf.mxu0
    %v3528 = vadd.f32 0.0, %v3527
    %3529 = vmatmul.f32.gmra.mxu0 %v3318
    %v3530 = vpop.f32.mrf.mxu0
    %v3531 = vadd.f32 0.0, %v3530
    %3532 = vmatmul.f32.gmra.mxu0 %v3321
    %v3533 = vpop.f32.mrf.mxu0
    %v3534 = vadd.f32 0.0, %v3533
    %3535 = vmatmul.f32.gmra.mxu0 %v3324
    %v3536 = vpop.f32.mrf.mxu0
    %v3537 = vadd.f32 0.0, %v3536
    %3538 = vmatmul.f32.gmra.mxu0 %v3327
    %v3539 = vpop.f32.mrf.mxu0
    %v3540 = vadd.f32 0.0, %v3539
    %3541 = vmatmul.f32.gmra.mxu0 %v3330
    %v3542 = vpop.f32.mrf.mxu0
    %v3543 = vadd.f32 0.0, %v3542
    %3544 = vmatmul.f32.gmra.mxu0 %v3333
    %v3545 = vpop.f32.mrf.mxu0
    %v3546 = vadd.f32 0.0, %v3545
    %3547 = vmatmul.f32.gmra.mxu0 %v3336
    %v3548 = vpop.f32.mrf.mxu0
    %v3549 = vadd.f32 0.0, %v3548
    %3550 = vmatmul.f32.gmra.mxu0 %v3339
    %v3551 = vpop.f32.mrf.mxu0
    %v3552 = vadd.f32 0.0, %v3551
    %3553 = vmatmul.f32.gmra.mxu0 %v3342
    %v3554 = vpop.f32.mrf.mxu0
    %v3555 = vadd.f32 0.0, %v3554
    %3556 = vmatmul.f32.gmra.mxu0 %v3345
    %v3557 = vpop.f32.mrf.mxu0
    %v3558 = vadd.f32 0.0, %v3557
    %3559 = vmatmul.f32.gmra.mxu0 %v3348
    %v3560 = vpop.f32.mrf.mxu0
    %v3561 = vadd.f32 0.0, %v3560
    %3562 = vmatmul.f32.gmra.mxu0 %v3351
    %v3563 = vpop.f32.mrf.mxu0
    %v3564 = vadd.f32 0.0, %v3563
    %3565 = vmatmul.f32.gmra.mxu0 %v3354
    %v3566 = vpop.f32.mrf.mxu0
    %v3567 = vadd.f32 0.0, %v3566
    %3568 = vmatmul.f32.gmra.mxu0 %v3357
    %v3569 = vpop.f32.mrf.mxu0
    %v3570 = vadd.f32 0.0, %v3569
    %3571 = vmatmul.f32.gmra.mxu0 %v3360
    %v3572 = vpop.f32.mrf.mxu0
    %v3573 = vadd.f32 0.0, %v3572
    %3574 = vmatmul.f32.gmra.mxu0 %v3363
    %v3575 = vpop.f32.mrf.mxu0
    %v3576 = vadd.f32 0.0, %v3575
    %3577 = vmatmul.f32.gmra.mxu0 %v3366
    %v3578 = vpop.f32.mrf.mxu0
    %v3579 = vadd.f32 0.0, %v3578
    %3580 = vmatmul.f32.gmra.mxu0 %v3369
    %v3581 = vpop.f32.mrf.mxu0
    %v3582 = vadd.f32 0.0, %v3581
    %3583 = vdwg.mxu0
    %v3584 = vld [vmem:[%s2] sm:$0x1]
    %v3585 = vld [vmem:[%s3] sm:$0x1]
    %v3586 = vsel %vm2718, %v3393, 0.0
    %v3587 = vsel %vm2718, %v3396, 0.0
    %v3588 = vadd.f32 %v3586, %v3587
    %v3589 = vsel %vm2718, %v3399, 0.0
    %v3590 = vadd.f32 %v3588, %v3589
    %v3591 = vsel %vm2718, %v3402, 0.0
    %v3592 = vadd.f32 %v3590, %v3591
    %v3593 = vsel %vm2718, %v3405, 0.0
    %v3594 = vadd.f32 %v3592, %v3593
    %v3595 = vsel %vm2718, %v3408, 0.0
    %v3596 = vadd.f32 %v3594, %v3595
    %v3597 = vsel %vm2718, %v3411, 0.0
    %v3598 = vadd.f32 %v3596, %v3597
    %v3599 = vsel %vm2718, %v3414, 0.0
    %v3600 = vadd.f32 %v3598, %v3599
    %v3601 = vsel %vm2718, %v3417, 0.0
    %v3602 = vadd.f32 %v3600, %v3601
    %v3603 = vsel %vm2718, %v3420, 0.0
    %v3604 = vadd.f32 %v3602, %v3603
    %v3605 = vsel %vm2718, %v3423, 0.0
    %v3606 = vadd.f32 %v3604, %v3605
    %v3607 = vsel %vm2718, %v3426, 0.0
    %v3608 = vadd.f32 %v3606, %v3607
    %v3609 = vsel %vm2718, %v3429, 0.0
    %v3610 = vadd.f32 %v3608, %v3609
    %v3611 = vsel %vm2718, %v3432, 0.0
    %v3612 = vadd.f32 %v3610, %v3611
    %v3613 = vsel %vm2718, %v3435, 0.0
    %v3614 = vadd.f32 %v3612, %v3613
    %v3615 = vsel %vm2718, %v3438, 0.0
    %v3616 = vadd.f32 %v3614, %v3615
    %v3617 = vsel %vm2718, %v3441, 0.0
    %v3618 = vadd.f32 %v3616, %v3617
    %v3619 = vsel %vm2718, %v3444, 0.0
    %v3620 = vadd.f32 %v3618, %v3619
    %v3621 = vsel %vm2718, %v3447, 0.0
    %v3622 = vadd.f32 %v3620, %v3621
    %v3623 = vsel %vm2718, %v3450, 0.0
    %v3624 = vadd.f32 %v3622, %v3623
    %v3625 = vsel %vm2718, %v3453, 0.0
    %v3626 = vadd.f32 %v3624, %v3625
    %v3627 = vsel %vm2718, %v3456, 0.0
    %v3628 = vadd.f32 %v3626, %v3627
    %v3629 = vsel %vm2718, %v3459, 0.0
    %v3630 = vadd.f32 %v3628, %v3629
    %v3631 = vsel %vm2718, %v3462, 0.0
    %v3632 = vadd.f32 %v3630, %v3631
    %v3633 = vsel %vm2718, %v3465, 0.0
    %v3634 = vadd.f32 %v3632, %v3633
    %v3635 = vsel %vm2718, %v3468, 0.0
    %v3636 = vadd.f32 %v3634, %v3635
    %v3637 = vsel %vm2718, %v3471, 0.0
    %v3638 = vadd.f32 %v3636, %v3637
    %v3639 = vsel %vm2718, %v3474, 0.0
    %v3640 = vadd.f32 %v3638, %v3639
    %v3641 = vsel %vm2718, %v3477, 0.0
    %v3642 = vadd.f32 %v3640, %v3641
    %v3643 = vsel %vm2718, %v3480, 0.0
    %v3644 = vadd.f32 %v3642, %v3643
    %v3645 = vsel %vm2718, %v3483, 0.0
    %v3646 = vadd.f32 %v3644, %v3645
    %v3647 = vsel %vm2718, %v3486, 0.0
    %v3648 = vadd.f32 %v3646, %v3647
    %v3649 = vsel %vm2718, %v3489, 0.0
    %v3650 = vadd.f32 %v3648, %v3649
    %v3651 = vsel %vm2718, %v3492, 0.0
    %v3652 = vadd.f32 %v3650, %v3651
    %v3653 = vsel %vm2718, %v3495, 0.0
    %v3654 = vadd.f32 %v3652, %v3653
    %v3655 = vsel %vm2718, %v3498, 0.0
    %v3656 = vadd.f32 %v3654, %v3655
    %v3657 = vsel %vm2718, %v3501, 0.0
    %v3658 = vadd.f32 %v3656, %v3657
    %v3659 = vsel %vm2718, %v3504, 0.0
    %v3660 = vadd.f32 %v3658, %v3659
    %v3661 = vsel %vm2718, %v3507, 0.0
    %v3662 = vadd.f32 %v3660, %v3661
    %v3663 = vsel %vm2718, %v3510, 0.0
    %v3664 = vadd.f32 %v3662, %v3663
    %v3665 = vsel %vm2718, %v3513, 0.0
    %v3666 = vadd.f32 %v3664, %v3665
    %v3667 = vsel %vm2718, %v3516, 0.0
    %v3668 = vadd.f32 %v3666, %v3667
    %v3669 = vsel %vm2718, %v3519, 0.0
    %v3670 = vadd.f32 %v3668, %v3669
    %v3671 = vsel %vm2718, %v3522, 0.0
    %v3672 = vadd.f32 %v3670, %v3671
    %v3673 = vsel %vm2718, %v3525, 0.0
    %v3674 = vadd.f32 %v3672, %v3673
    %v3675 = vsel %vm2718, %v3528, 0.0
    %v3676 = vadd.f32 %v3674, %v3675
    %v3677 = vsel %vm2718, %v3531, 0.0
    %v3678 = vadd.f32 %v3676, %v3677
    %v3679 = vsel %vm2718, %v3534, 0.0
    %v3680 = vadd.f32 %v3678, %v3679
    %v3681 = vsel %vm2718, %v3537, 0.0
    %v3682 = vadd.f32 %v3680, %v3681
    %v3683 = vsel %vm2718, %v3540, 0.0
    %v3684 = vadd.f32 %v3682, %v3683
    %v3685 = vsel %vm2718, %v3543, 0.0
    %v3686 = vadd.f32 %v3684, %v3685
    %v3687 = vsel %vm2718, %v3546, 0.0
    %v3688 = vadd.f32 %v3686, %v3687
    %v3689 = vsel %vm2718, %v3549, 0.0
    %v3690 = vadd.f32 %v3688, %v3689
    %v3691 = vsel %vm2718, %v3552, 0.0
    %v3692 = vadd.f32 %v3690, %v3691
    %v3693 = vsel %vm2718, %v3555, 0.0
    %v3694 = vadd.f32 %v3692, %v3693
    %v3695 = vsel %vm2718, %v3558, 0.0
    %v3696 = vadd.f32 %v3694, %v3695
    %v3697 = vsel %vm2718, %v3561, 0.0
    %v3698 = vadd.f32 %v3696, %v3697
    %v3699 = vsel %vm2718, %v3564, 0.0
    %v3700 = vadd.f32 %v3698, %v3699
    %v3701 = vsel %vm2718, %v3567, 0.0
    %v3702 = vadd.f32 %v3700, %v3701
    %v3703 = vsel %vm2718, %v3570, 0.0
    %v3704 = vadd.f32 %v3702, %v3703
    %v3705 = vsel %vm2718, %v3573, 0.0
    %v3706 = vadd.f32 %v3704, %v3705
    %v3707 = vsel %vm2718, %v3576, 0.0
    %v3708 = vadd.f32 %v3706, %v3707
    %v3709 = vsel %vm2718, %v3579, 0.0
    %v3710 = vadd.f32 %v3708, %v3709
    %v3711 = vsel %vm2718, %v3582, 0.0
    %v3712 = vadd.f32 %v3710, %v3711
    %v3713 = vrot.slane %v3712, 4
    %v3714 = vadd.f32 %v3712, %v3713
    %v3715 = vrot.slane %v3714, 2
    %v3716 = vadd.f32 %v3714, %v3715
    %v3717 = vrot.slane %v3716, 1
    %v3718 = vadd.f32 %v3716, %v3717
    %v3719 = vmul.f32 %v3393, %v3393
    %v3720 = vmul.f32 %v3396, %v3396
    %v3721 = vmul.f32 %v3399, %v3399
    %v3722 = vmul.f32 %v3402, %v3402
    %v3723 = vmul.f32 %v3405, %v3405
    %v3724 = vmul.f32 %v3408, %v3408
    %v3725 = vmul.f32 %v3411, %v3411
    %v3726 = vmul.f32 %v3414, %v3414
    %v3727 = vmul.f32 %v3417, %v3417
    %v3728 = vmul.f32 %v3420, %v3420
    %v3729 = vmul.f32 %v3423, %v3423
    %v3730 = vmul.f32 %v3426, %v3426
    %v3731 = vmul.f32 %v3429, %v3429
    %v3732 = vmul.f32 %v3432, %v3432
    %v3733 = vmul.f32 %v3435, %v3435
    %v3734 = vmul.f32 %v3438, %v3438
    %v3735 = vmul.f32 %v3441, %v3441
    %v3736 = vmul.f32 %v3444, %v3444
    %v3737 = vmul.f32 %v3447, %v3447
    %v3738 = vmul.f32 %v3450, %v3450
    %v3739 = vmul.f32 %v3453, %v3453
    %v3740 = vmul.f32 %v3456, %v3456
    %v3741 = vmul.f32 %v3459, %v3459
    %v3742 = vmul.f32 %v3462, %v3462
    %v3743 = vmul.f32 %v3465, %v3465
    %v3744 = vmul.f32 %v3468, %v3468
    %v3745 = vmul.f32 %v3471, %v3471
    %v3746 = vmul.f32 %v3474, %v3474
    %v3747 = vmul.f32 %v3477, %v3477
    %v3748 = vmul.f32 %v3480, %v3480
    %v3749 = vmul.f32 %v3483, %v3483
    %v3750 = vmul.f32 %v3486, %v3486
    %v3751 = vmul.f32 %v3489, %v3489
    %v3752 = vmul.f32 %v3492, %v3492
    %v3753 = vmul.f32 %v3495, %v3495
    %v3754 = vmul.f32 %v3498, %v3498
    %v3755 = vmul.f32 %v3501, %v3501
    %v3756 = vmul.f32 %v3504, %v3504
    %v3757 = vmul.f32 %v3507, %v3507
    %v3758 = vmul.f32 %v3510, %v3510
    %v3759 = vmul.f32 %v3513, %v3513
    %v3760 = vmul.f32 %v3516, %v3516
    %v3761 = vmul.f32 %v3519, %v3519
    %v3762 = vmul.f32 %v3522, %v3522
    %v3763 = vmul.f32 %v3525, %v3525
    %v3764 = vmul.f32 %v3528, %v3528
    %v3765 = vmul.f32 %v3531, %v3531
    %v3766 = vmul.f32 %v3534, %v3534
    %v3767 = vmul.f32 %v3537, %v3537
    %v3768 = vmul.f32 %v3540, %v3540
    %v3769 = vmul.f32 %v3543, %v3543
    %v3770 = vmul.f32 %v3546, %v3546
    %v3771 = vmul.f32 %v3549, %v3549
    %v3772 = vmul.f32 %v3552, %v3552
    %v3773 = vmul.f32 %v3555, %v3555
    %v3774 = vmul.f32 %v3558, %v3558
    %v3775 = vmul.f32 %v3561, %v3561
    %v3776 = vmul.f32 %v3564, %v3564
    %v3777 = vmul.f32 %v3567, %v3567
    %v3778 = vmul.f32 %v3570, %v3570
    %v3779 = vmul.f32 %v3573, %v3573
    %v3780 = vmul.f32 %v3576, %v3576
    %v3781 = vmul.f32 %v3579, %v3579
    %v3782 = vmul.f32 %v3582, %v3582
    %v3783 = vsel %vm2718, %v3719, 0.0
    %v3784 = vsel %vm2718, %v3720, 0.0
    %v3785 = vadd.f32 %v3783, %v3784
    %v3786 = vsel %vm2718, %v3721, 0.0
    %v3787 = vadd.f32 %v3785, %v3786
    %v3788 = vsel %vm2718, %v3722, 0.0
    %v3789 = vadd.f32 %v3787, %v3788
    %v3790 = vsel %vm2718, %v3723, 0.0
    %v3791 = vadd.f32 %v3789, %v3790
    %v3792 = vsel %vm2718, %v3724, 0.0
    %v3793 = vadd.f32 %v3791, %v3792
    %v3794 = vsel %vm2718, %v3725, 0.0
    %v3795 = vadd.f32 %v3793, %v3794
    %v3796 = vsel %vm2718, %v3726, 0.0
    %v3797 = vadd.f32 %v3795, %v3796
    %v3798 = vsel %vm2718, %v3727, 0.0
    %v3799 = vadd.f32 %v3797, %v3798
    %v3800 = vsel %vm2718, %v3728, 0.0
    %v3801 = vadd.f32 %v3799, %v3800
    %v3802 = vsel %vm2718, %v3729, 0.0
    %v3803 = vadd.f32 %v3801, %v3802
    %v3804 = vsel %vm2718, %v3730, 0.0
    %v3805 = vadd.f32 %v3803, %v3804
    %v3806 = vsel %vm2718, %v3731, 0.0
    %v3807 = vadd.f32 %v3805, %v3806
    %v3808 = vsel %vm2718, %v3732, 0.0
    %v3809 = vadd.f32 %v3807, %v3808
    %v3810 = vsel %vm2718, %v3733, 0.0
    %v3811 = vadd.f32 %v3809, %v3810
    %v3812 = vsel %vm2718, %v3734, 0.0
    %v3813 = vadd.f32 %v3811, %v3812
    %v3814 = vsel %vm2718, %v3735, 0.0
    %v3815 = vadd.f32 %v3813, %v3814
    %v3816 = vsel %vm2718, %v3736, 0.0
    %v3817 = vadd.f32 %v3815, %v3816
    %v3818 = vsel %vm2718, %v3737, 0.0
    %v3819 = vadd.f32 %v3817, %v3818
    %v3820 = vsel %vm2718, %v3738, 0.0
    %v3821 = vadd.f32 %v3819, %v3820
    %v3822 = vsel %vm2718, %v3739, 0.0
    %v3823 = vadd.f32 %v3821, %v3822
    %v3824 = vsel %vm2718, %v3740, 0.0
    %v3825 = vadd.f32 %v3823, %v3824
    %v3826 = vsel %vm2718, %v3741, 0.0
    %v3827 = vadd.f32 %v3825, %v3826
    %v3828 = vsel %vm2718, %v3742, 0.0
    %v3829 = vadd.f32 %v3827, %v3828
    %v3830 = vsel %vm2718, %v3743, 0.0
    %v3831 = vadd.f32 %v3829, %v3830
    %v3832 = vsel %vm2718, %v3744, 0.0
    %v3833 = vadd.f32 %v3831, %v3832
    %v3834 = vsel %vm2718, %v3745, 0.0
    %v3835 = vadd.f32 %v3833, %v3834
    %v3836 = vsel %vm2718, %v3746, 0.0
    %v3837 = vadd.f32 %v3835, %v3836
    %v3838 = vsel %vm2718, %v3747, 0.0
    %v3839 = vadd.f32 %v3837, %v3838
    %v3840 = vsel %vm2718, %v3748, 0.0
    %v3841 = vadd.f32 %v3839, %v3840
    %v3842 = vsel %vm2718, %v3749, 0.0
    %v3843 = vadd.f32 %v3841, %v3842
    %v3844 = vsel %vm2718, %v3750, 0.0
    %v3845 = vadd.f32 %v3843, %v3844
    %v3846 = vsel %vm2718, %v3751, 0.0
    %v3847 = vadd.f32 %v3845, %v3846
    %v3848 = vsel %vm2718, %v3752, 0.0
    %v3849 = vadd.f32 %v3847, %v3848
    %v3850 = vsel %vm2718, %v3753, 0.0
    %v3851 = vadd.f32 %v3849, %v3850
    %v3852 = vsel %vm2718, %v3754, 0.0
    %v3853 = vadd.f32 %v3851, %v3852
    %v3854 = vsel %vm2718, %v3755, 0.0
    %v3855 = vadd.f32 %v3853, %v3854
    %v3856 = vsel %vm2718, %v3756, 0.0
    %v3857 = vadd.f32 %v3855, %v3856
    %v3858 = vsel %vm2718, %v3757, 0.0
    %v3859 = vadd.f32 %v3857, %v3858
    %v3860 = vsel %vm2718, %v3758, 0.0
    %v3861 = vadd.f32 %v3859, %v3860
    %v3862 = vsel %vm2718, %v3759, 0.0
    %v3863 = vadd.f32 %v3861, %v3862
    %v3864 = vsel %vm2718, %v3760, 0.0
    %v3865 = vadd.f32 %v3863, %v3864
    %v3866 = vsel %vm2718, %v3761, 0.0
    %v3867 = vadd.f32 %v3865, %v3866
    %v3868 = vsel %vm2718, %v3762, 0.0
    %v3869 = vadd.f32 %v3867, %v3868
    %v3870 = vsel %vm2718, %v3763, 0.0
    %v3871 = vadd.f32 %v3869, %v3870
    %v3872 = vsel %vm2718, %v3764, 0.0
    %v3873 = vadd.f32 %v3871, %v3872
    %v3874 = vsel %vm2718, %v3765, 0.0
    %v3875 = vadd.f32 %v3873, %v3874
    %v3876 = vsel %vm2718, %v3766, 0.0
    %v3877 = vadd.f32 %v3875, %v3876
    %v3878 = vsel %vm2718, %v3767, 0.0
    %v3879 = vadd.f32 %v3877, %v3878
    %v3880 = vsel %vm2718, %v3768, 0.0
    %v3881 = vadd.f32 %v3879, %v3880
    %v3882 = vsel %vm2718, %v3769, 0.0
    %v3883 = vadd.f32 %v3881, %v3882
    %v3884 = vsel %vm2718, %v3770, 0.0
    %v3885 = vadd.f32 %v3883, %v3884
    %v3886 = vsel %vm2718, %v3771, 0.0
    %v3887 = vadd.f32 %v3885, %v3886
    %v3888 = vsel %vm2718, %v3772, 0.0
    %v3889 = vadd.f32 %v3887, %v3888
    %v3890 = vsel %vm2718, %v3773, 0.0
    %v3891 = vadd.f32 %v3889, %v3890
    %v3892 = vsel %vm2718, %v3774, 0.0
    %v3893 = vadd.f32 %v3891, %v3892
    %v3894 = vsel %vm2718, %v3775, 0.0
    %v3895 = vadd.f32 %v3893, %v3894
    %v3896 = vsel %vm2718, %v3776, 0.0
    %v3897 = vadd.f32 %v3895, %v3896
    %v3898 = vsel %vm2718, %v3777, 0.0
    %v3899 = vadd.f32 %v3897, %v3898
    %v3900 = vsel %vm2718, %v3778, 0.0
    %v3901 = vadd.f32 %v3899, %v3900
    %v3902 = vsel %vm2718, %v3779, 0.0
    %v3903 = vadd.f32 %v3901, %v3902
    %v3904 = vsel %vm2718, %v3780, 0.0
    %v3905 = vadd.f32 %v3903, %v3904
    %v3906 = vsel %vm2718, %v3781, 0.0
    %v3907 = vadd.f32 %v3905, %v3906
    %v3908 = vsel %vm2718, %v3782, 0.0
    %v3909 = vadd.f32 %v3907, %v3908
    %v3910 = vrot.slane %v3909, 4
    %v3911 = vadd.f32 %v3909, %v3910
    %v3912 = vrot.slane %v3911, 2
    %v3913 = vadd.f32 %v3911, %v3912
    %v3914 = vrot.slane %v3913, 1
    %v3915 = vadd.f32 %v3913, %v3914
    %v3916 = vrcp.pop 512.0
    %v3917 = vmul.f32 512.0, %v3916
    %v3918 = vsub.f32 1.0, %v3917
    %v3919 = vmul.f32 %v3916, %v3918
    %v3920 = vadd.f32 %v3916, %v3919
    %vm3921 = vweird.f32 %v3916
    %v3922 = vsel %vm3921, %v3916, %v3920
    %v3923 = vmul.f32 %v3718, %v3922
    %v3924 = vmul.f32 %v3915, %v3922
    %v3925 = vmul.f32 %v3923, %v3923
    %v3926 = vsub.f32 %v3924, %v3925
    %v3927 = vsub.f32 %v3393, %v3923
    %v3928 = vsub.f32 %v3396, %v3923
    %v3929 = vsub.f32 %v3399, %v3923
    %v3930 = vsub.f32 %v3402, %v3923
    %v3931 = vsub.f32 %v3405, %v3923
    %v3932 = vsub.f32 %v3408, %v3923
    %v3933 = vsub.f32 %v3411, %v3923
    %v3934 = vsub.f32 %v3414, %v3923
    %v3935 = vsub.f32 %v3417, %v3923
    %v3936 = vsub.f32 %v3420, %v3923
    %v3937 = vsub.f32 %v3423, %v3923
    %v3938 = vsub.f32 %v3426, %v3923
    %v3939 = vsub.f32 %v3429, %v3923
    %v3940 = vsub.f32 %v3432, %v3923
    %v3941 = vsub.f32 %v3435, %v3923
    %v3942 = vsub.f32 %v3438, %v3923
    %v3943 = vsub.f32 %v3441, %v3923
    %v3944 = vsub.f32 %v3444, %v3923
    %v3945 = vsub.f32 %v3447, %v3923
    %v3946 = vsub.f32 %v3450, %v3923
    %v3947 = vsub.f32 %v3453, %v3923
    %v3948 = vsub.f32 %v3456, %v3923
    %v3949 = vsub.f32 %v3459, %v3923
    %v3950 = vsub.f32 %v3462, %v3923
    %v3951 = vsub.f32 %v3465, %v3923
    %v3952 = vsub.f32 %v3468, %v3923
    %v3953 = vsub.f32 %v3471, %v3923
    %v3954 = vsub.f32 %v3474, %v3923
    %v3955 = vsub.f32 %v3477, %v3923
    %v3956 = vsub.f32 %v3480, %v3923
    %v3957 = vsub.f32 %v3483, %v3923
    %v3958 = vsub.f32 %v3486, %v3923
    %v3959 = vsub.f32 %v3489, %v3923
    %v3960 = vsub.f32 %v3492, %v3923
    %v3961 = vsub.f32 %v3495, %v3923
    %v3962 = vsub.f32 %v3498, %v3923
    %v3963 = vsub.f32 %v3501, %v3923
    %v3964 = vsub.f32 %v3504, %v3923
    %v3965 = vsub.f32 %v3507, %v3923
    %v3966 = vsub.f32 %v3510, %v3923
    %v3967 = vsub.f32 %v3513, %v3923
    %v3968 = vsub.f32 %v3516, %v3923
    %v3969 = vsub.f32 %v3519, %v3923
    %v3970 = vsub.f32 %v3522, %v3923
    %v3971 = vsub.f32 %v3525, %v3923
    %v3972 = vsub.f32 %v3528, %v3923
    %v3973 = vsub.f32 %v3531, %v3923
    %v3974 = vsub.f32 %v3534, %v3923
    %v3975 = vsub.f32 %v3537, %v3923
    %v3976 = vsub.f32 %v3540, %v3923
    %v3977 = vsub.f32 %v3543, %v3923
    %v3978 = vsub.f32 %v3546, %v3923
    %v3979 = vsub.f32 %v3549, %v3923
    %v3980 = vsub.f32 %v3552, %v3923
    %v3981 = vsub.f32 %v3555, %v3923
    %v3982 = vsub.f32 %v3558, %v3923
    %v3983 = vsub.f32 %v3561, %v3923
    %v3984 = vsub.f32 %v3564, %v3923
    %v3985 = vsub.f32 %v3567, %v3923
    %v3986 = vsub.f32 %v3570, %v3923
    %v3987 = vsub.f32 %v3573, %v3923
    %v3988 = vsub.f32 %v3576, %v3923
    %v3989 = vsub.f32 %v3579, %v3923
    %v3990 = vsub.f32 %v3582, %v3923
    %v3991 = vadd.f32 %v3926, 1e-05
    %v3992 = vrsqrt.pop %v3991
    %v3993 = vmul.f32 %v3992, %v3991
    %v3994 = vmul.f32 %v3993, %v3992
    %v3995 = vmul.f32 0.5, %v3994
    %v3996 = vsub.f32 1.5, %v3995
    %v3997 = vmul.f32 %v3992, %v3996
    %vm3998 = vweird.f32 %v3991
    %vm3999 = vweird.f32 %v3992
    %vm4000 = vmor %vm3998, %vm3999
    %v4001 = vsel %vm4000, %v3992, %v3997
    %v4002 = vmul.f32 %v3927, %v4001
    %v4003 = vmul.f32 %v3928, %v4001
    %v4004 = vmul.f32 %v3929, %v4001
    %v4005 = vmul.f32 %v3930, %v4001
    %v4006 = vmul.f32 %v3931, %v4001
    %v4007 = vmul.f32 %v3932, %v4001
    %v4008 = vmul.f32 %v3933, %v4001
    %v4009 = vmul.f32 %v3934, %v4001
    %v4010 = vmul.f32 %v3935, %v4001
    %v4011 = vmul.f32 %v3936, %v4001
    %v4012 = vmul.f32 %v3937, %v4001
    %v4013 = vmul.f32 %v3938, %v4001
    %v4014 = vmul.f32 %v3939, %v4001
    %v4015 = vmul.f32 %v3940, %v4001
    %v4016 = vmul.f32 %v3941, %v4001
    %v4017 = vmul.f32 %v3942, %v4001
    %v4018 = vmul.f32 %v3943, %v4001
    %v4019 = vmul.f32 %v3944, %v4001
    %v4020 = vmul.f32 %v3945, %v4001
    %v4021 = vmul.f32 %v3946, %v4001
    %v4022 = vmul.f32 %v3947, %v4001
    %v4023 = vmul.f32 %v3948, %v4001
    %v4024 = vmul.f32 %v3949, %v4001
    %v4025 = vmul.f32 %v3950, %v4001
    %v4026 = vmul.f32 %v3951, %v4001
    %v4027 = vmul.f32 %v3952, %v4001
    %v4028 = vmul.f32 %v3953, %v4001
    %v4029 = vmul.f32 %v3954, %v4001
    %v4030 = vmul.f32 %v3955, %v4001
    %v4031 = vmul.f32 %v3956, %v4001
    %v4032 = vmul.f32 %v3957, %v4001
    %v4033 = vmul.f32 %v3958, %v4001
    %v4034 = vmul.f32 %v3959, %v4001
    %v4035 = vmul.f32 %v3960, %v4001
    %v4036 = vmul.f32 %v3961, %v4001
    %v4037 = vmul.f32 %v3962, %v4001
    %v4038 = vmul.f32 %v3963, %v4001
    %v4039 = vmul.f32 %v3964, %v4001
    %v4040 = vmul.f32 %v3965, %v4001
    %v4041 = vmul.f32 %v3966, %v4001
    %v4042 = vmul.f32 %v3967, %v4001
    %v4043 = vmul.f32 %v3968, %v4001
    %v4044 = vmul.f32 %v3969, %v4001
    %v4045 = vmul.f32 %v3970, %v4001
    %v4046 = vmul.f32 %v3971, %v4001
    %v4047 = vmul.f32 %v3972, %v4001
    %v4048 = vmul.f32 %v3973, %v4001
    %v4049 = vmul.f32 %v3974, %v4001
    %v4050 = vmul.f32 %v3975, %v4001
    %v4051 = vmul.f32 %v3976, %v4001
    %v4052 = vmul.f32 %v3977, %v4001
    %v4053 = vmul.f32 %v3978, %v4001
    %v4054 = vmul.f32 %v3979, %v4001
    %v4055 = vmul.f32 %v3980, %v4001
    %v4056 = vmul.f32 %v3981, %v4001
    %v4057 = vmul.f32 %v3982, %v4001
    %v4058 = vmul.f32 %v3983, %v4001
    %v4059 = vmul.f32 %v3984, %v4001
    %v4060 = vmul.f32 %v3985, %v4001
    %v4061 = vmul.f32 %v3986, %v4001
    %v4062 = vmul.f32 %v3987, %v4001
    %v4063 = vmul.f32 %v3988, %v4001
    %v4064 = vmul.f32 %v3989, %v4001
    %v4065 = vmul.f32 %v3990, %v4001
    %v4067 = vperm.slane %v3584, 0
    %v4069 = vmul.f32 %v4002, %v4067
    %v4070 = vmul.f32 %v4003, %v4067
    %v4071 = vmul.f32 %v4004, %v4067
    %v4072 = vmul.f32 %v4005, %v4067
    %v4073 = vmul.f32 %v4006, %v4067
    %v4074 = vmul.f32 %v4007, %v4067
    %v4075 = vmul.f32 %v4008, %v4067
    %v4076 = vmul.f32 %v4009, %v4067
    %v4077 = vmul.f32 %v4010, %v4067
    %v4078 = vmul.f32 %v4011, %v4067
    %v4079 = vmul.f32 %v4012, %v4067
    %v4080 = vmul.f32 %v4013, %v4067
    %v4081 = vmul.f32 %v4014, %v4067
    %v4082 = vmul.f32 %v4015, %v4067
    %v4083 = vmul.f32 %v4016, %v4067
    %v4084 = vmul.f32 %v4017, %v4067
    %v4085 = vmul.f32 %v4018, %v4067
    %v4086 = vmul.f32 %v4019, %v4067
    %v4087 = vmul.f32 %v4020, %v4067
    %v4088 = vmul.f32 %v4021, %v4067
    %v4089 = vmul.f32 %v4022, %v4067
    %v4090 = vmul.f32 %v4023, %v4067
    %v4091 = vmul.f32 %v4024, %v4067
    %v4092 = vmul.f32 %v4025, %v4067
    %v4093 = vmul.f32 %v4026, %v4067
    %v4094 = vmul.f32 %v4027, %v4067
    %v4095 = vmul.f32 %v4028, %v4067
    %v4096 = vmul.f32 %v4029, %v4067
    %v4097 = vmul.f32 %v4030, %v4067
    %v4098 = vmul.f32 %v4031, %v4067
    %v4099 = vmul.f32 %v4032, %v4067
    %v4100 = vmul.f32 %v4033, %v4067
    %v4101 = vmul.f32 %v4034, %v4067
    %v4102 = vmul.f32 %v4035, %v4067
    %v4103 = vmul.f32 %v4036, %v4067
    %v4104 = vmul.f32 %v4037, %v4067
    %v4105 = vmul.f32 %v4038, %v4067
    %v4106 = vmul.f32 %v4039, %v4067
    %v4107 = vmul.f32 %v4040, %v4067
    %v4108 = vmul.f32 %v4041, %v4067
    %v4109 = vmul.f32 %v4042, %v4067
    %v4110 = vmul.f32 %v4043, %v4067
    %v4111 = vmul.f32 %v4044, %v4067
    %v4112 = vmul.f32 %v4045, %v4067
    %v4113 = vmul.f32 %v4046, %v4067
    %v4114 = vmul.f32 %v4047, %v4067
    %v4115 = vmul.f32 %v4048, %v4067
    %v4116 = vmul.f32 %v4049, %v4067
    %v4117 = vmul.f32 %v4050, %v4067
    %v4118 = vmul.f32 %v4051, %v4067
    %v4119 = vmul.f32 %v4052, %v4067
    %v4120 = vmul.f32 %v4053, %v4067
    %v4121 = vmul.f32 %v4054, %v4067
    %v4122 = vmul.f32 %v4055, %v4067
    %v4123 = vmul.f32 %v4056, %v4067
    %v4124 = vmul.f32 %v4057, %v4067
    %v4125 = vmul.f32 %v4058, %v4067
    %v4126 = vmul.f32 %v4059, %v4067
    %v4127 = vmul.f32 %v4060, %v4067
    %v4128 = vmul.f32 %v4061, %v4067
    %v4129 = vmul.f32 %v4062, %v4067
    %v4130 = vmul.f32 %v4063, %v4067
    %v4131 = vmul.f32 %v4064, %v4067
    %v4132 = vmul.f32 %v4065, %v4067
    %v4134 = vperm.slane %v3585, 0
    %v4136 = vadd.f32 %v4069, %v4134
    %v4137 = vadd.f32 %v4070, %v4134
    %v4138 = vadd.f32 %v4071, %v4134
    %v4139 = vadd.f32 %v4072, %v4134
    %v4140 = vadd.f32 %v4073, %v4134
    %v4141 = vadd.f32 %v4074, %v4134
    %v4142 = vadd.f32 %v4075, %v4134
    %v4143 = vadd.f32 %v4076, %v4134
    %v4144 = vadd.f32 %v4077, %v4134
    %v4145 = vadd.f32 %v4078, %v4134
    %v4146 = vadd.f32 %v4079, %v4134
    %v4147 = vadd.f32 %v4080, %v4134
    %v4148 = vadd.f32 %v4081, %v4134
    %v4149 = vadd.f32 %v4082, %v4134
    %v4150 = vadd.f32 %v4083, %v4134
    %v4151 = vadd.f32 %v4084, %v4134
    %v4152 = vadd.f32 %v4085, %v4134
    %v4153 = vadd.f32 %v4086, %v4134
    %v4154 = vadd.f32 %v4087, %v4134
    %v4155 = vadd.f32 %v4088, %v4134
    %v4156 = vadd.f32 %v4089, %v4134
    %v4157 = vadd.f32 %v4090, %v4134
    %v4158 = vadd.f32 %v4091, %v4134
    %v4159 = vadd.f32 %v4092, %v4134
    %v4160 = vadd.f32 %v4093, %v4134
    %v4161 = vadd.f32 %v4094, %v4134
    %v4162 = vadd.f32 %v4095, %v4134
    %v4163 = vadd.f32 %v4096, %v4134
    %v4164 = vadd.f32 %v4097, %v4134
    %v4165 = vadd.f32 %v4098, %v4134
    %v4166 = vadd.f32 %v4099, %v4134
    %v4167 = vadd.f32 %v4100, %v4134
    %v4168 = vadd.f32 %v4101, %v4134
    %v4169 = vadd.f32 %v4102, %v4134
    %v4170 = vadd.f32 %v4103, %v4134
    %v4171 = vadd.f32 %v4104, %v4134
    %v4172 = vadd.f32 %v4105, %v4134
    %v4173 = vadd.f32 %v4106, %v4134
    %v4174 = vadd.f32 %v4107, %v4134
    %v4175 = vadd.f32 %v4108, %v4134
    %v4176 = vadd.f32 %v4109, %v4134
    %v4177 = vadd.f32 %v4110, %v4134
    %v4178 = vadd.f32 %v4111, %v4134
    %v4179 = vadd.f32 %v4112, %v4134
    %v4180 = vadd.f32 %v4113, %v4134
    %v4181 = vadd.f32 %v4114, %v4134
    %v4182 = vadd.f32 %v4115, %v4134
    %v4183 = vadd.f32 %v4116, %v4134
    %v4184 = vadd.f32 %v4117, %v4134
    %v4185 = vadd.f32 %v4118, %v4134
    %v4186 = vadd.f32 %v4119, %v4134
    %v4187 = vadd.f32 %v4120, %v4134
    %v4188 = vadd.f32 %v4121, %v4134
    %v4189 = vadd.f32 %v4122, %v4134
    %v4190 = vadd.f32 %v4123, %v4134
    %v4191 = vadd.f32 %v4124, %v4134
    %v4192 = vadd.f32 %v4125, %v4134
    %v4193 = vadd.f32 %v4126, %v4134
    %v4194 = vadd.f32 %v4127, %v4134
    %v4195 = vadd.f32 %v4128, %v4134
    %v4196 = vadd.f32 %v4129, %v4134
    %v4197 = vadd.f32 %v4130, %v4134
    %v4198 = vadd.f32 %v4131, %v4134
    %v4199 = vadd.f32 %v4132, %v4134
    %v4200 = vmax.f32 %v4136, 0.0
    %v4201 = vmax.f32 %v4137, 0.0
    %v4202 = vmax.f32 %v4138, 0.0
    %v4203 = vmax.f32 %v4139, 0.0
    %v4204 = vmax.f32 %v4140, 0.0
    %v4205 = vmax.f32 %v4141, 0.0
    %v4206 = vmax.f32 %v4142, 0.0
    %v4207 = vmax.f32 %v4143, 0.0
    %v4208 = vmax.f32 %v4144, 0.0
    %v4209 = vmax.f32 %v4145, 0.0
    %v4210 = vmax.f32 %v4146, 0.0
    %v4211 = vmax.f32 %v4147, 0.0
    %v4212 = vmax.f32 %v4148, 0.0
    %v4213 = vmax.f32 %v4149, 0.0
    %v4214 = vmax.f32 %v4150, 0.0
    %v4215 = vmax.f32 %v4151, 0.0
    %v4216 = vmax.f32 %v4152, 0.0
    %v4217 = vmax.f32 %v4153, 0.0
    %v4218 = vmax.f32 %v4154, 0.0
    %v4219 = vmax.f32 %v4155, 0.0
    %v4220 = vmax.f32 %v4156, 0.0
    %v4221 = vmax.f32 %v4157, 0.0
    %v4222 = vmax.f32 %v4158, 0.0
    %v4223 = vmax.f32 %v4159, 0.0
    %v4224 = vmax.f32 %v4160, 0.0
    %v4225 = vmax.f32 %v4161, 0.0
    %v4226 = vmax.f32 %v4162, 0.0
    %v4227 = vmax.f32 %v4163, 0.0
    %v4228 = vmax.f32 %v4164, 0.0
    %v4229 = vmax.f32 %v4165, 0.0
    %v4230 = vmax.f32 %v4166, 0.0
    %v4231 = vmax.f32 %v4167, 0.0
    %v4232 = vmax.f32 %v4168, 0.0
    %v4233 = vmax.f32 %v4169, 0.0
    %v4234 = vmax.f32 %v4170, 0.0
    %v4235 = vmax.f32 %v4171, 0.0
    %v4236 = vmax.f32 %v4172, 0.0
    %v4237 = vmax.f32 %v4173, 0.0
    %v4238 = vmax.f32 %v4174, 0.0
    %v4239 = vmax.f32 %v4175, 0.0
    %v4240 = vmax.f32 %v4176, 0.0
    %v4241 = vmax.f32 %v4177, 0.0
    %v4242 = vmax.f32 %v4178, 0.0
    %v4243 = vmax.f32 %v4179, 0.0
    %v4244 = vmax.f32 %v4180, 0.0
    %v4245 = vmax.f32 %v4181, 0.0
    %v4246 = vmax.f32 %v4182, 0.0
    %v4247 = vmax.f32 %v4183, 0.0
    %v4248 = vmax.f32 %v4184, 0.0
    %v4249 = vmax.f32 %v4185, 0.0
    %v4250 = vmax.f32 %v4186, 0.0
    %v4251 = vmax.f32 %v4187, 0.0
    %v4252 = vmax.f32 %v4188, 0.0
    %v4253 = vmax.f32 %v4189, 0.0
    %v4254 = vmax.f32 %v4190, 0.0
    %v4255 = vmax.f32 %v4191, 0.0
    %v4256 = vmax.f32 %v4192, 0.0
    %v4257 = vmax.f32 %v4193, 0.0
    %v4258 = vmax.f32 %v4194, 0.0
    %v4259 = vmax.f32 %v4195, 0.0
    %v4260 = vmax.f32 %v4196, 0.0
    %v4261 = vmax.f32 %v4197, 0.0
    %v4262 = vmax.f32 %v4198, 0.0
    %v4263 = vmax.f32 %v4199, 0.0
    %4264 = vst.msk [vmem:[#allocation2] sm:$0xff] %vm2718, 0.0
    %4265 = vst.msk [vmem:[#allocation2 + $0x8] sm:$0xff] %vm2718, 0.0
    %vm4266 = vcmask 58368
    %4267 = vst.msk [vmem:[#allocation2 + $0x10] sm:$0x3] %vm4266, 0.0
    %4268 = vst.msk [vmem:[#allocation2 + $0x1b0] sm:$0xff] %vm2718, 0.0
    %4269 = vst.msk [vmem:[#allocation2 + $0x1b8] sm:$0xff] %vm2718, 0.0
    %4270 = vst.msk [vmem:[#allocation2 + $0x1c0] sm:$0x3] %vm4266, 0.0
    %s4271 = scalar_lea.vmem [#allocation2], 408
    %4272 = vst.msk [vmem:[%s4271] sm:$0xff] %vm2718, 0.0
    %4273 = vst.msk [vmem:[%s4271 + $0x8] sm:$0xff] %vm2718, 0.0
    %4274 = vst.msk [vmem:[%s4271 + $0x10] sm:$0x3] %vm4266, 0.0
    %4275 = vst.msk [vmem:[%s4271 + $0x1b0] sm:$0xff] %vm2718, 0.0
    %4276 = vst.msk [vmem:[%s4271 + $0x1b8] sm:$0xff] %vm2718, 0.0
    %4277 = vst.msk [vmem:[%s4271 + $0x1c0] sm:$0x3] %vm4266, 0.0
    %s4278 = scalar_lea.vmem [#allocation2], 24
    %vm4279 = vcmask 57344
    %4280 = vst.msk [vmem:[%s4278] sm:$0x1] %vm4279, 0.0
    %4281 = vst.msk [vmem:[%s4278 + $0x18] sm:$0x1] %vm4279, 0.0
    %4282 = vst.msk [vmem:[%s4278 + $0x30] sm:$0x1] %vm4279, 0.0
    %4283 = vst.msk [vmem:[%s4278 + $0x48] sm:$0x1] %vm4279, 0.0
    %4284 = vst.msk [vmem:[%s4278 + $0x60] sm:$0x1] %vm4279, 0.0
    %4285 = vst.msk [vmem:[%s4278 + $0x78] sm:$0x1] %vm4279, 0.0
    %4286 = vst.msk [vmem:[%s4278 + $0x90] sm:$0x1] %vm4279, 0.0
    %4287 = vst.msk [vmem:[%s4278 + $0xa8] sm:$0x1] %vm4279, 0.0
    %4288 = vst.msk [vmem:[%s4278 + $0xc0] sm:$0x1] %vm4279, 0.0
    %4289 = vst.msk [vmem:[%s4278 + $0xd8] sm:$0x1] %vm4279, 0.0
    %4290 = vst.msk [vmem:[%s4278 + $0xf0] sm:$0x1] %vm4279, 0.0
    %4291 = vst.msk [vmem:[%s4278 + $0x108] sm:$0x1] %vm4279, 0.0
    %4292 = vst.msk [vmem:[%s4278 + $0x120] sm:$0x1] %vm4279, 0.0
    %4293 = vst.msk [vmem:[%s4278 + $0x138] sm:$0x1] %vm4279, 0.0
    %4294 = vst.msk [vmem:[%s4278 + $0x150] sm:$0x1] %vm4279, 0.0
    %4295 = vst.msk [vmem:[%s4278 + $0x168] sm:$0x1] %vm4279, 0.0
    %4296 = vst.msk [vmem:[%s4278 + $0x1b0] sm:$0x1] %vm4279, 0.0
    %4297 = vst.msk [vmem:[%s4278 + $0x1c8] sm:$0x1] %vm4279, 0.0
    %4298 = vst.msk [vmem:[%s4278 + $0x1e0] sm:$0x1] %vm4279, 0.0
    %4299 = vst.msk [vmem:[%s4278 + $0x1f8] sm:$0x1] %vm4279, 0.0
    %4300 = vst.msk [vmem:[%s4278 + $0x210] sm:$0x1] %vm4279, 0.0
    %4301 = vst.msk [vmem:[%s4278 + $0x228] sm:$0x1] %vm4279, 0.0
    %4302 = vst.msk [vmem:[%s4278 + $0x240] sm:$0x1] %vm4279, 0.0
    %4303 = vst.msk [vmem:[%s4278 + $0x258] sm:$0x1] %vm4279, 0.0
    %4304 = vst.msk [vmem:[%s4278 + $0x270] sm:$0x1] %vm4279, 0.0
    %4305 = vst.msk [vmem:[%s4278 + $0x288] sm:$0x1] %vm4279, 0.0
    %4306 = vst.msk [vmem:[%s4278 + $0x2a0] sm:$0x1] %vm4279, 0.0
    %4307 = vst.msk [vmem:[%s4278 + $0x2b8] sm:$0x1] %vm4279, 0.0
    %4308 = vst.msk [vmem:[%s4278 + $0x2d0] sm:$0x1] %vm4279, 0.0
    %4309 = vst.msk [vmem:[%s4278 + $0x2e8] sm:$0x1] %vm4279, 0.0
    %4310 = vst.msk [vmem:[%s4278 + $0x300] sm:$0x1] %vm4279, 0.0
    %4311 = vst.msk [vmem:[%s4278 + $0x318] sm:$0x1] %vm4279, 0.0
    %4312 = vst.msk [vmem:[%s4278 + $0x11] sm:$0x1] %vm4279, 0.0
    %4313 = vst.msk [vmem:[%s4278 + $0x29] sm:$0x1] %vm4279, 0.0
    %4314 = vst.msk [vmem:[%s4278 + $0x41] sm:$0x1] %vm4279, 0.0
    %4315 = vst.msk [vmem:[%s4278 + $0x59] sm:$0x1] %vm4279, 0.0
    %4316 = vst.msk [vmem:[%s4278 + $0x71] sm:$0x1] %vm4279, 0.0
    %4317 = vst.msk [vmem:[%s4278 + $0x89] sm:$0x1] %vm4279, 0.0
    %4318 = vst.msk [vmem:[%s4278 + $0xa1] sm:$0x1] %vm4279, 0.0
    %4319 = vst.msk [vmem:[%s4278 + $0xb9] sm:$0x1] %vm4279, 0.0
    %4320 = vst.msk [vmem:[%s4278 + $0xd1] sm:$0x1] %vm4279, 0.0
    %4321 = vst.msk [vmem:[%s4278 + $0xe9] sm:$0x1] %vm4279, 0.0
    %4322 = vst.msk [vmem:[%s4278 + $0x101] sm:$0x1] %vm4279, 0.0
    %4323 = vst.msk [vmem:[%s4278 + $0x119] sm:$0x1] %vm4279, 0.0
    %4324 = vst.msk [vmem:[%s4278 + $0x131] sm:$0x1] %vm4279, 0.0
    %4325 = vst.msk [vmem:[%s4278 + $0x149] sm:$0x1] %vm4279, 0.0
    %4326 = vst.msk [vmem:[%s4278 + $0x161] sm:$0x1] %vm4279, 0.0
    %4327 = vst.msk [vmem:[%s4278 + $0x179] sm:$0x1] %vm4279, 0.0
    %4328 = vst.msk [vmem:[%s4278 + $0x1c1] sm:$0x1] %vm4279, 0.0
    %4329 = vst.msk [vmem:[%s4278 + $0x1d9] sm:$0x1] %vm4279, 0.0
    %4330 = vst.msk [vmem:[%s4278 + $0x1f1] sm:$0x1] %vm4279, 0.0
    %4331 = vst.msk [vmem:[%s4278 + $0x209] sm:$0x1] %vm4279, 0.0
    %4332 = vst.msk [vmem:[%s4278 + $0x221] sm:$0x1] %vm4279, 0.0
    %4333 = vst.msk [vmem:[%s4278 + $0x239] sm:$0x1] %vm4279, 0.0
    %4334 = vst.msk [vmem:[%s4278 + $0x251] sm:$0x1] %vm4279, 0.0
    %4335 = vst.msk [vmem:[%s4278 + $0x269] sm:$0x1] %vm4279, 0.0
    %4336 = vst.msk [vmem:[%s4278 + $0x281] sm:$0x1] %vm4279, 0.0
    %4337 = vst.msk [vmem:[%s4278 + $0x299] sm:$0x1] %vm4279, 0.0
    %4338 = vst.msk [vmem:[%s4278 + $0x2b1] sm:$0x1] %vm4279, 0.0
    %4339 = vst.msk [vmem:[%s4278 + $0x2c9] sm:$0x1] %vm4279, 0.0
    %4340 = vst.msk [vmem:[%s4278 + $0x2e1] sm:$0x1] %vm4279, 0.0
    %4341 = vst.msk [vmem:[%s4278 + $0x2f9] sm:$0x1] %vm4279, 0.0
    %4342 = vst.msk [vmem:[%s4278 + $0x311] sm:$0x1] %vm4279, 0.0
    %4343 = vst.msk [vmem:[%s4278 + $0x329] sm:$0x1] %vm4279, 0.0
    %4344 = vst.msk [vmem:[%s4278 + $0x1] sm:$0xff] %vm2718, %v4200
    %4345 = vst.msk [vmem:[%s4278 + $0x9] sm:$0xff] %vm2718, %v4201
    %4346 = vst.msk [vmem:[%s4278 + $0x19] sm:$0xff] %vm2718, %v4202
    %4347 = vst.msk [vmem:[%s4278 + $0x21] sm:$0xff] %vm2718, %v4203
    %4348 = vst.msk [vmem:[%s4278 + $0x31] sm:$0xff] %vm2718, %v4204
    %4349 = vst.msk [vmem:[%s4278 + $0x39] sm:$0xff] %vm2718, %v4205
    %4350 = vst.msk [vmem:[%s4278 + $0x49] sm:$0xff] %vm2718, %v4206
    %4351 = vst.msk [vmem:[%s4278 + $0x51] sm:$0xff] %vm2718, %v4207
    %4352 = vst.msk [vmem:[%s4278 + $0x61] sm:$0xff] %vm2718, %v4208
    %4353 = vst.msk [vmem:[%s4278 + $0x69] sm:$0xff] %vm2718, %v4209
    %4354 = vst.msk [vmem:[%s4278 + $0x79] sm:$0xff] %vm2718, %v4210
    %4355 = vst.msk [vmem:[%s4278 + $0x81] sm:$0xff] %vm2718, %v4211
    %4356 = vst.msk [vmem:[%s4278 + $0x91] sm:$0xff] %vm2718, %v4212
    %4357 = vst.msk [vmem:[%s4278 + $0x99] sm:$0xff] %vm2718, %v4213
    %4358 = vst.msk [vmem:[%s4278 + $0xa9] sm:$0xff] %vm2718, %v4214
    %4359 = vst.msk [vmem:[%s4278 + $0xb1] sm:$0xff] %vm2718, %v4215
    %4360 = vst.msk [vmem:[%s4278 + $0xc1] sm:$0xff] %vm2718, %v4216
    %4361 = vst.msk [vmem:[%s4278 + $0xc9] sm:$0xff] %vm2718, %v4217
    %4362 = vst.msk [vmem:[%s4278 + $0xd9] sm:$0xff] %vm2718, %v4218
    %4363 = vst.msk [vmem:[%s4278 + $0xe1] sm:$0xff] %vm2718, %v4219
    %4364 = vst.msk [vmem:[%s4278 + $0xf1] sm:$0xff] %vm2718, %v4220
    %4365 = vst.msk [vmem:[%s4278 + $0xf9] sm:$0xff] %vm2718, %v4221
    %4366 = vst.msk [vmem:[%s4278 + $0x109] sm:$0xff] %vm2718, %v4222
    %4367 = vst.msk [vmem:[%s4278 + $0x111] sm:$0xff] %vm2718, %v4223
    %4368 = vst.msk [vmem:[%s4278 + $0x121] sm:$0xff] %vm2718, %v4224
    %4369 = vst.msk [vmem:[%s4278 + $0x129] sm:$0xff] %vm2718, %v4225
    %4370 = vst.msk [vmem:[%s4278 + $0x139] sm:$0xff] %vm2718, %v4226
    %4371 = vst.msk [vmem:[%s4278 + $0x141] sm:$0xff] %vm2718, %v4227
    %4372 = vst.msk [vmem:[%s4278 + $0x151] sm:$0xff] %vm2718, %v4228
    %4373 = vst.msk [vmem:[%s4278 + $0x159] sm:$0xff] %vm2718, %v4229
    %4374 = vst.msk [vmem:[%s4278 + $0x169] sm:$0xff] %vm2718, %v4230
    %4375 = vst.msk [vmem:[%s4278 + $0x171] sm:$0xff] %vm2718, %v4231
    %4376 = vst.msk [vmem:[%s4278 + $0x1b1] sm:$0xff] %vm2718, %v4232
    %4377 = vst.msk [vmem:[%s4278 + $0x1b9] sm:$0xff] %vm2718, %v4233
    %4378 = vst.msk [vmem:[%s4278 + $0x1c9] sm:$0xff] %vm2718, %v4234
    %4379 = vst.msk [vmem:[%s4278 + $0x1d1] sm:$0xff] %vm2718, %v4235
    %4380 = vst.msk [vmem:[%s4278 + $0x1e1] sm:$0xff] %vm2718, %v4236
    %4381 = vst.msk [vmem:[%s4278 + $0x1e9] sm:$0xff] %vm2718, %v4237
    %4382 = vst.msk [vmem:[%s4278 + $0x1f9] sm:$0xff] %vm2718, %v4238
    %4383 = vst.msk [vmem:[%s4278 + $0x201] sm:$0xff] %vm2718, %v4239
    %4384 = vst.msk [vmem:[%s4278 + $0x211] sm:$0xff] %vm2718, %v4240
    %4385 = vst.msk [vmem:[%s4278 + $0x219] sm:$0xff] %vm2718, %v4241
    %4386 = vst.msk [vmem:[%s4278 + $0x229] sm:$0xff] %vm2718, %v4242
    %4387 = vst.msk [vmem:[%s4278 + $0x231] sm:$0xff] %vm2718, %v4243
    %4388 = vst.msk [vmem:[%s4278 + $0x241] sm:$0xff] %vm2718, %v4244
    %4389 = vst.msk [vmem:[%s4278 + $0x249] sm:$0xff] %vm2718, %v4245
    %4390 = vst.msk [vmem:[%s4278 + $0x259] sm:$0xff] %vm2718, %v4246
    %4391 = vst.msk [vmem:[%s4278 + $0x261] sm:$0xff] %vm2718, %v4247
    %4392 = vst.msk [vmem:[%s4278 + $0x271] sm:$0xff] %vm2718, %v4248
    %4393 = vst.msk [vmem:[%s4278 + $0x279] sm:$0xff] %vm2718, %v4249
    %4394 = vst.msk [vmem:[%s4278 + $0x289] sm:$0xff] %vm2718, %v4250
    %4395 = vst.msk [vmem:[%s4278 + $0x291] sm:$0xff] %vm2718, %v4251
    %4396 = vst.msk [vmem:[%s4278 + $0x2a1] sm:$0xff] %vm2718, %v4252
    %4397 = vst.msk [vmem:[%s4278 + $0x2a9] sm:$0xff] %vm2718, %v4253
    %4398 = vst.msk [vmem:[%s4278 + $0x2b9] sm:$0xff] %vm2718, %v4254
    %4399 = vst.msk [vmem:[%s4278 + $0x2c1] sm:$0xff] %vm2718, %v4255
    %4400 = vst.msk [vmem:[%s4278 + $0x2d1] sm:$0xff] %vm2718, %v4256
    %4401 = vst.msk [vmem:[%s4278 + $0x2d9] sm:$0xff] %vm2718, %v4257
    %4402 = vst.msk [vmem:[%s4278 + $0x2e9] sm:$0xff] %vm2718, %v4258
    %4403 = vst.msk [vmem:[%s4278 + $0x2f1] sm:$0xff] %vm2718, %v4259
    %4404 = vst.msk [vmem:[%s4278 + $0x301] sm:$0xff] %vm2718, %v4260
    %4405 = vst.msk [vmem:[%s4278 + $0x309] sm:$0xff] %vm2718, %v4261
    %4406 = vst.msk [vmem:[%s4278 + $0x319] sm:$0xff] %vm2718, %v4262
    %4407 = vst.msk [vmem:[%s4278 + $0x321] sm:$0xff] %vm2718, %v4263
    %v4408 = vld [vmem:[#allocation2] sm:$0xff]
    %v4409 = vld [vmem:[#allocation2 + $0x8] sm:$0xff]
    %v4410 = vld [vmem:[#allocation2 + $0x18] sm:$0xff]
    %v4411 = vld [vmem:[#allocation2 + $0x20] sm:$0xff]
    %v4412 = vld [vmem:[#allocation2 + $0x30] sm:$0xff]
    %v4413 = vld [vmem:[#allocation2 + $0x38] sm:$0xff]
    %v4414 = vld [vmem:[#allocation2 + $0x48] sm:$0xff]
    %v4415 = vld [vmem:[#allocation2 + $0x50] sm:$0xff]
    %v4416 = vld [vmem:[#allocation2 + $0x60] sm:$0xff]
    %v4417 = vld [vmem:[#allocation2 + $0x68] sm:$0xff]
    %v4418 = vld [vmem:[#allocation2 + $0x78] sm:$0xff]
    %v4419 = vld [vmem:[#allocation2 + $0x80] sm:$0xff]
    %v4420 = vld [vmem:[#allocation2 + $0x90] sm:$0xff]
    %v4421 = vld [vmem:[#allocation2 + $0x98] sm:$0xff]
    %v4422 = vld [vmem:[#allocation2 + $0xa8] sm:$0xff]
    %v4423 = vld [vmem:[#allocation2 + $0xb0] sm:$0xff]
    %v4424 = vld [vmem:[#allocation2 + $0xc0] sm:$0xff]
    %v4425 = vld [vmem:[#allocation2 + $0xc8] sm:$0xff]
    %v4426 = vld [vmem:[#allocation2 + $0xd8] sm:$0xff]
    %v4427 = vld [vmem:[#allocation2 + $0xe0] sm:$0xff]
    %v4428 = vld [vmem:[#allocation2 + $0xf0] sm:$0xff]
    %v4429 = vld [vmem:[#allocation2 + $0xf8] sm:$0xff]
    %v4430 = vld [vmem:[#allocation2 + $0x108] sm:$0xff]
    %v4431 = vld [vmem:[#allocation2 + $0x110] sm:$0xff]
    %v4432 = vld [vmem:[#allocation2 + $0x120] sm:$0xff]
    %v4433 = vld [vmem:[#allocation2 + $0x128] sm:$0xff]
    %v4434 = vld [vmem:[#allocation2 + $0x138] sm:$0xff]
    %v4435 = vld [vmem:[#allocation2 + $0x140] sm:$0xff]
    %v4436 = vld [vmem:[#allocation2 + $0x150] sm:$0xff]
    %v4437 = vld [vmem:[#allocation2 + $0x158] sm:$0xff]
    %v4438 = vld [vmem:[#allocation2 + $0x168] sm:$0xff]
    %v4439 = vld [vmem:[#allocation2 + $0x170] sm:$0xff]
    %v4440 = vld [vmem:[#allocation2 + $0x1b0] sm:$0xff]
    %v4441 = vld [vmem:[#allocation2 + $0x1b8] sm:$0xff]
    %v4442 = vld [vmem:[#allocation2 + $0x1c8] sm:$0xff]
    %v4443 = vld [vmem:[#allocation2 + $0x1d0] sm:$0xff]
    %v4444 = vld [vmem:[#allocation2 + $0x1e0] sm:$0xff]
    %v4445 = vld [vmem:[#allocation2 + $0x1e8] sm:$0xff]
    %v4446 = vld [vmem:[#allocation2 + $0x1f8] sm:$0xff]
    %v4447 = vld [vmem:[#allocation2 + $0x200] sm:$0xff]
    %v4448 = vld [vmem:[#allocation2 + $0x210] sm:$0xff]
    %v4449 = vld [vmem:[#allocation2 + $0x218] sm:$0xff]
    %v4450 = vld [vmem:[#allocation2 + $0x228] sm:$0xff]
    %v4451 = vld [vmem:[#allocation2 + $0x230] sm:$0xff]
    %v4452 = vld [vmem:[#allocation2 + $0x240] sm:$0xff]
    %v4453 = vld [vmem:[#allocation2 + $0x248] sm:$0xff]
    %v4454 = vld [vmem:[#allocation2 + $0x258] sm:$0xff]
    %v4455 = vld [vmem:[#allocation2 + $0x260] sm:$0xff]
    %v4456 = vld [vmem:[#allocation2 + $0x270] sm:$0xff]
    %v4457 = vld [vmem:[#allocation2 + $0x278] sm:$0xff]
    %v4458 = vld [vmem:[#allocation2 + $0x288] sm:$0xff]
    %v4459 = vld [vmem:[#allocation2 + $0x290] sm:$0xff]
    %v4460 = vld [vmem:[#allocation2 + $0x2a0] sm:$0xff]
    %v4461 = vld [vmem:[#allocation2 + $0x2a8] sm:$0xff]
    %v4462 = vld [vmem:[#allocation2 + $0x2b8] sm:$0xff]
    %v4463 = vld [vmem:[#allocation2 + $0x2c0] sm:$0xff]
    %v4464 = vld [vmem:[#allocation2 + $0x2d0] sm:$0xff]
    %v4465 = vld [vmem:[#allocation2 + $0x2d8] sm:$0xff]
    %v4466 = vld [vmem:[#allocation2 + $0x2e8] sm:$0xff]
    %v4467 = vld [vmem:[#allocation2 + $0x2f0] sm:$0xff]
    %v4468 = vld [vmem:[#allocation2 + $0x300] sm:$0xff]
    %v4469 = vld [vmem:[#allocation2 + $0x308] sm:$0xff]
    %v4470 = vld [vmem:[#allocation2 + $0x318] sm:$0xff]
    %v4471 = vld [vmem:[#allocation2 + $0x320] sm:$0xff]
    %v4472 = vld [vmem:[#allocation2 + $0x1] sm:$0xff]
    %v4473 = vld [vmem:[#allocation2 + $0x9] sm:$0xff]
    %v4474 = vld [vmem:[#allocation2 + $0x19] sm:$0xff]
    %v4475 = vld [vmem:[#allocation2 + $0x21] sm:$0xff]
    %v4476 = vld [vmem:[#allocation2 + $0x31] sm:$0xff]
    %v4477 = vld [vmem:[#allocation2 + $0x39] sm:$0xff]
    %v4478 = vld [vmem:[#allocation2 + $0x49] sm:$0xff]
    %v4479 = vld [vmem:[#allocation2 + $0x51] sm:$0xff]
    %v4480 = vld [vmem:[#allocation2 + $0x61] sm:$0xff]
    %v4481 = vld [vmem:[#allocation2 + $0x69] sm:$0xff]
    %v4482 = vld [vmem:[#allocation2 + $0x79] sm:$0xff]
    %v4483 = vld [vmem:[#allocation2 + $0x81] sm:$0xff]
    %v4484 = vld [vmem:[#allocation2 + $0x91] sm:$0xff]
    %v4485 = vld [vmem:[#allocation2 + $0x99] sm:$0xff]
    %v4486 = vld [vmem:[#allocation2 + $0xa9] sm:$0xff]
    %v4487 = vld [vmem:[#allocation2 + $0xb1] sm:$0xff]
    %v4488 = vld [vmem:[#allocation2 + $0xc1] sm:$0xff]
    %v4489 = vld [vmem:[#allocation2 + $0xc9] sm:$0xff]
    %v4490 = vld [vmem:[#allocation2 + $0xd9] sm:$0xff]
    %v4491 = vld [vmem:[#allocation2 + $0xe1] sm:$0xff]
    %v4492 = vld [vmem:[#allocation2 + $0xf1] sm:$0xff]
    %v4493 = vld [vmem:[#allocation2 + $0xf9] sm:$0xff]
    %v4494 = vld [vmem:[#allocation2 + $0x109] sm:$0xff]
    %v4495 = vld [vmem:[#allocation2 + $0x111] sm:$0xff]
    %v4496 = vld [vmem:[#allocation2 + $0x121] sm:$0xff]
    %v4497 = vld [vmem:[#allocation2 + $0x129] sm:$0xff]
    %v4498 = vld [vmem:[#allocation2 + $0x139] sm:$0xff]
    %v4499 = vld [vmem:[#allocation2 + $0x141] sm:$0xff]
    %v4500 = vld [vmem:[#allocation2 + $0x151] sm:$0xff]
    %v4501 = vld [vmem:[#allocation2 + $0x159] sm:$0xff]
    %v4502 = vld [vmem:[#allocation2 + $0x169] sm:$0xff]
    %v4503 = vld [vmem:[#allocation2 + $0x171] sm:$0xff]
    %v4504 = vld [vmem:[#allocation2 + $0x1b1] sm:$0xff]
    %v4505 = vld [vmem:[#allocation2 + $0x1b9] sm:$0xff]
    %v4506 = vld [vmem:[#allocation2 + $0x1c9] sm:$0xff]
    %v4507 = vld [vmem:[#allocation2 + $0x1d1] sm:$0xff]
    %v4508 = vld [vmem:[#allocation2 + $0x1e1] sm:$0xff]
    %v4509 = vld [vmem:[#allocation2 + $0x1e9] sm:$0xff]
    %v4510 = vld [vmem:[#allocation2 + $0x1f9] sm:$0xff]
    %v4511 = vld [vmem:[#allocation2 + $0x201] sm:$0xff]
    %v4512 = vld [vmem:[#allocation2 + $0x211] sm:$0xff]
    %v4513 = vld [vmem:[#allocation2 + $0x219] sm:$0xff]
    %v4514 = vld [vmem:[#allocation2 + $0x229] sm:$0xff]
    %v4515 = vld [vmem:[#allocation2 + $0x231] sm:$0xff]
    %v4516 = vld [vmem:[#allocation2 + $0x241] sm:$0xff]
    %v4517 = vld [vmem:[#allocation2 + $0x249] sm:$0xff]
    %v4518 = vld [vmem:[#allocation2 + $0x259] sm:$0xff]
    %v4519 = vld [vmem:[#allocation2 + $0x261] sm:$0xff]
    %v4520 = vld [vmem:[#allocation2 + $0x271] sm:$0xff]
    %v4521 = vld [vmem:[#allocation2 + $0x279] sm:$0xff]
    %v4522 = vld [vmem:[#allocation2 + $0x289] sm:$0xff]
    %v4523 = vld [vmem:[#allocation2 + $0x291] sm:$0xff]
    %v4524 = vld [vmem:[#allocation2 + $0x2a1] sm:$0xff]
    %v4525 = vld [vmem:[#allocation2 + $0x2a9] sm:$0xff]
    %v4526 = vld [vmem:[#allocation2 + $0x2b9] sm:$0xff]
    %v4527 = vld [vmem:[#allocation2 + $0x2c1] sm:$0xff]
    %v4528 = vld [vmem:[#allocation2 + $0x2d1] sm:$0xff]
    %v4529 = vld [vmem:[#allocation2 + $0x2d9] sm:$0xff]
    %v4530 = vld [vmem:[#allocation2 + $0x2e9] sm:$0xff]
    %v4531 = vld [vmem:[#allocation2 + $0x2f1] sm:$0xff]
    %v4532 = vld [vmem:[#allocation2 + $0x301] sm:$0xff]
    %v4533 = vld [vmem:[#allocation2 + $0x309] sm:$0xff]
    %v4534 = vld [vmem:[#allocation2 + $0x319] sm:$0xff]
    %v4535 = vld [vmem:[#allocation2 + $0x321] sm:$0xff]
    %v4536 = vld [vmem:[#allocation2 + $0x2] sm:$0xff]
    %v4537 = vld [vmem:[#allocation2 + $0xa] sm:$0xff]
    %v4538 = vld [vmem:[#allocation2 + $0x1a] sm:$0xff]
    %v4539 = vld [vmem:[#allocation2 + $0x22] sm:$0xff]
    %v4540 = vld [vmem:[#allocation2 + $0x32] sm:$0xff]
    %v4541 = vld [vmem:[#allocation2 + $0x3a] sm:$0xff]
    %v4542 = vld [vmem:[#allocation2 + $0x4a] sm:$0xff]
    %v4543 = vld [vmem:[#allocation2 + $0x52] sm:$0xff]
    %v4544 = vld [vmem:[#allocation2 + $0x62] sm:$0xff]
    %v4545 = vld [vmem:[#allocation2 + $0x6a] sm:$0xff]
    %v4546 = vld [vmem:[#allocation2 + $0x7a] sm:$0xff]
    %v4547 = vld [vmem:[#allocation2 + $0x82] sm:$0xff]
    %v4548 = vld [vmem:[#allocation2 + $0x92] sm:$0xff]
    %v4549 = vld [vmem:[#allocation2 + $0x9a] sm:$0xff]
    %v4550 = vld [vmem:[#allocation2 + $0xaa] sm:$0xff]
    %v4551 = vld [vmem:[#allocation2 + $0xb2] sm:$0xff]
    %v4552 = vld [vmem:[#allocation2 + $0xc2] sm:$0xff]
    %v4553 = vld [vmem:[#allocation2 + $0xca] sm:$0xff]
    %v4554 = vld [vmem:[#allocation2 + $0xda] sm:$0xff]
    %v4555 = vld [vmem:[#allocation2 + $0xe2] sm:$0xff]
    %v4556 = vld [vmem:[#allocation2 + $0xf2] sm:$0xff]
    %v4557 = vld [vmem:[#allocation2 + $0xfa] sm:$0xff]
    %v4558 = vld [vmem:[#allocation2 + $0x10a] sm:$0xff]
    %v4559 = vld [vmem:[#allocation2 + $0x112] sm:$0xff]
    %v4560 = vld [vmem:[#allocation2 + $0x122] sm:$0xff]
    %v4561 = vld [vmem:[#allocation2 + $0x12a] sm:$0xff]
    %v4562 = vld [vmem:[#allocation2 + $0x13a] sm:$0xff]
    %v4563 = vld [vmem:[#allocation2 + $0x142] sm:$0xff]
    %v4564 = vld [vmem:[#allocation2 + $0x152] sm:$0xff]
    %v4565 = vld [vmem:[#allocation2 + $0x15a] sm:$0xff]
    %v4566 = vld [vmem:[#allocation2 + $0x16a] sm:$0xff]
    %v4567 = vld [vmem:[#allocation2 + $0x172] sm:$0xff]
    %v4568 = vld [vmem:[#allocation2 + $0x1b2] sm:$0xff]
    %v4569 = vld [vmem:[#allocation2 + $0x1ba] sm:$0xff]
    %v4570 = vld [vmem:[#allocation2 + $0x1ca] sm:$0xff]
    %v4571 = vld [vmem:[#allocation2 + $0x1d2] sm:$0xff]
    %v4572 = vld [vmem:[#allocation2 + $0x1e2] sm:$0xff]
    %v4573 = vld [vmem:[#allocation2 + $0x1ea] sm:$0xff]
    %v4574 = vld [vmem:[#allocation2 + $0x1fa] sm:$0xff]
    %v4575 = vld [vmem:[#allocation2 + $0x202] sm:$0xff]
    %v4576 = vld [vmem:[#allocation2 + $0x212] sm:$0xff]
    %v4577 = vld [vmem:[#allocation2 + $0x21a] sm:$0xff]
    %v4578 = vld [vmem:[#allocation2 + $0x22a] sm:$0xff]
    %v4579 = vld [vmem:[#allocation2 + $0x232] sm:$0xff]
    %v4580 = vld [vmem:[#allocation2 + $0x242] sm:$0xff]
    %v4581 = vld [vmem:[#allocation2 + $0x24a] sm:$0xff]
    %v4582 = vld [vmem:[#allocation2 + $0x25a] sm:$0xff]
    %v4583 = vld [vmem:[#allocation2 + $0x262] sm:$0xff]
    %v4584 = vld [vmem:[#allocation2 + $0x272] sm:$0xff]
    %v4585 = vld [vmem:[#allocation2 + $0x27a] sm:$0xff]
    %v4586 = vld [vmem:[#allocation2 + $0x28a] sm:$0xff]
    %v4587 = vld [vmem:[#allocation2 + $0x292] sm:$0xff]
    %v4588 = vld [vmem:[#allocation2 + $0x2a2] sm:$0xff]
    %v4589 = vld [vmem:[#allocation2 + $0x2aa] sm:$0xff]
    %v4590 = vld [vmem:[#allocation2 + $0x2ba] sm:$0xff]
    %v4591 = vld [vmem:[#allocation2 + $0x2c2] sm:$0xff]
    %v4592 = vld [vmem:[#allocation2 + $0x2d2] sm:$0xff]
    %v4593 = vld [vmem:[#allocation2 + $0x2da] sm:$0xff]
    %v4594 = vld [vmem:[#allocation2 + $0x2ea] sm:$0xff]
    %v4595 = vld [vmem:[#allocation2 + $0x2f2] sm:$0xff]
    %v4596 = vld [vmem:[#allocation2 + $0x302] sm:$0xff]
    %v4597 = vld [vmem:[#allocation2 + $0x30a] sm:$0xff]
    %v4598 = vld [vmem:[#allocation2 + $0x31a] sm:$0xff]
    %v4599 = vld [vmem:[#allocation2 + $0x322] sm:$0xff]
    %v4600 = vld [vmem:[%s4278] sm:$0xff]
    %v4601 = vld [vmem:[%s4278 + $0x8] sm:$0xff]
    %v4602 = vld [vmem:[%s4278 + $0x18] sm:$0xff]
    %v4603 = vld [vmem:[%s4278 + $0x20] sm:$0xff]
    %v4604 = vld [vmem:[%s4278 + $0x30] sm:$0xff]
    %v4605 = vld [vmem:[%s4278 + $0x38] sm:$0xff]
    %v4606 = vld [vmem:[%s4278 + $0x48] sm:$0xff]
    %v4607 = vld [vmem:[%s4278 + $0x50] sm:$0xff]
    %v4608 = vld [vmem:[%s4278 + $0x60] sm:$0xff]
    %v4609 = vld [vmem:[%s4278 + $0x68] sm:$0xff]
    %v4610 = vld [vmem:[%s4278 + $0x78] sm:$0xff]
    %v4611 = vld [vmem:[%s4278 + $0x80] sm:$0xff]
    %v4612 = vld [vmem:[%s4278 + $0x90] sm:$0xff]
    %v4613 = vld [vmem:[%s4278 + $0x98] sm:$0xff]
    %v4614 = vld [vmem:[%s4278 + $0xa8] sm:$0xff]
    %v4615 = vld [vmem:[%s4278 + $0xb0] sm:$0xff]
    %v4616 = vld [vmem:[%s4278 + $0xc0] sm:$0xff]
    %v4617 = vld [vmem:[%s4278 + $0xc8] sm:$0xff]
    %v4618 = vld [vmem:[%s4278 + $0xd8] sm:$0xff]
    %v4619 = vld [vmem:[%s4278 + $0xe0] sm:$0xff]
    %v4620 = vld [vmem:[%s4278 + $0xf0] sm:$0xff]
    %v4621 = vld [vmem:[%s4278 + $0xf8] sm:$0xff]
    %v4622 = vld [vmem:[%s4278 + $0x108] sm:$0xff]
    %v4623 = vld [vmem:[%s4278 + $0x110] sm:$0xff]
    %v4624 = vld [vmem:[%s4278 + $0x120] sm:$0xff]
    %v4625 = vld [vmem:[%s4278 + $0x128] sm:$0xff]
    %v4626 = vld [vmem:[%s4278 + $0x138] sm:$0xff]
    %v4627 = vld [vmem:[%s4278 + $0x140] sm:$0xff]
    %v4628 = vld [vmem:[%s4278 + $0x150] sm:$0xff]
    %v4629 = vld [vmem:[%s4278 + $0x158] sm:$0xff]
    %v4630 = vld [vmem:[%s4278 + $0x168] sm:$0xff]
    %v4631 = vld [vmem:[%s4278 + $0x170] sm:$0xff]
    %v4632 = vld [vmem:[%s4278 + $0x1b0] sm:$0xff]
    %v4633 = vld [vmem:[%s4278 + $0x1b8] sm:$0xff]
    %v4634 = vld [vmem:[%s4278 + $0x1c8] sm:$0xff]
    %v4635 = vld [vmem:[%s4278 + $0x1d0] sm:$0xff]
    %v4636 = vld [vmem:[%s4278 + $0x1e0] sm:$0xff]
    %v4637 = vld [vmem:[%s4278 + $0x1e8] sm:$0xff]
    %v4638 = vld [vmem:[%s4278 + $0x1f8] sm:$0xff]
    %v4639 = vld [vmem:[%s4278 + $0x200] sm:$0xff]
    %v4640 = vld [vmem:[%s4278 + $0x210] sm:$0xff]
    %v4641 = vld [vmem:[%s4278 + $0x218] sm:$0xff]
    %v4642 = vld [vmem:[%s4278 + $0x228] sm:$0xff]
    %v4643 = vld [vmem:[%s4278 + $0x230] sm:$0xff]
    %v4644 = vld [vmem:[%s4278 + $0x240] sm:$0xff]
    %v4645 = vld [vmem:[%s4278 + $0x248] sm:$0xff]
    %v4646 = vld [vmem:[%s4278 + $0x258] sm:$0xff]
    %v4647 = vld [vmem:[%s4278 + $0x260] sm:$0xff]
    %v4648 = vld [vmem:[%s4278 + $0x270] sm:$0xff]
    %v4649 = vld [vmem:[%s4278 + $0x278] sm:$0xff]
    %v4650 = vld [vmem:[%s4278 + $0x288] sm:$0xff]
    %v4651 = vld [vmem:[%s4278 + $0x290] sm:$0xff]
    %v4652 = vld [vmem:[%s4278 + $0x2a0] sm:$0xff]
    %v4653 = vld [vmem:[%s4278 + $0x2a8] sm:$0xff]
    %v4654 = vld [vmem:[%s4278 + $0x2b8] sm:$0xff]
    %v4655 = vld [vmem:[%s4278 + $0x2c0] sm:$0xff]
    %v4656 = vld [vmem:[%s4278 + $0x2d0] sm:$0xff]
    %v4657 = vld [vmem:[%s4278 + $0x2d8] sm:$0xff]
    %v4658 = vld [vmem:[%s4278 + $0x2e8] sm:$0xff]
    %v4659 = vld [vmem:[%s4278 + $0x2f0] sm:$0xff]
    %v4660 = vld [vmem:[%s4278 + $0x300] sm:$0xff]
    %v4661 = vld [vmem:[%s4278 + $0x308] sm:$0xff]
    %v4662 = vld [vmem:[%s4278 + $0x318] sm:$0xff]
    %v4663 = vld [vmem:[%s4278 + $0x320] sm:$0xff]
    %v4664 = vld [vmem:[%s4278 + $0x1] sm:$0xff]
    %v4665 = vld [vmem:[%s4278 + $0x9] sm:$0xff]
    %v4666 = vld [vmem:[%s4278 + $0x19] sm:$0xff]
    %v4667 = vld [vmem:[%s4278 + $0x21] sm:$0xff]
    %v4668 = vld [vmem:[%s4278 + $0x31] sm:$0xff]
    %v4669 = vld [vmem:[%s4278 + $0x39] sm:$0xff]
    %v4670 = vld [vmem:[%s4278 + $0x49] sm:$0xff]
    %v4671 = vld [vmem:[%s4278 + $0x51] sm:$0xff]
    %v4672 = vld [vmem:[%s4278 + $0x61] sm:$0xff]
    %v4673 = vld [vmem:[%s4278 + $0x69] sm:$0xff]
    %v4674 = vld [vmem:[%s4278 + $0x79] sm:$0xff]
    %v4675 = vld [vmem:[%s4278 + $0x81] sm:$0xff]
    %v4676 = vld [vmem:[%s4278 + $0x91] sm:$0xff]
    %v4677 = vld [vmem:[%s4278 + $0x99] sm:$0xff]
    %v4678 = vld [vmem:[%s4278 + $0xa9] sm:$0xff]
    %v4679 = vld [vmem:[%s4278 + $0xb1] sm:$0xff]
    %v4680 = vld [vmem:[%s4278 + $0xc1] sm:$0xff]
    %v4681 = vld [vmem:[%s4278 + $0xc9] sm:$0xff]
    %v4682 = vld [vmem:[%s4278 + $0xd9] sm:$0xff]
    %v4683 = vld [vmem:[%s4278 + $0xe1] sm:$0xff]
    %v4684 = vld [vmem:[%s4278 + $0xf1] sm:$0xff]
    %v4685 = vld [vmem:[%s4278 + $0xf9] sm:$0xff]
    %v4686 = vld [vmem:[%s4278 + $0x109] sm:$0xff]
    %v4687 = vld [vmem:[%s4278 + $0x111] sm:$0xff]
    %v4688 = vld [vmem:[%s4278 + $0x121] sm:$0xff]
    %v4689 = vld [vmem:[%s4278 + $0x129] sm:$0xff]
    %v4690 = vld [vmem:[%s4278 + $0x139] sm:$0xff]
    %v4691 = vld [vmem:[%s4278 + $0x141] sm:$0xff]
    %v4692 = vld [vmem:[%s4278 + $0x151] sm:$0xff]
    %v4693 = vld [vmem:[%s4278 + $0x159] sm:$0xff]
    %v4694 = vld [vmem:[%s4278 + $0x169] sm:$0xff]
    %v4695 = vld [vmem:[%s4278 + $0x171] sm:$0xff]
    %v4696 = vld [vmem:[%s4278 + $0x1b1] sm:$0xff]
    %v4697 = vld [vmem:[%s4278 + $0x1b9] sm:$0xff]
    %v4698 = vld [vmem:[%s4278 + $0x1c9] sm:$0xff]
    %v4699 = vld [vmem:[%s4278 + $0x1d1] sm:$0xff]
    %v4700 = vld [vmem:[%s4278 + $0x1e1] sm:$0xff]
    %v4701 = vld [vmem:[%s4278 + $0x1e9] sm:$0xff]
    %v4702 = vld [vmem:[%s4278 + $0x1f9] sm:$0xff]
    %v4703 = vld [vmem:[%s4278 + $0x201] sm:$0xff]
    %v4704 = vld [vmem:[%s4278 + $0x211] sm:$0xff]
    %v4705 = vld [vmem:[%s4278 + $0x219] sm:$0xff]
    %v4706 = vld [vmem:[%s4278 + $0x229] sm:$0xff]
    %v4707 = vld [vmem:[%s4278 + $0x231] sm:$0xff]
    %v4708 = vld [vmem:[%s4278 + $0x241] sm:$0xff]
    %v4709 = vld [vmem:[%s4278 + $0x249] sm:$0xff]
    %v4710 = vld [vmem:[%s4278 + $0x259] sm:$0xff]
    %v4711 = vld [vmem:[%s4278 + $0x261] sm:$0xff]
    %v4712 = vld [vmem:[%s4278 + $0x271] sm:$0xff]
    %v4713 = vld [vmem:[%s4278 + $0x279] sm:$0xff]
    %v4714 = vld [vmem:[%s4278 + $0x289] sm:$0xff]
    %v4715 = vld [vmem:[%s4278 + $0x291] sm:$0xff]
    %v4716 = vld [vmem:[%s4278 + $0x2a1] sm:$0xff]
    %v4717 = vld [vmem:[%s4278 + $0x2a9] sm:$0xff]
    %v4718 = vld [vmem:[%s4278 + $0x2b9] sm:$0xff]
    %v4719 = vld [vmem:[%s4278 + $0x2c1] sm:$0xff]
    %v4720 = vld [vmem:[%s4278 + $0x2d1] sm:$0xff]
    %v4721 = vld [vmem:[%s4278 + $0x2d9] sm:$0xff]
    %v4722 = vld [vmem:[%s4278 + $0x2e9] sm:$0xff]
    %v4723 = vld [vmem:[%s4278 + $0x2f1] sm:$0xff]
    %v4724 = vld [vmem:[%s4278 + $0x301] sm:$0xff]
    %v4725 = vld [vmem:[%s4278 + $0x309] sm:$0xff]
    %v4726 = vld [vmem:[%s4278 + $0x319] sm:$0xff]
    %v4727 = vld [vmem:[%s4278 + $0x321] sm:$0xff]
    %v4728 = vld [vmem:[%s4278 + $0x2] sm:$0xff]
    %v4729 = vld [vmem:[%s4278 + $0xa] sm:$0xff]
    %v4730 = vld [vmem:[%s4278 + $0x1a] sm:$0xff]
    %v4731 = vld [vmem:[%s4278 + $0x22] sm:$0xff]
    %v4732 = vld [vmem:[%s4278 + $0x32] sm:$0xff]
    %v4733 = vld [vmem:[%s4278 + $0x3a] sm:$0xff]
    %v4734 = vld [vmem:[%s4278 + $0x4a] sm:$0xff]
    %v4735 = vld [vmem:[%s4278 + $0x52] sm:$0xff]
    %v4736 = vld [vmem:[%s4278 + $0x62] sm:$0xff]
    %v4737 = vld [vmem:[%s4278 + $0x6a] sm:$0xff]
    %v4738 = vld [vmem:[%s4278 + $0x7a] sm:$0xff]
    %v4739 = vld [vmem:[%s4278 + $0x82] sm:$0xff]
    %v4740 = vld [vmem:[%s4278 + $0x92] sm:$0xff]
    %v4741 = vld [vmem:[%s4278 + $0x9a] sm:$0xff]
    %v4742 = vld [vmem:[%s4278 + $0xaa] sm:$0xff]
    %v4743 = vld [vmem:[%s4278 + $0xb2] sm:$0xff]
    %v4744 = vld [vmem:[%s4278 + $0xc2] sm:$0xff]
    %v4745 = vld [vmem:[%s4278 + $0xca] sm:$0xff]
    %v4746 = vld [vmem:[%s4278 + $0xda] sm:$0xff]
    %v4747 = vld [vmem:[%s4278 + $0xe2] sm:$0xff]
    %v4748 = vld [vmem:[%s4278 + $0xf2] sm:$0xff]
    %v4749 = vld [vmem:[%s4278 + $0xfa] sm:$0xff]
    %v4750 = vld [vmem:[%s4278 + $0x10a] sm:$0xff]
    %v4751 = vld [vmem:[%s4278 + $0x112] sm:$0xff]
    %v4752 = vld [vmem:[%s4278 + $0x122] sm:$0xff]
    %v4753 = vld [vmem:[%s4278 + $0x12a] sm:$0xff]
    %v4754 = vld [vmem:[%s4278 + $0x13a] sm:$0xff]
    %v4755 = vld [vmem:[%s4278 + $0x142] sm:$0xff]
    %v4756 = vld [vmem:[%s4278 + $0x152] sm:$0xff]
    %v4757 = vld [vmem:[%s4278 + $0x15a] sm:$0xff]
    %v4758 = vld [vmem:[%s4278 + $0x16a] sm:$0xff]
    %v4759 = vld [vmem:[%s4278 + $0x172] sm:$0xff]
    %v4760 = vld [vmem:[%s4278 + $0x1b2] sm:$0xff]
    %v4761 = vld [vmem:[%s4278 + $0x1ba] sm:$0xff]
    %v4762 = vld [vmem:[%s4278 + $0x1ca] sm:$0xff]
    %v4763 = vld [vmem:[%s4278 + $0x1d2] sm:$0xff]
    %v4764 = vld [vmem:[%s4278 + $0x1e2] sm:$0xff]
    %v4765 = vld [vmem:[%s4278 + $0x1ea] sm:$0xff]
    %v4766 = vld [vmem:[%s4278 + $0x1fa] sm:$0xff]
    %v4767 = vld [vmem:[%s4278 + $0x202] sm:$0xff]
    %v4768 = vld [vmem:[%s4278 + $0x212] sm:$0xff]
    %v4769 = vld [vmem:[%s4278 + $0x21a] sm:$0xff]
    %v4770 = vld [vmem:[%s4278 + $0x22a] sm:$0xff]
    %v4771 = vld [vmem:[%s4278 + $0x232] sm:$0xff]
    %v4772 = vld [vmem:[%s4278 + $0x242] sm:$0xff]
    %v4773 = vld [vmem:[%s4278 + $0x24a] sm:$0xff]
    %v4774 = vld [vmem:[%s4278 + $0x25a] sm:$0xff]
    %v4775 = vld [vmem:[%s4278 + $0x262] sm:$0xff]
    %v4776 = vld [vmem:[%s4278 + $0x272] sm:$0xff]
    %v4777 = vld [vmem:[%s4278 + $0x27a] sm:$0xff]
    %v4778 = vld [vmem:[%s4278 + $0x28a] sm:$0xff]
    %v4779 = vld [vmem:[%s4278 + $0x292] sm:$0xff]
    %v4780 = vld [vmem:[%s4278 + $0x2a2] sm:$0xff]
    %v4781 = vld [vmem:[%s4278 + $0x2aa] sm:$0xff]
    %v4782 = vld [vmem:[%s4278 + $0x2ba] sm:$0xff]
    %v4783 = vld [vmem:[%s4278 + $0x2c2] sm:$0xff]
    %v4784 = vld [vmem:[%s4278 + $0x2d2] sm:$0xff]
    %v4785 = vld [vmem:[%s4278 + $0x2da] sm:$0xff]
    %v4786 = vld [vmem:[%s4278 + $0x2ea] sm:$0xff]
    %v4787 = vld [vmem:[%s4278 + $0x2f2] sm:$0xff]
    %v4788 = vld [vmem:[%s4278 + $0x302] sm:$0xff]
    %v4789 = vld [vmem:[%s4278 + $0x30a] sm:$0xff]
    %v4790 = vld [vmem:[%s4278 + $0x31a] sm:$0xff]
    %v4791 = vld [vmem:[%s4278 + $0x322] sm:$0xff]
    %s4792 = scalar_lea.vmem [#allocation2], 48
    %v4793 = vld [vmem:[%s4792] sm:$0xff]
    %v4794 = vld [vmem:[%s4792 + $0x8] sm:$0xff]
    %v4795 = vld [vmem:[%s4792 + $0x18] sm:$0xff]
    %v4796 = vld [vmem:[%s4792 + $0x20] sm:$0xff]
    %v4797 = vld [vmem:[%s4792 + $0x30] sm:$0xff]
    %v4798 = vld [vmem:[%s4792 + $0x38] sm:$0xff]
    %v4799 = vld [vmem:[%s4792 + $0x48] sm:$0xff]
    %v4800 = vld [vmem:[%s4792 + $0x50] sm:$0xff]
    %v4801 = vld [vmem:[%s4792 + $0x60] sm:$0xff]
    %v4802 = vld [vmem:[%s4792 + $0x68] sm:$0xff]
    %v4803 = vld [vmem:[%s4792 + $0x78] sm:$0xff]
    %v4804 = vld [vmem:[%s4792 + $0x80] sm:$0xff]
    %v4805 = vld [vmem:[%s4792 + $0x90] sm:$0xff]
    %v4806 = vld [vmem:[%s4792 + $0x98] sm:$0xff]
    %v4807 = vld [vmem:[%s4792 + $0xa8] sm:$0xff]
    %v4808 = vld [vmem:[%s4792 + $0xb0] sm:$0xff]
    %v4809 = vld [vmem:[%s4792 + $0xc0] sm:$0xff]
    %v4810 = vld [vmem:[%s4792 + $0xc8] sm:$0xff]
    %v4811 = vld [vmem:[%s4792 + $0xd8] sm:$0xff]
    %v4812 = vld [vmem:[%s4792 + $0xe0] sm:$0xff]
    %v4813 = vld [vmem:[%s4792 + $0xf0] sm:$0xff]
    %v4814 = vld [vmem:[%s4792 + $0xf8] sm:$0xff]
    %v4815 = vld [vmem:[%s4792 + $0x108] sm:$0xff]
    %v4816 = vld [vmem:[%s4792 + $0x110] sm:$0xff]
    %v4817 = vld [vmem:[%s4792 + $0x120] sm:$0xff]
    %v4818 = vld [vmem:[%s4792 + $0x128] sm:$0xff]
    %v4819 = vld [vmem:[%s4792 + $0x138] sm:$0xff]
    %v4820 = vld [vmem:[%s4792 + $0x140] sm:$0xff]
    %v4821 = vld [vmem:[%s4792 + $0x150] sm:$0xff]
    %v4822 = vld [vmem:[%s4792 + $0x158] sm:$0xff]
    %v4823 = vld [vmem:[%s4792 + $0x168] sm:$0xff]
    %v4824 = vld [vmem:[%s4792 + $0x170] sm:$0xff]
    %v4825 = vld [vmem:[%s4792 + $0x1b0] sm:$0xff]
    %v4826 = vld [vmem:[%s4792 + $0x1b8] sm:$0xff]
    %v4827 = vld [vmem:[%s4792 + $0x1c8] sm:$0xff]
    %v4828 = vld [vmem:[%s4792 + $0x1d0] sm:$0xff]
    %v4829 = vld [vmem:[%s4792 + $0x1e0] sm:$0xff]
    %v4830 = vld [vmem:[%s4792 + $0x1e8] sm:$0xff]
    %v4831 = vld [vmem:[%s4792 + $0x1f8] sm:$0xff]
    %v4832 = vld [vmem:[%s4792 + $0x200] sm:$0xff]
    %v4833 = vld [vmem:[%s4792 + $0x210] sm:$0xff]
    %v4834 = vld [vmem:[%s4792 + $0x218] sm:$0xff]
    %v4835 = vld [vmem:[%s4792 + $0x228] sm:$0xff]
    %v4836 = vld [vmem:[%s4792 + $0x230] sm:$0xff]
    %v4837 = vld [vmem:[%s4792 + $0x240] sm:$0xff]
    %v4838 = vld [vmem:[%s4792 + $0x248] sm:$0xff]
    %v4839 = vld [vmem:[%s4792 + $0x258] sm:$0xff]
    %v4840 = vld [vmem:[%s4792 + $0x260] sm:$0xff]
    %v4841 = vld [vmem:[%s4792 + $0x270] sm:$0xff]
    %v4842 = vld [vmem:[%s4792 + $0x278] sm:$0xff]
    %v4843 = vld [vmem:[%s4792 + $0x288] sm:$0xff]
    %v4844 = vld [vmem:[%s4792 + $0x290] sm:$0xff]
    %v4845 = vld [vmem:[%s4792 + $0x2a0] sm:$0xff]
    %v4846 = vld [vmem:[%s4792 + $0x2a8] sm:$0xff]
    %v4847 = vld [vmem:[%s4792 + $0x2b8] sm:$0xff]
    %v4848 = vld [vmem:[%s4792 + $0x2c0] sm:$0xff]
    %v4849 = vld [vmem:[%s4792 + $0x2d0] sm:$0xff]
    %v4850 = vld [vmem:[%s4792 + $0x2d8] sm:$0xff]
    %v4851 = vld [vmem:[%s4792 + $0x2e8] sm:$0xff]
    %v4852 = vld [vmem:[%s4792 + $0x2f0] sm:$0xff]
    %v4853 = vld [vmem:[%s4792 + $0x300] sm:$0xff]
    %v4854 = vld [vmem:[%s4792 + $0x308] sm:$0xff]
    %v4855 = vld [vmem:[%s4792 + $0x318] sm:$0xff]
    %v4856 = vld [vmem:[%s4792 + $0x320] sm:$0xff]
    %v4857 = vld [vmem:[%s4792 + $0x1] sm:$0xff]
    %v4858 = vld [vmem:[%s4792 + $0x9] sm:$0xff]
    %v4859 = vld [vmem:[%s4792 + $0x19] sm:$0xff]
    %v4860 = vld [vmem:[%s4792 + $0x21] sm:$0xff]
    %v4861 = vld [vmem:[%s4792 + $0x31] sm:$0xff]
    %v4862 = vld [vmem:[%s4792 + $0x39] sm:$0xff]
    %v4863 = vld [vmem:[%s4792 + $0x49] sm:$0xff]
    %v4864 = vld [vmem:[%s4792 + $0x51] sm:$0xff]
    %v4865 = vld [vmem:[%s4792 + $0x61] sm:$0xff]
    %v4866 = vld [vmem:[%s4792 + $0x69] sm:$0xff]
    %v4867 = vld [vmem:[%s4792 + $0x79] sm:$0xff]
    %v4868 = vld [vmem:[%s4792 + $0x81] sm:$0xff]
    %v4869 = vld [vmem:[%s4792 + $0x91] sm:$0xff]
    %v4870 = vld [vmem:[%s4792 + $0x99] sm:$0xff]
    %v4871 = vld [vmem:[%s4792 + $0xa9] sm:$0xff]
    %v4872 = vld [vmem:[%s4792 + $0xb1] sm:$0xff]
    %v4873 = vld [vmem:[%s4792 + $0xc1] sm:$0xff]
    %v4874 = vld [vmem:[%s4792 + $0xc9] sm:$0xff]
    %v4875 = vld [vmem:[%s4792 + $0xd9] sm:$0xff]
    %v4876 = vld [vmem:[%s4792 + $0xe1] sm:$0xff]
    %v4877 = vld [vmem:[%s4792 + $0xf1] sm:$0xff]
    %v4878 = vld [vmem:[%s4792 + $0xf9] sm:$0xff]
    %v4879 = vld [vmem:[%s4792 + $0x109] sm:$0xff]
    %v4880 = vld [vmem:[%s4792 + $0x111] sm:$0xff]
    %v4881 = vld [vmem:[%s4792 + $0x121] sm:$0xff]
    %v4882 = vld [vmem:[%s4792 + $0x129] sm:$0xff]
    %v4883 = vld [vmem:[%s4792 + $0x139] sm:$0xff]
    %v4884 = vld [vmem:[%s4792 + $0x141] sm:$0xff]
    %v4885 = vld [vmem:[%s4792 + $0x151] sm:$0xff]
    %v4886 = vld [vmem:[%s4792 + $0x159] sm:$0xff]
    %v4887 = vld [vmem:[%s4792 + $0x169] sm:$0xff]
    %v4888 = vld [vmem:[%s4792 + $0x171] sm:$0xff]
    %v4889 = vld [vmem:[%s4792 + $0x1b1] sm:$0xff]
    %v4890 = vld [vmem:[%s4792 + $0x1b9] sm:$0xff]
    %v4891 = vld [vmem:[%s4792 + $0x1c9] sm:$0xff]
    %v4892 = vld [vmem:[%s4792 + $0x1d1] sm:$0xff]
    %v4893 = vld [vmem:[%s4792 + $0x1e1] sm:$0xff]
    %v4894 = vld [vmem:[%s4792 + $0x1e9] sm:$0xff]
    %v4895 = vld [vmem:[%s4792 + $0x1f9] sm:$0xff]
    %v4896 = vld [vmem:[%s4792 + $0x201] sm:$0xff]
    %v4897 = vld [vmem:[%s4792 + $0x211] sm:$0xff]
    %v4898 = vld [vmem:[%s4792 + $0x219] sm:$0xff]
    %v4899 = vld [vmem:[%s4792 + $0x229] sm:$0xff]
    %v4900 = vld [vmem:[%s4792 + $0x231] sm:$0xff]
    %v4901 = vld [vmem:[%s4792 + $0x241] sm:$0xff]
    %v4902 = vld [vmem:[%s4792 + $0x249] sm:$0xff]
    %v4903 = vld [vmem:[%s4792 + $0x259] sm:$0xff]
    %v4904 = vld [vmem:[%s4792 + $0x261] sm:$0xff]
    %v4905 = vld [vmem:[%s4792 + $0x271] sm:$0xff]
    %v4906 = vld [vmem:[%s4792 + $0x279] sm:$0xff]
    %v4907 = vld [vmem:[%s4792 + $0x289] sm:$0xff]
    %v4908 = vld [vmem:[%s4792 + $0x291] sm:$0xff]
    %v4909 = vld [vmem:[%s4792 + $0x2a1] sm:$0xff]
    %v4910 = vld [vmem:[%s4792 + $0x2a9] sm:$0xff]
    %v4911 = vld [vmem:[%s4792 + $0x2b9] sm:$0xff]
    %v4912 = vld [vmem:[%s4792 + $0x2c1] sm:$0xff]
    %v4913 = vld [vmem:[%s4792 + $0x2d1] sm:$0xff]
    %v4914 = vld [vmem:[%s4792 + $0x2d9] sm:$0xff]
    %v4915 = vld [vmem:[%s4792 + $0x2e9] sm:$0xff]
    %v4916 = vld [vmem:[%s4792 + $0x2f1] sm:$0xff]
    %v4917 = vld [vmem:[%s4792 + $0x301] sm:$0xff]
    %v4918 = vld [vmem:[%s4792 + $0x309] sm:$0xff]
    %v4919 = vld [vmem:[%s4792 + $0x319] sm:$0xff]
    %v4920 = vld [vmem:[%s4792 + $0x321] sm:$0xff]
    %v4921 = vld [vmem:[%s4792 + $0x2] sm:$0xff]
    %v4922 = vld [vmem:[%s4792 + $0xa] sm:$0xff]
    %v4923 = vld [vmem:[%s4792 + $0x1a] sm:$0xff]
    %v4924 = vld [vmem:[%s4792 + $0x22] sm:$0xff]
    %v4925 = vld [vmem:[%s4792 + $0x32] sm:$0xff]
    %v4926 = vld [vmem:[%s4792 + $0x3a] sm:$0xff]
    %v4927 = vld [vmem:[%s4792 + $0x4a] sm:$0xff]
    %v4928 = vld [vmem:[%s4792 + $0x52] sm:$0xff]
    %v4929 = vld [vmem:[%s4792 + $0x62] sm:$0xff]
    %v4930 = vld [vmem:[%s4792 + $0x6a] sm:$0xff]
    %v4931 = vld [vmem:[%s4792 + $0x7a] sm:$0xff]
    %v4932 = vld [vmem:[%s4792 + $0x82] sm:$0xff]
    %v4933 = vld [vmem:[%s4792 + $0x92] sm:$0xff]
    %v4934 = vld [vmem:[%s4792 + $0x9a] sm:$0xff]
    %v4935 = vld [vmem:[%s4792 + $0xaa] sm:$0xff]
    %v4936 = vld [vmem:[%s4792 + $0xb2] sm:$0xff]
    %v4937 = vld [vmem:[%s4792 + $0xc2] sm:$0xff]
    %v4938 = vld [vmem:[%s4792 + $0xca] sm:$0xff]
    %v4939 = vld [vmem:[%s4792 + $0xda] sm:$0xff]
    %v4940 = vld [vmem:[%s4792 + $0xe2] sm:$0xff]
    %v4941 = vld [vmem:[%s4792 + $0xf2] sm:$0xff]
    %v4942 = vld [vmem:[%s4792 + $0xfa] sm:$0xff]
    %v4943 = vld [vmem:[%s4792 + $0x10a] sm:$0xff]
    %v4944 = vld [vmem:[%s4792 + $0x112] sm:$0xff]
    %v4945 = vld [vmem:[%s4792 + $0x122] sm:$0xff]
    %v4946 = vld [vmem:[%s4792 + $0x12a] sm:$0xff]
    %v4947 = vld [vmem:[%s4792 + $0x13a] sm:$0xff]
    %v4948 = vld [vmem:[%s4792 + $0x142] sm:$0xff]
    %v4949 = vld [vmem:[%s4792 + $0x152] sm:$0xff]
    %v4950 = vld [vmem:[%s4792 + $0x15a] sm:$0xff]
    %v4951 = vld [vmem:[%s4792 + $0x16a] sm:$0xff]
    %v4952 = vld [vmem:[%s4792 + $0x172] sm:$0xff]
    %v4953 = vld [vmem:[%s4792 + $0x1b2] sm:$0xff]
    %v4954 = vld [vmem:[%s4792 + $0x1ba] sm:$0xff]
    %v4955 = vld [vmem:[%s4792 + $0x1ca] sm:$0xff]
    %v4956 = vld [vmem:[%s4792 + $0x1d2] sm:$0xff]
    %v4957 = vld [vmem:[%s4792 + $0x1e2] sm:$0xff]
    %v4958 = vld [vmem:[%s4792 + $0x1ea] sm:$0xff]
    %v4959 = vld [vmem:[%s4792 + $0x1fa] sm:$0xff]
    %v4960 = vld [vmem:[%s4792 + $0x202] sm:$0xff]
    %v4961 = vld [vmem:[%s4792 + $0x212] sm:$0xff]
    %v4962 = vld [vmem:[%s4792 + $0x21a] sm:$0xff]
    %v4963 = vld [vmem:[%s4792 + $0x22a] sm:$0xff]
    %v4964 = vld [vmem:[%s4792 + $0x232] sm:$0xff]
    %v4965 = vld [vmem:[%s4792 + $0x242] sm:$0xff]
    %v4966 = vld [vmem:[%s4792 + $0x24a] sm:$0xff]
    %v4967 = vld [vmem:[%s4792 + $0x25a] sm:$0xff]
    %v4968 = vld [vmem:[%s4792 + $0x262] sm:$0xff]
    %v4969 = vld [vmem:[%s4792 + $0x272] sm:$0xff]
    %v4970 = vld [vmem:[%s4792 + $0x27a] sm:$0xff]
    %v4971 = vld [vmem:[%s4792 + $0x28a] sm:$0xff]
    %v4972 = vld [vmem:[%s4792 + $0x292] sm:$0xff]
    %v4973 = vld [vmem:[%s4792 + $0x2a2] sm:$0xff]
    %v4974 = vld [vmem:[%s4792 + $0x2aa] sm:$0xff]
    %v4975 = vld [vmem:[%s4792 + $0x2ba] sm:$0xff]
    %v4976 = vld [vmem:[%s4792 + $0x2c2] sm:$0xff]
    %v4977 = vld [vmem:[%s4792 + $0x2d2] sm:$0xff]
    %v4978 = vld [vmem:[%s4792 + $0x2da] sm:$0xff]
    %v4979 = vld [vmem:[%s4792 + $0x2ea] sm:$0xff]
    %v4980 = vld [vmem:[%s4792 + $0x2f2] sm:$0xff]
    %v4981 = vld [vmem:[%s4792 + $0x302] sm:$0xff]
    %v4982 = vld [vmem:[%s4792 + $0x30a] sm:$0xff]
    %v4983 = vld [vmem:[%s4792 + $0x31a] sm:$0xff]
    %v4984 = vld [vmem:[%s4792 + $0x322] sm:$0xff]
    %5049 = vrot.lane.b32.xlu0 %v4472, 8
    %v5050 = vpop.permute.xlu0 %5049
    %5051 = vrot.lane.b32.xlu0 %v4473, 8
    %v5052 = vpop.permute.xlu0 %5051
    %5053 = vrot.lane.b32.xlu0 %v4474, 8
    %v5054 = vpop.permute.xlu0 %5053
    %5055 = vrot.lane.b32.xlu0 %v4475, 8
    %v5056 = vpop.permute.xlu0 %5055
    %5057 = vrot.lane.b32.xlu0 %v4476, 8
    %v5058 = vpop.permute.xlu0 %5057
    %5059 = vrot.lane.b32.xlu0 %v4477, 8
    %v5060 = vpop.permute.xlu0 %5059
    %5061 = vrot.lane.b32.xlu0 %v4478, 8
    %v5062 = vpop.permute.xlu0 %5061
    %5063 = vrot.lane.b32.xlu0 %v4479, 8
    %v5064 = vpop.permute.xlu0 %5063
    %5065 = vrot.lane.b32.xlu0 %v4480, 8
    %v5066 = vpop.permute.xlu0 %5065
    %5067 = vrot.lane.b32.xlu0 %v4481, 8
    %v5068 = vpop.permute.xlu0 %5067
    %5069 = vrot.lane.b32.xlu0 %v4482, 8
    %v5070 = vpop.permute.xlu0 %5069
    %5071 = vrot.lane.b32.xlu0 %v4483, 8
    %v5072 = vpop.permute.xlu0 %5071
    %5073 = vrot.lane.b32.xlu0 %v4484, 8
    %v5074 = vpop.permute.xlu0 %5073
    %5075 = vrot.lane.b32.xlu0 %v4485, 8
    %v5076 = vpop.permute.xlu0 %5075
    %5077 = vrot.lane.b32.xlu0 %v4486, 8
    %v5078 = vpop.permute.xlu0 %5077
    %5079 = vrot.lane.b32.xlu0 %v4487, 8
    %v5080 = vpop.permute.xlu0 %5079
    %5081 = vrot.lane.b32.xlu0 %v4488, 8
    %v5082 = vpop.permute.xlu0 %5081
    %5083 = vrot.lane.b32.xlu0 %v4489, 8
    %v5084 = vpop.permute.xlu0 %5083
    %5085 = vrot.lane.b32.xlu0 %v4490, 8
    %v5086 = vpop.permute.xlu0 %5085
    %5087 = vrot.lane.b32.xlu0 %v4491, 8
    %v5088 = vpop.permute.xlu0 %5087
    %5089 = vrot.lane.b32.xlu0 %v4492, 8
    %v5090 = vpop.permute.xlu0 %5089
    %5091 = vrot.lane.b32.xlu0 %v4493, 8
    %v5092 = vpop.permute.xlu0 %5091
    %5093 = vrot.lane.b32.xlu0 %v4494, 8
    %v5094 = vpop.permute.xlu0 %5093
    %5095 = vrot.lane.b32.xlu0 %v4495, 8
    %v5096 = vpop.permute.xlu0 %5095
    %5097 = vrot.lane.b32.xlu0 %v4496, 8
    %v5098 = vpop.permute.xlu0 %5097
    %5099 = vrot.lane.b32.xlu0 %v4497, 8
    %v5100 = vpop.permute.xlu0 %5099
    %5101 = vrot.lane.b32.xlu0 %v4498, 8
    %v5102 = vpop.permute.xlu0 %5101
    %5103 = vrot.lane.b32.xlu0 %v4499, 8
    %v5104 = vpop.permute.xlu0 %5103
    %5105 = vrot.lane.b32.xlu0 %v4500, 8
    %v5106 = vpop.permute.xlu0 %5105
    %5107 = vrot.lane.b32.xlu0 %v4501, 8
    %v5108 = vpop.permute.xlu0 %5107
    %5109 = vrot.lane.b32.xlu0 %v4502, 8
    %v5110 = vpop.permute.xlu0 %5109
    %5111 = vrot.lane.b32.xlu0 %v4503, 8
    %v5112 = vpop.permute.xlu0 %5111
    %5113 = vrot.lane.b32.xlu0 %v4504, 8
    %v5114 = vpop.permute.xlu0 %5113
    %5115 = vrot.lane.b32.xlu0 %v4505, 8
    %v5116 = vpop.permute.xlu0 %5115
    %5117 = vrot.lane.b32.xlu0 %v4506, 8
    %v5118 = vpop.permute.xlu0 %5117
    %5119 = vrot.lane.b32.xlu0 %v4507, 8
    %v5120 = vpop.permute.xlu0 %5119
    %5121 = vrot.lane.b32.xlu0 %v4508, 8
    %v5122 = vpop.permute.xlu0 %5121
    %5123 = vrot.lane.b32.xlu0 %v4509, 8
    %v5124 = vpop.permute.xlu0 %5123
    %5125 = vrot.lane.b32.xlu0 %v4510, 8
    %v5126 = vpop.permute.xlu0 %5125
    %5127 = vrot.lane.b32.xlu0 %v4511, 8
    %v5128 = vpop.permute.xlu0 %5127
    %5129 = vrot.lane.b32.xlu0 %v4512, 8
    %v5130 = vpop.permute.xlu0 %5129
    %5131 = vrot.lane.b32.xlu0 %v4513, 8
    %v5132 = vpop.permute.xlu0 %5131
    %5133 = vrot.lane.b32.xlu0 %v4514, 8
    %v5134 = vpop.permute.xlu0 %5133
    %5135 = vrot.lane.b32.xlu0 %v4515, 8
    %v5136 = vpop.permute.xlu0 %5135
    %5137 = vrot.lane.b32.xlu0 %v4516, 8
    %v5138 = vpop.permute.xlu0 %5137
    %5139 = vrot.lane.b32.xlu0 %v4517, 8
    %v5140 = vpop.permute.xlu0 %5139
    %5141 = vrot.lane.b32.xlu0 %v4518, 8
    %v5142 = vpop.permute.xlu0 %5141
    %5143 = vrot.lane.b32.xlu0 %v4519, 8
    %v5144 = vpop.permute.xlu0 %5143
    %5145 = vrot.lane.b32.xlu0 %v4520, 8
    %v5146 = vpop.permute.xlu0 %5145
    %5147 = vrot.lane.b32.xlu0 %v4521, 8
    %v5148 = vpop.permute.xlu0 %5147
    %5149 = vrot.lane.b32.xlu0 %v4522, 8
    %v5150 = vpop.permute.xlu0 %5149
    %5151 = vrot.lane.b32.xlu0 %v4523, 8
    %v5152 = vpop.permute.xlu0 %5151
    %5153 = vrot.lane.b32.xlu0 %v4524, 8
    %v5154 = vpop.permute.xlu0 %5153
    %5155 = vrot.lane.b32.xlu0 %v4525, 8
    %v5156 = vpop.permute.xlu0 %5155
    %5157 = vrot.lane.b32.xlu0 %v4526, 8
    %v5158 = vpop.permute.xlu0 %5157
    %5159 = vrot.lane.b32.xlu0 %v4527, 8
    %v5160 = vpop.permute.xlu0 %5159
    %5161 = vrot.lane.b32.xlu0 %v4528, 8
    %v5162 = vpop.permute.xlu0 %5161
    %5163 = vrot.lane.b32.xlu0 %v4529, 8
    %v5164 = vpop.permute.xlu0 %5163
    %5165 = vrot.lane.b32.xlu0 %v4530, 8
    %v5166 = vpop.permute.xlu0 %5165
    %5167 = vrot.lane.b32.xlu0 %v4531, 8
    %v5168 = vpop.permute.xlu0 %5167
    %5169 = vrot.lane.b32.xlu0 %v4532, 8
    %v5170 = vpop.permute.xlu0 %5169
    %5171 = vrot.lane.b32.xlu0 %v4533, 8
    %v5172 = vpop.permute.xlu0 %5171
    %5173 = vrot.lane.b32.xlu0 %v4534, 8
    %v5174 = vpop.permute.xlu0 %5173
    %5175 = vrot.lane.b32.xlu0 %v4535, 8
    %v5176 = vpop.permute.xlu0 %5175
    %5305 = vrot.lane.b32.xlu0 %v4536, 16
    %v5306 = vpop.permute.xlu0 %5305
    %5307 = vrot.lane.b32.xlu0 %v4537, 16
    %v5308 = vpop.permute.xlu0 %5307
    %5309 = vrot.lane.b32.xlu0 %v4538, 16
    %v5310 = vpop.permute.xlu0 %5309
    %5311 = vrot.lane.b32.xlu0 %v4539, 16
    %v5312 = vpop.permute.xlu0 %5311
    %5313 = vrot.lane.b32.xlu0 %v4540, 16
    %v5314 = vpop.permute.xlu0 %5313
    %5315 = vrot.lane.b32.xlu0 %v4541, 16
    %v5316 = vpop.permute.xlu0 %5315
    %5317 = vrot.lane.b32.xlu0 %v4542, 16
    %v5318 = vpop.permute.xlu0 %5317
    %5319 = vrot.lane.b32.xlu0 %v4543, 16
    %v5320 = vpop.permute.xlu0 %5319
    %5321 = vrot.lane.b32.xlu0 %v4544, 16
    %v5322 = vpop.permute.xlu0 %5321
    %5323 = vrot.lane.b32.xlu0 %v4545, 16
    %v5324 = vpop.permute.xlu0 %5323
    %5325 = vrot.lane.b32.xlu0 %v4546, 16
    %v5326 = vpop.permute.xlu0 %5325
    %5327 = vrot.lane.b32.xlu0 %v4547, 16
    %v5328 = vpop.permute.xlu0 %5327
    %5329 = vrot.lane.b32.xlu0 %v4548, 16
    %v5330 = vpop.permute.xlu0 %5329
    %5331 = vrot.lane.b32.xlu0 %v4549, 16
    %v5332 = vpop.permute.xlu0 %5331
    %5333 = vrot.lane.b32.xlu0 %v4550, 16
    %v5334 = vpop.permute.xlu0 %5333
    %5335 = vrot.lane.b32.xlu0 %v4551, 16
    %v5336 = vpop.permute.xlu0 %5335
    %5337 = vrot.lane.b32.xlu0 %v4552, 16
    %v5338 = vpop.permute.xlu0 %5337
    %5339 = vrot.lane.b32.xlu0 %v4553, 16
    %v5340 = vpop.permute.xlu0 %5339
    %5341 = vrot.lane.b32.xlu0 %v4554, 16
    %v5342 = vpop.permute.xlu0 %5341
    %5343 = vrot.lane.b32.xlu0 %v4555, 16
    %v5344 = vpop.permute.xlu0 %5343
    %5345 = vrot.lane.b32.xlu0 %v4556, 16
    %v5346 = vpop.permute.xlu0 %5345
    %5347 = vrot.lane.b32.xlu0 %v4557, 16
    %v5348 = vpop.permute.xlu0 %5347
    %5349 = vrot.lane.b32.xlu0 %v4558, 16
    %v5350 = vpop.permute.xlu0 %5349
    %5351 = vrot.lane.b32.xlu0 %v4559, 16
    %v5352 = vpop.permute.xlu0 %5351
    %5353 = vrot.lane.b32.xlu0 %v4560, 16
    %v5354 = vpop.permute.xlu0 %5353
    %5355 = vrot.lane.b32.xlu0 %v4561, 16
    %v5356 = vpop.permute.xlu0 %5355
    %5357 = vrot.lane.b32.xlu0 %v4562, 16
    %v5358 = vpop.permute.xlu0 %5357
    %5359 = vrot.lane.b32.xlu0 %v4563, 16
    %v5360 = vpop.permute.xlu0 %5359
    %5361 = vrot.lane.b32.xlu0 %v4564, 16
    %v5362 = vpop.permute.xlu0 %5361
    %5363 = vrot.lane.b32.xlu0 %v4565, 16
    %v5364 = vpop.permute.xlu0 %5363
    %5365 = vrot.lane.b32.xlu0 %v4566, 16
    %v5366 = vpop.permute.xlu0 %5365
    %5367 = vrot.lane.b32.xlu0 %v4567, 16
    %v5368 = vpop.permute.xlu0 %5367
    %5369 = vrot.lane.b32.xlu0 %v4568, 16
    %v5370 = vpop.permute.xlu0 %5369
    %5371 = vrot.lane.b32.xlu0 %v4569, 16
    %v5372 = vpop.permute.xlu0 %5371
    %5373 = vrot.lane.b32.xlu0 %v4570, 16
    %v5374 = vpop.permute.xlu0 %5373
    %5375 = vrot.lane.b32.xlu0 %v4571, 16
    %v5376 = vpop.permute.xlu0 %5375
    %5377 = vrot.lane.b32.xlu0 %v4572, 16
    %v5378 = vpop.permute.xlu0 %5377
    %5379 = vrot.lane.b32.xlu0 %v4573, 16
    %v5380 = vpop.permute.xlu0 %5379
    %5381 = vrot.lane.b32.xlu0 %v4574, 16
    %v5382 = vpop.permute.xlu0 %5381
    %5383 = vrot.lane.b32.xlu0 %v4575, 16
    %v5384 = vpop.permute.xlu0 %5383
    %5385 = vrot.lane.b32.xlu0 %v4576, 16
    %v5386 = vpop.permute.xlu0 %5385
    %5387 = vrot.lane.b32.xlu0 %v4577, 16
    %v5388 = vpop.permute.xlu0 %5387
    %5389 = vrot.lane.b32.xlu0 %v4578, 16
    %v5390 = vpop.permute.xlu0 %5389
    %5391 = vrot.lane.b32.xlu0 %v4579, 16
    %v5392 = vpop.permute.xlu0 %5391
    %5393 = vrot.lane.b32.xlu0 %v4580, 16
    %v5394 = vpop.permute.xlu0 %5393
    %5395 = vrot.lane.b32.xlu0 %v4581, 16
    %v5396 = vpop.permute.xlu0 %5395
    %5397 = vrot.lane.b32.xlu0 %v4582, 16
    %v5398 = vpop.permute.xlu0 %5397
    %5399 = vrot.lane.b32.xlu0 %v4583, 16
    %v5400 = vpop.permute.xlu0 %5399
    %5401 = vrot.lane.b32.xlu0 %v4584, 16
    %v5402 = vpop.permute.xlu0 %5401
    %5403 = vrot.lane.b32.xlu0 %v4585, 16
    %v5404 = vpop.permute.xlu0 %5403
    %5405 = vrot.lane.b32.xlu0 %v4586, 16
    %v5406 = vpop.permute.xlu0 %5405
    %5407 = vrot.lane.b32.xlu0 %v4587, 16
    %v5408 = vpop.permute.xlu0 %5407
    %5409 = vrot.lane.b32.xlu0 %v4588, 16
    %v5410 = vpop.permute.xlu0 %5409
    %5411 = vrot.lane.b32.xlu0 %v4589, 16
    %v5412 = vpop.permute.xlu0 %5411
    %5413 = vrot.lane.b32.xlu0 %v4590, 16
    %v5414 = vpop.permute.xlu0 %5413
    %5415 = vrot.lane.b32.xlu0 %v4591, 16
    %v5416 = vpop.permute.xlu0 %5415
    %5417 = vrot.lane.b32.xlu0 %v4592, 16
    %v5418 = vpop.permute.xlu0 %5417
    %5419 = vrot.lane.b32.xlu0 %v4593, 16
    %v5420 = vpop.permute.xlu0 %5419
    %5421 = vrot.lane.b32.xlu0 %v4594, 16
    %v5422 = vpop.permute.xlu0 %5421
    %5423 = vrot.lane.b32.xlu0 %v4595, 16
    %v5424 = vpop.permute.xlu0 %5423
    %5425 = vrot.lane.b32.xlu0 %v4596, 16
    %v5426 = vpop.permute.xlu0 %5425
    %5427 = vrot.lane.b32.xlu0 %v4597, 16
    %v5428 = vpop.permute.xlu0 %5427
    %5429 = vrot.lane.b32.xlu0 %v4598, 16
    %v5430 = vpop.permute.xlu0 %5429
    %5431 = vrot.lane.b32.xlu0 %v4599, 16
    %v5432 = vpop.permute.xlu0 %5431
    %5561 = vrot.lane.b32.xlu0 %v4600, 24
    %v5562 = vpop.permute.xlu0 %5561
    %5563 = vrot.lane.b32.xlu0 %v4601, 24
    %v5564 = vpop.permute.xlu0 %5563
    %5565 = vrot.lane.b32.xlu0 %v4602, 24
    %v5566 = vpop.permute.xlu0 %5565
    %5567 = vrot.lane.b32.xlu0 %v4603, 24
    %v5568 = vpop.permute.xlu0 %5567
    %5569 = vrot.lane.b32.xlu0 %v4604, 24
    %v5570 = vpop.permute.xlu0 %5569
    %5571 = vrot.lane.b32.xlu0 %v4605, 24
    %v5572 = vpop.permute.xlu0 %5571
    %5573 = vrot.lane.b32.xlu0 %v4606, 24
    %v5574 = vpop.permute.xlu0 %5573
    %5575 = vrot.lane.b32.xlu0 %v4607, 24
    %v5576 = vpop.permute.xlu0 %5575
    %5577 = vrot.lane.b32.xlu0 %v4608, 24
    %v5578 = vpop.permute.xlu0 %5577
    %5579 = vrot.lane.b32.xlu0 %v4609, 24
    %v5580 = vpop.permute.xlu0 %5579
    %5581 = vrot.lane.b32.xlu0 %v4610, 24
    %v5582 = vpop.permute.xlu0 %5581
    %5583 = vrot.lane.b32.xlu0 %v4611, 24
    %v5584 = vpop.permute.xlu0 %5583
    %5585 = vrot.lane.b32.xlu0 %v4612, 24
    %v5586 = vpop.permute.xlu0 %5585
    %5587 = vrot.lane.b32.xlu0 %v4613, 24
    %v5588 = vpop.permute.xlu0 %5587
    %5589 = vrot.lane.b32.xlu0 %v4614, 24
    %v5590 = vpop.permute.xlu0 %5589
    %5591 = vrot.lane.b32.xlu0 %v4615, 24
    %v5592 = vpop.permute.xlu0 %5591
    %5593 = vrot.lane.b32.xlu0 %v4616, 24
    %v5594 = vpop.permute.xlu0 %5593
    %5595 = vrot.lane.b32.xlu0 %v4617, 24
    %v5596 = vpop.permute.xlu0 %5595
    %5597 = vrot.lane.b32.xlu0 %v4618, 24
    %v5598 = vpop.permute.xlu0 %5597
    %5599 = vrot.lane.b32.xlu0 %v4619, 24
    %v5600 = vpop.permute.xlu0 %5599
    %5601 = vrot.lane.b32.xlu0 %v4620, 24
    %v5602 = vpop.permute.xlu0 %5601
    %5603 = vrot.lane.b32.xlu0 %v4621, 24
    %v5604 = vpop.permute.xlu0 %5603
    %5605 = vrot.lane.b32.xlu0 %v4622, 24
    %v5606 = vpop.permute.xlu0 %5605
    %5607 = vrot.lane.b32.xlu0 %v4623, 24
    %v5608 = vpop.permute.xlu0 %5607
    %5609 = vrot.lane.b32.xlu0 %v4624, 24
    %v5610 = vpop.permute.xlu0 %5609
    %5611 = vrot.lane.b32.xlu0 %v4625, 24
    %v5612 = vpop.permute.xlu0 %5611
    %5613 = vrot.lane.b32.xlu0 %v4626, 24
    %v5614 = vpop.permute.xlu0 %5613
    %5615 = vrot.lane.b32.xlu0 %v4627, 24
    %v5616 = vpop.permute.xlu0 %5615
    %5617 = vrot.lane.b32.xlu0 %v4628, 24
    %v5618 = vpop.permute.xlu0 %5617
    %5619 = vrot.lane.b32.xlu0 %v4629, 24
    %v5620 = vpop.permute.xlu0 %5619
    %5621 = vrot.lane.b32.xlu0 %v4630, 24
    %v5622 = vpop.permute.xlu0 %5621
    %5623 = vrot.lane.b32.xlu0 %v4631, 24
    %v5624 = vpop.permute.xlu0 %5623
    %5625 = vrot.lane.b32.xlu0 %v4632, 24
    %v5626 = vpop.permute.xlu0 %5625
    %5627 = vrot.lane.b32.xlu0 %v4633, 24
    %v5628 = vpop.permute.xlu0 %5627
    %5629 = vrot.lane.b32.xlu0 %v4634, 24
    %v5630 = vpop.permute.xlu0 %5629
    %5631 = vrot.lane.b32.xlu0 %v4635, 24
    %v5632 = vpop.permute.xlu0 %5631
    %5633 = vrot.lane.b32.xlu0 %v4636, 24
    %v5634 = vpop.permute.xlu0 %5633
    %5635 = vrot.lane.b32.xlu0 %v4637, 24
    %v5636 = vpop.permute.xlu0 %5635
    %5637 = vrot.lane.b32.xlu0 %v4638, 24
    %v5638 = vpop.permute.xlu0 %5637
    %5639 = vrot.lane.b32.xlu0 %v4639, 24
    %v5640 = vpop.permute.xlu0 %5639
    %5641 = vrot.lane.b32.xlu0 %v4640, 24
    %v5642 = vpop.permute.xlu0 %5641
    %5643 = vrot.lane.b32.xlu0 %v4641, 24
    %v5644 = vpop.permute.xlu0 %5643
    %5645 = vrot.lane.b32.xlu0 %v4642, 24
    %v5646 = vpop.permute.xlu0 %5645
    %5647 = vrot.lane.b32.xlu0 %v4643, 24
    %v5648 = vpop.permute.xlu0 %5647
    %5649 = vrot.lane.b32.xlu0 %v4644, 24
    %v5650 = vpop.permute.xlu0 %5649
    %5651 = vrot.lane.b32.xlu0 %v4645, 24
    %v5652 = vpop.permute.xlu0 %5651
    %5653 = vrot.lane.b32.xlu0 %v4646, 24
    %v5654 = vpop.permute.xlu0 %5653
    %5655 = vrot.lane.b32.xlu0 %v4647, 24
    %v5656 = vpop.permute.xlu0 %5655
    %5657 = vrot.lane.b32.xlu0 %v4648, 24
    %v5658 = vpop.permute.xlu0 %5657
    %5659 = vrot.lane.b32.xlu0 %v4649, 24
    %v5660 = vpop.permute.xlu0 %5659
    %5661 = vrot.lane.b32.xlu0 %v4650, 24
    %v5662 = vpop.permute.xlu0 %5661
    %5663 = vrot.lane.b32.xlu0 %v4651, 24
    %v5664 = vpop.permute.xlu0 %5663
    %5665 = vrot.lane.b32.xlu0 %v4652, 24
    %v5666 = vpop.permute.xlu0 %5665
    %5667 = vrot.lane.b32.xlu0 %v4653, 24
    %v5668 = vpop.permute.xlu0 %5667
    %5669 = vrot.lane.b32.xlu0 %v4654, 24
    %v5670 = vpop.permute.xlu0 %5669
    %5671 = vrot.lane.b32.xlu0 %v4655, 24
    %v5672 = vpop.permute.xlu0 %5671
    %5673 = vrot.lane.b32.xlu0 %v4656, 24
    %v5674 = vpop.permute.xlu0 %5673
    %5675 = vrot.lane.b32.xlu0 %v4657, 24
    %v5676 = vpop.permute.xlu0 %5675
    %5677 = vrot.lane.b32.xlu0 %v4658, 24
    %v5678 = vpop.permute.xlu0 %5677
    %5679 = vrot.lane.b32.xlu0 %v4659, 24
    %v5680 = vpop.permute.xlu0 %5679
    %5681 = vrot.lane.b32.xlu0 %v4660, 24
    %v5682 = vpop.permute.xlu0 %5681
    %5683 = vrot.lane.b32.xlu0 %v4661, 24
    %v5684 = vpop.permute.xlu0 %5683
    %5685 = vrot.lane.b32.xlu0 %v4662, 24
    %v5686 = vpop.permute.xlu0 %5685
    %5687 = vrot.lane.b32.xlu0 %v4663, 24
    %v5688 = vpop.permute.xlu0 %5687
    %5817 = vrot.lane.b32.xlu0 %v4664, 32
    %v5818 = vpop.permute.xlu0 %5817
    %5819 = vrot.lane.b32.xlu0 %v4665, 32
    %v5820 = vpop.permute.xlu0 %5819
    %5821 = vrot.lane.b32.xlu0 %v4666, 32
    %v5822 = vpop.permute.xlu0 %5821
    %5823 = vrot.lane.b32.xlu0 %v4667, 32
    %v5824 = vpop.permute.xlu0 %5823
    %5825 = vrot.lane.b32.xlu0 %v4668, 32
    %v5826 = vpop.permute.xlu0 %5825
    %5827 = vrot.lane.b32.xlu0 %v4669, 32
    %v5828 = vpop.permute.xlu0 %5827
    %5829 = vrot.lane.b32.xlu0 %v4670, 32
    %v5830 = vpop.permute.xlu0 %5829
    %5831 = vrot.lane.b32.xlu0 %v4671, 32
    %v5832 = vpop.permute.xlu0 %5831
    %5833 = vrot.lane.b32.xlu0 %v4672, 32
    %v5834 = vpop.permute.xlu0 %5833
    %5835 = vrot.lane.b32.xlu0 %v4673, 32
    %v5836 = vpop.permute.xlu0 %5835
    %5837 = vrot.lane.b32.xlu0 %v4674, 32
    %v5838 = vpop.permute.xlu0 %5837
    %5839 = vrot.lane.b32.xlu0 %v4675, 32
    %v5840 = vpop.permute.xlu0 %5839
    %5841 = vrot.lane.b32.xlu0 %v4676, 32
    %v5842 = vpop.permute.xlu0 %5841
    %5843 = vrot.lane.b32.xlu0 %v4677, 32
    %v5844 = vpop.permute.xlu0 %5843
    %5845 = vrot.lane.b32.xlu0 %v4678, 32
    %v5846 = vpop.permute.xlu0 %5845
    %5847 = vrot.lane.b32.xlu0 %v4679, 32
    %v5848 = vpop.permute.xlu0 %5847
    %5849 = vrot.lane.b32.xlu0 %v4680, 32
    %v5850 = vpop.permute.xlu0 %5849
    %5851 = vrot.lane.b32.xlu0 %v4681, 32
    %v5852 = vpop.permute.xlu0 %5851
    %5853 = vrot.lane.b32.xlu0 %v4682, 32
    %v5854 = vpop.permute.xlu0 %5853
    %5855 = vrot.lane.b32.xlu0 %v4683, 32
    %v5856 = vpop.permute.xlu0 %5855
    %5857 = vrot.lane.b32.xlu0 %v4684, 32
    %v5858 = vpop.permute.xlu0 %5857
    %5859 = vrot.lane.b32.xlu0 %v4685, 32
    %v5860 = vpop.permute.xlu0 %5859
    %5861 = vrot.lane.b32.xlu0 %v4686, 32
    %v5862 = vpop.permute.xlu0 %5861
    %5863 = vrot.lane.b32.xlu0 %v4687, 32
    %v5864 = vpop.permute.xlu0 %5863
    %5865 = vrot.lane.b32.xlu0 %v4688, 32
    %v5866 = vpop.permute.xlu0 %5865
    %5867 = vrot.lane.b32.xlu0 %v4689, 32
    %v5868 = vpop.permute.xlu0 %5867
    %5869 = vrot.lane.b32.xlu0 %v4690, 32
    %v5870 = vpop.permute.xlu0 %5869
    %5871 = vrot.lane.b32.xlu0 %v4691, 32
    %v5872 = vpop.permute.xlu0 %5871
    %5873 = vrot.lane.b32.xlu0 %v4692, 32
    %v5874 = vpop.permute.xlu0 %5873
    %5875 = vrot.lane.b32.xlu0 %v4693, 32
    %v5876 = vpop.permute.xlu0 %5875
    %5877 = vrot.lane.b32.xlu0 %v4694, 32
    %v5878 = vpop.permute.xlu0 %5877
    %5879 = vrot.lane.b32.xlu0 %v4695, 32
    %v5880 = vpop.permute.xlu0 %5879
    %5881 = vrot.lane.b32.xlu0 %v4696, 32
    %v5882 = vpop.permute.xlu0 %5881
    %5883 = vrot.lane.b32.xlu0 %v4697, 32
    %v5884 = vpop.permute.xlu0 %5883
    %5885 = vrot.lane.b32.xlu0 %v4698, 32
    %v5886 = vpop.permute.xlu0 %5885
    %5887 = vrot.lane.b32.xlu0 %v4699, 32
    %v5888 = vpop.permute.xlu0 %5887
    %5889 = vrot.lane.b32.xlu0 %v4700, 32
    %v5890 = vpop.permute.xlu0 %5889
    %5891 = vrot.lane.b32.xlu0 %v4701, 32
    %v5892 = vpop.permute.xlu0 %5891
    %5893 = vrot.lane.b32.xlu0 %v4702, 32
    %v5894 = vpop.permute.xlu0 %5893
    %5895 = vrot.lane.b32.xlu0 %v4703, 32
    %v5896 = vpop.permute.xlu0 %5895
    %5897 = vrot.lane.b32.xlu0 %v4704, 32
    %v5898 = vpop.permute.xlu0 %5897
    %5899 = vrot.lane.b32.xlu0 %v4705, 32
    %v5900 = vpop.permute.xlu0 %5899
    %5901 = vrot.lane.b32.xlu0 %v4706, 32
    %v5902 = vpop.permute.xlu0 %5901
    %5903 = vrot.lane.b32.xlu0 %v4707, 32
    %v5904 = vpop.permute.xlu0 %5903
    %5905 = vrot.lane.b32.xlu0 %v4708, 32
    %v5906 = vpop.permute.xlu0 %5905
    %5907 = vrot.lane.b32.xlu0 %v4709, 32
    %v5908 = vpop.permute.xlu0 %5907
    %5909 = vrot.lane.b32.xlu0 %v4710, 32
    %v5910 = vpop.permute.xlu0 %5909
    %5911 = vrot.lane.b32.xlu0 %v4711, 32
    %v5912 = vpop.permute.xlu0 %5911
    %5913 = vrot.lane.b32.xlu0 %v4712, 32
    %v5914 = vpop.permute.xlu0 %5913
    %5915 = vrot.lane.b32.xlu0 %v4713, 32
    %v5916 = vpop.permute.xlu0 %5915
    %5917 = vrot.lane.b32.xlu0 %v4714, 32
    %v5918 = vpop.permute.xlu0 %5917
    %5919 = vrot.lane.b32.xlu0 %v4715, 32
    %v5920 = vpop.permute.xlu0 %5919
    %5921 = vrot.lane.b32.xlu0 %v4716, 32
    %v5922 = vpop.permute.xlu0 %5921
    %5923 = vrot.lane.b32.xlu0 %v4717, 32
    %v5924 = vpop.permute.xlu0 %5923
    %5925 = vrot.lane.b32.xlu0 %v4718, 32
    %v5926 = vpop.permute.xlu0 %5925
    %5927 = vrot.lane.b32.xlu0 %v4719, 32
    %v5928 = vpop.permute.xlu0 %5927
    %5929 = vrot.lane.b32.xlu0 %v4720, 32
    %v5930 = vpop.permute.xlu0 %5929
    %5931 = vrot.lane.b32.xlu0 %v4721, 32
    %v5932 = vpop.permute.xlu0 %5931
    %5933 = vrot.lane.b32.xlu0 %v4722, 32
    %v5934 = vpop.permute.xlu0 %5933
    %5935 = vrot.lane.b32.xlu0 %v4723, 32
    %v5936 = vpop.permute.xlu0 %5935
    %5937 = vrot.lane.b32.xlu0 %v4724, 32
    %v5938 = vpop.permute.xlu0 %5937
    %5939 = vrot.lane.b32.xlu0 %v4725, 32
    %v5940 = vpop.permute.xlu0 %5939
    %5941 = vrot.lane.b32.xlu0 %v4726, 32
    %v5942 = vpop.permute.xlu0 %5941
    %5943 = vrot.lane.b32.xlu0 %v4727, 32
    %v5944 = vpop.permute.xlu0 %5943
    %6073 = vrot.lane.b32.xlu0 %v4728, 40
    %v6074 = vpop.permute.xlu0 %6073
    %6075 = vrot.lane.b32.xlu0 %v4729, 40
    %v6076 = vpop.permute.xlu0 %6075
    %6077 = vrot.lane.b32.xlu0 %v4730, 40
    %v6078 = vpop.permute.xlu0 %6077
    %6079 = vrot.lane.b32.xlu0 %v4731, 40
    %v6080 = vpop.permute.xlu0 %6079
    %6081 = vrot.lane.b32.xlu0 %v4732, 40
    %v6082 = vpop.permute.xlu0 %6081
    %6083 = vrot.lane.b32.xlu0 %v4733, 40
    %v6084 = vpop.permute.xlu0 %6083
    %6085 = vrot.lane.b32.xlu0 %v4734, 40
    %v6086 = vpop.permute.xlu0 %6085
    %6087 = vrot.lane.b32.xlu0 %v4735, 40
    %v6088 = vpop.permute.xlu0 %6087
    %6089 = vrot.lane.b32.xlu0 %v4736, 40
    %v6090 = vpop.permute.xlu0 %6089
    %6091 = vrot.lane.b32.xlu0 %v4737, 40
    %v6092 = vpop.permute.xlu0 %6091
    %6093 = vrot.lane.b32.xlu0 %v4738, 40
    %v6094 = vpop.permute.xlu0 %6093
    %6095 = vrot.lane.b32.xlu0 %v4739, 40
    %v6096 = vpop.permute.xlu0 %6095
    %6097 = vrot.lane.b32.xlu0 %v4740, 40
    %v6098 = vpop.permute.xlu0 %6097
    %6099 = vrot.lane.b32.xlu0 %v4741, 40
    %v6100 = vpop.permute.xlu0 %6099
    %6101 = vrot.lane.b32.xlu0 %v4742, 40
    %v6102 = vpop.permute.xlu0 %6101
    %6103 = vrot.lane.b32.xlu0 %v4743, 40
    %v6104 = vpop.permute.xlu0 %6103
    %6105 = vrot.lane.b32.xlu0 %v4744, 40
    %v6106 = vpop.permute.xlu0 %6105
    %6107 = vrot.lane.b32.xlu0 %v4745, 40
    %v6108 = vpop.permute.xlu0 %6107
    %6109 = vrot.lane.b32.xlu0 %v4746, 40
    %v6110 = vpop.permute.xlu0 %6109
    %6111 = vrot.lane.b32.xlu0 %v4747, 40
    %v6112 = vpop.permute.xlu0 %6111
    %6113 = vrot.lane.b32.xlu0 %v4748, 40
    %v6114 = vpop.permute.xlu0 %6113
    %6115 = vrot.lane.b32.xlu0 %v4749, 40
    %v6116 = vpop.permute.xlu0 %6115
    %6117 = vrot.lane.b32.xlu0 %v4750, 40
    %v6118 = vpop.permute.xlu0 %6117
    %6119 = vrot.lane.b32.xlu0 %v4751, 40
    %v6120 = vpop.permute.xlu0 %6119
    %6121 = vrot.lane.b32.xlu0 %v4752, 40
    %v6122 = vpop.permute.xlu0 %6121
    %6123 = vrot.lane.b32.xlu0 %v4753, 40
    %v6124 = vpop.permute.xlu0 %6123
    %6125 = vrot.lane.b32.xlu0 %v4754, 40
    %v6126 = vpop.permute.xlu0 %6125
    %6127 = vrot.lane.b32.xlu0 %v4755, 40
    %v6128 = vpop.permute.xlu0 %6127
    %6129 = vrot.lane.b32.xlu0 %v4756, 40
    %v6130 = vpop.permute.xlu0 %6129
    %6131 = vrot.lane.b32.xlu0 %v4757, 40
    %v6132 = vpop.permute.xlu0 %6131
    %6133 = vrot.lane.b32.xlu0 %v4758, 40
    %v6134 = vpop.permute.xlu0 %6133
    %6135 = vrot.lane.b32.xlu0 %v4759, 40
    %v6136 = vpop.permute.xlu0 %6135
    %6137 = vrot.lane.b32.xlu0 %v4760, 40
    %v6138 = vpop.permute.xlu0 %6137
    %6139 = vrot.lane.b32.xlu0 %v4761, 40
    %v6140 = vpop.permute.xlu0 %6139
    %6141 = vrot.lane.b32.xlu0 %v4762, 40
    %v6142 = vpop.permute.xlu0 %6141
    %6143 = vrot.lane.b32.xlu0 %v4763, 40
    %v6144 = vpop.permute.xlu0 %6143
    %6145 = vrot.lane.b32.xlu0 %v4764, 40
    %v6146 = vpop.permute.xlu0 %6145
    %6147 = vrot.lane.b32.xlu0 %v4765, 40
    %v6148 = vpop.permute.xlu0 %6147
    %6149 = vrot.lane.b32.xlu0 %v4766, 40
    %v6150 = vpop.permute.xlu0 %6149
    %6151 = vrot.lane.b32.xlu0 %v4767, 40
    %v6152 = vpop.permute.xlu0 %6151
    %6153 = vrot.lane.b32.xlu0 %v4768, 40
    %v6154 = vpop.permute.xlu0 %6153
    %6155 = vrot.lane.b32.xlu0 %v4769, 40
    %v6156 = vpop.permute.xlu0 %6155
    %6157 = vrot.lane.b32.xlu0 %v4770, 40
    %v6158 = vpop.permute.xlu0 %6157
    %6159 = vrot.lane.b32.xlu0 %v4771, 40
    %v6160 = vpop.permute.xlu0 %6159
    %6161 = vrot.lane.b32.xlu0 %v4772, 40
    %v6162 = vpop.permute.xlu0 %6161
    %6163 = vrot.lane.b32.xlu0 %v4773, 40
    %v6164 = vpop.permute.xlu0 %6163
    %6165 = vrot.lane.b32.xlu0 %v4774, 40
    %v6166 = vpop.permute.xlu0 %6165
    %6167 = vrot.lane.b32.xlu0 %v4775, 40
    %v6168 = vpop.permute.xlu0 %6167
    %6169 = vrot.lane.b32.xlu0 %v4776, 40
    %v6170 = vpop.permute.xlu0 %6169
    %6171 = vrot.lane.b32.xlu0 %v4777, 40
    %v6172 = vpop.permute.xlu0 %6171
    %6173 = vrot.lane.b32.xlu0 %v4778, 40
    %v6174 = vpop.permute.xlu0 %6173
    %6175 = vrot.lane.b32.xlu0 %v4779, 40
    %v6176 = vpop.permute.xlu0 %6175
    %6177 = vrot.lane.b32.xlu0 %v4780, 40
    %v6178 = vpop.permute.xlu0 %6177
    %6179 = vrot.lane.b32.xlu0 %v4781, 40
    %v6180 = vpop.permute.xlu0 %6179
    %6181 = vrot.lane.b32.xlu0 %v4782, 40
    %v6182 = vpop.permute.xlu0 %6181
    %6183 = vrot.lane.b32.xlu0 %v4783, 40
    %v6184 = vpop.permute.xlu0 %6183
    %6185 = vrot.lane.b32.xlu0 %v4784, 40
    %v6186 = vpop.permute.xlu0 %6185
    %6187 = vrot.lane.b32.xlu0 %v4785, 40
    %v6188 = vpop.permute.xlu0 %6187
    %6189 = vrot.lane.b32.xlu0 %v4786, 40
    %v6190 = vpop.permute.xlu0 %6189
    %6191 = vrot.lane.b32.xlu0 %v4787, 40
    %v6192 = vpop.permute.xlu0 %6191
    %6193 = vrot.lane.b32.xlu0 %v4788, 40
    %v6194 = vpop.permute.xlu0 %6193
    %6195 = vrot.lane.b32.xlu0 %v4789, 40
    %v6196 = vpop.permute.xlu0 %6195
    %6197 = vrot.lane.b32.xlu0 %v4790, 40
    %v6198 = vpop.permute.xlu0 %6197
    %6199 = vrot.lane.b32.xlu0 %v4791, 40
    %v6200 = vpop.permute.xlu0 %6199
    %6329 = vrot.lane.b32.xlu0 %v4793, 48
    %v6330 = vpop.permute.xlu0 %6329
    %6331 = vrot.lane.b32.xlu0 %v4794, 48
    %v6332 = vpop.permute.xlu0 %6331
    %6333 = vrot.lane.b32.xlu0 %v4795, 48
    %v6334 = vpop.permute.xlu0 %6333
    %6335 = vrot.lane.b32.xlu0 %v4796, 48
    %v6336 = vpop.permute.xlu0 %6335
    %6337 = vrot.lane.b32.xlu0 %v4797, 48
    %v6338 = vpop.permute.xlu0 %6337
    %6339 = vrot.lane.b32.xlu0 %v4798, 48
    %v6340 = vpop.permute.xlu0 %6339
    %6341 = vrot.lane.b32.xlu0 %v4799, 48
    %v6342 = vpop.permute.xlu0 %6341
    %6343 = vrot.lane.b32.xlu0 %v4800, 48
    %v6344 = vpop.permute.xlu0 %6343
    %6345 = vrot.lane.b32.xlu0 %v4801, 48
    %v6346 = vpop.permute.xlu0 %6345
    %6347 = vrot.lane.b32.xlu0 %v4802, 48
    %v6348 = vpop.permute.xlu0 %6347
    %6349 = vrot.lane.b32.xlu0 %v4803, 48
    %v6350 = vpop.permute.xlu0 %6349
    %6351 = vrot.lane.b32.xlu0 %v4804, 48
    %v6352 = vpop.permute.xlu0 %6351
    %6353 = vrot.lane.b32.xlu0 %v4805, 48
    %v6354 = vpop.permute.xlu0 %6353
    %6355 = vrot.lane.b32.xlu0 %v4806, 48
    %v6356 = vpop.permute.xlu0 %6355
    %6357 = vrot.lane.b32.xlu0 %v4807, 48
    %v6358 = vpop.permute.xlu0 %6357
    %6359 = vrot.lane.b32.xlu0 %v4808, 48
    %v6360 = vpop.permute.xlu0 %6359
    %6361 = vrot.lane.b32.xlu0 %v4809, 48
    %v6362 = vpop.permute.xlu0 %6361
    %6363 = vrot.lane.b32.xlu0 %v4810, 48
    %v6364 = vpop.permute.xlu0 %6363
    %6365 = vrot.lane.b32.xlu0 %v4811, 48
    %v6366 = vpop.permute.xlu0 %6365
    %6367 = vrot.lane.b32.xlu0 %v4812, 48
    %v6368 = vpop.permute.xlu0 %6367
    %6369 = vrot.lane.b32.xlu0 %v4813, 48
    %v6370 = vpop.permute.xlu0 %6369
    %6371 = vrot.lane.b32.xlu0 %v4814, 48
    %v6372 = vpop.permute.xlu0 %6371
    %6373 = vrot.lane.b32.xlu0 %v4815, 48
    %v6374 = vpop.permute.xlu0 %6373
    %6375 = vrot.lane.b32.xlu0 %v4816, 48
    %v6376 = vpop.permute.xlu0 %6375
    %6377 = vrot.lane.b32.xlu0 %v4817, 48
    %v6378 = vpop.permute.xlu0 %6377
    %6379 = vrot.lane.b32.xlu0 %v4818, 48
    %v6380 = vpop.permute.xlu0 %6379
    %6381 = vrot.lane.b32.xlu0 %v4819, 48
    %v6382 = vpop.permute.xlu0 %6381
    %6383 = vrot.lane.b32.xlu0 %v4820, 48
    %v6384 = vpop.permute.xlu0 %6383
    %6385 = vrot.lane.b32.xlu0 %v4821, 48
    %v6386 = vpop.permute.xlu0 %6385
    %6387 = vrot.lane.b32.xlu0 %v4822, 48
    %v6388 = vpop.permute.xlu0 %6387
    %6389 = vrot.lane.b32.xlu0 %v4823, 48
    %v6390 = vpop.permute.xlu0 %6389
    %6391 = vrot.lane.b32.xlu0 %v4824, 48
    %v6392 = vpop.permute.xlu0 %6391
    %6393 = vrot.lane.b32.xlu0 %v4825, 48
    %v6394 = vpop.permute.xlu0 %6393
    %6395 = vrot.lane.b32.xlu0 %v4826, 48
    %v6396 = vpop.permute.xlu0 %6395
    %6397 = vrot.lane.b32.xlu0 %v4827, 48
    %v6398 = vpop.permute.xlu0 %6397
    %6399 = vrot.lane.b32.xlu0 %v4828, 48
    %v6400 = vpop.permute.xlu0 %6399
    %6401 = vrot.lane.b32.xlu0 %v4829, 48
    %v6402 = vpop.permute.xlu0 %6401
    %6403 = vrot.lane.b32.xlu0 %v4830, 48
    %v6404 = vpop.permute.xlu0 %6403
    %6405 = vrot.lane.b32.xlu0 %v4831, 48
    %v6406 = vpop.permute.xlu0 %6405
    %6407 = vrot.lane.b32.xlu0 %v4832, 48
    %v6408 = vpop.permute.xlu0 %6407
    %6409 = vrot.lane.b32.xlu0 %v4833, 48
    %v6410 = vpop.permute.xlu0 %6409
    %6411 = vrot.lane.b32.xlu0 %v4834, 48
    %v6412 = vpop.permute.xlu0 %6411
    %6413 = vrot.lane.b32.xlu0 %v4835, 48
    %v6414 = vpop.permute.xlu0 %6413
    %6415 = vrot.lane.b32.xlu0 %v4836, 48
    %v6416 = vpop.permute.xlu0 %6415
    %6417 = vrot.lane.b32.xlu0 %v4837, 48
    %v6418 = vpop.permute.xlu0 %6417
    %6419 = vrot.lane.b32.xlu0 %v4838, 48
    %v6420 = vpop.permute.xlu0 %6419
    %6421 = vrot.lane.b32.xlu0 %v4839, 48
    %v6422 = vpop.permute.xlu0 %6421
    %6423 = vrot.lane.b32.xlu0 %v4840, 48
    %v6424 = vpop.permute.xlu0 %6423
    %6425 = vrot.lane.b32.xlu0 %v4841, 48
    %v6426 = vpop.permute.xlu0 %6425
    %6427 = vrot.lane.b32.xlu0 %v4842, 48
    %v6428 = vpop.permute.xlu0 %6427
    %6429 = vrot.lane.b32.xlu0 %v4843, 48
    %v6430 = vpop.permute.xlu0 %6429
    %6431 = vrot.lane.b32.xlu0 %v4844, 48
    %v6432 = vpop.permute.xlu0 %6431
    %6433 = vrot.lane.b32.xlu0 %v4845, 48
    %v6434 = vpop.permute.xlu0 %6433
    %6435 = vrot.lane.b32.xlu0 %v4846, 48
    %v6436 = vpop.permute.xlu0 %6435
    %6437 = vrot.lane.b32.xlu0 %v4847, 48
    %v6438 = vpop.permute.xlu0 %6437
    %6439 = vrot.lane.b32.xlu0 %v4848, 48
    %v6440 = vpop.permute.xlu0 %6439
    %6441 = vrot.lane.b32.xlu0 %v4849, 48
    %v6442 = vpop.permute.xlu0 %6441
    %6443 = vrot.lane.b32.xlu0 %v4850, 48
    %v6444 = vpop.permute.xlu0 %6443
    %6445 = vrot.lane.b32.xlu0 %v4851, 48
    %v6446 = vpop.permute.xlu0 %6445
    %6447 = vrot.lane.b32.xlu0 %v4852, 48
    %v6448 = vpop.permute.xlu0 %6447
    %6449 = vrot.lane.b32.xlu0 %v4853, 48
    %v6450 = vpop.permute.xlu0 %6449
    %6451 = vrot.lane.b32.xlu0 %v4854, 48
    %v6452 = vpop.permute.xlu0 %6451
    %6453 = vrot.lane.b32.xlu0 %v4855, 48
    %v6454 = vpop.permute.xlu0 %6453
    %6455 = vrot.lane.b32.xlu0 %v4856, 48
    %v6456 = vpop.permute.xlu0 %6455
    %6585 = vrot.lane.b32.xlu0 %v4857, 56
    %v6586 = vpop.permute.xlu0 %6585
    %6587 = vrot.lane.b32.xlu0 %v4858, 56
    %v6588 = vpop.permute.xlu0 %6587
    %6589 = vrot.lane.b32.xlu0 %v4859, 56
    %v6590 = vpop.permute.xlu0 %6589
    %6591 = vrot.lane.b32.xlu0 %v4860, 56
    %v6592 = vpop.permute.xlu0 %6591
    %6593 = vrot.lane.b32.xlu0 %v4861, 56
    %v6594 = vpop.permute.xlu0 %6593
    %6595 = vrot.lane.b32.xlu0 %v4862, 56
    %v6596 = vpop.permute.xlu0 %6595
    %6597 = vrot.lane.b32.xlu0 %v4863, 56
    %v6598 = vpop.permute.xlu0 %6597
    %6599 = vrot.lane.b32.xlu0 %v4864, 56
    %v6600 = vpop.permute.xlu0 %6599
    %6601 = vrot.lane.b32.xlu0 %v4865, 56
    %v6602 = vpop.permute.xlu0 %6601
    %6603 = vrot.lane.b32.xlu0 %v4866, 56
    %v6604 = vpop.permute.xlu0 %6603
    %6605 = vrot.lane.b32.xlu0 %v4867, 56
    %v6606 = vpop.permute.xlu0 %6605
    %6607 = vrot.lane.b32.xlu0 %v4868, 56
    %v6608 = vpop.permute.xlu0 %6607
    %6609 = vrot.lane.b32.xlu0 %v4869, 56
    %v6610 = vpop.permute.xlu0 %6609
    %6611 = vrot.lane.b32.xlu0 %v4870, 56
    %v6612 = vpop.permute.xlu0 %6611
    %6613 = vrot.lane.b32.xlu0 %v4871, 56
    %v6614 = vpop.permute.xlu0 %6613
    %6615 = vrot.lane.b32.xlu0 %v4872, 56
    %v6616 = vpop.permute.xlu0 %6615
    %6617 = vrot.lane.b32.xlu0 %v4873, 56
    %v6618 = vpop.permute.xlu0 %6617
    %6619 = vrot.lane.b32.xlu0 %v4874, 56
    %v6620 = vpop.permute.xlu0 %6619
    %6621 = vrot.lane.b32.xlu0 %v4875, 56
    %v6622 = vpop.permute.xlu0 %6621
    %6623 = vrot.lane.b32.xlu0 %v4876, 56
    %v6624 = vpop.permute.xlu0 %6623
    %6625 = vrot.lane.b32.xlu0 %v4877, 56
    %v6626 = vpop.permute.xlu0 %6625
    %6627 = vrot.lane.b32.xlu0 %v4878, 56
    %v6628 = vpop.permute.xlu0 %6627
    %6629 = vrot.lane.b32.xlu0 %v4879, 56
    %v6630 = vpop.permute.xlu0 %6629
    %6631 = vrot.lane.b32.xlu0 %v4880, 56
    %v6632 = vpop.permute.xlu0 %6631
    %6633 = vrot.lane.b32.xlu0 %v4881, 56
    %v6634 = vpop.permute.xlu0 %6633
    %6635 = vrot.lane.b32.xlu0 %v4882, 56
    %v6636 = vpop.permute.xlu0 %6635
    %6637 = vrot.lane.b32.xlu0 %v4883, 56
    %v6638 = vpop.permute.xlu0 %6637
    %6639 = vrot.lane.b32.xlu0 %v4884, 56
    %v6640 = vpop.permute.xlu0 %6639
    %6641 = vrot.lane.b32.xlu0 %v4885, 56
    %v6642 = vpop.permute.xlu0 %6641
    %6643 = vrot.lane.b32.xlu0 %v4886, 56
    %v6644 = vpop.permute.xlu0 %6643
    %6645 = vrot.lane.b32.xlu0 %v4887, 56
    %v6646 = vpop.permute.xlu0 %6645
    %6647 = vrot.lane.b32.xlu0 %v4888, 56
    %v6648 = vpop.permute.xlu0 %6647
    %6649 = vrot.lane.b32.xlu0 %v4889, 56
    %v6650 = vpop.permute.xlu0 %6649
    %6651 = vrot.lane.b32.xlu0 %v4890, 56
    %v6652 = vpop.permute.xlu0 %6651
    %6653 = vrot.lane.b32.xlu0 %v4891, 56
    %v6654 = vpop.permute.xlu0 %6653
    %6655 = vrot.lane.b32.xlu0 %v4892, 56
    %v6656 = vpop.permute.xlu0 %6655
    %6657 = vrot.lane.b32.xlu0 %v4893, 56
    %v6658 = vpop.permute.xlu0 %6657
    %6659 = vrot.lane.b32.xlu0 %v4894, 56
    %v6660 = vpop.permute.xlu0 %6659
    %6661 = vrot.lane.b32.xlu0 %v4895, 56
    %v6662 = vpop.permute.xlu0 %6661
    %6663 = vrot.lane.b32.xlu0 %v4896, 56
    %v6664 = vpop.permute.xlu0 %6663
    %6665 = vrot.lane.b32.xlu0 %v4897, 56
    %v6666 = vpop.permute.xlu0 %6665
    %6667 = vrot.lane.b32.xlu0 %v4898, 56
    %v6668 = vpop.permute.xlu0 %6667
    %6669 = vrot.lane.b32.xlu0 %v4899, 56
    %v6670 = vpop.permute.xlu0 %6669
    %6671 = vrot.lane.b32.xlu0 %v4900, 56
    %v6672 = vpop.permute.xlu0 %6671
    %6673 = vrot.lane.b32.xlu0 %v4901, 56
    %v6674 = vpop.permute.xlu0 %6673
    %6675 = vrot.lane.b32.xlu0 %v4902, 56
    %v6676 = vpop.permute.xlu0 %6675
    %6677 = vrot.lane.b32.xlu0 %v4903, 56
    %v6678 = vpop.permute.xlu0 %6677
    %6679 = vrot.lane.b32.xlu0 %v4904, 56
    %v6680 = vpop.permute.xlu0 %6679
    %6681 = vrot.lane.b32.xlu0 %v4905, 56
    %v6682 = vpop.permute.xlu0 %6681
    %6683 = vrot.lane.b32.xlu0 %v4906, 56
    %v6684 = vpop.permute.xlu0 %6683
    %6685 = vrot.lane.b32.xlu0 %v4907, 56
    %v6686 = vpop.permute.xlu0 %6685
    %6687 = vrot.lane.b32.xlu0 %v4908, 56
    %v6688 = vpop.permute.xlu0 %6687
    %6689 = vrot.lane.b32.xlu0 %v4909, 56
    %v6690 = vpop.permute.xlu0 %6689
    %6691 = vrot.lane.b32.xlu0 %v4910, 56
    %v6692 = vpop.permute.xlu0 %6691
    %6693 = vrot.lane.b32.xlu0 %v4911, 56
    %v6694 = vpop.permute.xlu0 %6693
    %6695 = vrot.lane.b32.xlu0 %v4912, 56
    %v6696 = vpop.permute.xlu0 %6695
    %6697 = vrot.lane.b32.xlu0 %v4913, 56
    %v6698 = vpop.permute.xlu0 %6697
    %6699 = vrot.lane.b32.xlu0 %v4914, 56
    %v6700 = vpop.permute.xlu0 %6699
    %6701 = vrot.lane.b32.xlu0 %v4915, 56
    %v6702 = vpop.permute.xlu0 %6701
    %6703 = vrot.lane.b32.xlu0 %v4916, 56
    %v6704 = vpop.permute.xlu0 %6703
    %6705 = vrot.lane.b32.xlu0 %v4917, 56
    %v6706 = vpop.permute.xlu0 %6705
    %6707 = vrot.lane.b32.xlu0 %v4918, 56
    %v6708 = vpop.permute.xlu0 %6707
    %6709 = vrot.lane.b32.xlu0 %v4919, 56
    %v6710 = vpop.permute.xlu0 %6709
    %6711 = vrot.lane.b32.xlu0 %v4920, 56
    %v6712 = vpop.permute.xlu0 %6711
    %6841 = vrot.lane.b32.xlu0 %v4921, 64
    %v6842 = vpop.permute.xlu0 %6841
    %6843 = vrot.lane.b32.xlu0 %v4922, 64
    %v6844 = vpop.permute.xlu0 %6843
    %6845 = vrot.lane.b32.xlu0 %v4923, 64
    %v6846 = vpop.permute.xlu0 %6845
    %6847 = vrot.lane.b32.xlu0 %v4924, 64
    %v6848 = vpop.permute.xlu0 %6847
    %6849 = vrot.lane.b32.xlu0 %v4925, 64
    %v6850 = vpop.permute.xlu0 %6849
    %6851 = vrot.lane.b32.xlu0 %v4926, 64
    %v6852 = vpop.permute.xlu0 %6851
    %6853 = vrot.lane.b32.xlu0 %v4927, 64
    %v6854 = vpop.permute.xlu0 %6853
    %6855 = vrot.lane.b32.xlu0 %v4928, 64
    %v6856 = vpop.permute.xlu0 %6855
    %6857 = vrot.lane.b32.xlu0 %v4929, 64
    %v6858 = vpop.permute.xlu0 %6857
    %6859 = vrot.lane.b32.xlu0 %v4930, 64
    %v6860 = vpop.permute.xlu0 %6859
    %6861 = vrot.lane.b32.xlu0 %v4931, 64
    %v6862 = vpop.permute.xlu0 %6861
    %6863 = vrot.lane.b32.xlu0 %v4932, 64
    %v6864 = vpop.permute.xlu0 %6863
    %6865 = vrot.lane.b32.xlu0 %v4933, 64
    %v6866 = vpop.permute.xlu0 %6865
    %6867 = vrot.lane.b32.xlu0 %v4934, 64
    %v6868 = vpop.permute.xlu0 %6867
    %6869 = vrot.lane.b32.xlu0 %v4935, 64
    %v6870 = vpop.permute.xlu0 %6869
    %6871 = vrot.lane.b32.xlu0 %v4936, 64
    %v6872 = vpop.permute.xlu0 %6871
    %6873 = vrot.lane.b32.xlu0 %v4937, 64
    %v6874 = vpop.permute.xlu0 %6873
    %6875 = vrot.lane.b32.xlu0 %v4938, 64
    %v6876 = vpop.permute.xlu0 %6875
    %6877 = vrot.lane.b32.xlu0 %v4939, 64
    %v6878 = vpop.permute.xlu0 %6877
    %6879 = vrot.lane.b32.xlu0 %v4940, 64
    %v6880 = vpop.permute.xlu0 %6879
    %6881 = vrot.lane.b32.xlu0 %v4941, 64
    %v6882 = vpop.permute.xlu0 %6881
    %6883 = vrot.lane.b32.xlu0 %v4942, 64
    %v6884 = vpop.permute.xlu0 %6883
    %6885 = vrot.lane.b32.xlu0 %v4943, 64
    %v6886 = vpop.permute.xlu0 %6885
    %6887 = vrot.lane.b32.xlu0 %v4944, 64
    %v6888 = vpop.permute.xlu0 %6887
    %6889 = vrot.lane.b32.xlu0 %v4945, 64
    %v6890 = vpop.permute.xlu0 %6889
    %6891 = vrot.lane.b32.xlu0 %v4946, 64
    %v6892 = vpop.permute.xlu0 %6891
    %6893 = vrot.lane.b32.xlu0 %v4947, 64
    %v6894 = vpop.permute.xlu0 %6893
    %6895 = vrot.lane.b32.xlu0 %v4948, 64
    %v6896 = vpop.permute.xlu0 %6895
    %6897 = vrot.lane.b32.xlu0 %v4949, 64
    %v6898 = vpop.permute.xlu0 %6897
    %6899 = vrot.lane.b32.xlu0 %v4950, 64
    %v6900 = vpop.permute.xlu0 %6899
    %6901 = vrot.lane.b32.xlu0 %v4951, 64
    %v6902 = vpop.permute.xlu0 %6901
    %6903 = vrot.lane.b32.xlu0 %v4952, 64
    %v6904 = vpop.permute.xlu0 %6903
    %6905 = vrot.lane.b32.xlu0 %v4953, 64
    %v6906 = vpop.permute.xlu0 %6905
    %6907 = vrot.lane.b32.xlu0 %v4954, 64
    %v6908 = vpop.permute.xlu0 %6907
    %6909 = vrot.lane.b32.xlu0 %v4955, 64
    %v6910 = vpop.permute.xlu0 %6909
    %6911 = vrot.lane.b32.xlu0 %v4956, 64
    %v6912 = vpop.permute.xlu0 %6911
    %6913 = vrot.lane.b32.xlu0 %v4957, 64
    %v6914 = vpop.permute.xlu0 %6913
    %6915 = vrot.lane.b32.xlu0 %v4958, 64
    %v6916 = vpop.permute.xlu0 %6915
    %6917 = vrot.lane.b32.xlu0 %v4959, 64
    %v6918 = vpop.permute.xlu0 %6917
    %6919 = vrot.lane.b32.xlu0 %v4960, 64
    %v6920 = vpop.permute.xlu0 %6919
    %6921 = vrot.lane.b32.xlu0 %v4961, 64
    %v6922 = vpop.permute.xlu0 %6921
    %6923 = vrot.lane.b32.xlu0 %v4962, 64
    %v6924 = vpop.permute.xlu0 %6923
    %6925 = vrot.lane.b32.xlu0 %v4963, 64
    %v6926 = vpop.permute.xlu0 %6925
    %6927 = vrot.lane.b32.xlu0 %v4964, 64
    %v6928 = vpop.permute.xlu0 %6927
    %6929 = vrot.lane.b32.xlu0 %v4965, 64
    %v6930 = vpop.permute.xlu0 %6929
    %6931 = vrot.lane.b32.xlu0 %v4966, 64
    %v6932 = vpop.permute.xlu0 %6931
    %6933 = vrot.lane.b32.xlu0 %v4967, 64
    %v6934 = vpop.permute.xlu0 %6933
    %6935 = vrot.lane.b32.xlu0 %v4968, 64
    %v6936 = vpop.permute.xlu0 %6935
    %6937 = vrot.lane.b32.xlu0 %v4969, 64
    %v6938 = vpop.permute.xlu0 %6937
    %6939 = vrot.lane.b32.xlu0 %v4970, 64
    %v6940 = vpop.permute.xlu0 %6939
    %6941 = vrot.lane.b32.xlu0 %v4971, 64
    %v6942 = vpop.permute.xlu0 %6941
    %6943 = vrot.lane.b32.xlu0 %v4972, 64
    %v6944 = vpop.permute.xlu0 %6943
    %6945 = vrot.lane.b32.xlu0 %v4973, 64
    %v6946 = vpop.permute.xlu0 %6945
    %6947 = vrot.lane.b32.xlu0 %v4974, 64
    %v6948 = vpop.permute.xlu0 %6947
    %6949 = vrot.lane.b32.xlu0 %v4975, 64
    %v6950 = vpop.permute.xlu0 %6949
    %6951 = vrot.lane.b32.xlu0 %v4976, 64
    %v6952 = vpop.permute.xlu0 %6951
    %6953 = vrot.lane.b32.xlu0 %v4977, 64
    %v6954 = vpop.permute.xlu0 %6953
    %6955 = vrot.lane.b32.xlu0 %v4978, 64
    %v6956 = vpop.permute.xlu0 %6955
    %6957 = vrot.lane.b32.xlu0 %v4979, 64
    %v6958 = vpop.permute.xlu0 %6957
    %6959 = vrot.lane.b32.xlu0 %v4980, 64
    %v6960 = vpop.permute.xlu0 %6959
    %6961 = vrot.lane.b32.xlu0 %v4981, 64
    %v6962 = vpop.permute.xlu0 %6961
    %6963 = vrot.lane.b32.xlu0 %v4982, 64
    %v6964 = vpop.permute.xlu0 %6963
    %6965 = vrot.lane.b32.xlu0 %v4983, 64
    %v6966 = vpop.permute.xlu0 %6965
    %6967 = vrot.lane.b32.xlu0 %v4984, 64
    %v6968 = vpop.permute.xlu0 %6967
    %v7033 = vsel %vm2718, %v4408, %v5050
    %v7034 = vsel %vm2718, %v4409, %v5052
    %v7035 = vsel %vm2718, %v4410, %v5054
    %v7036 = vsel %vm2718, %v4411, %v5056
    %v7037 = vsel %vm2718, %v4412, %v5058
    %v7038 = vsel %vm2718, %v4413, %v5060
    %v7039 = vsel %vm2718, %v4414, %v5062
    %v7040 = vsel %vm2718, %v4415, %v5064
    %v7041 = vsel %vm2718, %v4416, %v5066
    %v7042 = vsel %vm2718, %v4417, %v5068
    %v7043 = vsel %vm2718, %v4418, %v5070
    %v7044 = vsel %vm2718, %v4419, %v5072
    %v7045 = vsel %vm2718, %v4420, %v5074
    %v7046 = vsel %vm2718, %v4421, %v5076
    %v7047 = vsel %vm2718, %v4422, %v5078
    %v7048 = vsel %vm2718, %v4423, %v5080
    %v7049 = vsel %vm2718, %v4424, %v5082
    %v7050 = vsel %vm2718, %v4425, %v5084
    %v7051 = vsel %vm2718, %v4426, %v5086
    %v7052 = vsel %vm2718, %v4427, %v5088
    %v7053 = vsel %vm2718, %v4428, %v5090
    %v7054 = vsel %vm2718, %v4429, %v5092
    %v7055 = vsel %vm2718, %v4430, %v5094
    %v7056 = vsel %vm2718, %v4431, %v5096
    %v7057 = vsel %vm2718, %v4432, %v5098
    %v7058 = vsel %vm2718, %v4433, %v5100
    %v7059 = vsel %vm2718, %v4434, %v5102
    %v7060 = vsel %vm2718, %v4435, %v5104
    %v7061 = vsel %vm2718, %v4436, %v5106
    %v7062 = vsel %vm2718, %v4437, %v5108
    %v7063 = vsel %vm2718, %v4438, %v5110
    %v7064 = vsel %vm2718, %v4439, %v5112
    %v7065 = vsel %vm2718, %v4440, %v5114
    %v7066 = vsel %vm2718, %v4441, %v5116
    %v7067 = vsel %vm2718, %v4442, %v5118
    %v7068 = vsel %vm2718, %v4443, %v5120
    %v7069 = vsel %vm2718, %v4444, %v5122
    %v7070 = vsel %vm2718, %v4445, %v5124
    %v7071 = vsel %vm2718, %v4446, %v5126
    %v7072 = vsel %vm2718, %v4447, %v5128
    %v7073 = vsel %vm2718, %v4448, %v5130
    %v7074 = vsel %vm2718, %v4449, %v5132
    %v7075 = vsel %vm2718, %v4450, %v5134
    %v7076 = vsel %vm2718, %v4451, %v5136
    %v7077 = vsel %vm2718, %v4452, %v5138
    %v7078 = vsel %vm2718, %v4453, %v5140
    %v7079 = vsel %vm2718, %v4454, %v5142
    %v7080 = vsel %vm2718, %v4455, %v5144
    %v7081 = vsel %vm2718, %v4456, %v5146
    %v7082 = vsel %vm2718, %v4457, %v5148
    %v7083 = vsel %vm2718, %v4458, %v5150
    %v7084 = vsel %vm2718, %v4459, %v5152
    %v7085 = vsel %vm2718, %v4460, %v5154
    %v7086 = vsel %vm2718, %v4461, %v5156
    %v7087 = vsel %vm2718, %v4462, %v5158
    %v7088 = vsel %vm2718, %v4463, %v5160
    %v7089 = vsel %vm2718, %v4464, %v5162
    %v7090 = vsel %vm2718, %v4465, %v5164
    %v7091 = vsel %vm2718, %v4466, %v5166
    %v7092 = vsel %vm2718, %v4467, %v5168
    %v7093 = vsel %vm2718, %v4468, %v5170
    %v7094 = vsel %vm2718, %v4469, %v5172
    %v7095 = vsel %vm2718, %v4470, %v5174
    %v7096 = vsel %vm2718, %v4471, %v5176
    %v7097 = vsel %vm2848, %v7033, %v5306
    %v7098 = vsel %vm2848, %v7034, %v5308
    %v7099 = vsel %vm2848, %v7035, %v5310
    %v7100 = vsel %vm2848, %v7036, %v5312
    %v7101 = vsel %vm2848, %v7037, %v5314
    %v7102 = vsel %vm2848, %v7038, %v5316
    %v7103 = vsel %vm2848, %v7039, %v5318
    %v7104 = vsel %vm2848, %v7040, %v5320
    %v7105 = vsel %vm2848, %v7041, %v5322
    %v7106 = vsel %vm2848, %v7042, %v5324
    %v7107 = vsel %vm2848, %v7043, %v5326
    %v7108 = vsel %vm2848, %v7044, %v5328
    %v7109 = vsel %vm2848, %v7045, %v5330
    %v7110 = vsel %vm2848, %v7046, %v5332
    %v7111 = vsel %vm2848, %v7047, %v5334
    %v7112 = vsel %vm2848, %v7048, %v5336
    %v7113 = vsel %vm2848, %v7049, %v5338
    %v7114 = vsel %vm2848, %v7050, %v5340
    %v7115 = vsel %vm2848, %v7051, %v5342
    %v7116 = vsel %vm2848, %v7052, %v5344
    %v7117 = vsel %vm2848, %v7053, %v5346
    %v7118 = vsel %vm2848, %v7054, %v5348
    %v7119 = vsel %vm2848, %v7055, %v5350
    %v7120 = vsel %vm2848, %v7056, %v5352
    %v7121 = vsel %vm2848, %v7057, %v5354
    %v7122 = vsel %vm2848, %v7058, %v5356
    %v7123 = vsel %vm2848, %v7059, %v5358
    %v7124 = vsel %vm2848, %v7060, %v5360
    %v7125 = vsel %vm2848, %v7061, %v5362
    %v7126 = vsel %vm2848, %v7062, %v5364
    %v7127 = vsel %vm2848, %v7063, %v5366
    %v7128 = vsel %vm2848, %v7064, %v5368
    %v7129 = vsel %vm2848, %v7065, %v5370
    %v7130 = vsel %vm2848, %v7066, %v5372
    %v7131 = vsel %vm2848, %v7067, %v5374
    %v7132 = vsel %vm2848, %v7068, %v5376
    %v7133 = vsel %vm2848, %v7069, %v5378
    %v7134 = vsel %vm2848, %v7070, %v5380
    %v7135 = vsel %vm2848, %v7071, %v5382
    %v7136 = vsel %vm2848, %v7072, %v5384
    %v7137 = vsel %vm2848, %v7073, %v5386
    %v7138 = vsel %vm2848, %v7074, %v5388
    %v7139 = vsel %vm2848, %v7075, %v5390
    %v7140 = vsel %vm2848, %v7076, %v5392
    %v7141 = vsel %vm2848, %v7077, %v5394
    %v7142 = vsel %vm2848, %v7078, %v5396
    %v7143 = vsel %vm2848, %v7079, %v5398
    %v7144 = vsel %vm2848, %v7080, %v5400
    %v7145 = vsel %vm2848, %v7081, %v5402
    %v7146 = vsel %vm2848, %v7082, %v5404
    %v7147 = vsel %vm2848, %v7083, %v5406
    %v7148 = vsel %vm2848, %v7084, %v5408
    %v7149 = vsel %vm2848, %v7085, %v5410
    %v7150 = vsel %vm2848, %v7086, %v5412
    %v7151 = vsel %vm2848, %v7087, %v5414
    %v7152 = vsel %vm2848, %v7088, %v5416
    %v7153 = vsel %vm2848, %v7089, %v5418
    %v7154 = vsel %vm2848, %v7090, %v5420
    %v7155 = vsel %vm2848, %v7091, %v5422
    %v7156 = vsel %vm2848, %v7092, %v5424
    %v7157 = vsel %vm2848, %v7093, %v5426
    %v7158 = vsel %vm2848, %v7094, %v5428
    %v7159 = vsel %vm2848, %v7095, %v5430
    %v7160 = vsel %vm2848, %v7096, %v5432
    %v7161 = vsel %vm2978, %v7097, %v5562
    %v7162 = vsel %vm2978, %v7098, %v5564
    %v7163 = vsel %vm2978, %v7099, %v5566
    %v7164 = vsel %vm2978, %v7100, %v5568
    %v7165 = vsel %vm2978, %v7101, %v5570
    %v7166 = vsel %vm2978, %v7102, %v5572
    %v7167 = vsel %vm2978, %v7103, %v5574
    %v7168 = vsel %vm2978, %v7104, %v5576
    %v7169 = vsel %vm2978, %v7105, %v5578
    %v7170 = vsel %vm2978, %v7106, %v5580
    %v7171 = vsel %vm2978, %v7107, %v5582
    %v7172 = vsel %vm2978, %v7108, %v5584
    %v7173 = vsel %vm2978, %v7109, %v5586
    %v7174 = vsel %vm2978, %v7110, %v5588
    %v7175 = vsel %vm2978, %v7111, %v5590
    %v7176 = vsel %vm2978, %v7112, %v5592
    %v7177 = vsel %vm2978, %v7113, %v5594
    %v7178 = vsel %vm2978, %v7114, %v5596
    %v7179 = vsel %vm2978, %v7115, %v5598
    %v7180 = vsel %vm2978, %v7116, %v5600
    %v7181 = vsel %vm2978, %v7117, %v5602
    %v7182 = vsel %vm2978, %v7118, %v5604
    %v7183 = vsel %vm2978, %v7119, %v5606
    %v7184 = vsel %vm2978, %v7120, %v5608
    %v7185 = vsel %vm2978, %v7121, %v5610
    %v7186 = vsel %vm2978, %v7122, %v5612
    %v7187 = vsel %vm2978, %v7123, %v5614
    %v7188 = vsel %vm2978, %v7124, %v5616
    %v7189 = vsel %vm2978, %v7125, %v5618
    %v7190 = vsel %vm2978, %v7126, %v5620
    %v7191 = vsel %vm2978, %v7127, %v5622
    %v7192 = vsel %vm2978, %v7128, %v5624
    %v7193 = vsel %vm2978, %v7129, %v5626
    %v7194 = vsel %vm2978, %v7130, %v5628
    %v7195 = vsel %vm2978, %v7131, %v5630
    %v7196 = vsel %vm2978, %v7132, %v5632
    %v7197 = vsel %vm2978, %v7133, %v5634
    %v7198 = vsel %vm2978, %v7134, %v5636
    %v7199 = vsel %vm2978, %v7135, %v5638
    %v7200 = vsel %vm2978, %v7136, %v5640
    %v7201 = vsel %vm2978, %v7137, %v5642
    %v7202 = vsel %vm2978, %v7138, %v5644
    %v7203 = vsel %vm2978, %v7139, %v5646
    %v7204 = vsel %vm2978, %v7140, %v5648
    %v7205 = vsel %vm2978, %v7141, %v5650
    %v7206 = vsel %vm2978, %v7142, %v5652
    %v7207 = vsel %vm2978, %v7143, %v5654
    %v7208 = vsel %vm2978, %v7144, %v5656
    %v7209 = vsel %vm2978, %v7145, %v5658
    %v7210 = vsel %vm2978, %v7146, %v5660
    %v7211 = vsel %vm2978, %v7147, %v5662
    %v7212 = vsel %vm2978, %v7148, %v5664
    %v7213 = vsel %vm2978, %v7149, %v5666
    %v7214 = vsel %vm2978, %v7150, %v5668
    %v7215 = vsel %vm2978, %v7151, %v5670
    %v7216 = vsel %vm2978, %v7152, %v5672
    %v7217 = vsel %vm2978, %v7153, %v5674
    %v7218 = vsel %vm2978, %v7154, %v5676
    %v7219 = vsel %vm2978, %v7155, %v5678
    %v7220 = vsel %vm2978, %v7156, %v5680
    %v7221 = vsel %vm2978, %v7157, %v5682
    %v7222 = vsel %vm2978, %v7158, %v5684
    %v7223 = vsel %vm2978, %v7159, %v5686
    %v7224 = vsel %vm2978, %v7160, %v5688
    %v7225 = vsel %vm3108, %v7161, %v5818
    %v7226 = vsel %vm3108, %v7162, %v5820
    %v7227 = vsel %vm3108, %v7163, %v5822
    %v7228 = vsel %vm3108, %v7164, %v5824
    %v7229 = vsel %vm3108, %v7165, %v5826
    %v7230 = vsel %vm3108, %v7166, %v5828
    %v7231 = vsel %vm3108, %v7167, %v5830
    %v7232 = vsel %vm3108, %v7168, %v5832
    %v7233 = vsel %vm3108, %v7169, %v5834
    %v7234 = vsel %vm3108, %v7170, %v5836
    %v7235 = vsel %vm3108, %v7171, %v5838
    %v7236 = vsel %vm3108, %v7172, %v5840
    %v7237 = vsel %vm3108, %v7173, %v5842
    %v7238 = vsel %vm3108, %v7174, %v5844
    %v7239 = vsel %vm3108, %v7175, %v5846
    %v7240 = vsel %vm3108, %v7176, %v5848
    %v7241 = vsel %vm3108, %v7177, %v5850
    %v7242 = vsel %vm3108, %v7178, %v5852
    %v7243 = vsel %vm3108, %v7179, %v5854
    %v7244 = vsel %vm3108, %v7180, %v5856
    %v7245 = vsel %vm3108, %v7181, %v5858
    %v7246 = vsel %vm3108, %v7182, %v5860
    %v7247 = vsel %vm3108, %v7183, %v5862
    %v7248 = vsel %vm3108, %v7184, %v5864
    %v7249 = vsel %vm3108, %v7185, %v5866
    %v7250 = vsel %vm3108, %v7186, %v5868
    %v7251 = vsel %vm3108, %v7187, %v5870
    %v7252 = vsel %vm3108, %v7188, %v5872
    %v7253 = vsel %vm3108, %v7189, %v5874
    %v7254 = vsel %vm3108, %v7190, %v5876
    %v7255 = vsel %vm3108, %v7191, %v5878
    %v7256 = vsel %vm3108, %v7192, %v5880
    %v7257 = vsel %vm3108, %v7193, %v5882
    %v7258 = vsel %vm3108, %v7194, %v5884
    %v7259 = vsel %vm3108, %v7195, %v5886
    %v7260 = vsel %vm3108, %v7196, %v5888
    %v7261 = vsel %vm3108, %v7197, %v5890
    %v7262 = vsel %vm3108, %v7198, %v5892
    %v7263 = vsel %vm3108, %v7199, %v5894
    %v7264 = vsel %vm3108, %v7200, %v5896
    %v7265 = vsel %vm3108, %v7201, %v5898
    %v7266 = vsel %vm3108, %v7202, %v5900
    %v7267 = vsel %vm3108, %v7203, %v5902
    %v7268 = vsel %vm3108, %v7204, %v5904
    %v7269 = vsel %vm3108, %v7205, %v5906
    %v7270 = vsel %vm3108, %v7206, %v5908
    %v7271 = vsel %vm3108, %v7207, %v5910
    %v7272 = vsel %vm3108, %v7208, %v5912
    %v7273 = vsel %vm3108, %v7209, %v5914
    %v7274 = vsel %vm3108, %v7210, %v5916
    %v7275 = vsel %vm3108, %v7211, %v5918
    %v7276 = vsel %vm3108, %v7212, %v5920
    %v7277 = vsel %vm3108, %v7213, %v5922
    %v7278 = vsel %vm3108, %v7214, %v5924
    %v7279 = vsel %vm3108, %v7215, %v5926
    %v7280 = vsel %vm3108, %v7216, %v5928
    %v7281 = vsel %vm3108, %v7217, %v5930
    %v7282 = vsel %vm3108, %v7218, %v5932
    %v7283 = vsel %vm3108, %v7219, %v5934
    %v7284 = vsel %vm3108, %v7220, %v5936
    %v7285 = vsel %vm3108, %v7221, %v5938
    %v7286 = vsel %vm3108, %v7222, %v5940
    %v7287 = vsel %vm3108, %v7223, %v5942
    %v7288 = vsel %vm3108, %v7224, %v5944
    %vm7289 = vcmask 326656
    %v7290 = vsel %vm7289, %v7225, %v6074
    %v7291 = vsel %vm7289, %v7226, %v6076
    %v7292 = vsel %vm7289, %v7227, %v6078
    %v7293 = vsel %vm7289, %v7228, %v6080
    %v7294 = vsel %vm7289, %v7229, %v6082
    %v7295 = vsel %vm7289, %v7230, %v6084
    %v7296 = vsel %vm7289, %v7231, %v6086
    %v7297 = vsel %vm7289, %v7232, %v6088
    %v7298 = vsel %vm7289, %v7233, %v6090
    %v7299 = vsel %vm7289, %v7234, %v6092
    %v7300 = vsel %vm7289, %v7235, %v6094
    %v7301 = vsel %vm7289, %v7236, %v6096
    %v7302 = vsel %vm7289, %v7237, %v6098
    %v7303 = vsel %vm7289, %v7238, %v6100
    %v7304 = vsel %vm7289, %v7239, %v6102
    %v7305 = vsel %vm7289, %v7240, %v6104
    %v7306 = vsel %vm7289, %v7241, %v6106
    %v7307 = vsel %vm7289, %v7242, %v6108
    %v7308 = vsel %vm7289, %v7243, %v6110
    %v7309 = vsel %vm7289, %v7244, %v6112
    %v7310 = vsel %vm7289, %v7245, %v6114
    %v7311 = vsel %vm7289, %v7246, %v6116
    %v7312 = vsel %vm7289, %v7247, %v6118
    %v7313 = vsel %vm7289, %v7248, %v6120
    %v7314 = vsel %vm7289, %v7249, %v6122
    %v7315 = vsel %vm7289, %v7250, %v6124
    %v7316 = vsel %vm7289, %v7251, %v6126
    %v7317 = vsel %vm7289, %v7252, %v6128
    %v7318 = vsel %vm7289, %v7253, %v6130
    %v7319 = vsel %vm7289, %v7254, %v6132
    %v7320 = vsel %vm7289, %v7255, %v6134
    %v7321 = vsel %vm7289, %v7256, %v6136
    %v7322 = vsel %vm7289, %v7257, %v6138
    %v7323 = vsel %vm7289, %v7258, %v6140
    %v7324 = vsel %vm7289, %v7259, %v6142
    %v7325 = vsel %vm7289, %v7260, %v6144
    %v7326 = vsel %vm7289, %v7261, %v6146
    %v7327 = vsel %vm7289, %v7262, %v6148
    %v7328 = vsel %vm7289, %v7263, %v6150
    %v7329 = vsel %vm7289, %v7264, %v6152
    %v7330 = vsel %vm7289, %v7265, %v6154
    %v7331 = vsel %vm7289, %v7266, %v6156
    %v7332 = vsel %vm7289, %v7267, %v6158
    %v7333 = vsel %vm7289, %v7268, %v6160
    %v7334 = vsel %vm7289, %v7269, %v6162
    %v7335 = vsel %vm7289, %v7270, %v6164
    %v7336 = vsel %vm7289, %v7271, %v6166
    %v7337 = vsel %vm7289, %v7272, %v6168
    %v7338 = vsel %vm7289, %v7273, %v6170
    %v7339 = vsel %vm7289, %v7274, %v6172
    %v7340 = vsel %vm7289, %v7275, %v6174
    %v7341 = vsel %vm7289, %v7276, %v6176
    %v7342 = vsel %vm7289, %v7277, %v6178
    %v7343 = vsel %vm7289, %v7278, %v6180
    %v7344 = vsel %vm7289, %v7279, %v6182
    %v7345 = vsel %vm7289, %v7280, %v6184
    %v7346 = vsel %vm7289, %v7281, %v6186
    %v7347 = vsel %vm7289, %v7282, %v6188
    %v7348 = vsel %vm7289, %v7283, %v6190
    %v7349 = vsel %vm7289, %v7284, %v6192
    %v7350 = vsel %vm7289, %v7285, %v6194
    %v7351 = vsel %vm7289, %v7286, %v6196
    %v7352 = vsel %vm7289, %v7287, %v6198
    %v7353 = vsel %vm7289, %v7288, %v6200
    %vm7354 = vcmask 392192
    %v7355 = vsel %vm7354, %v7290, %v6330
    %v7356 = vsel %vm7354, %v7291, %v6332
    %v7357 = vsel %vm7354, %v7292, %v6334
    %v7358 = vsel %vm7354, %v7293, %v6336
    %v7359 = vsel %vm7354, %v7294, %v6338
    %v7360 = vsel %vm7354, %v7295, %v6340
    %v7361 = vsel %vm7354, %v7296, %v6342
    %v7362 = vsel %vm7354, %v7297, %v6344
    %v7363 = vsel %vm7354, %v7298, %v6346
    %v7364 = vsel %vm7354, %v7299, %v6348
    %v7365 = vsel %vm7354, %v7300, %v6350
    %v7366 = vsel %vm7354, %v7301, %v6352
    %v7367 = vsel %vm7354, %v7302, %v6354
    %v7368 = vsel %vm7354, %v7303, %v6356
    %v7369 = vsel %vm7354, %v7304, %v6358
    %v7370 = vsel %vm7354, %v7305, %v6360
    %v7371 = vsel %vm7354, %v7306, %v6362
    %v7372 = vsel %vm7354, %v7307, %v6364
    %v7373 = vsel %vm7354, %v7308, %v6366
    %v7374 = vsel %vm7354, %v7309, %v6368
    %v7375 = vsel %vm7354, %v7310, %v6370
    %v7376 = vsel %vm7354, %v7311, %v6372
    %v7377 = vsel %vm7354, %v7312, %v6374
    %v7378 = vsel %vm7354, %v7313, %v6376
    %v7379 = vsel %vm7354, %v7314, %v6378
    %v7380 = vsel %vm7354, %v7315, %v6380
    %v7381 = vsel %vm7354, %v7316, %v6382
    %v7382 = vsel %vm7354, %v7317, %v6384
    %v7383 = vsel %vm7354, %v7318, %v6386
    %v7384 = vsel %vm7354, %v7319, %v6388
    %v7385 = vsel %vm7354, %v7320, %v6390
    %v7386 = vsel %vm7354, %v7321, %v6392
    %v7387 = vsel %vm7354, %v7322, %v6394
    %v7388 = vsel %vm7354, %v7323, %v6396
    %v7389 = vsel %vm7354, %v7324, %v6398
    %v7390 = vsel %vm7354, %v7325, %v6400
    %v7391 = vsel %vm7354, %v7326, %v6402
    %v7392 = vsel %vm7354, %v7327, %v6404
    %v7393 = vsel %vm7354, %v7328, %v6406
    %v7394 = vsel %vm7354, %v7329, %v6408
    %v7395 = vsel %vm7354, %v7330, %v6410
    %v7396 = vsel %vm7354, %v7331, %v6412
    %v7397 = vsel %vm7354, %v7332, %v6414
    %v7398 = vsel %vm7354, %v7333, %v6416
    %v7399 = vsel %vm7354, %v7334, %v6418
    %v7400 = vsel %vm7354, %v7335, %v6420
    %v7401 = vsel %vm7354, %v7336, %v6422
    %v7402 = vsel %vm7354, %v7337, %v6424
    %v7403 = vsel %vm7354, %v7338, %v6426
    %v7404 = vsel %vm7354, %v7339, %v6428
    %v7405 = vsel %vm7354, %v7340, %v6430
    %v7406 = vsel %vm7354, %v7341, %v6432
    %v7407 = vsel %vm7354, %v7342, %v6434
    %v7408 = vsel %vm7354, %v7343, %v6436
    %v7409 = vsel %vm7354, %v7344, %v6438
    %v7410 = vsel %vm7354, %v7345, %v6440
    %v7411 = vsel %vm7354, %v7346, %v6442
    %v7412 = vsel %vm7354, %v7347, %v6444
    %v7413 = vsel %vm7354, %v7348, %v6446
    %v7414 = vsel %vm7354, %v7349, %v6448
    %v7415 = vsel %vm7354, %v7350, %v6450
    %v7416 = vsel %vm7354, %v7351, %v6452
    %v7417 = vsel %vm7354, %v7352, %v6454
    %v7418 = vsel %vm7354, %v7353, %v6456
    %vm7419 = vcmask 457728
    %v7420 = vsel %vm7419, %v7355, %v6586
    %v7421 = vsel %vm7419, %v7356, %v6588
    %v7422 = vsel %vm7419, %v7357, %v6590
    %v7423 = vsel %vm7419, %v7358, %v6592
    %v7424 = vsel %vm7419, %v7359, %v6594
    %v7425 = vsel %vm7419, %v7360, %v6596
    %v7426 = vsel %vm7419, %v7361, %v6598
    %v7427 = vsel %vm7419, %v7362, %v6600
    %v7428 = vsel %vm7419, %v7363, %v6602
    %v7429 = vsel %vm7419, %v7364, %v6604
    %v7430 = vsel %vm7419, %v7365, %v6606
    %v7431 = vsel %vm7419, %v7366, %v6608
    %v7432 = vsel %vm7419, %v7367, %v6610
    %v7433 = vsel %vm7419, %v7368, %v6612
    %v7434 = vsel %vm7419, %v7369, %v6614
    %v7435 = vsel %vm7419, %v7370, %v6616
    %v7436 = vsel %vm7419, %v7371, %v6618
    %v7437 = vsel %vm7419, %v7372, %v6620
    %v7438 = vsel %vm7419, %v7373, %v6622
    %v7439 = vsel %vm7419, %v7374, %v6624
    %v7440 = vsel %vm7419, %v7375, %v6626
    %v7441 = vsel %vm7419, %v7376, %v6628
    %v7442 = vsel %vm7419, %v7377, %v6630
    %v7443 = vsel %vm7419, %v7378, %v6632
    %v7444 = vsel %vm7419, %v7379, %v6634
    %v7445 = vsel %vm7419, %v7380, %v6636
    %v7446 = vsel %vm7419, %v7381, %v6638
    %v7447 = vsel %vm7419, %v7382, %v6640
    %v7448 = vsel %vm7419, %v7383, %v6642
    %v7449 = vsel %vm7419, %v7384, %v6644
    %v7450 = vsel %vm7419, %v7385, %v6646
    %v7451 = vsel %vm7419, %v7386, %v6648
    %v7452 = vsel %vm7419, %v7387, %v6650
    %v7453 = vsel %vm7419, %v7388, %v6652
    %v7454 = vsel %vm7419, %v7389, %v6654
    %v7455 = vsel %vm7419, %v7390, %v6656
    %v7456 = vsel %vm7419, %v7391, %v6658
    %v7457 = vsel %vm7419, %v7392, %v6660
    %v7458 = vsel %vm7419, %v7393, %v6662
    %v7459 = vsel %vm7419, %v7394, %v6664
    %v7460 = vsel %vm7419, %v7395, %v6666
    %v7461 = vsel %vm7419, %v7396, %v6668
    %v7462 = vsel %vm7419, %v7397, %v6670
    %v7463 = vsel %vm7419, %v7398, %v6672
    %v7464 = vsel %vm7419, %v7399, %v6674
    %v7465 = vsel %vm7419, %v7400, %v6676
    %v7466 = vsel %vm7419, %v7401, %v6678
    %v7467 = vsel %vm7419, %v7402, %v6680
    %v7468 = vsel %vm7419, %v7403, %v6682
    %v7469 = vsel %vm7419, %v7404, %v6684
    %v7470 = vsel %vm7419, %v7405, %v6686
    %v7471 = vsel %vm7419, %v7406, %v6688
    %v7472 = vsel %vm7419, %v7407, %v6690
    %v7473 = vsel %vm7419, %v7408, %v6692
    %v7474 = vsel %vm7419, %v7409, %v6694
    %v7475 = vsel %vm7419, %v7410, %v6696
    %v7476 = vsel %vm7419, %v7411, %v6698
    %v7477 = vsel %vm7419, %v7412, %v6700
    %v7478 = vsel %vm7419, %v7413, %v6702
    %v7479 = vsel %vm7419, %v7414, %v6704
    %v7480 = vsel %vm7419, %v7415, %v6706
    %v7481 = vsel %vm7419, %v7416, %v6708
    %v7482 = vsel %vm7419, %v7417, %v6710
    %v7483 = vsel %vm7419, %v7418, %v6712
    %vm7484 = vcmask 523264
    %v7485 = vsel %vm7484, %v7420, %v6842
    %v7486 = vsel %vm7484, %v7421, %v6844
    %v7487 = vsel %vm7484, %v7422, %v6846
    %v7488 = vsel %vm7484, %v7423, %v6848
    %v7489 = vsel %vm7484, %v7424, %v6850
    %v7490 = vsel %vm7484, %v7425, %v6852
    %v7491 = vsel %vm7484, %v7426, %v6854
    %v7492 = vsel %vm7484, %v7427, %v6856
    %v7493 = vsel %vm7484, %v7428, %v6858
    %v7494 = vsel %vm7484, %v7429, %v6860
    %v7495 = vsel %vm7484, %v7430, %v6862
    %v7496 = vsel %vm7484, %v7431, %v6864
    %v7497 = vsel %vm7484, %v7432, %v6866
    %v7498 = vsel %vm7484, %v7433, %v6868
    %v7499 = vsel %vm7484, %v7434, %v6870
    %v7500 = vsel %vm7484, %v7435, %v6872
    %v7501 = vsel %vm7484, %v7436, %v6874
    %v7502 = vsel %vm7484, %v7437, %v6876
    %v7503 = vsel %vm7484, %v7438, %v6878
    %v7504 = vsel %vm7484, %v7439, %v6880
    %v7505 = vsel %vm7484, %v7440, %v6882
    %v7506 = vsel %vm7484, %v7441, %v6884
    %v7507 = vsel %vm7484, %v7442, %v6886
    %v7508 = vsel %vm7484, %v7443, %v6888
    %v7509 = vsel %vm7484, %v7444, %v6890
    %v7510 = vsel %vm7484, %v7445, %v6892
    %v7511 = vsel %vm7484, %v7446, %v6894
    %v7512 = vsel %vm7484, %v7447, %v6896
    %v7513 = vsel %vm7484, %v7448, %v6898
    %v7514 = vsel %vm7484, %v7449, %v6900
    %v7515 = vsel %vm7484, %v7450, %v6902
    %v7516 = vsel %vm7484, %v7451, %v6904
    %v7517 = vsel %vm7484, %v7452, %v6906
    %v7518 = vsel %vm7484, %v7453, %v6908
    %v7519 = vsel %vm7484, %v7454, %v6910
    %v7520 = vsel %vm7484, %v7455, %v6912
    %v7521 = vsel %vm7484, %v7456, %v6914
    %v7522 = vsel %vm7484, %v7457, %v6916
    %v7523 = vsel %vm7484, %v7458, %v6918
    %v7524 = vsel %vm7484, %v7459, %v6920
    %v7525 = vsel %vm7484, %v7460, %v6922
    %v7526 = vsel %vm7484, %v7461, %v6924
    %v7527 = vsel %vm7484, %v7462, %v6926
    %v7528 = vsel %vm7484, %v7463, %v6928
    %v7529 = vsel %vm7484, %v7464, %v6930
    %v7530 = vsel %vm7484, %v7465, %v6932
    %v7531 = vsel %vm7484, %v7466, %v6934
    %v7532 = vsel %vm7484, %v7467, %v6936
    %v7533 = vsel %vm7484, %v7468, %v6938
    %v7534 = vsel %vm7484, %v7469, %v6940
    %v7535 = vsel %vm7484, %v7470, %v6942
    %v7536 = vsel %vm7484, %v7471, %v6944
    %v7537 = vsel %vm7484, %v7472, %v6946
    %v7538 = vsel %vm7484, %v7473, %v6948
    %v7539 = vsel %vm7484, %v7474, %v6950
    %v7540 = vsel %vm7484, %v7475, %v6952
    %v7541 = vsel %vm7484, %v7476, %v6954
    %v7542 = vsel %vm7484, %v7477, %v6956
    %v7543 = vsel %vm7484, %v7478, %v6958
    %v7544 = vsel %vm7484, %v7479, %v6960
    %v7545 = vsel %vm7484, %v7480, %v6962
    %v7546 = vsel %vm7484, %v7481, %v6964
    %v7547 = vsel %vm7484, %v7482, %v6966
    %v7548 = vsel %vm7484, %v7483, %v6968
    %v7549 = vld [vmem:[%s4] sm:$0xff]
    %v7550 = vld [vmem:[%s4 + $0x8] sm:$0xff]
    %v7551 = vld [vmem:[%s4 + $0x10] sm:$0xff]
    %v7552 = vld [vmem:[%s4 + $0x18] sm:$0xff]
    %v7553 = vld [vmem:[%s4 + $0x20] sm:$0xff]
    %v7554 = vld [vmem:[%s4 + $0x28] sm:$0xff]
    %v7555 = vld [vmem:[%s4 + $0x30] sm:$0xff]
    %v7556 = vld [vmem:[%s4 + $0x38] sm:$0xff]
    %v7557 = vld [vmem:[%s4 + $0x40] sm:$0xff]
    %vm7558 = vcmask 588800
    %v7560 = vsel %vm7558, %v7485, 0
    %v7563 = vsel %vm7558, %v7486, 0
    %v7566 = vsel %vm7558, %v7487, 0
    %v7569 = vsel %vm7558, %v7488, 0
    %v7572 = vsel %vm7558, %v7489, 0
    %v7575 = vsel %vm7558, %v7490, 0
    %v7578 = vsel %vm7558, %v7491, 0
    %v7581 = vsel %vm7558, %v7492, 0
    %v7584 = vsel %vm7558, %v7493, 0
    %v7587 = vsel %vm7558, %v7494, 0
    %v7590 = vsel %vm7558, %v7495, 0
    %v7593 = vsel %vm7558, %v7496, 0
    %v7596 = vsel %vm7558, %v7497, 0
    %v7599 = vsel %vm7558, %v7498, 0
    %v7602 = vsel %vm7558, %v7499, 0
    %v7605 = vsel %vm7558, %v7500, 0
    %v7608 = vsel %vm7558, %v7501, 0
    %v7611 = vsel %vm7558, %v7502, 0
    %v7614 = vsel %vm7558, %v7503, 0
    %v7617 = vsel %vm7558, %v7504, 0
    %v7620 = vsel %vm7558, %v7505, 0
    %v7623 = vsel %vm7558, %v7506, 0
    %v7626 = vsel %vm7558, %v7507, 0
    %v7629 = vsel %vm7558, %v7508, 0
    %v7632 = vsel %vm7558, %v7509, 0
    %v7635 = vsel %vm7558, %v7510, 0
    %v7638 = vsel %vm7558, %v7511, 0
    %v7641 = vsel %vm7558, %v7512, 0
    %v7644 = vsel %vm7558, %v7513, 0
    %v7647 = vsel %vm7558, %v7514, 0
    %v7650 = vsel %vm7558, %v7515, 0
    %v7653 = vsel %vm7558, %v7516, 0
    %v7656 = vsel %vm7558, %v7517, 0
    %v7659 = vsel %vm7558, %v7518, 0
    %v7662 = vsel %vm7558, %v7519, 0
    %v7665 = vsel %vm7558, %v7520, 0
    %v7668 = vsel %vm7558, %v7521, 0
    %v7671 = vsel %vm7558, %v7522, 0
    %v7674 = vsel %vm7558, %v7523, 0
    %v7677 = vsel %vm7558, %v7524, 0
    %v7680 = vsel %vm7558, %v7525, 0
    %v7683 = vsel %vm7558, %v7526, 0
    %v7686 = vsel %vm7558, %v7527, 0
    %v7689 = vsel %vm7558, %v7528, 0
    %v7692 = vsel %vm7558, %v7529, 0
    %v7695 = vsel %vm7558, %v7530, 0
    %v7698 = vsel %vm7558, %v7531, 0
    %v7701 = vsel %vm7558, %v7532, 0
    %v7704 = vsel %vm7558, %v7533, 0
    %v7707 = vsel %vm7558, %v7534, 0
    %v7710 = vsel %vm7558, %v7535, 0
    %v7713 = vsel %vm7558, %v7536, 0
    %v7716 = vsel %vm7558, %v7537, 0
    %v7719 = vsel %vm7558, %v7538, 0
    %v7722 = vsel %vm7558, %v7539, 0
    %v7725 = vsel %vm7558, %v7540, 0
    %v7728 = vsel %vm7558, %v7541, 0
    %v7731 = vsel %vm7558, %v7542, 0
    %v7734 = vsel %vm7558, %v7543, 0
    %v7737 = vsel %vm7558, %v7544, 0
    %v7740 = vsel %vm7558, %v7545, 0
    %v7743 = vsel %vm7558, %v7546, 0
    %v7746 = vsel %vm7558, %v7547, 0
    %v7749 = vsel %vm7558, %v7548, 0
    %7751 = vmatpush.msra.mxu0 0.0
    %7752 = vmatpush.msra.mxu0 0.0
    %7753 = vmatpush.msra.mxu0 0.0
    %7754 = vmatpush.msra.mxu0 0.0
    %7755 = vmatpush.msra.mxu0 0.0
    %7756 = vmatpush.msra.mxu0 0.0
    %7757 = vmatpush.msra.mxu0 0.0
    %7758 = vmatpush.msra.mxu0 %v7557
    %7759 = vmatpush.msra.mxu0 %v7556
    %7760 = vmatpush.msra.mxu0 %v7555
    %7761 = vmatpush.msra.mxu0 %v7554
    %7762 = vmatpush.msra.mxu0 %v7553
    %7763 = vmatpush.msra.mxu0 %v7552
    %7764 = vmatpush.msra.mxu0 %v7551
    %7765 = vmatpush.msra.mxu0 %v7550
    %7766 = vmatpush.msra.mxu0 %v7549
    %7767 = vmatmul.f32.gmra.mxu0 %v7560
    %v7768 = vpop.f32.mrf.mxu0
    %v7769 = vadd.f32 0.0, %v7768
    %7770 = vmatmul.f32.gmra.mxu0 %v7563
    %v7771 = vpop.f32.mrf.mxu0
    %v7772 = vadd.f32 0.0, %v7771
    %7773 = vmatmul.f32.gmra.mxu0 %v7566
    %v7774 = vpop.f32.mrf.mxu0
    %v7775 = vadd.f32 0.0, %v7774
    %7776 = vmatmul.f32.gmra.mxu0 %v7569
    %v7777 = vpop.f32.mrf.mxu0
    %v7778 = vadd.f32 0.0, %v7777
    %7779 = vmatmul.f32.gmra.mxu0 %v7572
    %v7780 = vpop.f32.mrf.mxu0
    %v7781 = vadd.f32 0.0, %v7780
    %7782 = vmatmul.f32.gmra.mxu0 %v7575
    %v7783 = vpop.f32.mrf.mxu0
    %v7784 = vadd.f32 0.0, %v7783
    %7785 = vmatmul.f32.gmra.mxu0 %v7578
    %v7786 = vpop.f32.mrf.mxu0
    %v7787 = vadd.f32 0.0, %v7786
    %7788 = vmatmul.f32.gmra.mxu0 %v7581
    %v7789 = vpop.f32.mrf.mxu0
    %v7790 = vadd.f32 0.0, %v7789
    %7791 = vmatmul.f32.gmra.mxu0 %v7584
    %v7792 = vpop.f32.mrf.mxu0
    %v7793 = vadd.f32 0.0, %v7792
    %7794 = vmatmul.f32.gmra.mxu0 %v7587
    %v7795 = vpop.f32.mrf.mxu0
    %v7796 = vadd.f32 0.0, %v7795
    %7797 = vmatmul.f32.gmra.mxu0 %v7590
    %v7798 = vpop.f32.mrf.mxu0
    %v7799 = vadd.f32 0.0, %v7798
    %7800 = vmatmul.f32.gmra.mxu0 %v7593
    %v7801 = vpop.f32.mrf.mxu0
    %v7802 = vadd.f32 0.0, %v7801
    %7803 = vmatmul.f32.gmra.mxu0 %v7596
    %v7804 = vpop.f32.mrf.mxu0
    %v7805 = vadd.f32 0.0, %v7804
    %7806 = vmatmul.f32.gmra.mxu0 %v7599
    %v7807 = vpop.f32.mrf.mxu0
    %v7808 = vadd.f32 0.0, %v7807
    %7809 = vmatmul.f32.gmra.mxu0 %v7602
    %v7810 = vpop.f32.mrf.mxu0
    %v7811 = vadd.f32 0.0, %v7810
    %7812 = vmatmul.f32.gmra.mxu0 %v7605
    %v7813 = vpop.f32.mrf.mxu0
    %v7814 = vadd.f32 0.0, %v7813
    %7815 = vmatmul.f32.gmra.mxu0 %v7608
    %v7816 = vpop.f32.mrf.mxu0
    %v7817 = vadd.f32 0.0, %v7816
    %7818 = vmatmul.f32.gmra.mxu0 %v7611
    %v7819 = vpop.f32.mrf.mxu0
    %v7820 = vadd.f32 0.0, %v7819
    %7821 = vmatmul.f32.gmra.mxu0 %v7614
    %v7822 = vpop.f32.mrf.mxu0
    %v7823 = vadd.f32 0.0, %v7822
    %7824 = vmatmul.f32.gmra.mxu0 %v7617
    %v7825 = vpop.f32.mrf.mxu0
    %v7826 = vadd.f32 0.0, %v7825
    %7827 = vmatmul.f32.gmra.mxu0 %v7620
    %v7828 = vpop.f32.mrf.mxu0
    %v7829 = vadd.f32 0.0, %v7828
    %7830 = vmatmul.f32.gmra.mxu0 %v7623
    %v7831 = vpop.f32.mrf.mxu0
    %v7832 = vadd.f32 0.0, %v7831
    %7833 = vmatmul.f32.gmra.mxu0 %v7626
    %v7834 = vpop.f32.mrf.mxu0
    %v7835 = vadd.f32 0.0, %v7834
    %7836 = vmatmul.f32.gmra.mxu0 %v7629
    %v7837 = vpop.f32.mrf.mxu0
    %v7838 = vadd.f32 0.0, %v7837
    %7839 = vmatmul.f32.gmra.mxu0 %v7632
    %v7840 = vpop.f32.mrf.mxu0
    %v7841 = vadd.f32 0.0, %v7840
    %7842 = vmatmul.f32.gmra.mxu0 %v7635
    %v7843 = vpop.f32.mrf.mxu0
    %v7844 = vadd.f32 0.0, %v7843
    %7845 = vmatmul.f32.gmra.mxu0 %v7638
    %v7846 = vpop.f32.mrf.mxu0
    %v7847 = vadd.f32 0.0, %v7846
    %7848 = vmatmul.f32.gmra.mxu0 %v7641
    %v7849 = vpop.f32.mrf.mxu0
    %v7850 = vadd.f32 0.0, %v7849
    %7851 = vmatmul.f32.gmra.mxu0 %v7644
    %v7852 = vpop.f32.mrf.mxu0
    %v7853 = vadd.f32 0.0, %v7852
    %7854 = vmatmul.f32.gmra.mxu0 %v7647
    %v7855 = vpop.f32.mrf.mxu0
    %v7856 = vadd.f32 0.0, %v7855
    %7857 = vmatmul.f32.gmra.mxu0 %v7650
    %v7858 = vpop.f32.mrf.mxu0
    %v7859 = vadd.f32 0.0, %v7858
    %7860 = vmatmul.f32.gmra.mxu0 %v7653
    %v7861 = vpop.f32.mrf.mxu0
    %v7862 = vadd.f32 0.0, %v7861
    %7863 = vmatmul.f32.gmra.mxu0 %v7656
    %v7864 = vpop.f32.mrf.mxu0
    %v7865 = vadd.f32 0.0, %v7864
    %7866 = vmatmul.f32.gmra.mxu0 %v7659
    %v7867 = vpop.f32.mrf.mxu0
    %v7868 = vadd.f32 0.0, %v7867
    %7869 = vmatmul.f32.gmra.mxu0 %v7662
    %v7870 = vpop.f32.mrf.mxu0
    %v7871 = vadd.f32 0.0, %v7870
    %7872 = vmatmul.f32.gmra.mxu0 %v7665
    %v7873 = vpop.f32.mrf.mxu0
    %v7874 = vadd.f32 0.0, %v7873
    %7875 = vmatmul.f32.gmra.mxu0 %v7668
    %v7876 = vpop.f32.mrf.mxu0
    %v7877 = vadd.f32 0.0, %v7876
    %7878 = vmatmul.f32.gmra.mxu0 %v7671
    %v7879 = vpop.f32.mrf.mxu0
    %v7880 = vadd.f32 0.0, %v7879
    %7881 = vmatmul.f32.gmra.mxu0 %v7674
    %v7882 = vpop.f32.mrf.mxu0
    %v7883 = vadd.f32 0.0, %v7882
    %7884 = vmatmul.f32.gmra.mxu0 %v7677
    %v7885 = vpop.f32.mrf.mxu0
    %v7886 = vadd.f32 0.0, %v7885
    %7887 = vmatmul.f32.gmra.mxu0 %v7680
    %v7888 = vpop.f32.mrf.mxu0
    %v7889 = vadd.f32 0.0, %v7888
    %7890 = vmatmul.f32.gmra.mxu0 %v7683
    %v7891 = vpop.f32.mrf.mxu0
    %v7892 = vadd.f32 0.0, %v7891
    %7893 = vmatmul.f32.gmra.mxu0 %v7686
    %v7894 = vpop.f32.mrf.mxu0
    %v7895 = vadd.f32 0.0, %v7894
    %7896 = vmatmul.f32.gmra.mxu0 %v7689
    %v7897 = vpop.f32.mrf.mxu0
    %v7898 = vadd.f32 0.0, %v7897
    %7899 = vmatmul.f32.gmra.mxu0 %v7692
    %v7900 = vpop.f32.mrf.mxu0
    %v7901 = vadd.f32 0.0, %v7900
    %7902 = vmatmul.f32.gmra.mxu0 %v7695
    %v7903 = vpop.f32.mrf.mxu0
    %v7904 = vadd.f32 0.0, %v7903
    %7905 = vmatmul.f32.gmra.mxu0 %v7698
    %v7906 = vpop.f32.mrf.mxu0
    %v7907 = vadd.f32 0.0, %v7906
    %7908 = vmatmul.f32.gmra.mxu0 %v7701
    %v7909 = vpop.f32.mrf.mxu0
    %v7910 = vadd.f32 0.0, %v7909
    %7911 = vmatmul.f32.gmra.mxu0 %v7704
    %v7912 = vpop.f32.mrf.mxu0
    %v7913 = vadd.f32 0.0, %v7912
    %7914 = vmatmul.f32.gmra.mxu0 %v7707
    %v7915 = vpop.f32.mrf.mxu0
    %v7916 = vadd.f32 0.0, %v7915
    %7917 = vmatmul.f32.gmra.mxu0 %v7710
    %v7918 = vpop.f32.mrf.mxu0
    %v7919 = vadd.f32 0.0, %v7918
    %7920 = vmatmul.f32.gmra.mxu0 %v7713
    %v7921 = vpop.f32.mrf.mxu0
    %v7922 = vadd.f32 0.0, %v7921
    %7923 = vmatmul.f32.gmra.mxu0 %v7716
    %v7924 = vpop.f32.mrf.mxu0
    %v7925 = vadd.f32 0.0, %v7924
    %7926 = vmatmul.f32.gmra.mxu0 %v7719
    %v7927 = vpop.f32.mrf.mxu0
    %v7928 = vadd.f32 0.0, %v7927
    %7929 = vmatmul.f32.gmra.mxu0 %v7722
    %v7930 = vpop.f32.mrf.mxu0
    %v7931 = vadd.f32 0.0, %v7930
    %7932 = vmatmul.f32.gmra.mxu0 %v7725
    %v7933 = vpop.f32.mrf.mxu0
    %v7934 = vadd.f32 0.0, %v7933
    %7935 = vmatmul.f32.gmra.mxu0 %v7728
    %v7936 = vpop.f32.mrf.mxu0
    %v7937 = vadd.f32 0.0, %v7936
    %7938 = vmatmul.f32.gmra.mxu0 %v7731
    %v7939 = vpop.f32.mrf.mxu0
    %v7940 = vadd.f32 0.0, %v7939
    %7941 = vmatmul.f32.gmra.mxu0 %v7734
    %v7942 = vpop.f32.mrf.mxu0
    %v7943 = vadd.f32 0.0, %v7942
    %7944 = vmatmul.f32.gmra.mxu0 %v7737
    %v7945 = vpop.f32.mrf.mxu0
    %v7946 = vadd.f32 0.0, %v7945
    %7947 = vmatmul.f32.gmra.mxu0 %v7740
    %v7948 = vpop.f32.mrf.mxu0
    %v7949 = vadd.f32 0.0, %v7948
    %7950 = vmatmul.f32.gmra.mxu0 %v7743
    %v7951 = vpop.f32.mrf.mxu0
    %v7952 = vadd.f32 0.0, %v7951
    %7953 = vmatmul.f32.gmra.mxu0 %v7746
    %v7954 = vpop.f32.mrf.mxu0
    %v7955 = vadd.f32 0.0, %v7954
    %7956 = vmatmul.f32.gmra.mxu0 %v7749
    %v7957 = vpop.f32.mrf.mxu0
    %v7958 = vadd.f32 0.0, %v7957
    %7959 = vdwg.mxu0
    %v7960 = vld [vmem:[%s5] sm:$0x1]
    %v7961 = vld [vmem:[%s6] sm:$0x1]
    %v7962 = vsel %vm2718, %v7769, 0.0
    %v7963 = vsel %vm2718, %v7772, 0.0
    %v7964 = vadd.f32 %v7962, %v7963
    %v7965 = vsel %vm2718, %v7775, 0.0
    %v7966 = vadd.f32 %v7964, %v7965
    %v7967 = vsel %vm2718, %v7778, 0.0
    %v7968 = vadd.f32 %v7966, %v7967
    %v7969 = vsel %vm2718, %v7781, 0.0
    %v7970 = vadd.f32 %v7968, %v7969
    %v7971 = vsel %vm2718, %v7784, 0.0
    %v7972 = vadd.f32 %v7970, %v7971
    %v7973 = vsel %vm2718, %v7787, 0.0
    %v7974 = vadd.f32 %v7972, %v7973
    %v7975 = vsel %vm2718, %v7790, 0.0
    %v7976 = vadd.f32 %v7974, %v7975
    %v7977 = vsel %vm2718, %v7793, 0.0
    %v7978 = vadd.f32 %v7976, %v7977
    %v7979 = vsel %vm2718, %v7796, 0.0
    %v7980 = vadd.f32 %v7978, %v7979
    %v7981 = vsel %vm2718, %v7799, 0.0
    %v7982 = vadd.f32 %v7980, %v7981
    %v7983 = vsel %vm2718, %v7802, 0.0
    %v7984 = vadd.f32 %v7982, %v7983
    %v7985 = vsel %vm2718, %v7805, 0.0
    %v7986 = vadd.f32 %v7984, %v7985
    %v7987 = vsel %vm2718, %v7808, 0.0
    %v7988 = vadd.f32 %v7986, %v7987
    %v7989 = vsel %vm2718, %v7811, 0.0
    %v7990 = vadd.f32 %v7988, %v7989
    %v7991 = vsel %vm2718, %v7814, 0.0
    %v7992 = vadd.f32 %v7990, %v7991
    %v7993 = vsel %vm2718, %v7817, 0.0
    %v7994 = vadd.f32 %v7992, %v7993
    %v7995 = vsel %vm2718, %v7820, 0.0
    %v7996 = vadd.f32 %v7994, %v7995
    %v7997 = vsel %vm2718, %v7823, 0.0
    %v7998 = vadd.f32 %v7996, %v7997
    %v7999 = vsel %vm2718, %v7826, 0.0
    %v8000 = vadd.f32 %v7998, %v7999
    %v8001 = vsel %vm2718, %v7829, 0.0
    %v8002 = vadd.f32 %v8000, %v8001
    %v8003 = vsel %vm2718, %v7832, 0.0
    %v8004 = vadd.f32 %v8002, %v8003
    %v8005 = vsel %vm2718, %v7835, 0.0
    %v8006 = vadd.f32 %v8004, %v8005
    %v8007 = vsel %vm2718, %v7838, 0.0
    %v8008 = vadd.f32 %v8006, %v8007
    %v8009 = vsel %vm2718, %v7841, 0.0
    %v8010 = vadd.f32 %v8008, %v8009
    %v8011 = vsel %vm2718, %v7844, 0.0
    %v8012 = vadd.f32 %v8010, %v8011
    %v8013 = vsel %vm2718, %v7847, 0.0
    %v8014 = vadd.f32 %v8012, %v8013
    %v8015 = vsel %vm2718, %v7850, 0.0
    %v8016 = vadd.f32 %v8014, %v8015
    %v8017 = vsel %vm2718, %v7853, 0.0
    %v8018 = vadd.f32 %v8016, %v8017
    %v8019 = vsel %vm2718, %v7856, 0.0
    %v8020 = vadd.f32 %v8018, %v8019
    %v8021 = vsel %vm2718, %v7859, 0.0
    %v8022 = vadd.f32 %v8020, %v8021
    %v8023 = vsel %vm2718, %v7862, 0.0
    %v8024 = vadd.f32 %v8022, %v8023
    %v8025 = vsel %vm2718, %v7865, 0.0
    %v8026 = vadd.f32 %v8024, %v8025
    %v8027 = vsel %vm2718, %v7868, 0.0
    %v8028 = vadd.f32 %v8026, %v8027
    %v8029 = vsel %vm2718, %v7871, 0.0
    %v8030 = vadd.f32 %v8028, %v8029
    %v8031 = vsel %vm2718, %v7874, 0.0
    %v8032 = vadd.f32 %v8030, %v8031
    %v8033 = vsel %vm2718, %v7877, 0.0
    %v8034 = vadd.f32 %v8032, %v8033
    %v8035 = vsel %vm2718, %v7880, 0.0
    %v8036 = vadd.f32 %v8034, %v8035
    %v8037 = vsel %vm2718, %v7883, 0.0
    %v8038 = vadd.f32 %v8036, %v8037
    %v8039 = vsel %vm2718, %v7886, 0.0
    %v8040 = vadd.f32 %v8038, %v8039
    %v8041 = vsel %vm2718, %v7889, 0.0
    %v8042 = vadd.f32 %v8040, %v8041
    %v8043 = vsel %vm2718, %v7892, 0.0
    %v8044 = vadd.f32 %v8042, %v8043
    %v8045 = vsel %vm2718, %v7895, 0.0
    %v8046 = vadd.f32 %v8044, %v8045
    %v8047 = vsel %vm2718, %v7898, 0.0
    %v8048 = vadd.f32 %v8046, %v8047
    %v8049 = vsel %vm2718, %v7901, 0.0
    %v8050 = vadd.f32 %v8048, %v8049
    %v8051 = vsel %vm2718, %v7904, 0.0
    %v8052 = vadd.f32 %v8050, %v8051
    %v8053 = vsel %vm2718, %v7907, 0.0
    %v8054 = vadd.f32 %v8052, %v8053
    %v8055 = vsel %vm2718, %v7910, 0.0
    %v8056 = vadd.f32 %v8054, %v8055
    %v8057 = vsel %vm2718, %v7913, 0.0
    %v8058 = vadd.f32 %v8056, %v8057
    %v8059 = vsel %vm2718, %v7916, 0.0
    %v8060 = vadd.f32 %v8058, %v8059
    %v8061 = vsel %vm2718, %v7919, 0.0
    %v8062 = vadd.f32 %v8060, %v8061
    %v8063 = vsel %vm2718, %v7922, 0.0
    %v8064 = vadd.f32 %v8062, %v8063
    %v8065 = vsel %vm2718, %v7925, 0.0
    %v8066 = vadd.f32 %v8064, %v8065
    %v8067 = vsel %vm2718, %v7928, 0.0
    %v8068 = vadd.f32 %v8066, %v8067
    %v8069 = vsel %vm2718, %v7931, 0.0
    %v8070 = vadd.f32 %v8068, %v8069
    %v8071 = vsel %vm2718, %v7934, 0.0
    %v8072 = vadd.f32 %v8070, %v8071
    %v8073 = vsel %vm2718, %v7937, 0.0
    %v8074 = vadd.f32 %v8072, %v8073
    %v8075 = vsel %vm2718, %v7940, 0.0
    %v8076 = vadd.f32 %v8074, %v8075
    %v8077 = vsel %vm2718, %v7943, 0.0
    %v8078 = vadd.f32 %v8076, %v8077
    %v8079 = vsel %vm2718, %v7946, 0.0
    %v8080 = vadd.f32 %v8078, %v8079
    %v8081 = vsel %vm2718, %v7949, 0.0
    %v8082 = vadd.f32 %v8080, %v8081
    %v8083 = vsel %vm2718, %v7952, 0.0
    %v8084 = vadd.f32 %v8082, %v8083
    %v8085 = vsel %vm2718, %v7955, 0.0
    %v8086 = vadd.f32 %v8084, %v8085
    %v8087 = vsel %vm2718, %v7958, 0.0
    %v8088 = vadd.f32 %v8086, %v8087
    %v8089 = vrot.slane %v8088, 4
    %v8090 = vadd.f32 %v8088, %v8089
    %v8091 = vrot.slane %v8090, 2
    %v8092 = vadd.f32 %v8090, %v8091
    %v8093 = vrot.slane %v8092, 1
    %v8094 = vadd.f32 %v8092, %v8093
    %v8095 = vmul.f32 %v7769, %v7769
    %v8096 = vmul.f32 %v7772, %v7772
    %v8097 = vmul.f32 %v7775, %v7775
    %v8098 = vmul.f32 %v7778, %v7778
    %v8099 = vmul.f32 %v7781, %v7781
    %v8100 = vmul.f32 %v7784, %v7784
    %v8101 = vmul.f32 %v7787, %v7787
    %v8102 = vmul.f32 %v7790, %v7790
    %v8103 = vmul.f32 %v7793, %v7793
    %v8104 = vmul.f32 %v7796, %v7796
    %v8105 = vmul.f32 %v7799, %v7799
    %v8106 = vmul.f32 %v7802, %v7802
    %v8107 = vmul.f32 %v7805, %v7805
    %v8108 = vmul.f32 %v7808, %v7808
    %v8109 = vmul.f32 %v7811, %v7811
    %v8110 = vmul.f32 %v7814, %v7814
    %v8111 = vmul.f32 %v7817, %v7817
    %v8112 = vmul.f32 %v7820, %v7820
    %v8113 = vmul.f32 %v7823, %v7823
    %v8114 = vmul.f32 %v7826, %v7826
    %v8115 = vmul.f32 %v7829, %v7829
    %v8116 = vmul.f32 %v7832, %v7832
    %v8117 = vmul.f32 %v7835, %v7835
    %v8118 = vmul.f32 %v7838, %v7838
    %v8119 = vmul.f32 %v7841, %v7841
    %v8120 = vmul.f32 %v7844, %v7844
    %v8121 = vmul.f32 %v7847, %v7847
    %v8122 = vmul.f32 %v7850, %v7850
    %v8123 = vmul.f32 %v7853, %v7853
    %v8124 = vmul.f32 %v7856, %v7856
    %v8125 = vmul.f32 %v7859, %v7859
    %v8126 = vmul.f32 %v7862, %v7862
    %v8127 = vmul.f32 %v7865, %v7865
    %v8128 = vmul.f32 %v7868, %v7868
    %v8129 = vmul.f32 %v7871, %v7871
    %v8130 = vmul.f32 %v7874, %v7874
    %v8131 = vmul.f32 %v7877, %v7877
    %v8132 = vmul.f32 %v7880, %v7880
    %v8133 = vmul.f32 %v7883, %v7883
    %v8134 = vmul.f32 %v7886, %v7886
    %v8135 = vmul.f32 %v7889, %v7889
    %v8136 = vmul.f32 %v7892, %v7892
    %v8137 = vmul.f32 %v7895, %v7895
    %v8138 = vmul.f32 %v7898, %v7898
    %v8139 = vmul.f32 %v7901, %v7901
    %v8140 = vmul.f32 %v7904, %v7904
    %v8141 = vmul.f32 %v7907, %v7907
    %v8142 = vmul.f32 %v7910, %v7910
    %v8143 = vmul.f32 %v7913, %v7913
    %v8144 = vmul.f32 %v7916, %v7916
    %v8145 = vmul.f32 %v7919, %v7919
    %v8146 = vmul.f32 %v7922, %v7922
    %v8147 = vmul.f32 %v7925, %v7925
    %v8148 = vmul.f32 %v7928, %v7928
    %v8149 = vmul.f32 %v7931, %v7931
    %v8150 = vmul.f32 %v7934, %v7934
    %v8151 = vmul.f32 %v7937, %v7937
    %v8152 = vmul.f32 %v7940, %v7940
    %v8153 = vmul.f32 %v7943, %v7943
    %v8154 = vmul.f32 %v7946, %v7946
    %v8155 = vmul.f32 %v7949, %v7949
    %v8156 = vmul.f32 %v7952, %v7952
    %v8157 = vmul.f32 %v7955, %v7955
    %v8158 = vmul.f32 %v7958, %v7958
    %v8159 = vsel %vm2718, %v8095, 0.0
    %v8160 = vsel %vm2718, %v8096, 0.0
    %v8161 = vadd.f32 %v8159, %v8160
    %v8162 = vsel %vm2718, %v8097, 0.0
    %v8163 = vadd.f32 %v8161, %v8162
    %v8164 = vsel %vm2718, %v8098, 0.0
    %v8165 = vadd.f32 %v8163, %v8164
    %v8166 = vsel %vm2718, %v8099, 0.0
    %v8167 = vadd.f32 %v8165, %v8166
    %v8168 = vsel %vm2718, %v8100, 0.0
    %v8169 = vadd.f32 %v8167, %v8168
    %v8170 = vsel %vm2718, %v8101, 0.0
    %v8171 = vadd.f32 %v8169, %v8170
    %v8172 = vsel %vm2718, %v8102, 0.0
    %v8173 = vadd.f32 %v8171, %v8172
    %v8174 = vsel %vm2718, %v8103, 0.0
    %v8175 = vadd.f32 %v8173, %v8174
    %v8176 = vsel %vm2718, %v8104, 0.0
    %v8177 = vadd.f32 %v8175, %v8176
    %v8178 = vsel %vm2718, %v8105, 0.0
    %v8179 = vadd.f32 %v8177, %v8178
    %v8180 = vsel %vm2718, %v8106, 0.0
    %v8181 = vadd.f32 %v8179, %v8180
    %v8182 = vsel %vm2718, %v8107, 0.0
    %v8183 = vadd.f32 %v8181, %v8182
    %v8184 = vsel %vm2718, %v8108, 0.0
    %v8185 = vadd.f32 %v8183, %v8184
    %v8186 = vsel %vm2718, %v8109, 0.0
    %v8187 = vadd.f32 %v8185, %v8186
    %v8188 = vsel %vm2718, %v8110, 0.0
    %v8189 = vadd.f32 %v8187, %v8188
    %v8190 = vsel %vm2718, %v8111, 0.0
    %v8191 = vadd.f32 %v8189, %v8190
    %v8192 = vsel %vm2718, %v8112, 0.0
    %v8193 = vadd.f32 %v8191, %v8192
    %v8194 = vsel %vm2718, %v8113, 0.0
    %v8195 = vadd.f32 %v8193, %v8194
    %v8196 = vsel %vm2718, %v8114, 0.0
    %v8197 = vadd.f32 %v8195, %v8196
    %v8198 = vsel %vm2718, %v8115, 0.0
    %v8199 = vadd.f32 %v8197, %v8198
    %v8200 = vsel %vm2718, %v8116, 0.0
    %v8201 = vadd.f32 %v8199, %v8200
    %v8202 = vsel %vm2718, %v8117, 0.0
    %v8203 = vadd.f32 %v8201, %v8202
    %v8204 = vsel %vm2718, %v8118, 0.0
    %v8205 = vadd.f32 %v8203, %v8204
    %v8206 = vsel %vm2718, %v8119, 0.0
    %v8207 = vadd.f32 %v8205, %v8206
    %v8208 = vsel %vm2718, %v8120, 0.0
    %v8209 = vadd.f32 %v8207, %v8208
    %v8210 = vsel %vm2718, %v8121, 0.0
    %v8211 = vadd.f32 %v8209, %v8210
    %v8212 = vsel %vm2718, %v8122, 0.0
    %v8213 = vadd.f32 %v8211, %v8212
    %v8214 = vsel %vm2718, %v8123, 0.0
    %v8215 = vadd.f32 %v8213, %v8214
    %v8216 = vsel %vm2718, %v8124, 0.0
    %v8217 = vadd.f32 %v8215, %v8216
    %v8218 = vsel %vm2718, %v8125, 0.0
    %v8219 = vadd.f32 %v8217, %v8218
    %v8220 = vsel %vm2718, %v8126, 0.0
    %v8221 = vadd.f32 %v8219, %v8220
    %v8222 = vsel %vm2718, %v8127, 0.0
    %v8223 = vadd.f32 %v8221, %v8222
    %v8224 = vsel %vm2718, %v8128, 0.0
    %v8225 = vadd.f32 %v8223, %v8224
    %v8226 = vsel %vm2718, %v8129, 0.0
    %v8227 = vadd.f32 %v8225, %v8226
    %v8228 = vsel %vm2718, %v8130, 0.0
    %v8229 = vadd.f32 %v8227, %v8228
    %v8230 = vsel %vm2718, %v8131, 0.0
    %v8231 = vadd.f32 %v8229, %v8230
    %v8232 = vsel %vm2718, %v8132, 0.0
    %v8233 = vadd.f32 %v8231, %v8232
    %v8234 = vsel %vm2718, %v8133, 0.0
    %v8235 = vadd.f32 %v8233, %v8234
    %v8236 = vsel %vm2718, %v8134, 0.0
    %v8237 = vadd.f32 %v8235, %v8236
    %v8238 = vsel %vm2718, %v8135, 0.0
    %v8239 = vadd.f32 %v8237, %v8238
    %v8240 = vsel %vm2718, %v8136, 0.0
    %v8241 = vadd.f32 %v8239, %v8240
    %v8242 = vsel %vm2718, %v8137, 0.0
    %v8243 = vadd.f32 %v8241, %v8242
    %v8244 = vsel %vm2718, %v8138, 0.0
    %v8245 = vadd.f32 %v8243, %v8244
    %v8246 = vsel %vm2718, %v8139, 0.0
    %v8247 = vadd.f32 %v8245, %v8246
    %v8248 = vsel %vm2718, %v8140, 0.0
    %v8249 = vadd.f32 %v8247, %v8248
    %v8250 = vsel %vm2718, %v8141, 0.0
    %v8251 = vadd.f32 %v8249, %v8250
    %v8252 = vsel %vm2718, %v8142, 0.0
    %v8253 = vadd.f32 %v8251, %v8252
    %v8254 = vsel %vm2718, %v8143, 0.0
    %v8255 = vadd.f32 %v8253, %v8254
    %v8256 = vsel %vm2718, %v8144, 0.0
    %v8257 = vadd.f32 %v8255, %v8256
    %v8258 = vsel %vm2718, %v8145, 0.0
    %v8259 = vadd.f32 %v8257, %v8258
    %v8260 = vsel %vm2718, %v8146, 0.0
    %v8261 = vadd.f32 %v8259, %v8260
    %v8262 = vsel %vm2718, %v8147, 0.0
    %v8263 = vadd.f32 %v8261, %v8262
    %v8264 = vsel %vm2718, %v8148, 0.0
    %v8265 = vadd.f32 %v8263, %v8264
    %v8266 = vsel %vm2718, %v8149, 0.0
    %v8267 = vadd.f32 %v8265, %v8266
    %v8268 = vsel %vm2718, %v8150, 0.0
    %v8269 = vadd.f32 %v8267, %v8268
    %v8270 = vsel %vm2718, %v8151, 0.0
    %v8271 = vadd.f32 %v8269, %v8270
    %v8272 = vsel %vm2718, %v8152, 0.0
    %v8273 = vadd.f32 %v8271, %v8272
    %v8274 = vsel %vm2718, %v8153, 0.0
    %v8275 = vadd.f32 %v8273, %v8274
    %v8276 = vsel %vm2718, %v8154, 0.0
    %v8277 = vadd.f32 %v8275, %v8276
    %v8278 = vsel %vm2718, %v8155, 0.0
    %v8279 = vadd.f32 %v8277, %v8278
    %v8280 = vsel %vm2718, %v8156, 0.0
    %v8281 = vadd.f32 %v8279, %v8280
    %v8282 = vsel %vm2718, %v8157, 0.0
    %v8283 = vadd.f32 %v8281, %v8282
    %v8284 = vsel %vm2718, %v8158, 0.0
    %v8285 = vadd.f32 %v8283, %v8284
    %v8286 = vrot.slane %v8285, 4
    %v8287 = vadd.f32 %v8285, %v8286
    %v8288 = vrot.slane %v8287, 2
    %v8289 = vadd.f32 %v8287, %v8288
    %v8290 = vrot.slane %v8289, 1
    %v8291 = vadd.f32 %v8289, %v8290
    %v8292 = vmul.f32 %v8094, %v3922
    %v8293 = vmul.f32 %v8291, %v3922
    %v8294 = vmul.f32 %v8292, %v8292
    %v8295 = vsub.f32 %v8293, %v8294
    %v8296 = vsub.f32 %v7769, %v8292
    %v8297 = vsub.f32 %v7772, %v8292
    %v8298 = vsub.f32 %v7775, %v8292
    %v8299 = vsub.f32 %v7778, %v8292
    %v8300 = vsub.f32 %v7781, %v8292
    %v8301 = vsub.f32 %v7784, %v8292
    %v8302 = vsub.f32 %v7787, %v8292
    %v8303 = vsub.f32 %v7790, %v8292
    %v8304 = vsub.f32 %v7793, %v8292
    %v8305 = vsub.f32 %v7796, %v8292
    %v8306 = vsub.f32 %v7799, %v8292
    %v8307 = vsub.f32 %v7802, %v8292
    %v8308 = vsub.f32 %v7805, %v8292
    %v8309 = vsub.f32 %v7808, %v8292
    %v8310 = vsub.f32 %v7811, %v8292
    %v8311 = vsub.f32 %v7814, %v8292
    %v8312 = vsub.f32 %v7817, %v8292
    %v8313 = vsub.f32 %v7820, %v8292
    %v8314 = vsub.f32 %v7823, %v8292
    %v8315 = vsub.f32 %v7826, %v8292
    %v8316 = vsub.f32 %v7829, %v8292
    %v8317 = vsub.f32 %v7832, %v8292
    %v8318 = vsub.f32 %v7835, %v8292
    %v8319 = vsub.f32 %v7838, %v8292
    %v8320 = vsub.f32 %v7841, %v8292
    %v8321 = vsub.f32 %v7844, %v8292
    %v8322 = vsub.f32 %v7847, %v8292
    %v8323 = vsub.f32 %v7850, %v8292
    %v8324 = vsub.f32 %v7853, %v8292
    %v8325 = vsub.f32 %v7856, %v8292
    %v8326 = vsub.f32 %v7859, %v8292
    %v8327 = vsub.f32 %v7862, %v8292
    %v8328 = vsub.f32 %v7865, %v8292
    %v8329 = vsub.f32 %v7868, %v8292
    %v8330 = vsub.f32 %v7871, %v8292
    %v8331 = vsub.f32 %v7874, %v8292
    %v8332 = vsub.f32 %v7877, %v8292
    %v8333 = vsub.f32 %v7880, %v8292
    %v8334 = vsub.f32 %v7883, %v8292
    %v8335 = vsub.f32 %v7886, %v8292
    %v8336 = vsub.f32 %v7889, %v8292
    %v8337 = vsub.f32 %v7892, %v8292
    %v8338 = vsub.f32 %v7895, %v8292
    %v8339 = vsub.f32 %v7898, %v8292
    %v8340 = vsub.f32 %v7901, %v8292
    %v8341 = vsub.f32 %v7904, %v8292
    %v8342 = vsub.f32 %v7907, %v8292
    %v8343 = vsub.f32 %v7910, %v8292
    %v8344 = vsub.f32 %v7913, %v8292
    %v8345 = vsub.f32 %v7916, %v8292
    %v8346 = vsub.f32 %v7919, %v8292
    %v8347 = vsub.f32 %v7922, %v8292
    %v8348 = vsub.f32 %v7925, %v8292
    %v8349 = vsub.f32 %v7928, %v8292
    %v8350 = vsub.f32 %v7931, %v8292
    %v8351 = vsub.f32 %v7934, %v8292
    %v8352 = vsub.f32 %v7937, %v8292
    %v8353 = vsub.f32 %v7940, %v8292
    %v8354 = vsub.f32 %v7943, %v8292
    %v8355 = vsub.f32 %v7946, %v8292
    %v8356 = vsub.f32 %v7949, %v8292
    %v8357 = vsub.f32 %v7952, %v8292
    %v8358 = vsub.f32 %v7955, %v8292
    %v8359 = vsub.f32 %v7958, %v8292
    %v8360 = vadd.f32 %v8295, 1e-05
    %v8361 = vrsqrt.pop %v8360
    %v8362 = vmul.f32 %v8361, %v8360
    %v8363 = vmul.f32 %v8362, %v8361
    %v8364 = vmul.f32 0.5, %v8363
    %v8365 = vsub.f32 1.5, %v8364
    %v8366 = vmul.f32 %v8361, %v8365
    %vm8367 = vweird.f32 %v8360
    %vm8368 = vweird.f32 %v8361
    %vm8369 = vmor %vm8367, %vm8368
    %v8370 = vsel %vm8369, %v8361, %v8366
    %v8371 = vmul.f32 %v8296, %v8370
    %v8372 = vmul.f32 %v8297, %v8370
    %v8373 = vmul.f32 %v8298, %v8370
    %v8374 = vmul.f32 %v8299, %v8370
    %v8375 = vmul.f32 %v8300, %v8370
    %v8376 = vmul.f32 %v8301, %v8370
    %v8377 = vmul.f32 %v8302, %v8370
    %v8378 = vmul.f32 %v8303, %v8370
    %v8379 = vmul.f32 %v8304, %v8370
    %v8380 = vmul.f32 %v8305, %v8370
    %v8381 = vmul.f32 %v8306, %v8370
    %v8382 = vmul.f32 %v8307, %v8370
    %v8383 = vmul.f32 %v8308, %v8370
    %v8384 = vmul.f32 %v8309, %v8370
    %v8385 = vmul.f32 %v8310, %v8370
    %v8386 = vmul.f32 %v8311, %v8370
    %v8387 = vmul.f32 %v8312, %v8370
    %v8388 = vmul.f32 %v8313, %v8370
    %v8389 = vmul.f32 %v8314, %v8370
    %v8390 = vmul.f32 %v8315, %v8370
    %v8391 = vmul.f32 %v8316, %v8370
    %v8392 = vmul.f32 %v8317, %v8370
    %v8393 = vmul.f32 %v8318, %v8370
    %v8394 = vmul.f32 %v8319, %v8370
    %v8395 = vmul.f32 %v8320, %v8370
    %v8396 = vmul.f32 %v8321, %v8370
    %v8397 = vmul.f32 %v8322, %v8370
    %v8398 = vmul.f32 %v8323, %v8370
    %v8399 = vmul.f32 %v8324, %v8370
    %v8400 = vmul.f32 %v8325, %v8370
    %v8401 = vmul.f32 %v8326, %v8370
    %v8402 = vmul.f32 %v8327, %v8370
    %v8403 = vmul.f32 %v8328, %v8370
    %v8404 = vmul.f32 %v8329, %v8370
    %v8405 = vmul.f32 %v8330, %v8370
    %v8406 = vmul.f32 %v8331, %v8370
    %v8407 = vmul.f32 %v8332, %v8370
    %v8408 = vmul.f32 %v8333, %v8370
    %v8409 = vmul.f32 %v8334, %v8370
    %v8410 = vmul.f32 %v8335, %v8370
    %v8411 = vmul.f32 %v8336, %v8370
    %v8412 = vmul.f32 %v8337, %v8370
    %v8413 = vmul.f32 %v8338, %v8370
    %v8414 = vmul.f32 %v8339, %v8370
    %v8415 = vmul.f32 %v8340, %v8370
    %v8416 = vmul.f32 %v8341, %v8370
    %v8417 = vmul.f32 %v8342, %v8370
    %v8418 = vmul.f32 %v8343, %v8370
    %v8419 = vmul.f32 %v8344, %v8370
    %v8420 = vmul.f32 %v8345, %v8370
    %v8421 = vmul.f32 %v8346, %v8370
    %v8422 = vmul.f32 %v8347, %v8370
    %v8423 = vmul.f32 %v8348, %v8370
    %v8424 = vmul.f32 %v8349, %v8370
    %v8425 = vmul.f32 %v8350, %v8370
    %v8426 = vmul.f32 %v8351, %v8370
    %v8427 = vmul.f32 %v8352, %v8370
    %v8428 = vmul.f32 %v8353, %v8370
    %v8429 = vmul.f32 %v8354, %v8370
    %v8430 = vmul.f32 %v8355, %v8370
    %v8431 = vmul.f32 %v8356, %v8370
    %v8432 = vmul.f32 %v8357, %v8370
    %v8433 = vmul.f32 %v8358, %v8370
    %v8434 = vmul.f32 %v8359, %v8370
    %v8436 = vperm.slane %v7960, 0
    %v8438 = vmul.f32 %v8371, %v8436
    %v8439 = vmul.f32 %v8372, %v8436
    %v8440 = vmul.f32 %v8373, %v8436
    %v8441 = vmul.f32 %v8374, %v8436
    %v8442 = vmul.f32 %v8375, %v8436
    %v8443 = vmul.f32 %v8376, %v8436
    %v8444 = vmul.f32 %v8377, %v8436
    %v8445 = vmul.f32 %v8378, %v8436
    %v8446 = vmul.f32 %v8379, %v8436
    %v8447 = vmul.f32 %v8380, %v8436
    %v8448 = vmul.f32 %v8381, %v8436
    %v8449 = vmul.f32 %v8382, %v8436
    %v8450 = vmul.f32 %v8383, %v8436
    %v8451 = vmul.f32 %v8384, %v8436
    %v8452 = vmul.f32 %v8385, %v8436
    %v8453 = vmul.f32 %v8386, %v8436
    %v8454 = vmul.f32 %v8387, %v8436
    %v8455 = vmul.f32 %v8388, %v8436
    %v8456 = vmul.f32 %v8389, %v8436
    %v8457 = vmul.f32 %v8390, %v8436
    %v8458 = vmul.f32 %v8391, %v8436
    %v8459 = vmul.f32 %v8392, %v8436
    %v8460 = vmul.f32 %v8393, %v8436
    %v8461 = vmul.f32 %v8394, %v8436
    %v8462 = vmul.f32 %v8395, %v8436
    %v8463 = vmul.f32 %v8396, %v8436
    %v8464 = vmul.f32 %v8397, %v8436
    %v8465 = vmul.f32 %v8398, %v8436
    %v8466 = vmul.f32 %v8399, %v8436
    %v8467 = vmul.f32 %v8400, %v8436
    %v8468 = vmul.f32 %v8401, %v8436
    %v8469 = vmul.f32 %v8402, %v8436
    %v8470 = vmul.f32 %v8403, %v8436
    %v8471 = vmul.f32 %v8404, %v8436
    %v8472 = vmul.f32 %v8405, %v8436
    %v8473 = vmul.f32 %v8406, %v8436
    %v8474 = vmul.f32 %v8407, %v8436
    %v8475 = vmul.f32 %v8408, %v8436
    %v8476 = vmul.f32 %v8409, %v8436
    %v8477 = vmul.f32 %v8410, %v8436
    %v8478 = vmul.f32 %v8411, %v8436
    %v8479 = vmul.f32 %v8412, %v8436
    %v8480 = vmul.f32 %v8413, %v8436
    %v8481 = vmul.f32 %v8414, %v8436
    %v8482 = vmul.f32 %v8415, %v8436
    %v8483 = vmul.f32 %v8416, %v8436
    %v8484 = vmul.f32 %v8417, %v8436
    %v8485 = vmul.f32 %v8418, %v8436
    %v8486 = vmul.f32 %v8419, %v8436
    %v8487 = vmul.f32 %v8420, %v8436
    %v8488 = vmul.f32 %v8421, %v8436
    %v8489 = vmul.f32 %v8422, %v8436
    %v8490 = vmul.f32 %v8423, %v8436
    %v8491 = vmul.f32 %v8424, %v8436
    %v8492 = vmul.f32 %v8425, %v8436
    %v8493 = vmul.f32 %v8426, %v8436
    %v8494 = vmul.f32 %v8427, %v8436
    %v8495 = vmul.f32 %v8428, %v8436
    %v8496 = vmul.f32 %v8429, %v8436
    %v8497 = vmul.f32 %v8430, %v8436
    %v8498 = vmul.f32 %v8431, %v8436
    %v8499 = vmul.f32 %v8432, %v8436
    %v8500 = vmul.f32 %v8433, %v8436
    %v8501 = vmul.f32 %v8434, %v8436
    %v8503 = vperm.slane %v7961, 0
    %v8505 = vadd.f32 %v8438, %v8503
    %v8506 = vadd.f32 %v8439, %v8503
    %v8507 = vadd.f32 %v8440, %v8503
    %v8508 = vadd.f32 %v8441, %v8503
    %v8509 = vadd.f32 %v8442, %v8503
    %v8510 = vadd.f32 %v8443, %v8503
    %v8511 = vadd.f32 %v8444, %v8503
    %v8512 = vadd.f32 %v8445, %v8503
    %v8513 = vadd.f32 %v8446, %v8503
    %v8514 = vadd.f32 %v8447, %v8503
    %v8515 = vadd.f32 %v8448, %v8503
    %v8516 = vadd.f32 %v8449, %v8503
    %v8517 = vadd.f32 %v8450, %v8503
    %v8518 = vadd.f32 %v8451, %v8503
    %v8519 = vadd.f32 %v8452, %v8503
    %v8520 = vadd.f32 %v8453, %v8503
    %v8521 = vadd.f32 %v8454, %v8503
    %v8522 = vadd.f32 %v8455, %v8503
    %v8523 = vadd.f32 %v8456, %v8503
    %v8524 = vadd.f32 %v8457, %v8503
    %v8525 = vadd.f32 %v8458, %v8503
    %v8526 = vadd.f32 %v8459, %v8503
    %v8527 = vadd.f32 %v8460, %v8503
    %v8528 = vadd.f32 %v8461, %v8503
    %v8529 = vadd.f32 %v8462, %v8503
    %v8530 = vadd.f32 %v8463, %v8503
    %v8531 = vadd.f32 %v8464, %v8503
    %v8532 = vadd.f32 %v8465, %v8503
    %v8533 = vadd.f32 %v8466, %v8503
    %v8534 = vadd.f32 %v8467, %v8503
    %v8535 = vadd.f32 %v8468, %v8503
    %v8536 = vadd.f32 %v8469, %v8503
    %v8537 = vadd.f32 %v8470, %v8503
    %v8538 = vadd.f32 %v8471, %v8503
    %v8539 = vadd.f32 %v8472, %v8503
    %v8540 = vadd.f32 %v8473, %v8503
    %v8541 = vadd.f32 %v8474, %v8503
    %v8542 = vadd.f32 %v8475, %v8503
    %v8543 = vadd.f32 %v8476, %v8503
    %v8544 = vadd.f32 %v8477, %v8503
    %v8545 = vadd.f32 %v8478, %v8503
    %v8546 = vadd.f32 %v8479, %v8503
    %v8547 = vadd.f32 %v8480, %v8503
    %v8548 = vadd.f32 %v8481, %v8503
    %v8549 = vadd.f32 %v8482, %v8503
    %v8550 = vadd.f32 %v8483, %v8503
    %v8551 = vadd.f32 %v8484, %v8503
    %v8552 = vadd.f32 %v8485, %v8503
    %v8553 = vadd.f32 %v8486, %v8503
    %v8554 = vadd.f32 %v8487, %v8503
    %v8555 = vadd.f32 %v8488, %v8503
    %v8556 = vadd.f32 %v8489, %v8503
    %v8557 = vadd.f32 %v8490, %v8503
    %v8558 = vadd.f32 %v8491, %v8503
    %v8559 = vadd.f32 %v8492, %v8503
    %v8560 = vadd.f32 %v8493, %v8503
    %v8561 = vadd.f32 %v8494, %v8503
    %v8562 = vadd.f32 %v8495, %v8503
    %v8563 = vadd.f32 %v8496, %v8503
    %v8564 = vadd.f32 %v8497, %v8503
    %v8565 = vadd.f32 %v8498, %v8503
    %v8566 = vadd.f32 %v8499, %v8503
    %v8567 = vadd.f32 %v8500, %v8503
    %v8568 = vadd.f32 %v8501, %v8503
    %v8569 = vmax.f32 %v8505, 0.0
    %v8570 = vmax.f32 %v8506, 0.0
    %v8571 = vmax.f32 %v8507, 0.0
    %v8572 = vmax.f32 %v8508, 0.0
    %v8573 = vmax.f32 %v8509, 0.0
    %v8574 = vmax.f32 %v8510, 0.0
    %v8575 = vmax.f32 %v8511, 0.0
    %v8576 = vmax.f32 %v8512, 0.0
    %v8577 = vmax.f32 %v8513, 0.0
    %v8578 = vmax.f32 %v8514, 0.0
    %v8579 = vmax.f32 %v8515, 0.0
    %v8580 = vmax.f32 %v8516, 0.0
    %v8581 = vmax.f32 %v8517, 0.0
    %v8582 = vmax.f32 %v8518, 0.0
    %v8583 = vmax.f32 %v8519, 0.0
    %v8584 = vmax.f32 %v8520, 0.0
    %v8585 = vmax.f32 %v8521, 0.0
    %v8586 = vmax.f32 %v8522, 0.0
    %v8587 = vmax.f32 %v8523, 0.0
    %v8588 = vmax.f32 %v8524, 0.0
    %v8589 = vmax.f32 %v8525, 0.0
    %v8590 = vmax.f32 %v8526, 0.0
    %v8591 = vmax.f32 %v8527, 0.0
    %v8592 = vmax.f32 %v8528, 0.0
    %v8593 = vmax.f32 %v8529, 0.0
    %v8594 = vmax.f32 %v8530, 0.0
    %v8595 = vmax.f32 %v8531, 0.0
    %v8596 = vmax.f32 %v8532, 0.0
    %v8597 = vmax.f32 %v8533, 0.0
    %v8598 = vmax.f32 %v8534, 0.0
    %v8599 = vmax.f32 %v8535, 0.0
    %v8600 = vmax.f32 %v8536, 0.0
    %v8601 = vmax.f32 %v8537, 0.0
    %v8602 = vmax.f32 %v8538, 0.0
    %v8603 = vmax.f32 %v8539, 0.0
    %v8604 = vmax.f32 %v8540, 0.0
    %v8605 = vmax.f32 %v8541, 0.0
    %v8606 = vmax.f32 %v8542, 0.0
    %v8607 = vmax.f32 %v8543, 0.0
    %v8608 = vmax.f32 %v8544, 0.0
    %v8609 = vmax.f32 %v8545, 0.0
    %v8610 = vmax.f32 %v8546, 0.0
    %v8611 = vmax.f32 %v8547, 0.0
    %v8612 = vmax.f32 %v8548, 0.0
    %v8613 = vmax.f32 %v8549, 0.0
    %v8614 = vmax.f32 %v8550, 0.0
    %v8615 = vmax.f32 %v8551, 0.0
    %v8616 = vmax.f32 %v8552, 0.0
    %v8617 = vmax.f32 %v8553, 0.0
    %v8618 = vmax.f32 %v8554, 0.0
    %v8619 = vmax.f32 %v8555, 0.0
    %v8620 = vmax.f32 %v8556, 0.0
    %v8621 = vmax.f32 %v8557, 0.0
    %v8622 = vmax.f32 %v8558, 0.0
    %v8623 = vmax.f32 %v8559, 0.0
    %v8624 = vmax.f32 %v8560, 0.0
    %v8625 = vmax.f32 %v8561, 0.0
    %v8626 = vmax.f32 %v8562, 0.0
    %v8627 = vmax.f32 %v8563, 0.0
    %v8628 = vmax.f32 %v8564, 0.0
    %v8629 = vmax.f32 %v8565, 0.0
    %v8630 = vmax.f32 %v8566, 0.0
    %v8631 = vmax.f32 %v8567, 0.0
    %v8632 = vmax.f32 %v8568, 0.0
    %v8665 = vrot.slane %v8571, 7
    %vm8666 = vcmask 1041409
    %v8667 = vsel %vm8666, %v8665, %v8569
    %v8668 = vrot.slane %v8573, 6
    %vm8669 = vcmask 1042434
    %v8670 = vsel %vm8669, %v8668, %v8667
    %v8671 = vrot.slane %v8575, 5
    %vm8672 = vcmask 1043459
    %v8673 = vsel %vm8672, %v8671, %v8670
    %v8674 = vrot.slane %v8577, 4
    %vm8675 = vcmask 1044484
    %v8676 = vsel %vm8675, %v8674, %v8673
    %v8677 = vrot.slane %v8579, 3
    %vm8678 = vcmask 1045509
    %v8679 = vsel %vm8678, %v8677, %v8676
    %v8680 = vrot.slane %v8581, 2
    %vm8681 = vcmask 1046534
    %v8682 = vsel %vm8681, %v8680, %v8679
    %v8683 = vrot.slane %v8583, 1
    %vm8684 = vcmask 1047559
    %v8685 = vsel %vm8684, %v8683, %v8682
    %v8686 = vrot.slane %v8587, 7
    %v8687 = vsel %vm8666, %v8686, %v8585
    %v8688 = vrot.slane %v8589, 6
    %v8689 = vsel %vm8669, %v8688, %v8687
    %v8690 = vrot.slane %v8591, 5
    %v8691 = vsel %vm8672, %v8690, %v8689
    %v8692 = vrot.slane %v8593, 4
    %v8693 = vsel %vm8675, %v8692, %v8691
    %v8694 = vrot.slane %v8595, 3
    %v8695 = vsel %vm8678, %v8694, %v8693
    %v8696 = vrot.slane %v8597, 2
    %v8697 = vsel %vm8681, %v8696, %v8695
    %v8698 = vrot.slane %v8599, 1
    %v8699 = vsel %vm8684, %v8698, %v8697
    %v8700 = vrot.slane %v8603, 7
    %v8701 = vsel %vm8666, %v8700, %v8601
    %v8702 = vrot.slane %v8605, 6
    %v8703 = vsel %vm8669, %v8702, %v8701
    %v8704 = vrot.slane %v8607, 5
    %v8705 = vsel %vm8672, %v8704, %v8703
    %v8706 = vrot.slane %v8609, 4
    %v8707 = vsel %vm8675, %v8706, %v8705
    %v8708 = vrot.slane %v8611, 3
    %v8709 = vsel %vm8678, %v8708, %v8707
    %v8710 = vrot.slane %v8613, 2
    %v8711 = vsel %vm8681, %v8710, %v8709
    %v8712 = vrot.slane %v8615, 1
    %v8713 = vsel %vm8684, %v8712, %v8711
    %v8714 = vrot.slane %v8619, 7
    %v8715 = vsel %vm8666, %v8714, %v8617
    %v8716 = vrot.slane %v8621, 6
    %v8717 = vsel %vm8669, %v8716, %v8715
    %v8718 = vrot.slane %v8623, 5
    %v8719 = vsel %vm8672, %v8718, %v8717
    %v8720 = vrot.slane %v8625, 4
    %v8721 = vsel %vm8675, %v8720, %v8719
    %v8722 = vrot.slane %v8627, 3
    %v8723 = vsel %vm8678, %v8722, %v8721
    %v8724 = vrot.slane %v8629, 2
    %v8725 = vsel %vm8681, %v8724, %v8723
    %v8726 = vrot.slane %v8631, 1
    %v8727 = vsel %vm8684, %v8726, %v8725
    %v8732 = vrot.slane %v8569, 1
    %v8733 = vsel %vm8666, %v8571, %v8732
    %v8734 = vrot.slane %v8573, 7
    %v8735 = vsel %vm8669, %v8734, %v8733
    %v8736 = vrot.slane %v8575, 6
    %v8737 = vsel %vm8672, %v8736, %v8735
    %v8738 = vrot.slane %v8577, 5
    %v8739 = vsel %vm8675, %v8738, %v8737
    %v8740 = vrot.slane %v8579, 4
    %v8741 = vsel %vm8678, %v8740, %v8739
    %v8742 = vrot.slane %v8581, 3
    %v8743 = vsel %vm8681, %v8742, %v8741
    %v8744 = vrot.slane %v8583, 2
    %v8745 = vsel %vm8684, %v8744, %v8743
    %v8746 = vrot.slane %v8585, 1
    %v8747 = vsel %vm8666, %v8587, %v8746
    %v8748 = vrot.slane %v8589, 7
    %v8749 = vsel %vm8669, %v8748, %v8747
    %v8750 = vrot.slane %v8591, 6
    %v8751 = vsel %vm8672, %v8750, %v8749
    %v8752 = vrot.slane %v8593, 5
    %v8753 = vsel %vm8675, %v8752, %v8751
    %v8754 = vrot.slane %v8595, 4
    %v8755 = vsel %vm8678, %v8754, %v8753
    %v8756 = vrot.slane %v8597, 3
    %v8757 = vsel %vm8681, %v8756, %v8755
    %v8758 = vrot.slane %v8599, 2
    %v8759 = vsel %vm8684, %v8758, %v8757
    %v8760 = vrot.slane %v8601, 1
    %v8761 = vsel %vm8666, %v8603, %v8760
    %v8762 = vrot.slane %v8605, 7
    %v8763 = vsel %vm8669, %v8762, %v8761
    %v8764 = vrot.slane %v8607, 6
    %v8765 = vsel %vm8672, %v8764, %v8763
    %v8766 = vrot.slane %v8609, 5
    %v8767 = vsel %vm8675, %v8766, %v8765
    %v8768 = vrot.slane %v8611, 4
    %v8769 = vsel %vm8678, %v8768, %v8767
    %v8770 = vrot.slane %v8613, 3
    %v8771 = vsel %vm8681, %v8770, %v8769
    %v8772 = vrot.slane %v8615, 2
    %v8773 = vsel %vm8684, %v8772, %v8771
    %v8774 = vrot.slane %v8617, 1
    %v8775 = vsel %vm8666, %v8619, %v8774
    %v8776 = vrot.slane %v8621, 7
    %v8777 = vsel %vm8669, %v8776, %v8775
    %v8778 = vrot.slane %v8623, 6
    %v8779 = vsel %vm8672, %v8778, %v8777
    %v8780 = vrot.slane %v8625, 5
    %v8781 = vsel %vm8675, %v8780, %v8779
    %v8782 = vrot.slane %v8627, 4
    %v8783 = vsel %vm8678, %v8782, %v8781
    %v8784 = vrot.slane %v8629, 3
    %v8785 = vsel %vm8681, %v8784, %v8783
    %v8786 = vrot.slane %v8631, 2
    %v8787 = vsel %vm8684, %v8786, %v8785
    %8788 = vrot.lane.b32.xlu0 %v8745, 8
    %v8789 = vpop.permute.xlu0 %8788
    %8790 = vrot.lane.b32.xlu0 %v8759, 8
    %v8791 = vpop.permute.xlu0 %8790
    %8792 = vrot.lane.b32.xlu0 %v8773, 8
    %v8793 = vpop.permute.xlu0 %8792
    %8794 = vrot.lane.b32.xlu0 %v8787, 8
    %v8795 = vpop.permute.xlu0 %8794
    %v8800 = vrot.slane %v8569, 2
    %v8801 = vrot.slane %v8571, 1
    %v8802 = vsel %vm8666, %v8801, %v8800
    %v8803 = vsel %vm8669, %v8573, %v8802
    %v8804 = vrot.slane %v8575, 7
    %v8805 = vsel %vm8672, %v8804, %v8803
    %v8806 = vrot.slane %v8577, 6
    %v8807 = vsel %vm8675, %v8806, %v8805
    %v8808 = vrot.slane %v8579, 5
    %v8809 = vsel %vm8678, %v8808, %v8807
    %v8810 = vrot.slane %v8581, 4
    %v8811 = vsel %vm8681, %v8810, %v8809
    %v8812 = vrot.slane %v8583, 3
    %v8813 = vsel %vm8684, %v8812, %v8811
    %v8814 = vrot.slane %v8585, 2
    %v8815 = vrot.slane %v8587, 1
    %v8816 = vsel %vm8666, %v8815, %v8814
    %v8817 = vsel %vm8669, %v8589, %v8816
    %v8818 = vrot.slane %v8591, 7
    %v8819 = vsel %vm8672, %v8818, %v8817
    %v8820 = vrot.slane %v8593, 6
    %v8821 = vsel %vm8675, %v8820, %v8819
    %v8822 = vrot.slane %v8595, 5
    %v8823 = vsel %vm8678, %v8822, %v8821
    %v8824 = vrot.slane %v8597, 4
    %v8825 = vsel %vm8681, %v8824, %v8823
    %v8826 = vrot.slane %v8599, 3
    %v8827 = vsel %vm8684, %v8826, %v8825
    %v8828 = vrot.slane %v8601, 2
    %v8829 = vrot.slane %v8603, 1
    %v8830 = vsel %vm8666, %v8829, %v8828
    %v8831 = vsel %vm8669, %v8605, %v8830
    %v8832 = vrot.slane %v8607, 7
    %v8833 = vsel %vm8672, %v8832, %v8831
    %v8834 = vrot.slane %v8609, 6
    %v8835 = vsel %vm8675, %v8834, %v8833
    %v8836 = vrot.slane %v8611, 5
    %v8837 = vsel %vm8678, %v8836, %v8835
    %v8838 = vrot.slane %v8613, 4
    %v8839 = vsel %vm8681, %v8838, %v8837
    %v8840 = vrot.slane %v8615, 3
    %v8841 = vsel %vm8684, %v8840, %v8839
    %v8842 = vrot.slane %v8617, 2
    %v8843 = vrot.slane %v8619, 1
    %v8844 = vsel %vm8666, %v8843, %v8842
    %v8845 = vsel %vm8669, %v8621, %v8844
    %v8846 = vrot.slane %v8623, 7
    %v8847 = vsel %vm8672, %v8846, %v8845
    %v8848 = vrot.slane %v8625, 6
    %v8849 = vsel %vm8675, %v8848, %v8847
    %v8850 = vrot.slane %v8627, 5
    %v8851 = vsel %vm8678, %v8850, %v8849
    %v8852 = vrot.slane %v8629, 4
    %v8853 = vsel %vm8681, %v8852, %v8851
    %v8854 = vrot.slane %v8631, 3
    %v8855 = vsel %vm8684, %v8854, %v8853
    %8856 = vrot.lane.b32.xlu0 %v8813, 16
    %v8857 = vpop.permute.xlu0 %8856
    %8858 = vrot.lane.b32.xlu0 %v8827, 16
    %v8859 = vpop.permute.xlu0 %8858
    %8860 = vrot.lane.b32.xlu0 %v8841, 16
    %v8861 = vpop.permute.xlu0 %8860
    %8862 = vrot.lane.b32.xlu0 %v8855, 16
    %v8863 = vpop.permute.xlu0 %8862
    %v8868 = vrot.slane %v8569, 3
    %v8869 = vrot.slane %v8571, 2
    %v8870 = vsel %vm8666, %v8869, %v8868
    %v8871 = vrot.slane %v8573, 1
    %v8872 = vsel %vm8669, %v8871, %v8870
    %v8873 = vsel %vm8672, %v8575, %v8872
    %v8874 = vrot.slane %v8577, 7
    %v8875 = vsel %vm8675, %v8874, %v8873
    %v8876 = vrot.slane %v8579, 6
    %v8877 = vsel %vm8678, %v8876, %v8875
    %v8878 = vrot.slane %v8581, 5
    %v8879 = vsel %vm8681, %v8878, %v8877
    %v8880 = vrot.slane %v8583, 4
    %v8881 = vsel %vm8684, %v8880, %v8879
    %v8882 = vrot.slane %v8585, 3
    %v8883 = vrot.slane %v8587, 2
    %v8884 = vsel %vm8666, %v8883, %v8882
    %v8885 = vrot.slane %v8589, 1
    %v8886 = vsel %vm8669, %v8885, %v8884
    %v8887 = vsel %vm8672, %v8591, %v8886
    %v8888 = vrot.slane %v8593, 7
    %v8889 = vsel %vm8675, %v8888, %v8887
    %v8890 = vrot.slane %v8595, 6
    %v8891 = vsel %vm8678, %v8890, %v8889
    %v8892 = vrot.slane %v8597, 5
    %v8893 = vsel %vm8681, %v8892, %v8891
    %v8894 = vrot.slane %v8599, 4
    %v8895 = vsel %vm8684, %v8894, %v8893
    %v8896 = vrot.slane %v8601, 3
    %v8897 = vrot.slane %v8603, 2
    %v8898 = vsel %vm8666, %v8897, %v8896
    %v8899 = vrot.slane %v8605, 1
    %v8900 = vsel %vm8669, %v8899, %v8898
    %v8901 = vsel %vm8672, %v8607, %v8900
    %v8902 = vrot.slane %v8609, 7
    %v8903 = vsel %vm8675, %v8902, %v8901
    %v8904 = vrot.slane %v8611, 6
    %v8905 = vsel %vm8678, %v8904, %v8903
    %v8906 = vrot.slane %v8613, 5
    %v8907 = vsel %vm8681, %v8906, %v8905
    %v8908 = vrot.slane %v8615, 4
    %v8909 = vsel %vm8684, %v8908, %v8907
    %v8910 = vrot.slane %v8617, 3
    %v8911 = vrot.slane %v8619, 2
    %v8912 = vsel %vm8666, %v8911, %v8910
    %v8913 = vrot.slane %v8621, 1
    %v8914 = vsel %vm8669, %v8913, %v8912
    %v8915 = vsel %vm8672, %v8623, %v8914
    %v8916 = vrot.slane %v8625, 7
    %v8917 = vsel %vm8675, %v8916, %v8915
    %v8918 = vrot.slane %v8627, 6
    %v8919 = vsel %vm8678, %v8918, %v8917
    %v8920 = vrot.slane %v8629, 5
    %v8921 = vsel %vm8681, %v8920, %v8919
    %v8922 = vrot.slane %v8631, 4
    %v8923 = vsel %vm8684, %v8922, %v8921
    %8924 = vrot.lane.b32.xlu0 %v8881, 24
    %v8925 = vpop.permute.xlu0 %8924
    %8926 = vrot.lane.b32.xlu0 %v8895, 24
    %v8927 = vpop.permute.xlu0 %8926
    %8928 = vrot.lane.b32.xlu0 %v8909, 24
    %v8929 = vpop.permute.xlu0 %8928
    %8930 = vrot.lane.b32.xlu0 %v8923, 24
    %v8931 = vpop.permute.xlu0 %8930
    %v8936 = vrot.slane %v8569, 4
    %v8937 = vrot.slane %v8571, 3
    %v8938 = vsel %vm8666, %v8937, %v8936
    %v8939 = vrot.slane %v8573, 2
    %v8940 = vsel %vm8669, %v8939, %v8938
    %v8941 = vrot.slane %v8575, 1
    %v8942 = vsel %vm8672, %v8941, %v8940
    %v8943 = vsel %vm8675, %v8577, %v8942
    %v8944 = vrot.slane %v8579, 7
    %v8945 = vsel %vm8678, %v8944, %v8943
    %v8946 = vrot.slane %v8581, 6
    %v8947 = vsel %vm8681, %v8946, %v8945
    %v8948 = vrot.slane %v8583, 5
    %v8949 = vsel %vm8684, %v8948, %v8947
    %v8950 = vrot.slane %v8585, 4
    %v8951 = vrot.slane %v8587, 3
    %v8952 = vsel %vm8666, %v8951, %v8950
    %v8953 = vrot.slane %v8589, 2
    %v8954 = vsel %vm8669, %v8953, %v8952
    %v8955 = vrot.slane %v8591, 1
    %v8956 = vsel %vm8672, %v8955, %v8954
    %v8957 = vsel %vm8675, %v8593, %v8956
    %v8958 = vrot.slane %v8595, 7
    %v8959 = vsel %vm8678, %v8958, %v8957
    %v8960 = vrot.slane %v8597, 6
    %v8961 = vsel %vm8681, %v8960, %v8959
    %v8962 = vrot.slane %v8599, 5
    %v8963 = vsel %vm8684, %v8962, %v8961
    %v8964 = vrot.slane %v8601, 4
    %v8965 = vrot.slane %v8603, 3
    %v8966 = vsel %vm8666, %v8965, %v8964
    %v8967 = vrot.slane %v8605, 2
    %v8968 = vsel %vm8669, %v8967, %v8966
    %v8969 = vrot.slane %v8607, 1
    %v8970 = vsel %vm8672, %v8969, %v8968
    %v8971 = vsel %vm8675, %v8609, %v8970
    %v8972 = vrot.slane %v8611, 7
    %v8973 = vsel %vm8678, %v8972, %v8971
    %v8974 = vrot.slane %v8613, 6
    %v8975 = vsel %vm8681, %v8974, %v8973
    %v8976 = vrot.slane %v8615, 5
    %v8977 = vsel %vm8684, %v8976, %v8975
    %v8978 = vrot.slane %v8617, 4
    %v8979 = vrot.slane %v8619, 3
    %v8980 = vsel %vm8666, %v8979, %v8978
    %v8981 = vrot.slane %v8621, 2
    %v8982 = vsel %vm8669, %v8981, %v8980
    %v8983 = vrot.slane %v8623, 1
    %v8984 = vsel %vm8672, %v8983, %v8982
    %v8985 = vsel %vm8675, %v8625, %v8984
    %v8986 = vrot.slane %v8627, 7
    %v8987 = vsel %vm8678, %v8986, %v8985
    %v8988 = vrot.slane %v8629, 6
    %v8989 = vsel %vm8681, %v8988, %v8987
    %v8990 = vrot.slane %v8631, 5
    %v8991 = vsel %vm8684, %v8990, %v8989
    %8992 = vrot.lane.b32.xlu0 %v8949, 32
    %v8993 = vpop.permute.xlu0 %8992
    %8994 = vrot.lane.b32.xlu0 %v8963, 32
    %v8995 = vpop.permute.xlu0 %8994
    %8996 = vrot.lane.b32.xlu0 %v8977, 32
    %v8997 = vpop.permute.xlu0 %8996
    %8998 = vrot.lane.b32.xlu0 %v8991, 32
    %v8999 = vpop.permute.xlu0 %8998
    %v9004 = vrot.slane %v8569, 5
    %v9005 = vrot.slane %v8571, 4
    %v9006 = vsel %vm8666, %v9005, %v9004
    %v9007 = vrot.slane %v8573, 3
    %v9008 = vsel %vm8669, %v9007, %v9006
    %v9009 = vrot.slane %v8575, 2
    %v9010 = vsel %vm8672, %v9009, %v9008
    %v9011 = vrot.slane %v8577, 1
    %v9012 = vsel %vm8675, %v9011, %v9010
    %v9013 = vsel %vm8678, %v8579, %v9012
    %v9014 = vrot.slane %v8581, 7
    %v9015 = vsel %vm8681, %v9014, %v9013
    %v9016 = vrot.slane %v8583, 6
    %v9017 = vsel %vm8684, %v9016, %v9015
    %v9018 = vrot.slane %v8585, 5
    %v9019 = vrot.slane %v8587, 4
    %v9020 = vsel %vm8666, %v9019, %v9018
    %v9021 = vrot.slane %v8589, 3
    %v9022 = vsel %vm8669, %v9021, %v9020
    %v9023 = vrot.slane %v8591, 2
    %v9024 = vsel %vm8672, %v9023, %v9022
    %v9025 = vrot.slane %v8593, 1
    %v9026 = vsel %vm8675, %v9025, %v9024
    %v9027 = vsel %vm8678, %v8595, %v9026
    %v9028 = vrot.slane %v8597, 7
    %v9029 = vsel %vm8681, %v9028, %v9027
    %v9030 = vrot.slane %v8599, 6
    %v9031 = vsel %vm8684, %v9030, %v9029
    %v9032 = vrot.slane %v8601, 5
    %v9033 = vrot.slane %v8603, 4
    %v9034 = vsel %vm8666, %v9033, %v9032
    %v9035 = vrot.slane %v8605, 3
    %v9036 = vsel %vm8669, %v9035, %v9034
    %v9037 = vrot.slane %v8607, 2
    %v9038 = vsel %vm8672, %v9037, %v9036
    %v9039 = vrot.slane %v8609, 1
    %v9040 = vsel %vm8675, %v9039, %v9038
    %v9041 = vsel %vm8678, %v8611, %v9040
    %v9042 = vrot.slane %v8613, 7
    %v9043 = vsel %vm8681, %v9042, %v9041
    %v9044 = vrot.slane %v8615, 6
    %v9045 = vsel %vm8684, %v9044, %v9043
    %v9046 = vrot.slane %v8617, 5
    %v9047 = vrot.slane %v8619, 4
    %v9048 = vsel %vm8666, %v9047, %v9046
    %v9049 = vrot.slane %v8621, 3
    %v9050 = vsel %vm8669, %v9049, %v9048
    %v9051 = vrot.slane %v8623, 2
    %v9052 = vsel %vm8672, %v9051, %v9050
    %v9053 = vrot.slane %v8625, 1
    %v9054 = vsel %vm8675, %v9053, %v9052
    %v9055 = vsel %vm8678, %v8627, %v9054
    %v9056 = vrot.slane %v8629, 7
    %v9057 = vsel %vm8681, %v9056, %v9055
    %v9058 = vrot.slane %v8631, 6
    %v9059 = vsel %vm8684, %v9058, %v9057
    %9060 = vrot.lane.b32.xlu0 %v9017, 40
    %v9061 = vpop.permute.xlu0 %9060
    %9062 = vrot.lane.b32.xlu0 %v9031, 40
    %v9063 = vpop.permute.xlu0 %9062
    %9064 = vrot.lane.b32.xlu0 %v9045, 40
    %v9065 = vpop.permute.xlu0 %9064
    %9066 = vrot.lane.b32.xlu0 %v9059, 40
    %v9067 = vpop.permute.xlu0 %9066
    %v9072 = vrot.slane %v8569, 6
    %v9073 = vrot.slane %v8571, 5
    %v9074 = vsel %vm8666, %v9073, %v9072
    %v9075 = vrot.slane %v8573, 4
    %v9076 = vsel %vm8669, %v9075, %v9074
    %v9077 = vrot.slane %v8575, 3
    %v9078 = vsel %vm8672, %v9077, %v9076
    %v9079 = vrot.slane %v8577, 2
    %v9080 = vsel %vm8675, %v9079, %v9078
    %v9081 = vrot.slane %v8579, 1
    %v9082 = vsel %vm8678, %v9081, %v9080
    %v9083 = vsel %vm8681, %v8581, %v9082
    %v9084 = vrot.slane %v8583, 7
    %v9085 = vsel %vm8684, %v9084, %v9083
    %v9086 = vrot.slane %v8585, 6
    %v9087 = vrot.slane %v8587, 5
    %v9088 = vsel %vm8666, %v9087, %v9086
    %v9089 = vrot.slane %v8589, 4
    %v9090 = vsel %vm8669, %v9089, %v9088
    %v9091 = vrot.slane %v8591, 3
    %v9092 = vsel %vm8672, %v9091, %v9090
    %v9093 = vrot.slane %v8593, 2
    %v9094 = vsel %vm8675, %v9093, %v9092
    %v9095 = vrot.slane %v8595, 1
    %v9096 = vsel %vm8678, %v9095, %v9094
    %v9097 = vsel %vm8681, %v8597, %v9096
    %v9098 = vrot.slane %v8599, 7
    %v9099 = vsel %vm8684, %v9098, %v9097
    %v9100 = vrot.slane %v8601, 6
    %v9101 = vrot.slane %v8603, 5
    %v9102 = vsel %vm8666, %v9101, %v9100
    %v9103 = vrot.slane %v8605, 4
    %v9104 = vsel %vm8669, %v9103, %v9102
    %v9105 = vrot.slane %v8607, 3
    %v9106 = vsel %vm8672, %v9105, %v9104
    %v9107 = vrot.slane %v8609, 2
    %v9108 = vsel %vm8675, %v9107, %v9106
    %v9109 = vrot.slane %v8611, 1
    %v9110 = vsel %vm8678, %v9109, %v9108
    %v9111 = vsel %vm8681, %v8613, %v9110
    %v9112 = vrot.slane %v8615, 7
    %v9113 = vsel %vm8684, %v9112, %v9111
    %v9114 = vrot.slane %v8617, 6
    %v9115 = vrot.slane %v8619, 5
    %v9116 = vsel %vm8666, %v9115, %v9114
    %v9117 = vrot.slane %v8621, 4
    %v9118 = vsel %vm8669, %v9117, %v9116
    %v9119 = vrot.slane %v8623, 3
    %v9120 = vsel %vm8672, %v9119, %v9118
    %v9121 = vrot.slane %v8625, 2
    %v9122 = vsel %vm8675, %v9121, %v9120
    %v9123 = vrot.slane %v8627, 1
    %v9124 = vsel %vm8678, %v9123, %v9122
    %v9125 = vsel %vm8681, %v8629, %v9124
    %v9126 = vrot.slane %v8631, 7
    %v9127 = vsel %vm8684, %v9126, %v9125
    %9128 = vrot.lane.b32.xlu0 %v9085, 48
    %v9129 = vpop.permute.xlu0 %9128
    %9130 = vrot.lane.b32.xlu0 %v9099, 48
    %v9131 = vpop.permute.xlu0 %9130
    %9132 = vrot.lane.b32.xlu0 %v9113, 48
    %v9133 = vpop.permute.xlu0 %9132
    %9134 = vrot.lane.b32.xlu0 %v9127, 48
    %v9135 = vpop.permute.xlu0 %9134
    %v9140 = vrot.slane %v8569, 7
    %v9141 = vrot.slane %v8571, 6
    %v9142 = vsel %vm8666, %v9141, %v9140
    %v9143 = vrot.slane %v8573, 5
    %v9144 = vsel %vm8669, %v9143, %v9142
    %v9145 = vrot.slane %v8575, 4
    %v9146 = vsel %vm8672, %v9145, %v9144
    %v9147 = vrot.slane %v8577, 3
    %v9148 = vsel %vm8675, %v9147, %v9146
    %v9149 = vrot.slane %v8579, 2
    %v9150 = vsel %vm8678, %v9149, %v9148
    %v9151 = vrot.slane %v8581, 1
    %v9152 = vsel %vm8681, %v9151, %v9150
    %v9153 = vsel %vm8684, %v8583, %v9152
    %v9154 = vrot.slane %v8585, 7
    %v9155 = vrot.slane %v8587, 6
    %v9156 = vsel %vm8666, %v9155, %v9154
    %v9157 = vrot.slane %v8589, 5
    %v9158 = vsel %vm8669, %v9157, %v9156
    %v9159 = vrot.slane %v8591, 4
    %v9160 = vsel %vm8672, %v9159, %v9158
    %v9161 = vrot.slane %v8593, 3
    %v9162 = vsel %vm8675, %v9161, %v9160
    %v9163 = vrot.slane %v8595, 2
    %v9164 = vsel %vm8678, %v9163, %v9162
    %v9165 = vrot.slane %v8597, 1
    %v9166 = vsel %vm8681, %v9165, %v9164
    %v9167 = vsel %vm8684, %v8599, %v9166
    %v9168 = vrot.slane %v8601, 7
    %v9169 = vrot.slane %v8603, 6
    %v9170 = vsel %vm8666, %v9169, %v9168
    %v9171 = vrot.slane %v8605, 5
    %v9172 = vsel %vm8669, %v9171, %v9170
    %v9173 = vrot.slane %v8607, 4
    %v9174 = vsel %vm8672, %v9173, %v9172
    %v9175 = vrot.slane %v8609, 3
    %v9176 = vsel %vm8675, %v9175, %v9174
    %v9177 = vrot.slane %v8611, 2
    %v9178 = vsel %vm8678, %v9177, %v9176
    %v9179 = vrot.slane %v8613, 1
    %v9180 = vsel %vm8681, %v9179, %v9178
    %v9181 = vsel %vm8684, %v8615, %v9180
    %v9182 = vrot.slane %v8617, 7
    %v9183 = vrot.slane %v8619, 6
    %v9184 = vsel %vm8666, %v9183, %v9182
    %v9185 = vrot.slane %v8621, 5
    %v9186 = vsel %vm8669, %v9185, %v9184
    %v9187 = vrot.slane %v8623, 4
    %v9188 = vsel %vm8672, %v9187, %v9186
    %v9189 = vrot.slane %v8625, 3
    %v9190 = vsel %vm8675, %v9189, %v9188
    %v9191 = vrot.slane %v8627, 2
    %v9192 = vsel %vm8678, %v9191, %v9190
    %v9193 = vrot.slane %v8629, 1
    %v9194 = vsel %vm8681, %v9193, %v9192
    %v9195 = vsel %vm8684, %v8631, %v9194
    %9196 = vrot.lane.b32.xlu0 %v9153, 56
    %v9197 = vpop.permute.xlu0 %9196
    %9198 = vrot.lane.b32.xlu0 %v9167, 56
    %v9199 = vpop.permute.xlu0 %9198
    %9200 = vrot.lane.b32.xlu0 %v9181, 56
    %v9201 = vpop.permute.xlu0 %9200
    %9202 = vrot.lane.b32.xlu0 %v9195, 56
    %v9203 = vpop.permute.xlu0 %9202
    %v9240 = vrot.slane %v8572, 7
    %v9241 = vsel %vm8666, %v9240, %v8570
    %v9242 = vrot.slane %v8574, 6
    %v9243 = vsel %vm8669, %v9242, %v9241
    %v9244 = vrot.slane %v8576, 5
    %v9245 = vsel %vm8672, %v9244, %v9243
    %v9246 = vrot.slane %v8578, 4
    %v9247 = vsel %vm8675, %v9246, %v9245
    %v9248 = vrot.slane %v8580, 3
    %v9249 = vsel %vm8678, %v9248, %v9247
    %v9250 = vrot.slane %v8582, 2
    %v9251 = vsel %vm8681, %v9250, %v9249
    %v9252 = vrot.slane %v8584, 1
    %v9253 = vsel %vm8684, %v9252, %v9251
    %v9254 = vrot.slane %v8588, 7
    %v9255 = vsel %vm8666, %v9254, %v8586
    %v9256 = vrot.slane %v8590, 6
    %v9257 = vsel %vm8669, %v9256, %v9255
    %v9258 = vrot.slane %v8592, 5
    %v9259 = vsel %vm8672, %v9258, %v9257
    %v9260 = vrot.slane %v8594, 4
    %v9261 = vsel %vm8675, %v9260, %v9259
    %v9262 = vrot.slane %v8596, 3
    %v9263 = vsel %vm8678, %v9262, %v9261
    %v9264 = vrot.slane %v8598, 2
    %v9265 = vsel %vm8681, %v9264, %v9263
    %v9266 = vrot.slane %v8600, 1
    %v9267 = vsel %vm8684, %v9266, %v9265
    %v9268 = vrot.slane %v8604, 7
    %v9269 = vsel %vm8666, %v9268, %v8602
    %v9270 = vrot.slane %v8606, 6
    %v9271 = vsel %vm8669, %v9270, %v9269
    %v9272 = vrot.slane %v8608, 5
    %v9273 = vsel %vm8672, %v9272, %v9271
    %v9274 = vrot.slane %v8610, 4
    %v9275 = vsel %vm8675, %v9274, %v9273
    %v9276 = vrot.slane %v8612, 3
    %v9277 = vsel %vm8678, %v9276, %v9275
    %v9278 = vrot.slane %v8614, 2
    %v9279 = vsel %vm8681, %v9278, %v9277
    %v9280 = vrot.slane %v8616, 1
    %v9281 = vsel %vm8684, %v9280, %v9279
    %v9282 = vrot.slane %v8620, 7
    %v9283 = vsel %vm8666, %v9282, %v8618
    %v9284 = vrot.slane %v8622, 6
    %v9285 = vsel %vm8669, %v9284, %v9283
    %v9286 = vrot.slane %v8624, 5
    %v9287 = vsel %vm8672, %v9286, %v9285
    %v9288 = vrot.slane %v8626, 4
    %v9289 = vsel %vm8675, %v9288, %v9287
    %v9290 = vrot.slane %v8628, 3
    %v9291 = vsel %vm8678, %v9290, %v9289
    %v9292 = vrot.slane %v8630, 2
    %v9293 = vsel %vm8681, %v9292, %v9291
    %v9294 = vrot.slane %v8632, 1
    %v9295 = vsel %vm8684, %v9294, %v9293
    %9296 = vrot.lane.b32.xlu0 %v9253, 64
    %v9297 = vpop.permute.xlu0 %9296
    %9298 = vrot.lane.b32.xlu0 %v9267, 64
    %v9299 = vpop.permute.xlu0 %9298
    %9300 = vrot.lane.b32.xlu0 %v9281, 64
    %v9301 = vpop.permute.xlu0 %9300
    %9302 = vrot.lane.b32.xlu0 %v9295, 64
    %v9303 = vpop.permute.xlu0 %9302
    %v9308 = vrot.slane %v8570, 1
    %v9309 = vsel %vm8666, %v8572, %v9308
    %v9310 = vrot.slane %v8574, 7
    %v9311 = vsel %vm8669, %v9310, %v9309
    %v9312 = vrot.slane %v8576, 6
    %v9313 = vsel %vm8672, %v9312, %v9311
    %v9314 = vrot.slane %v8578, 5
    %v9315 = vsel %vm8675, %v9314, %v9313
    %v9316 = vrot.slane %v8580, 4
    %v9317 = vsel %vm8678, %v9316, %v9315
    %v9318 = vrot.slane %v8582, 3
    %v9319 = vsel %vm8681, %v9318, %v9317
    %v9320 = vrot.slane %v8584, 2
    %v9321 = vsel %vm8684, %v9320, %v9319
    %v9322 = vrot.slane %v8586, 1
    %v9323 = vsel %vm8666, %v8588, %v9322
    %v9324 = vrot.slane %v8590, 7
    %v9325 = vsel %vm8669, %v9324, %v9323
    %v9326 = vrot.slane %v8592, 6
    %v9327 = vsel %vm8672, %v9326, %v9325
    %v9328 = vrot.slane %v8594, 5
    %v9329 = vsel %vm8675, %v9328, %v9327
    %v9330 = vrot.slane %v8596, 4
    %v9331 = vsel %vm8678, %v9330, %v9329
    %v9332 = vrot.slane %v8598, 3
    %v9333 = vsel %vm8681, %v9332, %v9331
    %v9334 = vrot.slane %v8600, 2
    %v9335 = vsel %vm8684, %v9334, %v9333
    %v9336 = vrot.slane %v8602, 1
    %v9337 = vsel %vm8666, %v8604, %v9336
    %v9338 = vrot.slane %v8606, 7
    %v9339 = vsel %vm8669, %v9338, %v9337
    %v9340 = vrot.slane %v8608, 6
    %v9341 = vsel %vm8672, %v9340, %v9339
    %v9342 = vrot.slane %v8610, 5
    %v9343 = vsel %vm8675, %v9342, %v9341
    %v9344 = vrot.slane %v8612, 4
    %v9345 = vsel %vm8678, %v9344, %v9343
    %v9346 = vrot.slane %v8614, 3
    %v9347 = vsel %vm8681, %v9346, %v9345
    %v9348 = vrot.slane %v8616, 2
    %v9349 = vsel %vm8684, %v9348, %v9347
    %v9350 = vrot.slane %v8618, 1
    %v9351 = vsel %vm8666, %v8620, %v9350
    %v9352 = vrot.slane %v8622, 7
    %v9353 = vsel %vm8669, %v9352, %v9351
    %v9354 = vrot.slane %v8624, 6
    %v9355 = vsel %vm8672, %v9354, %v9353
    %v9356 = vrot.slane %v8626, 5
    %v9357 = vsel %vm8675, %v9356, %v9355
    %v9358 = vrot.slane %v8628, 4
    %v9359 = vsel %vm8678, %v9358, %v9357
    %v9360 = vrot.slane %v8630, 3
    %v9361 = vsel %vm8681, %v9360, %v9359
    %v9362 = vrot.slane %v8632, 2
    %v9363 = vsel %vm8684, %v9362, %v9361
    %9364 = vrot.lane.b32.xlu0 %v9321, 72
    %v9365 = vpop.permute.xlu0 %9364
    %9366 = vrot.lane.b32.xlu0 %v9335, 72
    %v9367 = vpop.permute.xlu0 %9366
    %9368 = vrot.lane.b32.xlu0 %v9349, 72
    %v9369 = vpop.permute.xlu0 %9368
    %9370 = vrot.lane.b32.xlu0 %v9363, 72
    %v9371 = vpop.permute.xlu0 %9370
    %v9376 = vrot.slane %v8570, 2
    %v9377 = vrot.slane %v8572, 1
    %v9378 = vsel %vm8666, %v9377, %v9376
    %v9379 = vsel %vm8669, %v8574, %v9378
    %v9380 = vrot.slane %v8576, 7
    %v9381 = vsel %vm8672, %v9380, %v9379
    %v9382 = vrot.slane %v8578, 6
    %v9383 = vsel %vm8675, %v9382, %v9381
    %v9384 = vrot.slane %v8580, 5
    %v9385 = vsel %vm8678, %v9384, %v9383
    %v9386 = vrot.slane %v8582, 4
    %v9387 = vsel %vm8681, %v9386, %v9385
    %v9388 = vrot.slane %v8584, 3
    %v9389 = vsel %vm8684, %v9388, %v9387
    %v9390 = vrot.slane %v8586, 2
    %v9391 = vrot.slane %v8588, 1
    %v9392 = vsel %vm8666, %v9391, %v9390
    %v9393 = vsel %vm8669, %v8590, %v9392
    %v9394 = vrot.slane %v8592, 7
    %v9395 = vsel %vm8672, %v9394, %v9393
    %v9396 = vrot.slane %v8594, 6
    %v9397 = vsel %vm8675, %v9396, %v9395
    %v9398 = vrot.slane %v8596, 5
    %v9399 = vsel %vm8678, %v9398, %v9397
    %v9400 = vrot.slane %v8598, 4
    %v9401 = vsel %vm8681, %v9400, %v9399
    %v9402 = vrot.slane %v8600, 3
    %v9403 = vsel %vm8684, %v9402, %v9401
    %v9404 = vrot.slane %v8602, 2
    %v9405 = vrot.slane %v8604, 1
    %v9406 = vsel %vm8666, %v9405, %v9404
    %v9407 = vsel %vm8669, %v8606, %v9406
    %v9408 = vrot.slane %v8608, 7
    %v9409 = vsel %vm8672, %v9408, %v9407
    %v9410 = vrot.slane %v8610, 6
    %v9411 = vsel %vm8675, %v9410, %v9409
    %v9412 = vrot.slane %v8612, 5
    %v9413 = vsel %vm8678, %v9412, %v9411
    %v9414 = vrot.slane %v8614, 4
    %v9415 = vsel %vm8681, %v9414, %v9413
    %v9416 = vrot.slane %v8616, 3
    %v9417 = vsel %vm8684, %v9416, %v9415
    %v9418 = vrot.slane %v8618, 2
    %v9419 = vrot.slane %v8620, 1
    %v9420 = vsel %vm8666, %v9419, %v9418
    %v9421 = vsel %vm8669, %v8622, %v9420
    %v9422 = vrot.slane %v8624, 7
    %v9423 = vsel %vm8672, %v9422, %v9421
    %v9424 = vrot.slane %v8626, 6
    %v9425 = vsel %vm8675, %v9424, %v9423
    %v9426 = vrot.slane %v8628, 5
    %v9427 = vsel %vm8678, %v9426, %v9425
    %v9428 = vrot.slane %v8630, 4
    %v9429 = vsel %vm8681, %v9428, %v9427
    %v9430 = vrot.slane %v8632, 3
    %v9431 = vsel %vm8684, %v9430, %v9429
    %9432 = vrot.lane.b32.xlu0 %v9389, 80
    %v9433 = vpop.permute.xlu0 %9432
    %9434 = vrot.lane.b32.xlu0 %v9403, 80
    %v9435 = vpop.permute.xlu0 %9434
    %9436 = vrot.lane.b32.xlu0 %v9417, 80
    %v9437 = vpop.permute.xlu0 %9436
    %9438 = vrot.lane.b32.xlu0 %v9431, 80
    %v9439 = vpop.permute.xlu0 %9438
    %v9444 = vrot.slane %v8570, 3
    %v9445 = vrot.slane %v8572, 2
    %v9446 = vsel %vm8666, %v9445, %v9444
    %v9447 = vrot.slane %v8574, 1
    %v9448 = vsel %vm8669, %v9447, %v9446
    %v9449 = vsel %vm8672, %v8576, %v9448
    %v9450 = vrot.slane %v8578, 7
    %v9451 = vsel %vm8675, %v9450, %v9449
    %v9452 = vrot.slane %v8580, 6
    %v9453 = vsel %vm8678, %v9452, %v9451
    %v9454 = vrot.slane %v8582, 5
    %v9455 = vsel %vm8681, %v9454, %v9453
    %v9456 = vrot.slane %v8584, 4
    %v9457 = vsel %vm8684, %v9456, %v9455
    %v9458 = vrot.slane %v8586, 3
    %v9459 = vrot.slane %v8588, 2
    %v9460 = vsel %vm8666, %v9459, %v9458
    %v9461 = vrot.slane %v8590, 1
    %v9462 = vsel %vm8669, %v9461, %v9460
    %v9463 = vsel %vm8672, %v8592, %v9462
    %v9464 = vrot.slane %v8594, 7
    %v9465 = vsel %vm8675, %v9464, %v9463
    %v9466 = vrot.slane %v8596, 6
    %v9467 = vsel %vm8678, %v9466, %v9465
    %v9468 = vrot.slane %v8598, 5
    %v9469 = vsel %vm8681, %v9468, %v9467
    %v9470 = vrot.slane %v8600, 4
    %v9471 = vsel %vm8684, %v9470, %v9469
    %v9472 = vrot.slane %v8602, 3
    %v9473 = vrot.slane %v8604, 2
    %v9474 = vsel %vm8666, %v9473, %v9472
    %v9475 = vrot.slane %v8606, 1
    %v9476 = vsel %vm8669, %v9475, %v9474
    %v9477 = vsel %vm8672, %v8608, %v9476
    %v9478 = vrot.slane %v8610, 7
    %v9479 = vsel %vm8675, %v9478, %v9477
    %v9480 = vrot.slane %v8612, 6
    %v9481 = vsel %vm8678, %v9480, %v9479
    %v9482 = vrot.slane %v8614, 5
    %v9483 = vsel %vm8681, %v9482, %v9481
    %v9484 = vrot.slane %v8616, 4
    %v9485 = vsel %vm8684, %v9484, %v9483
    %v9486 = vrot.slane %v8618, 3
    %v9487 = vrot.slane %v8620, 2
    %v9488 = vsel %vm8666, %v9487, %v9486
    %v9489 = vrot.slane %v8622, 1
    %v9490 = vsel %vm8669, %v9489, %v9488
    %v9491 = vsel %vm8672, %v8624, %v9490
    %v9492 = vrot.slane %v8626, 7
    %v9493 = vsel %vm8675, %v9492, %v9491
    %v9494 = vrot.slane %v8628, 6
    %v9495 = vsel %vm8678, %v9494, %v9493
    %v9496 = vrot.slane %v8630, 5
    %v9497 = vsel %vm8681, %v9496, %v9495
    %v9498 = vrot.slane %v8632, 4
    %v9499 = vsel %vm8684, %v9498, %v9497
    %9500 = vrot.lane.b32.xlu0 %v9457, 88
    %v9501 = vpop.permute.xlu0 %9500
    %9502 = vrot.lane.b32.xlu0 %v9471, 88
    %v9503 = vpop.permute.xlu0 %9502
    %9504 = vrot.lane.b32.xlu0 %v9485, 88
    %v9505 = vpop.permute.xlu0 %9504
    %9506 = vrot.lane.b32.xlu0 %v9499, 88
    %v9507 = vpop.permute.xlu0 %9506
    %v9512 = vrot.slane %v8570, 4
    %v9513 = vrot.slane %v8572, 3
    %v9514 = vsel %vm8666, %v9513, %v9512
    %v9515 = vrot.slane %v8574, 2
    %v9516 = vsel %vm8669, %v9515, %v9514
    %v9517 = vrot.slane %v8576, 1
    %v9518 = vsel %vm8672, %v9517, %v9516
    %v9519 = vsel %vm8675, %v8578, %v9518
    %v9520 = vrot.slane %v8580, 7
    %v9521 = vsel %vm8678, %v9520, %v9519
    %v9522 = vrot.slane %v8582, 6
    %v9523 = vsel %vm8681, %v9522, %v9521
    %v9524 = vrot.slane %v8584, 5
    %v9525 = vsel %vm8684, %v9524, %v9523
    %v9526 = vrot.slane %v8586, 4
    %v9527 = vrot.slane %v8588, 3
    %v9528 = vsel %vm8666, %v9527, %v9526
    %v9529 = vrot.slane %v8590, 2
    %v9530 = vsel %vm8669, %v9529, %v9528
    %v9531 = vrot.slane %v8592, 1
    %v9532 = vsel %vm8672, %v9531, %v9530
    %v9533 = vsel %vm8675, %v8594, %v9532
    %v9534 = vrot.slane %v8596, 7
    %v9535 = vsel %vm8678, %v9534, %v9533
    %v9536 = vrot.slane %v8598, 6
    %v9537 = vsel %vm8681, %v9536, %v9535
    %v9538 = vrot.slane %v8600, 5
    %v9539 = vsel %vm8684, %v9538, %v9537
    %v9540 = vrot.slane %v8602, 4
    %v9541 = vrot.slane %v8604, 3
    %v9542 = vsel %vm8666, %v9541, %v9540
    %v9543 = vrot.slane %v8606, 2
    %v9544 = vsel %vm8669, %v9543, %v9542
    %v9545 = vrot.slane %v8608, 1
    %v9546 = vsel %vm8672, %v9545, %v9544
    %v9547 = vsel %vm8675, %v8610, %v9546
    %v9548 = vrot.slane %v8612, 7
    %v9549 = vsel %vm8678, %v9548, %v9547
    %v9550 = vrot.slane %v8614, 6
    %v9551 = vsel %vm8681, %v9550, %v9549
    %v9552 = vrot.slane %v8616, 5
    %v9553 = vsel %vm8684, %v9552, %v9551
    %v9554 = vrot.slane %v8618, 4
    %v9555 = vrot.slane %v8620, 3
    %v9556 = vsel %vm8666, %v9555, %v9554
    %v9557 = vrot.slane %v8622, 2
    %v9558 = vsel %vm8669, %v9557, %v9556
    %v9559 = vrot.slane %v8624, 1
    %v9560 = vsel %vm8672, %v9559, %v9558
    %v9561 = vsel %vm8675, %v8626, %v9560
    %v9562 = vrot.slane %v8628, 7
    %v9563 = vsel %vm8678, %v9562, %v9561
    %v9564 = vrot.slane %v8630, 6
    %v9565 = vsel %vm8681, %v9564, %v9563
    %v9566 = vrot.slane %v8632, 5
    %v9567 = vsel %vm8684, %v9566, %v9565
    %9568 = vrot.lane.b32.xlu0 %v9525, 96
    %v9569 = vpop.permute.xlu0 %9568
    %9570 = vrot.lane.b32.xlu0 %v9539, 96
    %v9571 = vpop.permute.xlu0 %9570
    %9572 = vrot.lane.b32.xlu0 %v9553, 96
    %v9573 = vpop.permute.xlu0 %9572
    %9574 = vrot.lane.b32.xlu0 %v9567, 96
    %v9575 = vpop.permute.xlu0 %9574
    %v9580 = vrot.slane %v8570, 5
    %v9581 = vrot.slane %v8572, 4
    %v9582 = vsel %vm8666, %v9581, %v9580
    %v9583 = vrot.slane %v8574, 3
    %v9584 = vsel %vm8669, %v9583, %v9582
    %v9585 = vrot.slane %v8576, 2
    %v9586 = vsel %vm8672, %v9585, %v9584
    %v9587 = vrot.slane %v8578, 1
    %v9588 = vsel %vm8675, %v9587, %v9586
    %v9589 = vsel %vm8678, %v8580, %v9588
    %v9590 = vrot.slane %v8582, 7
    %v9591 = vsel %vm8681, %v9590, %v9589
    %v9592 = vrot.slane %v8584, 6
    %v9593 = vsel %vm8684, %v9592, %v9591
    %v9594 = vrot.slane %v8586, 5
    %v9595 = vrot.slane %v8588, 4
    %v9596 = vsel %vm8666, %v9595, %v9594
    %v9597 = vrot.slane %v8590, 3
    %v9598 = vsel %vm8669, %v9597, %v9596
    %v9599 = vrot.slane %v8592, 2
    %v9600 = vsel %vm8672, %v9599, %v9598
    %v9601 = vrot.slane %v8594, 1
    %v9602 = vsel %vm8675, %v9601, %v9600
    %v9603 = vsel %vm8678, %v8596, %v9602
    %v9604 = vrot.slane %v8598, 7
    %v9605 = vsel %vm8681, %v9604, %v9603
    %v9606 = vrot.slane %v8600, 6
    %v9607 = vsel %vm8684, %v9606, %v9605
    %v9608 = vrot.slane %v8602, 5
    %v9609 = vrot.slane %v8604, 4
    %v9610 = vsel %vm8666, %v9609, %v9608
    %v9611 = vrot.slane %v8606, 3
    %v9612 = vsel %vm8669, %v9611, %v9610
    %v9613 = vrot.slane %v8608, 2
    %v9614 = vsel %vm8672, %v9613, %v9612
    %v9615 = vrot.slane %v8610, 1
    %v9616 = vsel %vm8675, %v9615, %v9614
    %v9617 = vsel %vm8678, %v8612, %v9616
    %v9618 = vrot.slane %v8614, 7
    %v9619 = vsel %vm8681, %v9618, %v9617
    %v9620 = vrot.slane %v8616, 6
    %v9621 = vsel %vm8684, %v9620, %v9619
    %v9622 = vrot.slane %v8618, 5
    %v9623 = vrot.slane %v8620, 4
    %v9624 = vsel %vm8666, %v9623, %v9622
    %v9625 = vrot.slane %v8622, 3
    %v9626 = vsel %vm8669, %v9625, %v9624
    %v9627 = vrot.slane %v8624, 2
    %v9628 = vsel %vm8672, %v9627, %v9626
    %v9629 = vrot.slane %v8626, 1
    %v9630 = vsel %vm8675, %v9629, %v9628
    %v9631 = vsel %vm8678, %v8628, %v9630
    %v9632 = vrot.slane %v8630, 7
    %v9633 = vsel %vm8681, %v9632, %v9631
    %v9634 = vrot.slane %v8632, 6
    %v9635 = vsel %vm8684, %v9634, %v9633
    %9636 = vrot.lane.b32.xlu0 %v9593, 104
    %v9637 = vpop.permute.xlu0 %9636
    %9638 = vrot.lane.b32.xlu0 %v9607, 104
    %v9639 = vpop.permute.xlu0 %9638
    %9640 = vrot.lane.b32.xlu0 %v9621, 104
    %v9641 = vpop.permute.xlu0 %9640
    %9642 = vrot.lane.b32.xlu0 %v9635, 104
    %v9643 = vpop.permute.xlu0 %9642
    %v9648 = vrot.slane %v8570, 6
    %v9649 = vrot.slane %v8572, 5
    %v9650 = vsel %vm8666, %v9649, %v9648
    %v9651 = vrot.slane %v8574, 4
    %v9652 = vsel %vm8669, %v9651, %v9650
    %v9653 = vrot.slane %v8576, 3
    %v9654 = vsel %vm8672, %v9653, %v9652
    %v9655 = vrot.slane %v8578, 2
    %v9656 = vsel %vm8675, %v9655, %v9654
    %v9657 = vrot.slane %v8580, 1
    %v9658 = vsel %vm8678, %v9657, %v9656
    %v9659 = vsel %vm8681, %v8582, %v9658
    %v9660 = vrot.slane %v8584, 7
    %v9661 = vsel %vm8684, %v9660, %v9659
    %v9662 = vrot.slane %v8586, 6
    %v9663 = vrot.slane %v8588, 5
    %v9664 = vsel %vm8666, %v9663, %v9662
    %v9665 = vrot.slane %v8590, 4
    %v9666 = vsel %vm8669, %v9665, %v9664
    %v9667 = vrot.slane %v8592, 3
    %v9668 = vsel %vm8672, %v9667, %v9666
    %v9669 = vrot.slane %v8594, 2
    %v9670 = vsel %vm8675, %v9669, %v9668
    %v9671 = vrot.slane %v8596, 1
    %v9672 = vsel %vm8678, %v9671, %v9670
    %v9673 = vsel %vm8681, %v8598, %v9672
    %v9674 = vrot.slane %v8600, 7
    %v9675 = vsel %vm8684, %v9674, %v9673
    %v9676 = vrot.slane %v8602, 6
    %v9677 = vrot.slane %v8604, 5
    %v9678 = vsel %vm8666, %v9677, %v9676
    %v9679 = vrot.slane %v8606, 4
    %v9680 = vsel %vm8669, %v9679, %v9678
    %v9681 = vrot.slane %v8608, 3
    %v9682 = vsel %vm8672, %v9681, %v9680
    %v9683 = vrot.slane %v8610, 2
    %v9684 = vsel %vm8675, %v9683, %v9682
    %v9685 = vrot.slane %v8612, 1
    %v9686 = vsel %vm8678, %v9685, %v9684
    %v9687 = vsel %vm8681, %v8614, %v9686
    %v9688 = vrot.slane %v8616, 7
    %v9689 = vsel %vm8684, %v9688, %v9687
    %v9690 = vrot.slane %v8618, 6
    %v9691 = vrot.slane %v8620, 5
    %v9692 = vsel %vm8666, %v9691, %v9690
    %v9693 = vrot.slane %v8622, 4
    %v9694 = vsel %vm8669, %v9693, %v9692
    %v9695 = vrot.slane %v8624, 3
    %v9696 = vsel %vm8672, %v9695, %v9694
    %v9697 = vrot.slane %v8626, 2
    %v9698 = vsel %vm8675, %v9697, %v9696
    %v9699 = vrot.slane %v8628, 1
    %v9700 = vsel %vm8678, %v9699, %v9698
    %v9701 = vsel %vm8681, %v8630, %v9700
    %v9702 = vrot.slane %v8632, 7
    %v9703 = vsel %vm8684, %v9702, %v9701
    %9704 = vrot.lane.b32.xlu0 %v9661, 112
    %v9705 = vpop.permute.xlu0 %9704
    %9706 = vrot.lane.b32.xlu0 %v9675, 112
    %v9707 = vpop.permute.xlu0 %9706
    %9708 = vrot.lane.b32.xlu0 %v9689, 112
    %v9709 = vpop.permute.xlu0 %9708
    %9710 = vrot.lane.b32.xlu0 %v9703, 112
    %v9711 = vpop.permute.xlu0 %9710
    %v9716 = vrot.slane %v8570, 7
    %v9717 = vrot.slane %v8572, 6
    %v9718 = vsel %vm8666, %v9717, %v9716
    %v9719 = vrot.slane %v8574, 5
    %v9720 = vsel %vm8669, %v9719, %v9718
    %v9721 = vrot.slane %v8576, 4
    %v9722 = vsel %vm8672, %v9721, %v9720
    %v9723 = vrot.slane %v8578, 3
    %v9724 = vsel %vm8675, %v9723, %v9722
    %v9725 = vrot.slane %v8580, 2
    %v9726 = vsel %vm8678, %v9725, %v9724
    %v9727 = vrot.slane %v8582, 1
    %v9728 = vsel %vm8681, %v9727, %v9726
    %v9729 = vsel %vm8684, %v8584, %v9728
    %v9730 = vrot.slane %v8586, 7
    %v9731 = vrot.slane %v8588, 6
    %v9732 = vsel %vm8666, %v9731, %v9730
    %v9733 = vrot.slane %v8590, 5
    %v9734 = vsel %vm8669, %v9733, %v9732
    %v9735 = vrot.slane %v8592, 4
    %v9736 = vsel %vm8672, %v9735, %v9734
    %v9737 = vrot.slane %v8594, 3
    %v9738 = vsel %vm8675, %v9737, %v9736
    %v9739 = vrot.slane %v8596, 2
    %v9740 = vsel %vm8678, %v9739, %v9738
    %v9741 = vrot.slane %v8598, 1
    %v9742 = vsel %vm8681, %v9741, %v9740
    %v9743 = vsel %vm8684, %v8600, %v9742
    %v9744 = vrot.slane %v8602, 7
    %v9745 = vrot.slane %v8604, 6
    %v9746 = vsel %vm8666, %v9745, %v9744
    %v9747 = vrot.slane %v8606, 5
    %v9748 = vsel %vm8669, %v9747, %v9746
    %v9749 = vrot.slane %v8608, 4
    %v9750 = vsel %vm8672, %v9749, %v9748
    %v9751 = vrot.slane %v8610, 3
    %v9752 = vsel %vm8675, %v9751, %v9750
    %v9753 = vrot.slane %v8612, 2
    %v9754 = vsel %vm8678, %v9753, %v9752
    %v9755 = vrot.slane %v8614, 1
    %v9756 = vsel %vm8681, %v9755, %v9754
    %v9757 = vsel %vm8684, %v8616, %v9756
    %v9758 = vrot.slane %v8618, 7
    %v9759 = vrot.slane %v8620, 6
    %v9760 = vsel %vm8666, %v9759, %v9758
    %v9761 = vrot.slane %v8622, 5
    %v9762 = vsel %vm8669, %v9761, %v9760
    %v9763 = vrot.slane %v8624, 4
    %v9764 = vsel %vm8672, %v9763, %v9762
    %v9765 = vrot.slane %v8626, 3
    %v9766 = vsel %vm8675, %v9765, %v9764
    %v9767 = vrot.slane %v8628, 2
    %v9768 = vsel %vm8678, %v9767, %v9766
    %v9769 = vrot.slane %v8630, 1
    %v9770 = vsel %vm8681, %v9769, %v9768
    %v9771 = vsel %vm8684, %v8632, %v9770
    %9772 = vrot.lane.b32.xlu0 %v9729, 120
    %v9773 = vpop.permute.xlu0 %9772
    %9774 = vrot.lane.b32.xlu0 %v9743, 120
    %v9775 = vpop.permute.xlu0 %9774
    %9776 = vrot.lane.b32.xlu0 %v9757, 120
    %v9777 = vpop.permute.xlu0 %9776
    %9778 = vrot.lane.b32.xlu0 %v9771, 120
    %v9779 = vpop.permute.xlu0 %9778
    %v9784 = vsel %vm2718, %v8685, %v8789
    %v9785 = vsel %vm2718, %v8699, %v8791
    %v9786 = vsel %vm2718, %v8713, %v8793
    %v9787 = vsel %vm2718, %v8727, %v8795
    %v9788 = vsel %vm2848, %v9784, %v8857
    %v9789 = vsel %vm2848, %v9785, %v8859
    %v9790 = vsel %vm2848, %v9786, %v8861
    %v9791 = vsel %vm2848, %v9787, %v8863
    %v9792 = vsel %vm2978, %v9788, %v8925
    %v9793 = vsel %vm2978, %v9789, %v8927
    %v9794 = vsel %vm2978, %v9790, %v8929
    %v9795 = vsel %vm2978, %v9791, %v8931
    %v9796 = vsel %vm3108, %v9792, %v8993
    %v9797 = vsel %vm3108, %v9793, %v8995
    %v9798 = vsel %vm3108, %v9794, %v8997
    %v9799 = vsel %vm3108, %v9795, %v8999
    %v9800 = vsel %vm7289, %v9796, %v9061
    %v9801 = vsel %vm7289, %v9797, %v9063
    %v9802 = vsel %vm7289, %v9798, %v9065
    %v9803 = vsel %vm7289, %v9799, %v9067
    %v9804 = vsel %vm7354, %v9800, %v9129
    %v9805 = vsel %vm7354, %v9801, %v9131
    %v9806 = vsel %vm7354, %v9802, %v9133
    %v9807 = vsel %vm7354, %v9803, %v9135
    %v9808 = vsel %vm7419, %v9804, %v9197
    %v9809 = vsel %vm7419, %v9805, %v9199
    %v9810 = vsel %vm7419, %v9806, %v9201
    %v9811 = vsel %vm7419, %v9807, %v9203
    %v9812 = vsel %vm7484, %v9808, %v9297
    %v9813 = vsel %vm7484, %v9809, %v9299
    %v9814 = vsel %vm7484, %v9810, %v9301
    %v9815 = vsel %vm7484, %v9811, %v9303
    %v9816 = vsel %vm7558, %v9812, %v9365
    %v9817 = vsel %vm7558, %v9813, %v9367
    %v9818 = vsel %vm7558, %v9814, %v9369
    %v9819 = vsel %vm7558, %v9815, %v9371
    %vm9820 = vcmask 654336
    %v9821 = vsel %vm9820, %v9816, %v9433
    %v9822 = vsel %vm9820, %v9817, %v9435
    %v9823 = vsel %vm9820, %v9818, %v9437
    %v9824 = vsel %vm9820, %v9819, %v9439
    %vm9825 = vcmask 719872
    %v9826 = vsel %vm9825, %v9821, %v9501
    %v9827 = vsel %vm9825, %v9822, %v9503
    %v9828 = vsel %vm9825, %v9823, %v9505
    %v9829 = vsel %vm9825, %v9824, %v9507
    %vm9830 = vcmask 785408
    %v9831 = vsel %vm9830, %v9826, %v9569
    %v9832 = vsel %vm9830, %v9827, %v9571
    %v9833 = vsel %vm9830, %v9828, %v9573
    %v9834 = vsel %vm9830, %v9829, %v9575
    %vm9835 = vcmask 850944
    %v9836 = vsel %vm9835, %v9831, %v9637
    %v9837 = vsel %vm9835, %v9832, %v9639
    %v9838 = vsel %vm9835, %v9833, %v9641
    %v9839 = vsel %vm9835, %v9834, %v9643
    %vm9840 = vcmask 916480
    %v9841 = vsel %vm9840, %v9836, %v9705
    %v9842 = vsel %vm9840, %v9837, %v9707
    %v9843 = vsel %vm9840, %v9838, %v9709
    %v9844 = vsel %vm9840, %v9839, %v9711
    %vm9845 = vcmask 982016
    %v9846 = vsel %vm9845, %v9841, %v9773
    %v9847 = vsel %vm9845, %v9842, %v9775
    %v9848 = vsel %vm9845, %v9843, %v9777
    %v9849 = vsel %vm9845, %v9844, %v9779
    %9850 = vst [vmem:[#allocation3] sm:$0xff] %v9846
    %9851 = vst [vmem:[#allocation3 + $0x8] sm:$0xff] %v9847
    %9852 = vst [vmem:[#allocation3 + $0x10] sm:$0xff] %v9848
    %9853 = vst [vmem:[#allocation3 + $0x18] sm:$0xff] %v9849
    // Predicated region
    $region30: #{tpu_custom_call.1} parent=1 // pred_check
      _
    $region31: #{tpu_custom_call.1} parent=1 // pred_check_branch
      %9855 = sbr.rel (0) target = $region33
    $region32: #{tpu_custom_call.1} parent=1 // pred_region
      %9857 = vsyncadd [#allocation4], 0
      %s9858 = sshll.u32 [#allocation3], 4
      %s9859 = int_to_ptr.vmem [resolvable:$true] %s9858
      %s9860 = sshll.u32 %s7, 4
      %s9861 = int_to_ptr.hbm [resolvable:$true] %s9860
      %9866 = dma.vmem_to_hbm [thread:$0]  %s9859, 512, %s9861, [#allocation4], 128, 128, 8
    $region33: #{tpu_custom_call.1} parent=1 // pred_fallthru
      _
    // Predicated region
    $region34: #{tpu_custom_call.1} parent=1 // pred_check
      _
    $region35: #{tpu_custom_call.1} parent=1 // pred_check_branch
      %9868 = sbr.rel (0) target = $region37
    $region36: #{tpu_custom_call.1} parent=1 // pred_region
      %9870 = dma.done [#allocation4], 512
    $region37: #{tpu_custom_call.1} parent=1 // pred_fallthru
      _
    %9871 = vsyncpa [#allocation4], 1

</llo_original>
